<compile_context>
chip_gen: v6e
topology: v6e:2x2x1
jax: 0.10.0
libtpu: 0.0.40
codegen_flags: <defaults>
</compile_context>

<pallas_src>
import jax
import jax.numpy as jnp
from jax.experimental import pallas as pl
from jax.experimental.pallas import tpu as pltpu


def up_block_elu_kernel(x_ref, w1_ref, w2_ref, bias_ref, o0_ref, o1_ref, a_scr):
    """Fused pad+Conv3x3+BN+ELU  ->  pad+ConvT(2,5)s(1,2)+crops+BN+ELU for one batch elem.

    x_ref   : (1, H+1, W+2, Cin)  stage-A zero-padded input (NHWC)
    w1_ref  : (9, Cin, Cout)      3x3 conv taps (BN1 scale folded), tap = kt*3 + kf
    w2_ref  : (10, Cout, Cout)    ConvT taps (BN2 scale folded), sub-pixel order
    bias_ref: (2, Cout)           [0]=stage-A bias(+BN1 shift), [1]=stage-B bias(+BN2 shift)
    o0_ref  : (1, H, W, Cout)     even output frequency columns
    o1_ref  : (1, H, W, Cout)     odd output frequency columns
    a_scr   : (H+1, W+2, Cout)    VMEM scratch: zero-padded stage-A activation
    """
    xp = x_ref[0]                              # (H+1, W+2, Cin)
    Hp1, Wp2, Cin = xp.shape
    Ha = Hp1 - 2                               # stage-A output rows = H - 1
    W = Wp2 - 2
    Ho = Ha + 1                                # final output rows = H
    Cout = o0_ref.shape[-1]

    biases = bias_ref[...]                     # (2, Cout)

    # ---- stage A: 3x3 valid conv (BN1 folded into weights) + ELU ----
    accA = jnp.broadcast_to(biases[0:1, :], (Ha * W, Cout)).astype(jnp.float32)
    for kt in range(3):
        for kf in range(3):
            patch = xp[kt:kt + Ha, kf:kf + W, :].reshape(Ha * W, Cin)
            accA = accA + jnp.dot(patch, w1_ref[kt * 3 + kf],
                                  preferred_element_type=jnp.float32)
    a = jnp.where(accA > 0, accA, jnp.exp(jnp.minimum(accA, 0.0)) - 1.0)   # ELU

    # Zero-padded stage-A activation kept in VMEM (no HBM round-trip):
    # 2 zero rows on top (pad3 + causal 2-tap time kernel), 1 zero col each side.
    a_scr[...] = jnp.zeros(a_scr.shape, jnp.float32)
    a_scr[pl.ds(2, Ha), pl.ds(1, W), :] = a.reshape(Ha, W, Cout)

    # ---- stage B: ConvTranspose2d((2,5), stride (1,2)) + crops, as sub-pixel phases ----
    # Final output row i uses stage-A rows (i-1, i-2)  ->  a_scr rows (i+1, i).
    # Even output col 2m:   (col shift df, kf) in {(0,1), (-1,3)}
    # Odd  output col 2m+1: (df, kf) in {(+1,0), (0,2), (-1,4)}
    def phase(taps, base):
        acc = jnp.broadcast_to(biases[1:2, :], (Ho * W, Cout)).astype(jnp.float32)
        for idx, (kt, df) in enumerate(taps):
            blk = a_scr[pl.ds(1 - kt, Ho), pl.ds(1 + df, W), :].reshape(Ho * W, Cout)
            acc = acc + jnp.dot(blk, w2_ref[base + idx],
                                preferred_element_type=jnp.float32)
        return jnp.where(acc > 0, acc, jnp.exp(jnp.minimum(acc, 0.0)) - 1.0)   # ELU

    out0 = phase([(0, 0), (0, -1), (1, 0), (1, -1)], 0)                        # even cols
    out1 = phase([(0, 1), (0, 0), (0, -1), (1, 1), (1, 0), (1, -1)], 4)        # odd cols

    o0_ref[...] = out0.reshape(1, Ho, W, Cout).astype(o0_ref.dtype)
    o1_ref[...] = out1.reshape(1, Ho, W, Cout).astype(o1_ref.dtype)


def up_block_elu_forward(x_nchw,
                         conv_w, conv_b, bn1_gamma, bn1_beta, bn1_mean, bn1_var,
                         convt_w, convt_b, bn2_gamma, bn2_beta, bn2_mean, bn2_var,
                         eps=1e-5):
    """Pallas forward of up_block_elu. x_nchw: (N, Cin, H, W) -> (N, Cout, H, 2W)."""
    N, Cin, H, W = x_nchw.shape
    Cout = conv_w.shape[0]

    # NHWC + stage-A padding: time (H) pad (1, 0), freq (W) pad (1, 1).  Tiny, done once.
    x = jnp.transpose(x_nchw, (0, 2, 3, 1)).astype(jnp.float32)
    x_pad = jnp.pad(x, ((0, 0), (1, 0), (1, 1), (0, 0)))            # (N, H+1, W+2, Cin)

    # Fold BN1 (inference running stats) into the conv weights / bias.
    scale1 = bn1_gamma / jnp.sqrt(bn1_var + eps)
    bias_a = scale1 * conv_b + bn1_beta - bn1_mean * scale1
    w1 = conv_w * scale1[:, None, None, None]                        # (Cout, Cin, 3, 3)
    w1_taps = jnp.transpose(w1, (2, 3, 1, 0)).reshape(9, Cin, Cout)  # tap = kt*3 + kf

    # Fold BN2 into the transpose-conv weights / bias.
    scale2 = bn2_gamma / jnp.sqrt(bn2_var + eps)
    bias_b = scale2 * convt_b + bn2_beta - bn2_mean * scale2
    w2 = convt_w * scale2[None, :, None, None]                       # (Cout, Cout, 2, 5)
    # Sub-pixel tap order (kt, kf): phase0 (even cols) then phase1 (odd cols).
    tap_kf = [(0, 1), (0, 3), (1, 1), (1, 3),
              (0, 0), (0, 2), (0, 4), (1, 0), (1, 2), (1, 4)]
    w2_taps = jnp.stack([w2[:, :, kt, kf] for kt, kf in tap_kf], axis=0)   # (10, Cout, Cout)

    biases = jnp.stack([bias_a, bias_b], axis=0).astype(jnp.float32)       # (2, Cout)

    Hp1, Wp2 = H + 1, W + 2
    o0, o1 = pl.pallas_call(
        up_block_elu_kernel,
        out_shape=(jax.ShapeDtypeStruct((N, H, W, Cout), jnp.float32),
                   jax.ShapeDtypeStruct((N, H, W, Cout), jnp.float32)),
        grid_spec=pltpu.PrefetchScalarGridSpec(
            num_scalar_prefetch=0,
            grid=(N,),
            in_specs=[
                pl.BlockSpec((1, Hp1, Wp2, Cin), lambda n: (n, 0, 0, 0)),
                pl.BlockSpec((9, Cin, Cout), lambda n: (0, 0, 0)),
                pl.BlockSpec((10, Cout, Cout), lambda n: (0, 0, 0)),
                pl.BlockSpec((2, Cout), lambda n: (0, 0)),
            ],
            out_specs=[
                pl.BlockSpec((1, H, W, Cout), lambda n: (n, 0, 0, 0)),
                pl.BlockSpec((1, H, W, Cout), lambda n: (n, 0, 0, 0)),
            ],
            scratch_shapes=[pltpu.VMEM((H + 1, W + 2, Cout), jnp.float32)],
        ),
        compiler_params=pltpu.CompilerParams(
            dimension_semantics=("parallel",)),
    )(x_pad, w1_taps.astype(jnp.float32), w2_taps.astype(jnp.float32), biases)

    # Interleave even/odd frequency columns (cheap wrapper reshape) and return NCHW.
    y = jnp.stack([o0, o1], axis=3).reshape(N, H, 2 * W, Cout)
    return jnp.transpose(y, (0, 3, 1, 2)).astype(x_nchw.dtype)


# ---------------- pure-JAX reference (mirrors the PyTorch module, eval-mode BN) ----------------
def _elu(x):
    return jnp.where(x > 0, x, jnp.exp(jnp.minimum(x, 0.0)) - 1.0)


def _bn_eval(x, gamma, beta, mean, var, eps):
    inv = gamma / jnp.sqrt(var + eps)
    return x * inv[None, :, None, None] + (beta - mean * inv)[None, :, None, None]


def _conv_transpose2d_ref(x, w, b, stride):
    # x: (N, Ci, Hi, Wi); w: (Ci, Co, kH, kW)  -- PyTorch ConvTranspose2d semantics.
    n, ci, hi, wi = x.shape
    _, co, kh, kw = w.shape
    sh, sw = stride
    ho, wo = (hi - 1) * sh + kh, (wi - 1) * sw + kw
    out = jnp.zeros((n, co, ho, wo), jnp.float32)
    for kt in range(kh):
        for kf in range(kw):
            contrib = jnp.einsum('ncij,cd->ndij', x, w[:, :, kt, kf],
                                 precision=jax.lax.Precision.HIGHEST)
            out = out.at[:, :, kt:kt + sh * hi:sh, kf:kf + sw * wi:sw].add(contrib)
    return out + b[None, :, None, None]


def up_block_elu_reference(x, conv_w, conv_b, bn1_g, bn1_b, bn1_m, bn1_v,
                           convt_w, convt_b, bn2_g, bn2_b, bn2_m, bn2_v, eps=1e-5):
    xp = jnp.pad(x, ((0, 0), (0, 0), (1, 0), (1, 1)))                 # pad1
    y1 = jax.lax.conv_general_dilated(
        xp, conv_w, window_strides=(1, 1), padding='VALID',
        dimension_numbers=('NCHW', 'OIHW', 'NCHW'),
        precision=jax.lax.Precision.HIGHEST) + conv_b[None, :, None, None]
    a = _elu(_bn_eval(y1, bn1_g, bn1_b, bn1_m, bn1_v, eps))
    ap = jnp.pad(a, ((0, 0), (0, 0), (1, 0), (0, 0)))                 # pad3
    y2 = _conv_transpose2d_ref(ap, convt_w, convt_b, (1, 2))
    y2 = y2[:, :, :, 1:][:, :, :, :-2][:, :, :-1, :]                  # up_f, down_f, chomp_t
    return _elu(_bn_eval(y2, bn2_g, bn2_b, bn2_m, bn2_v, eps))


if __name__ == "__main__":
    key = jax.random.PRNGKey(0)
    N, Cin, H, W = 2, 4, 16, 16
    Cout = 8

    ks = jax.random.split(key, 13)
    x = jax.random.normal(ks[0], (N, Cin, H, W), jnp.float32)
    conv_w = jax.random.normal(ks[1], (Cout, Cin, 3, 3), jnp.float32) * 0.2
    conv_b = jax.random.normal(ks[2], (Cout,), jnp.float32) * 0.05
    bn1_gamma = 1.0 + 0.1 * jax.random.normal(ks[3], (Cout,), jnp.float32)
    bn1_beta = 0.1 * jax.random.normal(ks[4], (Cout,), jnp.float32)
    bn1_mean = 0.05 * jax.random.normal(ks[5], (Cout,), jnp.float32)
    bn1_var = 1.0 + 0.1 * jax.random.uniform(ks[6], (Cout,), jnp.float32)
    convt_w = jax.random.normal(ks[7], (Cout, Cout, 2, 5), jnp.float32) * 0.2
    convt_b = jax.random.normal(ks[8], (Cout,), jnp.float32) * 0.05
    bn2_gamma = 1.0 + 0.1 * jax.random.normal(ks[9], (Cout,), jnp.float32)
    bn2_beta = 0.1 * jax.random.normal(ks[10], (Cout,), jnp.float32)
    bn2_mean = 0.05 * jax.random.normal(ks[11], (Cout,), jnp.float32)
    bn2_var = 1.0 + 0.1 * jax.random.uniform(ks[12], (Cout,), jnp.float32)

    fwd = jax.jit(up_block_elu_forward)
    out = fwd(x, conv_w, conv_b, bn1_gamma, bn1_beta, bn1_mean, bn1_var,
              convt_w, convt_b, bn2_gamma, bn2_beta, bn2_mean, bn2_var)
    jax.block_until_ready(out)
    assert out.shape == (N, Cout, H, 2 * W), out.shape

    ref = up_block_elu_reference(x, conv_w, conv_b, bn1_gamma, bn1_beta, bn1_mean, bn1_var,
                                 convt_w, convt_b, bn2_gamma, bn2_beta, bn2_mean, bn2_var)
    assert bool(jnp.allclose(out, ref, rtol=3e-2, atol=3e-2)), \
        float(jnp.max(jnp.abs(out - ref)))

    print("KERNEL_OK")
</pallas_src>

<mosaic_0001>
module attributes {stable_mosaic.version = 11 : i64} {
  func.func @up_block_elu_kernel(%arg0: i32, %arg1: memref<1x17x18x4xf32, #tpu.memory_space<vmem>>, %arg2: memref<9x4x8xf32, #tpu.memory_space<vmem>>, %arg3: memref<10x8x8xf32, #tpu.memory_space<vmem>>, %arg4: memref<2x8xf32, #tpu.memory_space<vmem>>, %arg5: memref<1x16x16x8xf32, #tpu.memory_space<vmem>>, %arg6: memref<1x16x16x8xf32, #tpu.memory_space<vmem>>, %arg7: memref<17x18x8xf32, #tpu.memory_space<vmem>>) attributes {dimension_semantics = [#tpu.dimension_semantics<parallel>], iteration_bounds = array<i64: 2>, scalar_prefetch = 0 : i64, scratch_operands = 1 : i64, tpu.core_type = #tpu.core_type<tc>, window_params = [{transform_indices = @transform_0, window_bounds = array<i64: 1, 17, 18, 4>}, {pipeline_mode = #tpu.pipeline_mode<synchronous>, transform_indices = @transform_1, window_bounds = array<i64: 9, 4, 8>}, {pipeline_mode = #tpu.pipeline_mode<synchronous>, transform_indices = @transform_2, window_bounds = array<i64: 10, 8, 8>}, {pipeline_mode = #tpu.pipeline_mode<synchronous>, transform_indices = @transform_3, window_bounds = array<i64: 2, 8>}, {transform_indices = @transform_4, window_bounds = array<i64: 1, 16, 16, 8>}, {transform_indices = @transform_5, window_bounds = array<i64: 1, 16, 16, 8>}]} {
    %c0 = arith.constant 0 : index
    %c0_0 = arith.constant 0 : index
    %c0_1 = arith.constant 0 : index
    %c0_2 = arith.constant 0 : index
    %0 = vector.load %arg1[%c0, %c0_0, %c0_1, %c0_2] : memref<1x17x18x4xf32, #tpu.memory_space<vmem>>, vector<1x17x18x4xf32>
    %1 = vector.shape_cast %0 : vector<1x17x18x4xf32> to vector<17x18x4xf32>
    %c0_3 = arith.constant 0 : index
    %c0_4 = arith.constant 0 : index
    %2 = vector.load %arg4[%c0_3, %c0_4] : memref<2x8xf32, #tpu.memory_space<vmem>>, vector<2x8xf32>
    %3 = vector.extract_strided_slice %2 {offsets = [0, 0], sizes = [1, 8], strides = [1, 1]} : vector<2x8xf32> to vector<1x8xf32>
    %4 = vector.shape_cast %3 : vector<1x8xf32> to vector<1x8xf32>
    %5 = vector.broadcast %4 : vector<1x8xf32> to vector<240x8xf32>
    %6 = vector.extract_strided_slice %1 {offsets = [0, 0, 0], sizes = [15, 16, 4], strides = [1, 1, 1]} : vector<17x18x4xf32> to vector<15x16x4xf32>
    %7 = vector.shape_cast %6 : vector<15x16x4xf32> to vector<240x4xf32>
    %c0_5 = arith.constant 0 : index
    %c0_6 = arith.constant 0 : index
    %c0_7 = arith.constant 0 : index
    %8 = vector.load %arg2[%c0_5, %c0_6, %c0_7] : memref<9x4x8xf32, #tpu.memory_space<vmem>>, vector<1x4x8xf32>
    %9 = vector.shape_cast %8 : vector<1x4x8xf32> to vector<4x8xf32>
    %cst = arith.constant dense<0.000000e+00> : vector<240x8xf32>
    %10 = tpu.matmul %7, %9, %cst {dimension_numbers = #tpu.dot_dimension_numbers<[1], [0], [0], [1], [0, 0, 1, 1], [], []>} : vector<240x4xf32>, vector<4x8xf32>, vector<240x8xf32> -> vector<240x8xf32>
    %11 = arith.addf %5, %10 : vector<240x8xf32>
    %12 = vector.extract_strided_slice %1 {offsets = [0, 1, 0], sizes = [15, 16, 4], strides = [1, 1, 1]} : vector<17x18x4xf32> to vector<15x16x4xf32>
    %13 = vector.shape_cast %12 : vector<15x16x4xf32> to vector<240x4xf32>
    %c1 = arith.constant 1 : index
    %c0_8 = arith.constant 0 : index
    %c0_9 = arith.constant 0 : index
    %14 = vector.load %arg2[%c1, %c0_8, %c0_9] : memref<9x4x8xf32, #tpu.memory_space<vmem>>, vector<1x4x8xf32>
    %15 = vector.shape_cast %14 : vector<1x4x8xf32> to vector<4x8xf32>
    %cst_10 = arith.constant dense<0.000000e+00> : vector<240x8xf32>
    %16 = tpu.matmul %13, %15, %cst_10 {dimension_numbers = #tpu.dot_dimension_numbers<[1], [0], [0], [1], [0, 0, 1, 1], [], []>} : vector<240x4xf32>, vector<4x8xf32>, vector<240x8xf32> -> vector<240x8xf32>
    %17 = arith.addf %11, %16 : vector<240x8xf32>
    %18 = vector.extract_strided_slice %1 {offsets = [0, 2, 0], sizes = [15, 16, 4], strides = [1, 1, 1]} : vector<17x18x4xf32> to vector<15x16x4xf32>
    %19 = vector.shape_cast %18 : vector<15x16x4xf32> to vector<240x4xf32>
    %c2 = arith.constant 2 : index
    %c0_11 = arith.constant 0 : index
    %c0_12 = arith.constant 0 : index
    %20 = vector.load %arg2[%c2, %c0_11, %c0_12] : memref<9x4x8xf32, #tpu.memory_space<vmem>>, vector<1x4x8xf32>
    %21 = vector.shape_cast %20 : vector<1x4x8xf32> to vector<4x8xf32>
    %cst_13 = arith.constant dense<0.000000e+00> : vector<240x8xf32>
    %22 = tpu.matmul %19, %21, %cst_13 {dimension_numbers = #tpu.dot_dimension_numbers<[1], [0], [0], [1], [0, 0, 1, 1], [], []>} : vector<240x4xf32>, vector<4x8xf32>, vector<240x8xf32> -> vector<240x8xf32>
    %23 = arith.addf %17, %22 : vector<240x8xf32>
    %24 = vector.extract_strided_slice %1 {offsets = [1, 0, 0], sizes = [15, 16, 4], strides = [1, 1, 1]} : vector<17x18x4xf32> to vector<15x16x4xf32>
    %25 = vector.shape_cast %24 : vector<15x16x4xf32> to vector<240x4xf32>
    %c3 = arith.constant 3 : index
    %c0_14 = arith.constant 0 : index
    %c0_15 = arith.constant 0 : index
    %26 = vector.load %arg2[%c3, %c0_14, %c0_15] : memref<9x4x8xf32, #tpu.memory_space<vmem>>, vector<1x4x8xf32>
    %27 = vector.shape_cast %26 : vector<1x4x8xf32> to vector<4x8xf32>
    %cst_16 = arith.constant dense<0.000000e+00> : vector<240x8xf32>
    %28 = tpu.matmul %25, %27, %cst_16 {dimension_numbers = #tpu.dot_dimension_numbers<[1], [0], [0], [1], [0, 0, 1, 1], [], []>} : vector<240x4xf32>, vector<4x8xf32>, vector<240x8xf32> -> vector<240x8xf32>
    %29 = arith.addf %23, %28 : vector<240x8xf32>
    %30 = vector.extract_strided_slice %1 {offsets = [1, 1, 0], sizes = [15, 16, 4], strides = [1, 1, 1]} : vector<17x18x4xf32> to vector<15x16x4xf32>
    %31 = vector.shape_cast %30 : vector<15x16x4xf32> to vector<240x4xf32>
    %c4 = arith.constant 4 : index
    %c0_17 = arith.constant 0 : index
    %c0_18 = arith.constant 0 : index
    %32 = vector.load %arg2[%c4, %c0_17, %c0_18] : memref<9x4x8xf32, #tpu.memory_space<vmem>>, vector<1x4x8xf32>
    %33 = vector.shape_cast %32 : vector<1x4x8xf32> to vector<4x8xf32>
    %cst_19 = arith.constant dense<0.000000e+00> : vector<240x8xf32>
    %34 = tpu.matmul %31, %33, %cst_19 {dimension_numbers = #tpu.dot_dimension_numbers<[1], [0], [0], [1], [0, 0, 1, 1], [], []>} : vector<240x4xf32>, vector<4x8xf32>, vector<240x8xf32> -> vector<240x8xf32>
    %35 = arith.addf %29, %34 : vector<240x8xf32>
    %36 = vector.extract_strided_slice %1 {offsets = [1, 2, 0], sizes = [15, 16, 4], strides = [1, 1, 1]} : vector<17x18x4xf32> to vector<15x16x4xf32>
    %37 = vector.shape_cast %36 : vector<15x16x4xf32> to vector<240x4xf32>
    %c5 = arith.constant 5 : index
    %c0_20 = arith.constant 0 : index
    %c0_21 = arith.constant 0 : index
    %38 = vector.load %arg2[%c5, %c0_20, %c0_21] : memref<9x4x8xf32, #tpu.memory_space<vmem>>, vector<1x4x8xf32>
    %39 = vector.shape_cast %38 : vector<1x4x8xf32> to vector<4x8xf32>
    %cst_22 = arith.constant dense<0.000000e+00> : vector<240x8xf32>
    %40 = tpu.matmul %37, %39, %cst_22 {dimension_numbers = #tpu.dot_dimension_numbers<[1], [0], [0], [1], [0, 0, 1, 1], [], []>} : vector<240x4xf32>, vector<4x8xf32>, vector<240x8xf32> -> vector<240x8xf32>
    %41 = arith.addf %35, %40 : vector<240x8xf32>
    %42 = vector.extract_strided_slice %1 {offsets = [2, 0, 0], sizes = [15, 16, 4], strides = [1, 1, 1]} : vector<17x18x4xf32> to vector<15x16x4xf32>
    %43 = vector.shape_cast %42 : vector<15x16x4xf32> to vector<240x4xf32>
    %c6 = arith.constant 6 : index
    %c0_23 = arith.constant 0 : index
    %c0_24 = arith.constant 0 : index
    %44 = vector.load %arg2[%c6, %c0_23, %c0_24] : memref<9x4x8xf32, #tpu.memory_space<vmem>>, vector<1x4x8xf32>
    %45 = vector.shape_cast %44 : vector<1x4x8xf32> to vector<4x8xf32>
    %cst_25 = arith.constant dense<0.000000e+00> : vector<240x8xf32>
    %46 = tpu.matmul %43, %45, %cst_25 {dimension_numbers = #tpu.dot_dimension_numbers<[1], [0], [0], [1], [0, 0, 1, 1], [], []>} : vector<240x4xf32>, vector<4x8xf32>, vector<240x8xf32> -> vector<240x8xf32>
    %47 = arith.addf %41, %46 : vector<240x8xf32>
    %48 = vector.extract_strided_slice %1 {offsets = [2, 1, 0], sizes = [15, 16, 4], strides = [1, 1, 1]} : vector<17x18x4xf32> to vector<15x16x4xf32>
    %49 = vector.shape_cast %48 : vector<15x16x4xf32> to vector<240x4xf32>
    %c7 = arith.constant 7 : index
    %c0_26 = arith.constant 0 : index
    %c0_27 = arith.constant 0 : index
    %50 = vector.load %arg2[%c7, %c0_26, %c0_27] : memref<9x4x8xf32, #tpu.memory_space<vmem>>, vector<1x4x8xf32>
    %51 = vector.shape_cast %50 : vector<1x4x8xf32> to vector<4x8xf32>
    %cst_28 = arith.constant dense<0.000000e+00> : vector<240x8xf32>
    %52 = tpu.matmul %49, %51, %cst_28 {dimension_numbers = #tpu.dot_dimension_numbers<[1], [0], [0], [1], [0, 0, 1, 1], [], []>} : vector<240x4xf32>, vector<4x8xf32>, vector<240x8xf32> -> vector<240x8xf32>
    %53 = arith.addf %47, %52 : vector<240x8xf32>
    %54 = vector.extract_strided_slice %1 {offsets = [2, 2, 0], sizes = [15, 16, 4], strides = [1, 1, 1]} : vector<17x18x4xf32> to vector<15x16x4xf32>
    %55 = vector.shape_cast %54 : vector<15x16x4xf32> to vector<240x4xf32>
    %c8 = arith.constant 8 : index
    %c0_29 = arith.constant 0 : index
    %c0_30 = arith.constant 0 : index
    %56 = vector.load %arg2[%c8, %c0_29, %c0_30] : memref<9x4x8xf32, #tpu.memory_space<vmem>>, vector<1x4x8xf32>
    %57 = vector.shape_cast %56 : vector<1x4x8xf32> to vector<4x8xf32>
    %cst_31 = arith.constant dense<0.000000e+00> : vector<240x8xf32>
    %58 = tpu.matmul %55, %57, %cst_31 {dimension_numbers = #tpu.dot_dimension_numbers<[1], [0], [0], [1], [0, 0, 1, 1], [], []>} : vector<240x4xf32>, vector<4x8xf32>, vector<240x8xf32> -> vector<240x8xf32>
    %59 = arith.addf %53, %58 : vector<240x8xf32>
    %cst_32 = arith.constant 0.000000e+00 : f32
    %60 = vector.broadcast %cst_32 : f32 to vector<240x8xf32>
    %61 = arith.cmpf ogt, %59, %60 : vector<240x8xf32>
    %cst_33 = arith.constant 0.000000e+00 : f32
    %62 = vector.broadcast %cst_33 : f32 to vector<240x8xf32>
    %63 = arith.minimumf %59, %62 : vector<240x8xf32>
    %64 = math.exp %63 : vector<240x8xf32>
    %cst_34 = arith.constant 1.000000e+00 : f32
    %65 = vector.broadcast %cst_34 : f32 to vector<240x8xf32>
    %66 = arith.subf %64, %65 : vector<240x8xf32>
    %67 = arith.select %61, %59, %66 : vector<240x8xi1>, vector<240x8xf32>
    %cst_35 = arith.constant 0.000000e+00 : f32
    %68 = vector.broadcast %cst_35 : f32 to vector<17x18x8xf32>
    %c0_36 = arith.constant 0 : index
    %c0_37 = arith.constant 0 : index
    %c0_38 = arith.constant 0 : index
    %69 = vector.load %arg7[%c0_36, %c0_37, %c0_38] : memref<17x18x8xf32, #tpu.memory_space<vmem>>, vector<17x18x8xf32>
    tpu.vector_store %arg7[%c0_36, %c0_37, %c0_38], %68 {strides = array<i32>} : memref<17x18x8xf32, #tpu.memory_space<vmem>>, vector<17x18x8xf32>,
    %70 = vector.shape_cast %67 : vector<240x8xf32> to vector<15x16x8xf32>
    %c2_39 = arith.constant 2 : index
    %c1_40 = arith.constant 1 : index
    %c0_41 = arith.constant 0 : index
    %71 = vector.load %arg7[%c2_39, %c1_40, %c0_41] : memref<17x18x8xf32, #tpu.memory_space<vmem>>, vector<15x16x8xf32>
    tpu.vector_store %arg7[%c2_39, %c1_40, %c0_41], %70 {strides = array<i32>} : memref<17x18x8xf32, #tpu.memory_space<vmem>>, vector<15x16x8xf32>,
    %72 = vector.extract_strided_slice %2 {offsets = [1, 0], sizes = [1, 8], strides = [1, 1]} : vector<2x8xf32> to vector<1x8xf32>
    %73 = vector.shape_cast %72 : vector<1x8xf32> to vector<1x8xf32>
    %74 = vector.broadcast %73 : vector<1x8xf32> to vector<256x8xf32>
    %c1_42 = arith.constant 1 : index
    %c1_43 = arith.constant 1 : index
    %c0_44 = arith.constant 0 : index
    %75 = vector.load %arg7[%c1_42, %c1_43, %c0_44] : memref<17x18x8xf32, #tpu.memory_space<vmem>>, vector<16x16x8xf32>
    %76 = vector.shape_cast %75 : vector<16x16x8xf32> to vector<256x8xf32>
    %c0_45 = arith.constant 0 : index
    %c0_46 = arith.constant 0 : index
    %c0_47 = arith.constant 0 : index
    %77 = vector.load %arg3[%c0_45, %c0_46, %c0_47] : memref<10x8x8xf32, #tpu.memory_space<vmem>>, vector<1x8x8xf32>
    %78 = vector.shape_cast %77 : vector<1x8x8xf32> to vector<8x8xf32>
    %cst_48 = arith.constant dense<0.000000e+00> : vector<256x8xf32>
    %79 = tpu.matmul %76, %78, %cst_48 {dimension_numbers = #tpu.dot_dimension_numbers<[1], [0], [0], [1], [0, 0, 1, 1], [], []>} : vector<256x8xf32>, vector<8x8xf32>, vector<256x8xf32> -> vector<256x8xf32>
    %80 = arith.addf %74, %79 : vector<256x8xf32>
    %c1_49 = arith.constant 1 : index
    %c0_50 = arith.constant 0 : index
    %c0_51 = arith.constant 0 : index
    %81 = vector.load %arg7[%c1_49, %c0_50, %c0_51] : memref<17x18x8xf32, #tpu.memory_space<vmem>>, vector<16x16x8xf32>
    %82 = vector.shape_cast %81 : vector<16x16x8xf32> to vector<256x8xf32>
    %c1_52 = arith.constant 1 : index
    %c0_53 = arith.constant 0 : index
    %c0_54 = arith.constant 0 : index
    %83 = vector.load %arg3[%c1_52, %c0_53, %c0_54] : memref<10x8x8xf32, #tpu.memory_space<vmem>>, vector<1x8x8xf32>
    %84 = vector.shape_cast %83 : vector<1x8x8xf32> to vector<8x8xf32>
    %cst_55 = arith.constant dense<0.000000e+00> : vector<256x8xf32>
    %85 = tpu.matmul %82, %84, %cst_55 {dimension_numbers = #tpu.dot_dimension_numbers<[1], [0], [0], [1], [0, 0, 1, 1], [], []>} : vector<256x8xf32>, vector<8x8xf32>, vector<256x8xf32> -> vector<256x8xf32>
    %86 = arith.addf %80, %85 : vector<256x8xf32>
    %c0_56 = arith.constant 0 : index
    %c1_57 = arith.constant 1 : index
    %c0_58 = arith.constant 0 : index
    %87 = vector.load %arg7[%c0_56, %c1_57, %c0_58] : memref<17x18x8xf32, #tpu.memory_space<vmem>>, vector<16x16x8xf32>
    %88 = vector.shape_cast %87 : vector<16x16x8xf32> to vector<256x8xf32>
    %c2_59 = arith.constant 2 : index
    %c0_60 = arith.constant 0 : index
    %c0_61 = arith.constant 0 : index
    %89 = vector.load %arg3[%c2_59, %c0_60, %c0_61] : memref<10x8x8xf32, #tpu.memory_space<vmem>>, vector<1x8x8xf32>
    %90 = vector.shape_cast %89 : vector<1x8x8xf32> to vector<8x8xf32>
    %cst_62 = arith.constant dense<0.000000e+00> : vector<256x8xf32>
    %91 = tpu.matmul %88, %90, %cst_62 {dimension_numbers = #tpu.dot_dimension_numbers<[1], [0], [0], [1], [0, 0, 1, 1], [], []>} : vector<256x8xf32>, vector<8x8xf32>, vector<256x8xf32> -> vector<256x8xf32>
    %92 = arith.addf %86, %91 : vector<256x8xf32>
    %c0_63 = arith.constant 0 : index
    %c0_64 = arith.constant 0 : index
    %c0_65 = arith.constant 0 : index
    %93 = vector.load %arg7[%c0_63, %c0_64, %c0_65] : memref<17x18x8xf32, #tpu.memory_space<vmem>>, vector<16x16x8xf32>
    %94 = vector.shape_cast %93 : vector<16x16x8xf32> to vector<256x8xf32>
    %c3_66 = arith.constant 3 : index
    %c0_67 = arith.constant 0 : index
    %c0_68 = arith.constant 0 : index
    %95 = vector.load %arg3[%c3_66, %c0_67, %c0_68] : memref<10x8x8xf32, #tpu.memory_space<vmem>>, vector<1x8x8xf32>
    %96 = vector.shape_cast %95 : vector<1x8x8xf32> to vector<8x8xf32>
    %cst_69 = arith.constant dense<0.000000e+00> : vector<256x8xf32>
    %97 = tpu.matmul %94, %96, %cst_69 {dimension_numbers = #tpu.dot_dimension_numbers<[1], [0], [0], [1], [0, 0, 1, 1], [], []>} : vector<256x8xf32>, vector<8x8xf32>, vector<256x8xf32> -> vector<256x8xf32>
    %98 = arith.addf %92, %97 : vector<256x8xf32>
    %cst_70 = arith.constant 0.000000e+00 : f32
    %99 = vector.broadcast %cst_70 : f32 to vector<256x8xf32>
    %100 = arith.cmpf ogt, %98, %99 : vector<256x8xf32>
    %cst_71 = arith.constant 0.000000e+00 : f32
    %101 = vector.broadcast %cst_71 : f32 to vector<256x8xf32>
    %102 = arith.minimumf %98, %101 : vector<256x8xf32>
    %103 = math.exp %102 : vector<256x8xf32>
    %cst_72 = arith.constant 1.000000e+00 : f32
    %104 = vector.broadcast %cst_72 : f32 to vector<256x8xf32>
    %105 = arith.subf %103, %104 : vector<256x8xf32>
    %106 = arith.select %100, %98, %105 : vector<256x8xi1>, vector<256x8xf32>
    %107 = vector.extract_strided_slice %2 {offsets = [1, 0], sizes = [1, 8], strides = [1, 1]} : vector<2x8xf32> to vector<1x8xf32>
    %108 = vector.shape_cast %107 : vector<1x8xf32> to vector<1x8xf32>
    %109 = vector.broadcast %108 : vector<1x8xf32> to vector<256x8xf32>
    %c1_73 = arith.constant 1 : index
    %c2_74 = arith.constant 2 : index
    %c0_75 = arith.constant 0 : index
    %110 = vector.load %arg7[%c1_73, %c2_74, %c0_75] : memref<17x18x8xf32, #tpu.memory_space<vmem>>, vector<16x16x8xf32>
    %111 = vector.shape_cast %110 : vector<16x16x8xf32> to vector<256x8xf32>
    %c4_76 = arith.constant 4 : index
    %c0_77 = arith.constant 0 : index
    %c0_78 = arith.constant 0 : index
    %112 = vector.load %arg3[%c4_76, %c0_77, %c0_78] : memref<10x8x8xf32, #tpu.memory_space<vmem>>, vector<1x8x8xf32>
    %113 = vector.shape_cast %112 : vector<1x8x8xf32> to vector<8x8xf32>
    %cst_79 = arith.constant dense<0.000000e+00> : vector<256x8xf32>
    %114 = tpu.matmul %111, %113, %cst_79 {dimension_numbers = #tpu.dot_dimension_numbers<[1], [0], [0], [1], [0, 0, 1, 1], [], []>} : vector<256x8xf32>, vector<8x8xf32>, vector<256x8xf32> -> vector<256x8xf32>
    %115 = arith.addf %109, %114 : vector<256x8xf32>
    %c1_80 = arith.constant 1 : index
    %c1_81 = arith.constant 1 : index
    %c0_82 = arith.constant 0 : index
    %116 = vector.load %arg7[%c1_80, %c1_81, %c0_82] : memref<17x18x8xf32, #tpu.memory_space<vmem>>, vector<16x16x8xf32>
    %117 = vector.shape_cast %116 : vector<16x16x8xf32> to vector<256x8xf32>
    %c5_83 = arith.constant 5 : index
    %c0_84 = arith.constant 0 : index
    %c0_85 = arith.constant 0 : index
    %118 = vector.load %arg3[%c5_83, %c0_84, %c0_85] : memref<10x8x8xf32, #tpu.memory_space<vmem>>, vector<1x8x8xf32>
    %119 = vector.shape_cast %118 : vector<1x8x8xf32> to vector<8x8xf32>
    %cst_86 = arith.constant dense<0.000000e+00> : vector<256x8xf32>
    %120 = tpu.matmul %117, %119, %cst_86 {dimension_numbers = #tpu.dot_dimension_numbers<[1], [0], [0], [1], [0, 0, 1, 1], [], []>} : vector<256x8xf32>, vector<8x8xf32>, vector<256x8xf32> -> vector<256x8xf32>
    %121 = arith.addf %115, %120 : vector<256x8xf32>
    %c1_87 = arith.constant 1 : index
    %c0_88 = arith.constant 0 : index
    %c0_89 = arith.constant 0 : index
    %122 = vector.load %arg7[%c1_87, %c0_88, %c0_89] : memref<17x18x8xf32, #tpu.memory_space<vmem>>, vector<16x16x8xf32>
    %123 = vector.shape_cast %122 : vector<16x16x8xf32> to vector<256x8xf32>
    %c6_90 = arith.constant 6 : index
    %c0_91 = arith.constant 0 : index
    %c0_92 = arith.constant 0 : index
    %124 = vector.load %arg3[%c6_90, %c0_91, %c0_92] : memref<10x8x8xf32, #tpu.memory_space<vmem>>, vector<1x8x8xf32>
    %125 = vector.shape_cast %124 : vector<1x8x8xf32> to vector<8x8xf32>
    %cst_93 = arith.constant dense<0.000000e+00> : vector<256x8xf32>
    %126 = tpu.matmul %123, %125, %cst_93 {dimension_numbers = #tpu.dot_dimension_numbers<[1], [0], [0], [1], [0, 0, 1, 1], [], []>} : vector<256x8xf32>, vector<8x8xf32>, vector<256x8xf32> -> vector<256x8xf32>
    %127 = arith.addf %121, %126 : vector<256x8xf32>
    %c0_94 = arith.constant 0 : index
    %c2_95 = arith.constant 2 : index
    %c0_96 = arith.constant 0 : index
    %128 = vector.load %arg7[%c0_94, %c2_95, %c0_96] : memref<17x18x8xf32, #tpu.memory_space<vmem>>, vector<16x16x8xf32>
    %129 = vector.shape_cast %128 : vector<16x16x8xf32> to vector<256x8xf32>
    %c7_97 = arith.constant 7 : index
    %c0_98 = arith.constant 0 : index
    %c0_99 = arith.constant 0 : index
    %130 = vector.load %arg3[%c7_97, %c0_98, %c0_99] : memref<10x8x8xf32, #tpu.memory_space<vmem>>, vector<1x8x8xf32>
    %131 = vector.shape_cast %130 : vector<1x8x8xf32> to vector<8x8xf32>
    %cst_100 = arith.constant dense<0.000000e+00> : vector<256x8xf32>
    %132 = tpu.matmul %129, %131, %cst_100 {dimension_numbers = #tpu.dot_dimension_numbers<[1], [0], [0], [1], [0, 0, 1, 1], [], []>} : vector<256x8xf32>, vector<8x8xf32>, vector<256x8xf32> -> vector<256x8xf32>
    %133 = arith.addf %127, %132 : vector<256x8xf32>
    %c0_101 = arith.constant 0 : index
    %c1_102 = arith.constant 1 : index
    %c0_103 = arith.constant 0 : index
    %134 = vector.load %arg7[%c0_101, %c1_102, %c0_103] : memref<17x18x8xf32, #tpu.memory_space<vmem>>, vector<16x16x8xf32>
    %135 = vector.shape_cast %134 : vector<16x16x8xf32> to vector<256x8xf32>
    %c8_104 = arith.constant 8 : index
    %c0_105 = arith.constant 0 : index
    %c0_106 = arith.constant 0 : index
    %136 = vector.load %arg3[%c8_104, %c0_105, %c0_106] : memref<10x8x8xf32, #tpu.memory_space<vmem>>, vector<1x8x8xf32>
    %137 = vector.shape_cast %136 : vector<1x8x8xf32> to vector<8x8xf32>
    %cst_107 = arith.constant dense<0.000000e+00> : vector<256x8xf32>
    %138 = tpu.matmul %135, %137, %cst_107 {dimension_numbers = #tpu.dot_dimension_numbers<[1], [0], [0], [1], [0, 0, 1, 1], [], []>} : vector<256x8xf32>, vector<8x8xf32>, vector<256x8xf32> -> vector<256x8xf32>
    %139 = arith.addf %133, %138 : vector<256x8xf32>
    %c0_108 = arith.constant 0 : index
    %c0_109 = arith.constant 0 : index
    %c0_110 = arith.constant 0 : index
    %140 = vector.load %arg7[%c0_108, %c0_109, %c0_110] : memref<17x18x8xf32, #tpu.memory_space<vmem>>, vector<16x16x8xf32>
    %141 = vector.shape_cast %140 : vector<16x16x8xf32> to vector<256x8xf32>
    %c9 = arith.constant 9 : index
    %c0_111 = arith.constant 0 : index
    %c0_112 = arith.constant 0 : index
    %142 = vector.load %arg3[%c9, %c0_111, %c0_112] : memref<10x8x8xf32, #tpu.memory_space<vmem>>, vector<1x8x8xf32>
    %143 = vector.shape_cast %142 : vector<1x8x8xf32> to vector<8x8xf32>
    %cst_113 = arith.constant dense<0.000000e+00> : vector<256x8xf32>
    %144 = tpu.matmul %141, %143, %cst_113 {dimension_numbers = #tpu.dot_dimension_numbers<[1], [0], [0], [1], [0, 0, 1, 1], [], []>} : vector<256x8xf32>, vector<8x8xf32>, vector<256x8xf32> -> vector<256x8xf32>
    %145 = arith.addf %139, %144 : vector<256x8xf32>
    %cst_114 = arith.constant 0.000000e+00 : f32
    %146 = vector.broadcast %cst_114 : f32 to vector<256x8xf32>
    %147 = arith.cmpf ogt, %145, %146 : vector<256x8xf32>
    %cst_115 = arith.constant 0.000000e+00 : f32
    %148 = vector.broadcast %cst_115 : f32 to vector<256x8xf32>
    %149 = arith.minimumf %145, %148 : vector<256x8xf32>
    %150 = math.exp %149 : vector<256x8xf32>
    %cst_116 = arith.constant 1.000000e+00 : f32
    %151 = vector.broadcast %cst_116 : f32 to vector<256x8xf32>
    %152 = arith.subf %150, %151 : vector<256x8xf32>
    %153 = arith.select %147, %145, %152 : vector<256x8xi1>, vector<256x8xf32>
    %154 = vector.shape_cast %106 : vector<256x8xf32> to vector<1x16x16x8xf32>
    %c0_117 = arith.constant 0 : index
    %c0_118 = arith.constant 0 : index
    %c0_119 = arith.constant 0 : index
    %c0_120 = arith.constant 0 : index
    %155 = vector.load %arg5[%c0_117, %c0_118, %c0_119, %c0_120] : memref<1x16x16x8xf32, #tpu.memory_space<vmem>>, vector<1x16x16x8xf32>
    tpu.vector_store %arg5[%c0_117, %c0_118, %c0_119, %c0_120], %154 {strides = array<i32>} : memref<1x16x16x8xf32, #tpu.memory_space<vmem>>, vector<1x16x16x8xf32>,
    %156 = vector.shape_cast %153 : vector<256x8xf32> to vector<1x16x16x8xf32>
    %c0_121 = arith.constant 0 : index
    %c0_122 = arith.constant 0 : index
    %c0_123 = arith.constant 0 : index
    %c0_124 = arith.constant 0 : index
    %157 = vector.load %arg6[%c0_121, %c0_122, %c0_123, %c0_124] : memref<1x16x16x8xf32, #tpu.memory_space<vmem>>, vector<1x16x16x8xf32>
    tpu.vector_store %arg6[%c0_121, %c0_122, %c0_123, %c0_124], %156 {strides = array<i32>} : memref<1x16x16x8xf32, #tpu.memory_space<vmem>>, vector<1x16x16x8xf32>,
    return
  }
  func.func @transform_0(%arg0: i32) -> (i32, i32, i32, i32) {
    %c0_i32 = arith.constant 0 : i32
    %c0_i32_0 = arith.constant 0 : i32
    %c0_i32_1 = arith.constant 0 : i32
    %c0_i32_2 = arith.constant 0 : i32
    return %arg0, %c0_i32, %c0_i32_0, %c0_i32_1 : i32, i32, i32, i32
  }
  func.func @transform_1(%arg0: i32) -> (i32, i32, i32) {
    %c0_i32 = arith.constant 0 : i32
    %c0_i32_0 = arith.constant 0 : i32
    %c0_i32_1 = arith.constant 0 : i32
    %c0_i32_2 = arith.constant 0 : i32
    return %c0_i32, %c0_i32_0, %c0_i32_1 : i32, i32, i32
  }
  func.func @transform_2(%arg0: i32) -> (i32, i32, i32) {
    %c0_i32 = arith.constant 0 : i32
    %c0_i32_0 = arith.constant 0 : i32
    %c0_i32_1 = arith.constant 0 : i32
    %c0_i32_2 = arith.constant 0 : i32
    return %c0_i32, %c0_i32_0, %c0_i32_1 : i32, i32, i32
  }
  func.func @transform_3(%arg0: i32) -> (i32, i32) {
    %c0_i32 = arith.constant 0 : i32
    %c0_i32_0 = arith.constant 0 : i32
    %c0_i32_1 = arith.constant 0 : i32
    return %c0_i32, %c0_i32_0 : i32, i32
  }
  func.func @transform_4(%arg0: i32) -> (i32, i32, i32, i32) {
    %c0_i32 = arith.constant 0 : i32
    %c0_i32_0 = arith.constant 0 : i32
    %c0_i32_1 = arith.constant 0 : i32
    %c0_i32_2 = arith.constant 0 : i32
    return %arg0, %c0_i32, %c0_i32_0, %c0_i32_1 : i32, i32, i32, i32
  }
  func.func @transform_5(%arg0: i32) -> (i32, i32, i32, i32) {
    %c0_i32 = arith.constant 0 : i32
    %c0_i32_0 = arith.constant 0 : i32
    %c0_i32_1 = arith.constant 0 : i32
    %c0_i32_2 = arith.constant 0 : i32
    return %arg0, %c0_i32, %c0_i32_0, %c0_i32_1 : i32, i32, i32, i32
  }
}

</mosaic_0001>

<llo_original>
// kernel: up_block_elu_forward.1
$region0: #{up_block_elu_forward.1}
  #allocation0 [shape = 'u32[]', space=smem, size = 0x4, offset = 0x4, fixed_abs, tag = 'smem constant byte address 0x4 - core index']
  #allocation1 [shape = 'u32[144,128]{1,0:T(1,128)}', space=vmem, size = 0x12000, scoped, tag = 'internal scratch']
  #allocation2 [shape = 'f32[17,18,8]{2,1,0:T(8,128)}', space=vmem, size = 0x33000, scoped, tag = 'scratch operand']
  %s0 = inlined_call_operand.vmem [shape: f32[2,17,18,4], index: 0, kind: input, shape index: {}]
  %s1 = inlined_call_operand.vmem [shape: f32[9,4,8], index: 1, kind: input, shape index: {}]
  %s2 = inlined_call_operand.vmem [shape: f32[10,8,8], index: 2, kind: input, shape index: {}]
  %s3 = inlined_call_operand.vmem [shape: f32[2,8], index: 3, kind: input, shape index: {}]
  %s4 = inlined_call_operand.vmem [shape: f32[2,16,16,8], index: 4, kind: output, shape index: {0}]
  %s5 = inlined_call_operand.vmem [shape: f32[2,16,16,8], index: 5, kind: output, shape index: {1}]
  %6 = xla_tuple %s4, %s5
  %s7 = sld [smem:[#allocation0]]
  $region57: #{up_block_elu_forward.1} parent=0
    _
  %s9 = ssub.s32 1, %s7
  %s10 = scalar_select 0, %s9, %s7
  loop: start=0, step=1, limit=4
  $region2: #{up_block_elu_forward.1} parent=0 // loop_pre_header
    _
  $region3: #{up_block_elu_forward.1} parent=0 // loop_header
    %s12 = sphi 0, %s16
    %p13 = scmp.ge.s32.totalorder %s12, 4
    %s22 = sphi 0, %s24
    %s25 = sphi 0, %s22
    %s26 = sphi 0, %s25
    %s42 = sphi 0, %s26
    %s46 = sphi 0, %s46
    %s48 = sphi 0, %s46
    %s49 = sphi 0, %s48
    %s63 = sphi 0, %s49
    %s67 = sphi 0, %s67
    %s69 = sphi 0, %s67
    %s70 = sphi 0, %s69
    %s84 = sphi 0, %s70
    %s88 = sphi 0, %s88
    %s90 = sphi 0, %s88
    %s91 = sphi 0, %s90
    %s105 = sphi 0, %s91
    %s111 = sphi 0, %s113
    %s114 = sphi 0, %s111
    %s115 = sphi 0, %s114
    %s131 = sphi 0, %s115
    %s137 = sphi 0, %s139
    %s140 = sphi 0, %s137
    %s141 = sphi 0, %s140
    %s157 = sphi 0, %s141
  $region4: #{up_block_elu_forward.1} parent=0 // loop_header_branch
    %15 = sbr.rel (%p13) target = $region8
  $region5: #{up_block_elu_forward.1} parent=0 // loop_body
    %s17 = ssub.s32 %s12, 1
    %s18 = ssub.s32 %s12, 2
    %s19 = sadd.s32 %s12, 1
    %s20 = ssub.s32 %s12, %s19
    %p21 = scmp.eq.s32.totalorder %s20, 0
    %s23 = sadd.s32 %s22, 1
    %s24 = scalar_select %p21, %s22, %s23
    %p27 = pneg %p21
    %p28 = scmp.eq.s32.totalorder %s12, 1
    %p29 = por %p27, %p28
    %p30 = scmp.ne.s32.totalorder %s22, %s25
    %p31 = scmp.eq.s32.totalorder %s12, 0
    %p32 = por %p30, %p31
    %p33 = scmp.ne.s32.totalorder %s22, %s25
    %p34 = scmp.eq.s32.totalorder %s17, 1
    %p35 = por %p33, %p34
    %p36 = scmp.ne.s32.totalorder %s25, %s26
    %p37 = scmp.eq.s32.totalorder %s17, 0
    %p38 = por %p36, %p37
    %p39 = scmp.ne.s32.totalorder %s25, %s26
    %p40 = scmp.eq.s32.totalorder %s18, 1
    %p41 = por %p39, %p40
    %p43 = scmp.ne.s32.totalorder %s26, %s42
    %p44 = scmp.eq.s32.totalorder %s18, 0
    %p45 = por %p43, %p44
    %s47 = sadd.s32 %s46, 1
    %p50 = scmp.eq.s32.totalorder %s12, 1
    %p51 = scmp.ne.s32.totalorder %s46, %s48
    %p52 = scmp.eq.s32.totalorder %s12, 0
    %p53 = por %p51, %p52
    %p54 = scmp.ne.s32.totalorder %s46, %s48
    %p55 = scmp.eq.s32.totalorder %s17, 1
    %p56 = por %p54, %p55
    %p57 = scmp.ne.s32.totalorder %s48, %s49
    %p58 = scmp.eq.s32.totalorder %s17, 0
    %p59 = por %p57, %p58
    %p60 = scmp.ne.s32.totalorder %s48, %s49
    %p61 = scmp.eq.s32.totalorder %s18, 1
    %p62 = por %p60, %p61
    %p64 = scmp.ne.s32.totalorder %s49, %s63
    %p65 = scmp.eq.s32.totalorder %s18, 0
    %p66 = por %p64, %p65
    %s68 = sadd.s32 %s67, 1
    %p71 = scmp.eq.s32.totalorder %s12, 1
    %p72 = scmp.ne.s32.totalorder %s67, %s69
    %p73 = scmp.eq.s32.totalorder %s12, 0
    %p74 = por %p72, %p73
    %p75 = scmp.ne.s32.totalorder %s67, %s69
    %p76 = scmp.eq.s32.totalorder %s17, 1
    %p77 = por %p75, %p76
    %p78 = scmp.ne.s32.totalorder %s69, %s70
    %p79 = scmp.eq.s32.totalorder %s17, 0
    %p80 = por %p78, %p79
    %p81 = scmp.ne.s32.totalorder %s69, %s70
    %p82 = scmp.eq.s32.totalorder %s18, 1
    %p83 = por %p81, %p82
    %p85 = scmp.ne.s32.totalorder %s70, %s84
    %p86 = scmp.eq.s32.totalorder %s18, 0
    %p87 = por %p85, %p86
    %s89 = sadd.s32 %s88, 1
    %p92 = scmp.eq.s32.totalorder %s12, 1
    %p93 = scmp.ne.s32.totalorder %s88, %s90
    %p94 = scmp.eq.s32.totalorder %s12, 0
    %p95 = por %p93, %p94
    %p96 = scmp.ne.s32.totalorder %s88, %s90
    %p97 = scmp.eq.s32.totalorder %s17, 1
    %p98 = por %p96, %p97
    %p99 = scmp.ne.s32.totalorder %s90, %s91
    %p100 = scmp.eq.s32.totalorder %s17, 0
    %p101 = por %p99, %p100
    %p102 = scmp.ne.s32.totalorder %s90, %s91
    %p103 = scmp.eq.s32.totalorder %s18, 1
    %p104 = por %p102, %p103
    %p106 = scmp.ne.s32.totalorder %s91, %s105
    %p107 = scmp.eq.s32.totalorder %s18, 0
    %p108 = por %p106, %p107
    %s109 = ssub.s32 %s12, %s19
    %p110 = scmp.eq.s32.totalorder %s109, 0
    %s112 = sadd.s32 %s111, 1
    %s113 = scalar_select %p110, %s111, %s112
    %p116 = pneg %p110
    %p117 = scmp.eq.s32.totalorder %s12, 1
    %p118 = por %p116, %p117
    %p119 = scmp.ne.s32.totalorder %s111, %s114
    %p120 = scmp.eq.s32.totalorder %s12, 0
    %p121 = por %p119, %p120
    %p122 = scmp.ne.s32.totalorder %s111, %s114
    %p123 = scmp.eq.s32.totalorder %s17, 1
    %p124 = por %p122, %p123
    %p125 = scmp.ne.s32.totalorder %s114, %s115
    %p126 = scmp.eq.s32.totalorder %s17, 0
    %p127 = por %p125, %p126
    %p128 = scmp.ne.s32.totalorder %s114, %s115
    %p129 = scmp.eq.s32.totalorder %s18, 1
    %p130 = por %p128, %p129
    %p132 = scmp.ne.s32.totalorder %s115, %s131
    %p133 = scmp.eq.s32.totalorder %s18, 0
    %p134 = por %p132, %p133
    %s135 = ssub.s32 %s12, %s19
    %p136 = scmp.eq.s32.totalorder %s135, 0
    %s138 = sadd.s32 %s137, 1
    %s139 = scalar_select %p136, %s137, %s138
    %p142 = pneg %p136
    %p143 = scmp.eq.s32.totalorder %s12, 1
    %p144 = por %p142, %p143
    %p145 = scmp.ne.s32.totalorder %s137, %s140
    %p146 = scmp.eq.s32.totalorder %s12, 0
    %p147 = por %p145, %p146
    %p148 = scmp.ne.s32.totalorder %s137, %s140
    %p149 = scmp.eq.s32.totalorder %s17, 1
    %p150 = por %p148, %p149
    %p151 = scmp.ne.s32.totalorder %s140, %s141
    %p152 = scmp.eq.s32.totalorder %s17, 0
    %p153 = por %p151, %p152
    %p154 = scmp.ne.s32.totalorder %s140, %s141
    %p155 = scmp.eq.s32.totalorder %s18, 1
    %p156 = por %p154, %p155
    %p158 = scmp.ne.s32.totalorder %s141, %s157
    %p159 = scmp.eq.s32.totalorder %s18, 0
    %p160 = por %p158, %p159
    %p161 = scmp.le.s32.totalorder 1, %s12
    %p162 = scmp.lt.s32.totalorder %s12, 3
    %p163 = pnand %p161, %p162
    %p164 = pneg %p163
    // Predicated region
    $region9: #{up_block_elu_forward.1} parent=5 // pred_check
      _
    $region10: #{up_block_elu_forward.1} parent=5 // pred_check_branch
      %166 = sbr.rel (%p163) target = $region12
    $region11: #{up_block_elu_forward.1} parent=5 // pred_region
      %s167 = ssub.s32 %s12, 1
      // Predicated region
      $region13: #{up_block_elu_forward.1} parent=11 // pred_check
        %p168 = pneg %p59
      $region14: #{up_block_elu_forward.1} parent=11 // pred_check_branch
        %170 = sbr.rel (%p168) target = $region16
      $region15: #{up_block_elu_forward.1} parent=11 // pred_region
        _
      $region16: #{up_block_elu_forward.1} parent=11 // pred_fallthru
        _
      // Predicated region
      $region17: #{up_block_elu_forward.1} parent=11 // pred_check
        %p171 = pneg %p80
      $region18: #{up_block_elu_forward.1} parent=11 // pred_check_branch
        %173 = sbr.rel (%p171) target = $region20
      $region19: #{up_block_elu_forward.1} parent=11 // pred_region
        _
      $region20: #{up_block_elu_forward.1} parent=11 // pred_fallthru
        _
      // Predicated region
      $region21: #{up_block_elu_forward.1} parent=11 // pred_check
        %p174 = pneg %p101
      $region22: #{up_block_elu_forward.1} parent=11 // pred_check_branch
        %176 = sbr.rel (%p174) target = $region24
      $region23: #{up_block_elu_forward.1} parent=11 // pred_region
        _
      $region24: #{up_block_elu_forward.1} parent=11 // pred_fallthru
        _
    $region12: #{up_block_elu_forward.1} parent=5 // pred_fallthru
      _
    %p177 = scmp.lt.s32.totalorder %s12, 2
    // Predicated region
    $region25: #{up_block_elu_forward.1} parent=5 // pred_check
      %p178 = pneg %p177
    $region26: #{up_block_elu_forward.1} parent=5 // pred_check_branch
      %180 = sbr.rel (%p178) target = $region28
    $region27: #{up_block_elu_forward.1} parent=5 // pred_region
      // Predicated region
      $region29: #{up_block_elu_forward.1} parent=27 // pred_check
        %p181 = pneg %p32
      $region30: #{up_block_elu_forward.1} parent=27 // pred_check_branch
        %183 = sbr.rel (%p181) target = $region32
      $region31: #{up_block_elu_forward.1} parent=27 // pred_region
        %p184 = scmp.lt.s32.totalorder %s12, 1
        %s185 = scalar_select %p184, %s12, 1
        %s186 = smul.addr %s185, 51
        %s187 = smul.addr %s186, 8
        %s188 = scalar_lea.vmem %s0, %s187
      $region32: #{up_block_elu_forward.1} parent=27 // pred_fallthru
        _
    $region28: #{up_block_elu_forward.1} parent=5 // pred_fallthru
      _
    %p189 = scmp.le.s32.totalorder 1, %s12
    %p190 = scmp.lt.s32.totalorder %s12, 3
    %p191 = pnand %p189, %p190
    %p192 = pneg %p191
    // Predicated region
    $region33: #{up_block_elu_forward.1} parent=5 // pred_check
      _
    $region34: #{up_block_elu_forward.1} parent=5 // pred_check_branch
      %194 = sbr.rel (%p191) target = $region36
    $region35: #{up_block_elu_forward.1} parent=5 // pred_region
      %s195 = ssub.s32 %s12, 1
      %p196 = scmp.lt.s32.totalorder %s17, 1
      %s197 = scalar_select %p196, %s17, 1
      %s198 = smul.addr %s197, 51
      %s199 = smul.addr %s198, 8
      %s200 = scalar_lea.vmem %s0, %s199
      %p201 = pneg %p38
      %p202 = pneg %p35
      %p203 = pneg %p59
      %p204 = pneg %p56
      %p205 = pneg %p80
      %p206 = pneg %p77
      %p207 = pneg %p101
      %p208 = pneg %p98
      %p209 = pneg %p127
      %p210 = pneg %p124
      %p211 = scmp.lt.s32.totalorder %s17, 1
      %s212 = scalar_select %p211, %s17, 1
      %s213 = smul.addr %s212, 32
      %s214 = smul.addr %s213, 8
      %s215 = scalar_lea.vmem %s4, %s214
      %p216 = pneg %p153
      %p217 = pneg %p150
      %p218 = scmp.lt.s32.totalorder %s17, 1
      %s219 = scalar_select %p218, %s17, 1
      %s220 = smul.addr %s219, 32
      %s221 = smul.addr %s220, 8
      %s222 = scalar_lea.vmem %s5, %s221
      %p223 = scmp.lt.s32.totalorder %s17, 1
      %s224 = scalar_select %p223, %s17, 1
      %s225 = smul.addr %s224, 51
      %s226 = smul.addr %s225, 8
      %s227 = scalar_lea.vmem %s0, %s226
      %p228 = scmp.lt.s32.totalorder %s17, 1
      %s229 = scalar_select %p228, %s17, 1
      %s230 = smul.addr %s229, 32
      %s231 = smul.addr %s230, 8
      %s232 = scalar_lea.vmem %s4, %s231
      %p233 = scmp.lt.s32.totalorder %s17, 1
      %s234 = scalar_select %p233, %s17, 1
      %s235 = smul.addr %s234, 32
      %s236 = smul.addr %s235, 8
      %s237 = scalar_lea.vmem %s5, %s236
      %v238 = vld [vmem:[%s227] sm:$0xff]
      %v239 = vld [vmem:[%s227 + $0x8] sm:$0xff]
      %v240 = vld [vmem:[%s227 + $0x10] sm:$0x3]
      %v241 = vld [vmem:[%s227 + $0x18] sm:$0xff]
      %v242 = vld [vmem:[%s227 + $0x20] sm:$0xff]
      %v243 = vld [vmem:[%s227 + $0x28] sm:$0x3]
      %v244 = vld [vmem:[%s227 + $0x30] sm:$0xff]
      %v245 = vld [vmem:[%s227 + $0x38] sm:$0xff]
      %v246 = vld [vmem:[%s227 + $0x40] sm:$0x3]
      %v247 = vld [vmem:[%s227 + $0x48] sm:$0xff]
      %v248 = vld [vmem:[%s227 + $0x50] sm:$0xff]
      %v249 = vld [vmem:[%s227 + $0x58] sm:$0x3]
      %v250 = vld [vmem:[%s227 + $0x60] sm:$0xff]
      %v251 = vld [vmem:[%s227 + $0x68] sm:$0xff]
      %v252 = vld [vmem:[%s227 + $0x70] sm:$0x3]
      %v253 = vld [vmem:[%s227 + $0x78] sm:$0xff]
      %v254 = vld [vmem:[%s227 + $0x80] sm:$0xff]
      %v255 = vld [vmem:[%s227 + $0x88] sm:$0x3]
      %v256 = vld [vmem:[%s227 + $0x90] sm:$0xff]
      %v257 = vld [vmem:[%s227 + $0x98] sm:$0xff]
      %v258 = vld [vmem:[%s227 + $0xa0] sm:$0x3]
      %v259 = vld [vmem:[%s227 + $0xa8] sm:$0xff]
      %v260 = vld [vmem:[%s227 + $0xb0] sm:$0xff]
      %v261 = vld [vmem:[%s227 + $0xb8] sm:$0x3]
      %v262 = vld [vmem:[%s227 + $0xc0] sm:$0xff]
      %v263 = vld [vmem:[%s227 + $0xc8] sm:$0xff]
      %v264 = vld [vmem:[%s227 + $0xd0] sm:$0x3]
      %v265 = vld [vmem:[%s227 + $0xd8] sm:$0xff]
      %v266 = vld [vmem:[%s227 + $0xe0] sm:$0xff]
      %v267 = vld [vmem:[%s227 + $0xe8] sm:$0x3]
      %v268 = vld [vmem:[%s227 + $0xf0] sm:$0xff]
      %v269 = vld [vmem:[%s227 + $0xf8] sm:$0xff]
      %v270 = vld [vmem:[%s227 + $0x100] sm:$0x3]
      %v271 = vld [vmem:[%s227 + $0x108] sm:$0xff]
      %v272 = vld [vmem:[%s227 + $0x110] sm:$0xff]
      %v273 = vld [vmem:[%s227 + $0x118] sm:$0x3]
      %v274 = vld [vmem:[%s227 + $0x120] sm:$0xff]
      %v275 = vld [vmem:[%s227 + $0x128] sm:$0xff]
      %v276 = vld [vmem:[%s227 + $0x130] sm:$0x3]
      %v277 = vld [vmem:[%s227 + $0x138] sm:$0xff]
      %v278 = vld [vmem:[%s227 + $0x140] sm:$0xff]
      %v279 = vld [vmem:[%s227 + $0x148] sm:$0x3]
      %v280 = vld [vmem:[%s227 + $0x150] sm:$0xff]
      %v281 = vld [vmem:[%s227 + $0x158] sm:$0xff]
      %v282 = vld [vmem:[%s227 + $0x160] sm:$0x3]
      %v283 = vld [vmem:[%s227 + $0x168] sm:$0xff]
      %v284 = vld [vmem:[%s227 + $0x170] sm:$0xff]
      %v285 = vld [vmem:[%s227 + $0x178] sm:$0x3]
      %v286 = vld [vmem:[%s227 + $0x180] sm:$0xff]
      %v287 = vld [vmem:[%s227 + $0x188] sm:$0xff]
      %v288 = vld [vmem:[%s227 + $0x190] sm:$0x3]
      %v289 = vld [vmem:[%s3] sm:$0x3]
      %v290 = vlaneseq
      %v291 = vshrl.u32 %v290, 7
      %v292 = vsub.s32 0, %v291
      %v293 = vrot.slane %v289, %v292
      %v294 = vld [vmem:[%s1] sm:$0xf]
      %vm295 = vcmask 31744
      %v297 = vsel %vm295, %v238, 0
      %v300 = vsel %vm295, %v239, 0
      %v303 = vsel %vm295, %v241, 0
      %v306 = vsel %vm295, %v242, 0
      %v309 = vsel %vm295, %v244, 0
      %v312 = vsel %vm295, %v245, 0
      %v315 = vsel %vm295, %v247, 0
      %v318 = vsel %vm295, %v248, 0
      %v321 = vsel %vm295, %v250, 0
      %v324 = vsel %vm295, %v251, 0
      %v327 = vsel %vm295, %v253, 0
      %v330 = vsel %vm295, %v254, 0
      %v333 = vsel %vm295, %v256, 0
      %v336 = vsel %vm295, %v257, 0
      %v339 = vsel %vm295, %v259, 0
      %v342 = vsel %vm295, %v260, 0
      %v345 = vsel %vm295, %v262, 0
      %v348 = vsel %vm295, %v263, 0
      %v351 = vsel %vm295, %v265, 0
      %v354 = vsel %vm295, %v266, 0
      %v357 = vsel %vm295, %v268, 0
      %v360 = vsel %vm295, %v269, 0
      %v363 = vsel %vm295, %v271, 0
      %v366 = vsel %vm295, %v272, 0
      %v369 = vsel %vm295, %v274, 0
      %v372 = vsel %vm295, %v275, 0
      %v375 = vsel %vm295, %v277, 0
      %v378 = vsel %vm295, %v278, 0
      %v381 = vsel %vm295, %v280, 0
      %v384 = vsel %vm295, %v281, 0
      %vm386 = vcmask 1043456
      %v388 = vsel %vm386, %v294, 0
      %390 = vmatprep.subr.mxu0 0.0
      %391 = vmatpush1.msra.mxu0 0.0
      %392 = vmatprep.subr.mxu0 0.0
      %393 = vmatpush1.msra.mxu0 0.0
      %394 = vmatprep.subr.mxu0 0.0
      %395 = vmatpush1.msra.mxu0 0.0
      %396 = vmatprep.subr.mxu0 0.0
      %397 = vmatpush1.msra.mxu0 0.0
      %398 = vmatprep.subr.mxu0 0.0
      %399 = vmatpush1.msra.mxu0 0.0
      %400 = vmatprep.subr.mxu0 0.0
      %401 = vmatpush1.msra.mxu0 0.0
      %402 = vmatprep.subr.mxu0 0.0
      %403 = vmatpush1.msra.mxu0 0.0
      %404 = vmatprep.subr.mxu0 0.0
      %405 = vmatpush1.msra.mxu0 0.0
      %406 = vmatprep.subr.mxu0 0.0
      %407 = vmatpush1.msra.mxu0 0.0
      %408 = vmatprep.subr.mxu0 0.0
      %409 = vmatpush1.msra.mxu0 0.0
      %410 = vmatprep.subr.mxu0 0.0
      %411 = vmatpush1.msra.mxu0 0.0
      %412 = vmatprep.subr.mxu0 0.0
      %413 = vmatpush1.msra.mxu0 0.0
      %414 = vmatprep.subr.mxu0 0.0
      %415 = vmatpush1.msra.mxu0 0.0
      %416 = vmatprep.subr.mxu0 0.0
      %417 = vmatpush1.msra.mxu0 0.0
      %418 = vmatprep.subr.mxu0 0.0
      %419 = vmatpush1.msra.mxu0 0.0
      %420 = vmatprep.subr.mxu0 0.0
      %421 = vmatpush1.msra.mxu0 %v388
      %422 = vmatprep.subr.mxu0 0.0
      %423 = vmatpush2.msra.mxu0 0.0
      %424 = vmatprep.subr.mxu0 0.0
      %425 = vmatpush2.msra.mxu0 0.0
      %426 = vmatprep.subr.mxu0 0.0
      %427 = vmatpush2.msra.mxu0 0.0
      %428 = vmatprep.subr.mxu0 0.0
      %429 = vmatpush2.msra.mxu0 0.0
      %430 = vmatprep.subr.mxu0 0.0
      %431 = vmatpush2.msra.mxu0 0.0
      %432 = vmatprep.subr.mxu0 0.0
      %433 = vmatpush2.msra.mxu0 0.0
      %434 = vmatprep.subr.mxu0 0.0
      %435 = vmatpush2.msra.mxu0 0.0
      %436 = vmatprep.subr.mxu0 0.0
      %437 = vmatpush2.msra.mxu0 0.0
      %438 = vmatprep.subr.mxu0 0.0
      %439 = vmatpush2.msra.mxu0 0.0
      %440 = vmatprep.subr.mxu0 0.0
      %441 = vmatpush2.msra.mxu0 0.0
      %442 = vmatprep.subr.mxu0 0.0
      %443 = vmatpush2.msra.mxu0 0.0
      %444 = vmatprep.subr.mxu0 0.0
      %445 = vmatpush2.msra.mxu0 0.0
      %446 = vmatprep.subr.mxu0 0.0
      %447 = vmatpush2.msra.mxu0 0.0
      %448 = vmatprep.subr.mxu0 0.0
      %449 = vmatpush2.msra.mxu0 0.0
      %450 = vmatprep.subr.mxu0 0.0
      %451 = vmatpush2.msra.mxu0 0.0
      %452 = vmatprep.subr.mxu0 0.0
      %453 = vmatpush2.msra.mxu0 0.0
      %454 = vmatprep.mubr.f32.mxu0 0.0
      %455 = vmatmul.mubr.f32.gmra.mxu0 %v297
      %v456 = vpop.f32.mrf.mxu0
      %v457 = vadd.f32 0.0, %v456
      %v458 = vpop.f32.mrf.mxu0
      %459 = vmatprep.mubr.f32.mxu0 0.0
      %460 = vmatmul.mubr.f32.gmra.mxu0 %v300
      %v461 = vpop.f32.mrf.mxu0
      %v462 = vadd.f32 0.0, %v461
      %v463 = vpop.f32.mrf.mxu0
      %464 = vmatprep.mubr.f32.mxu0 0.0
      %465 = vmatmul.mubr.f32.gmra.mxu0 %v303
      %v466 = vpop.f32.mrf.mxu0
      %v467 = vadd.f32 0.0, %v466
      %v468 = vpop.f32.mrf.mxu0
      %469 = vmatprep.mubr.f32.mxu0 0.0
      %470 = vmatmul.mubr.f32.gmra.mxu0 %v306
      %v471 = vpop.f32.mrf.mxu0
      %v472 = vadd.f32 0.0, %v471
      %v473 = vpop.f32.mrf.mxu0
      %474 = vmatprep.mubr.f32.mxu0 0.0
      %475 = vmatmul.mubr.f32.gmra.mxu0 %v309
      %v476 = vpop.f32.mrf.mxu0
      %v477 = vadd.f32 0.0, %v476
      %v478 = vpop.f32.mrf.mxu0
      %479 = vmatprep.mubr.f32.mxu0 0.0
      %480 = vmatmul.mubr.f32.gmra.mxu0 %v312
      %v481 = vpop.f32.mrf.mxu0
      %v482 = vadd.f32 0.0, %v481
      %v483 = vpop.f32.mrf.mxu0
      %484 = vmatprep.mubr.f32.mxu0 0.0
      %485 = vmatmul.mubr.f32.gmra.mxu0 %v315
      %v486 = vpop.f32.mrf.mxu0
      %v487 = vadd.f32 0.0, %v486
      %v488 = vpop.f32.mrf.mxu0
      %489 = vmatprep.mubr.f32.mxu0 0.0
      %490 = vmatmul.mubr.f32.gmra.mxu0 %v318
      %v491 = vpop.f32.mrf.mxu0
      %v492 = vadd.f32 0.0, %v491
      %v493 = vpop.f32.mrf.mxu0
      %494 = vmatprep.mubr.f32.mxu0 0.0
      %495 = vmatmul.mubr.f32.gmra.mxu0 %v321
      %v496 = vpop.f32.mrf.mxu0
      %v497 = vadd.f32 0.0, %v496
      %v498 = vpop.f32.mrf.mxu0
      %499 = vmatprep.mubr.f32.mxu0 0.0
      %500 = vmatmul.mubr.f32.gmra.mxu0 %v324
      %v501 = vpop.f32.mrf.mxu0
      %v502 = vadd.f32 0.0, %v501
      %v503 = vpop.f32.mrf.mxu0
      %504 = vmatprep.mubr.f32.mxu0 0.0
      %505 = vmatmul.mubr.f32.gmra.mxu0 %v327
      %v506 = vpop.f32.mrf.mxu0
      %v507 = vadd.f32 0.0, %v506
      %v508 = vpop.f32.mrf.mxu0
      %509 = vmatprep.mubr.f32.mxu0 0.0
      %510 = vmatmul.mubr.f32.gmra.mxu0 %v330
      %v511 = vpop.f32.mrf.mxu0
      %v512 = vadd.f32 0.0, %v511
      %v513 = vpop.f32.mrf.mxu0
      %514 = vmatprep.mubr.f32.mxu0 0.0
      %515 = vmatmul.mubr.f32.gmra.mxu0 %v333
      %v516 = vpop.f32.mrf.mxu0
      %v517 = vadd.f32 0.0, %v516
      %v518 = vpop.f32.mrf.mxu0
      %519 = vmatprep.mubr.f32.mxu0 0.0
      %520 = vmatmul.mubr.f32.gmra.mxu0 %v336
      %v521 = vpop.f32.mrf.mxu0
      %v522 = vadd.f32 0.0, %v521
      %v523 = vpop.f32.mrf.mxu0
      %524 = vmatprep.mubr.f32.mxu0 0.0
      %525 = vmatmul.mubr.f32.gmra.mxu0 %v339
      %v526 = vpop.f32.mrf.mxu0
      %v527 = vadd.f32 0.0, %v526
      %v528 = vpop.f32.mrf.mxu0
      %529 = vmatprep.mubr.f32.mxu0 0.0
      %530 = vmatmul.mubr.f32.gmra.mxu0 %v342
      %v531 = vpop.f32.mrf.mxu0
      %v532 = vadd.f32 0.0, %v531
      %v533 = vpop.f32.mrf.mxu0
      %534 = vmatprep.mubr.f32.mxu0 0.0
      %535 = vmatmul.mubr.f32.gmra.mxu0 %v345
      %v536 = vpop.f32.mrf.mxu0
      %v537 = vadd.f32 0.0, %v536
      %v538 = vpop.f32.mrf.mxu0
      %539 = vmatprep.mubr.f32.mxu0 0.0
      %540 = vmatmul.mubr.f32.gmra.mxu0 %v348
      %v541 = vpop.f32.mrf.mxu0
      %v542 = vadd.f32 0.0, %v541
      %v543 = vpop.f32.mrf.mxu0
      %544 = vmatprep.mubr.f32.mxu0 0.0
      %545 = vmatmul.mubr.f32.gmra.mxu0 %v351
      %v546 = vpop.f32.mrf.mxu0
      %v547 = vadd.f32 0.0, %v546
      %v548 = vpop.f32.mrf.mxu0
      %549 = vmatprep.mubr.f32.mxu0 0.0
      %550 = vmatmul.mubr.f32.gmra.mxu0 %v354
      %v551 = vpop.f32.mrf.mxu0
      %v552 = vadd.f32 0.0, %v551
      %v553 = vpop.f32.mrf.mxu0
      %554 = vmatprep.mubr.f32.mxu0 0.0
      %555 = vmatmul.mubr.f32.gmra.mxu0 %v357
      %v556 = vpop.f32.mrf.mxu0
      %v557 = vadd.f32 0.0, %v556
      %v558 = vpop.f32.mrf.mxu0
      %559 = vmatprep.mubr.f32.mxu0 0.0
      %560 = vmatmul.mubr.f32.gmra.mxu0 %v360
      %v561 = vpop.f32.mrf.mxu0
      %v562 = vadd.f32 0.0, %v561
      %v563 = vpop.f32.mrf.mxu0
      %564 = vmatprep.mubr.f32.mxu0 0.0
      %565 = vmatmul.mubr.f32.gmra.mxu0 %v363
      %v566 = vpop.f32.mrf.mxu0
      %v567 = vadd.f32 0.0, %v566
      %v568 = vpop.f32.mrf.mxu0
      %569 = vmatprep.mubr.f32.mxu0 0.0
      %570 = vmatmul.mubr.f32.gmra.mxu0 %v366
      %v571 = vpop.f32.mrf.mxu0
      %v572 = vadd.f32 0.0, %v571
      %v573 = vpop.f32.mrf.mxu0
      %574 = vmatprep.mubr.f32.mxu0 0.0
      %575 = vmatmul.mubr.f32.gmra.mxu0 %v369
      %v576 = vpop.f32.mrf.mxu0
      %v577 = vadd.f32 0.0, %v576
      %v578 = vpop.f32.mrf.mxu0
      %579 = vmatprep.mubr.f32.mxu0 0.0
      %580 = vmatmul.mubr.f32.gmra.mxu0 %v372
      %v581 = vpop.f32.mrf.mxu0
      %v582 = vadd.f32 0.0, %v581
      %v583 = vpop.f32.mrf.mxu0
      %584 = vmatprep.mubr.f32.mxu0 0.0
      %585 = vmatmul.mubr.f32.gmra.mxu0 %v375
      %v586 = vpop.f32.mrf.mxu0
      %v587 = vadd.f32 0.0, %v586
      %v588 = vpop.f32.mrf.mxu0
      %589 = vmatprep.mubr.f32.mxu0 0.0
      %590 = vmatmul.mubr.f32.gmra.mxu0 %v378
      %v591 = vpop.f32.mrf.mxu0
      %v592 = vadd.f32 0.0, %v591
      %v593 = vpop.f32.mrf.mxu0
      %594 = vmatprep.mubr.f32.mxu0 0.0
      %595 = vmatmul.mubr.f32.gmra.mxu0 %v381
      %v596 = vpop.f32.mrf.mxu0
      %v597 = vadd.f32 0.0, %v596
      %v598 = vpop.f32.mrf.mxu0
      %599 = vmatprep.mubr.f32.mxu0 0.0
      %600 = vmatmul.mubr.f32.gmra.mxu0 %v384
      %v601 = vpop.f32.mrf.mxu0
      %v602 = vadd.f32 0.0, %v601
      %v603 = vpop.f32.mrf.mxu0
      %604 = vdwg.mxu0
      %v605 = vadd.f32 %v293, %v457
      %v606 = vadd.f32 %v293, %v462
      %v607 = vadd.f32 %v293, %v467
      %v608 = vadd.f32 %v293, %v472
      %v609 = vadd.f32 %v293, %v477
      %v610 = vadd.f32 %v293, %v482
      %v611 = vadd.f32 %v293, %v487
      %v612 = vadd.f32 %v293, %v492
      %v613 = vadd.f32 %v293, %v497
      %v614 = vadd.f32 %v293, %v502
      %v615 = vadd.f32 %v293, %v507
      %v616 = vadd.f32 %v293, %v512
      %v617 = vadd.f32 %v293, %v517
      %v618 = vadd.f32 %v293, %v522
      %v619 = vadd.f32 %v293, %v527
      %v620 = vadd.f32 %v293, %v532
      %v621 = vadd.f32 %v293, %v537
      %v622 = vadd.f32 %v293, %v542
      %v623 = vadd.f32 %v293, %v547
      %v624 = vadd.f32 %v293, %v552
      %v625 = vadd.f32 %v293, %v557
      %v626 = vadd.f32 %v293, %v562
      %v627 = vadd.f32 %v293, %v567
      %v628 = vadd.f32 %v293, %v572
      %v629 = vadd.f32 %v293, %v577
      %v630 = vadd.f32 %v293, %v582
      %v631 = vadd.f32 %v293, %v587
      %v632 = vadd.f32 %v293, %v592
      %v633 = vadd.f32 %v293, %v597
      %v634 = vadd.f32 %v293, %v602
      %vm650 = vcmask 1046528
      %v651 = vrot.slane %v238, 1
      %v652 = vrot.slane %v239, 1
      %v653 = vsel %vm650, %v651, %v652
      %v654 = vrot.slane %v240, 1
      %v655 = vsel %vm650, %v652, %v654
      %v656 = vrot.slane %v241, 1
      %v657 = vrot.slane %v242, 1
      %v658 = vsel %vm650, %v656, %v657
      %v659 = vrot.slane %v243, 1
      %v660 = vsel %vm650, %v657, %v659
      %v661 = vrot.slane %v244, 1
      %v662 = vrot.slane %v245, 1
      %v663 = vsel %vm650, %v661, %v662
      %v664 = vrot.slane %v246, 1
      %v665 = vsel %vm650, %v662, %v664
      %v666 = vrot.slane %v247, 1
      %v667 = vrot.slane %v248, 1
      %v668 = vsel %vm650, %v666, %v667
      %v669 = vrot.slane %v249, 1
      %v670 = vsel %vm650, %v667, %v669
      %v671 = vrot.slane %v250, 1
      %v672 = vrot.slane %v251, 1
      %v673 = vsel %vm650, %v671, %v672
      %v674 = vrot.slane %v252, 1
      %v675 = vsel %vm650, %v672, %v674
      %v676 = vrot.slane %v253, 1
      %v677 = vrot.slane %v254, 1
      %v678 = vsel %vm650, %v676, %v677
      %v679 = vrot.slane %v255, 1
      %v680 = vsel %vm650, %v677, %v679
      %v681 = vrot.slane %v256, 1
      %v682 = vrot.slane %v257, 1
      %v683 = vsel %vm650, %v681, %v682
      %v684 = vrot.slane %v258, 1
      %v685 = vsel %vm650, %v682, %v684
      %v686 = vrot.slane %v259, 1
      %v687 = vrot.slane %v260, 1
      %v688 = vsel %vm650, %v686, %v687
      %v689 = vrot.slane %v261, 1
      %v690 = vsel %vm650, %v687, %v689
      %v691 = vrot.slane %v262, 1
      %v692 = vrot.slane %v263, 1
      %v693 = vsel %vm650, %v691, %v692
      %v694 = vrot.slane %v264, 1
      %v695 = vsel %vm650, %v692, %v694
      %v696 = vrot.slane %v265, 1
      %v697 = vrot.slane %v266, 1
      %v698 = vsel %vm650, %v696, %v697
      %v699 = vrot.slane %v267, 1
      %v700 = vsel %vm650, %v697, %v699
      %v701 = vrot.slane %v268, 1
      %v702 = vrot.slane %v269, 1
      %v703 = vsel %vm650, %v701, %v702
      %v704 = vrot.slane %v270, 1
      %v705 = vsel %vm650, %v702, %v704
      %v706 = vrot.slane %v271, 1
      %v707 = vrot.slane %v272, 1
      %v708 = vsel %vm650, %v706, %v707
      %v709 = vrot.slane %v273, 1
      %v710 = vsel %vm650, %v707, %v709
      %v711 = vrot.slane %v274, 1
      %v712 = vrot.slane %v275, 1
      %v713 = vsel %vm650, %v711, %v712
      %v714 = vrot.slane %v276, 1
      %v715 = vsel %vm650, %v712, %v714
      %v716 = vrot.slane %v277, 1
      %v717 = vrot.slane %v278, 1
      %v718 = vsel %vm650, %v716, %v717
      %v719 = vrot.slane %v279, 1
      %v720 = vsel %vm650, %v717, %v719
      %v721 = vrot.slane %v280, 1
      %v722 = vrot.slane %v281, 1
      %v723 = vsel %vm650, %v721, %v722
      %v724 = vrot.slane %v282, 1
      %v725 = vsel %vm650, %v722, %v724
      %s726 = scalar_lea.vmem %s1, 4
      %v727 = vld [vmem:[%s726] sm:$0xf]
      %v728 = vsel %vm295, %v653, 0
      %v730 = vsel %vm295, %v655, 0
      %v732 = vsel %vm295, %v658, 0
      %v734 = vsel %vm295, %v660, 0
      %v736 = vsel %vm295, %v663, 0
      %v738 = vsel %vm295, %v665, 0
      %v740 = vsel %vm295, %v668, 0
      %v742 = vsel %vm295, %v670, 0
      %v744 = vsel %vm295, %v673, 0
      %v746 = vsel %vm295, %v675, 0
      %v748 = vsel %vm295, %v678, 0
      %v750 = vsel %vm295, %v680, 0
      %v752 = vsel %vm295, %v683, 0
      %v754 = vsel %vm295, %v685, 0
      %v756 = vsel %vm295, %v688, 0
      %v758 = vsel %vm295, %v690, 0
      %v760 = vsel %vm295, %v693, 0
      %v762 = vsel %vm295, %v695, 0
      %v764 = vsel %vm295, %v698, 0
      %v766 = vsel %vm295, %v700, 0
      %v768 = vsel %vm295, %v703, 0
      %v770 = vsel %vm295, %v705, 0
      %v772 = vsel %vm295, %v708, 0
      %v774 = vsel %vm295, %v710, 0
      %v776 = vsel %vm295, %v713, 0
      %v778 = vsel %vm295, %v715, 0
      %v780 = vsel %vm295, %v718, 0
      %v782 = vsel %vm295, %v720, 0
      %v784 = vsel %vm295, %v723, 0
      %v786 = vsel %vm295, %v725, 0
      %v789 = vsel %vm386, %v727, 0
      %791 = vmatprep.subr.mxu0 0.0
      %792 = vmatpush1.msra.mxu0 0.0
      %793 = vmatprep.subr.mxu0 0.0
      %794 = vmatpush1.msra.mxu0 0.0
      %795 = vmatprep.subr.mxu0 0.0
      %796 = vmatpush1.msra.mxu0 0.0
      %797 = vmatprep.subr.mxu0 0.0
      %798 = vmatpush1.msra.mxu0 0.0
      %799 = vmatprep.subr.mxu0 0.0
      %800 = vmatpush1.msra.mxu0 0.0
      %801 = vmatprep.subr.mxu0 0.0
      %802 = vmatpush1.msra.mxu0 0.0
      %803 = vmatprep.subr.mxu0 0.0
      %804 = vmatpush1.msra.mxu0 0.0
      %805 = vmatprep.subr.mxu0 0.0
      %806 = vmatpush1.msra.mxu0 0.0
      %807 = vmatprep.subr.mxu0 0.0
      %808 = vmatpush1.msra.mxu0 0.0
      %809 = vmatprep.subr.mxu0 0.0
      %810 = vmatpush1.msra.mxu0 0.0
      %811 = vmatprep.subr.mxu0 0.0
      %812 = vmatpush1.msra.mxu0 0.0
      %813 = vmatprep.subr.mxu0 0.0
      %814 = vmatpush1.msra.mxu0 0.0
      %815 = vmatprep.subr.mxu0 0.0
      %816 = vmatpush1.msra.mxu0 0.0
      %817 = vmatprep.subr.mxu0 0.0
      %818 = vmatpush1.msra.mxu0 0.0
      %819 = vmatprep.subr.mxu0 0.0
      %820 = vmatpush1.msra.mxu0 0.0
      %821 = vmatprep.subr.mxu0 0.0
      %822 = vmatpush1.msra.mxu0 %v789
      %823 = vmatprep.subr.mxu0 0.0
      %824 = vmatpush2.msra.mxu0 0.0
      %825 = vmatprep.subr.mxu0 0.0
      %826 = vmatpush2.msra.mxu0 0.0
      %827 = vmatprep.subr.mxu0 0.0
      %828 = vmatpush2.msra.mxu0 0.0
      %829 = vmatprep.subr.mxu0 0.0
      %830 = vmatpush2.msra.mxu0 0.0
      %831 = vmatprep.subr.mxu0 0.0
      %832 = vmatpush2.msra.mxu0 0.0
      %833 = vmatprep.subr.mxu0 0.0
      %834 = vmatpush2.msra.mxu0 0.0
      %835 = vmatprep.subr.mxu0 0.0
      %836 = vmatpush2.msra.mxu0 0.0
      %837 = vmatprep.subr.mxu0 0.0
      %838 = vmatpush2.msra.mxu0 0.0
      %839 = vmatprep.subr.mxu0 0.0
      %840 = vmatpush2.msra.mxu0 0.0
      %841 = vmatprep.subr.mxu0 0.0
      %842 = vmatpush2.msra.mxu0 0.0
      %843 = vmatprep.subr.mxu0 0.0
      %844 = vmatpush2.msra.mxu0 0.0
      %845 = vmatprep.subr.mxu0 0.0
      %846 = vmatpush2.msra.mxu0 0.0
      %847 = vmatprep.subr.mxu0 0.0
      %848 = vmatpush2.msra.mxu0 0.0
      %849 = vmatprep.subr.mxu0 0.0
      %850 = vmatpush2.msra.mxu0 0.0
      %851 = vmatprep.subr.mxu0 0.0
      %852 = vmatpush2.msra.mxu0 0.0
      %853 = vmatprep.subr.mxu0 0.0
      %854 = vmatpush2.msra.mxu0 0.0
      %855 = vmatprep.mubr.f32.mxu0 0.0
      %856 = vmatmul.mubr.f32.gmra.mxu0 %v728
      %v857 = vpop.f32.mrf.mxu0
      %v858 = vadd.f32 0.0, %v857
      %v859 = vpop.f32.mrf.mxu0
      %860 = vmatprep.mubr.f32.mxu0 0.0
      %861 = vmatmul.mubr.f32.gmra.mxu0 %v730
      %v862 = vpop.f32.mrf.mxu0
      %v863 = vadd.f32 0.0, %v862
      %v864 = vpop.f32.mrf.mxu0
      %865 = vmatprep.mubr.f32.mxu0 0.0
      %866 = vmatmul.mubr.f32.gmra.mxu0 %v732
      %v867 = vpop.f32.mrf.mxu0
      %v868 = vadd.f32 0.0, %v867
      %v869 = vpop.f32.mrf.mxu0
      %870 = vmatprep.mubr.f32.mxu0 0.0
      %871 = vmatmul.mubr.f32.gmra.mxu0 %v734
      %v872 = vpop.f32.mrf.mxu0
      %v873 = vadd.f32 0.0, %v872
      %v874 = vpop.f32.mrf.mxu0
      %875 = vmatprep.mubr.f32.mxu0 0.0
      %876 = vmatmul.mubr.f32.gmra.mxu0 %v736
      %v877 = vpop.f32.mrf.mxu0
      %v878 = vadd.f32 0.0, %v877
      %v879 = vpop.f32.mrf.mxu0
      %880 = vmatprep.mubr.f32.mxu0 0.0
      %881 = vmatmul.mubr.f32.gmra.mxu0 %v738
      %v882 = vpop.f32.mrf.mxu0
      %v883 = vadd.f32 0.0, %v882
      %v884 = vpop.f32.mrf.mxu0
      %885 = vmatprep.mubr.f32.mxu0 0.0
      %886 = vmatmul.mubr.f32.gmra.mxu0 %v740
      %v887 = vpop.f32.mrf.mxu0
      %v888 = vadd.f32 0.0, %v887
      %v889 = vpop.f32.mrf.mxu0
      %890 = vmatprep.mubr.f32.mxu0 0.0
      %891 = vmatmul.mubr.f32.gmra.mxu0 %v742
      %v892 = vpop.f32.mrf.mxu0
      %v893 = vadd.f32 0.0, %v892
      %v894 = vpop.f32.mrf.mxu0
      %895 = vmatprep.mubr.f32.mxu0 0.0
      %896 = vmatmul.mubr.f32.gmra.mxu0 %v744
      %v897 = vpop.f32.mrf.mxu0
      %v898 = vadd.f32 0.0, %v897
      %v899 = vpop.f32.mrf.mxu0
      %900 = vmatprep.mubr.f32.mxu0 0.0
      %901 = vmatmul.mubr.f32.gmra.mxu0 %v746
      %v902 = vpop.f32.mrf.mxu0
      %v903 = vadd.f32 0.0, %v902
      %v904 = vpop.f32.mrf.mxu0
      %905 = vmatprep.mubr.f32.mxu0 0.0
      %906 = vmatmul.mubr.f32.gmra.mxu0 %v748
      %v907 = vpop.f32.mrf.mxu0
      %v908 = vadd.f32 0.0, %v907
      %v909 = vpop.f32.mrf.mxu0
      %910 = vmatprep.mubr.f32.mxu0 0.0
      %911 = vmatmul.mubr.f32.gmra.mxu0 %v750
      %v912 = vpop.f32.mrf.mxu0
      %v913 = vadd.f32 0.0, %v912
      %v914 = vpop.f32.mrf.mxu0
      %915 = vmatprep.mubr.f32.mxu0 0.0
      %916 = vmatmul.mubr.f32.gmra.mxu0 %v752
      %v917 = vpop.f32.mrf.mxu0
      %v918 = vadd.f32 0.0, %v917
      %v919 = vpop.f32.mrf.mxu0
      %920 = vmatprep.mubr.f32.mxu0 0.0
      %921 = vmatmul.mubr.f32.gmra.mxu0 %v754
      %v922 = vpop.f32.mrf.mxu0
      %v923 = vadd.f32 0.0, %v922
      %v924 = vpop.f32.mrf.mxu0
      %925 = vmatprep.mubr.f32.mxu0 0.0
      %926 = vmatmul.mubr.f32.gmra.mxu0 %v756
      %v927 = vpop.f32.mrf.mxu0
      %v928 = vadd.f32 0.0, %v927
      %v929 = vpop.f32.mrf.mxu0
      %930 = vmatprep.mubr.f32.mxu0 0.0
      %931 = vmatmul.mubr.f32.gmra.mxu0 %v758
      %v932 = vpop.f32.mrf.mxu0
      %v933 = vadd.f32 0.0, %v932
      %v934 = vpop.f32.mrf.mxu0
      %935 = vmatprep.mubr.f32.mxu0 0.0
      %936 = vmatmul.mubr.f32.gmra.mxu0 %v760
      %v937 = vpop.f32.mrf.mxu0
      %v938 = vadd.f32 0.0, %v937
      %v939 = vpop.f32.mrf.mxu0
      %940 = vmatprep.mubr.f32.mxu0 0.0
      %941 = vmatmul.mubr.f32.gmra.mxu0 %v762
      %v942 = vpop.f32.mrf.mxu0
      %v943 = vadd.f32 0.0, %v942
      %v944 = vpop.f32.mrf.mxu0
      %945 = vmatprep.mubr.f32.mxu0 0.0
      %946 = vmatmul.mubr.f32.gmra.mxu0 %v764
      %v947 = vpop.f32.mrf.mxu0
      %v948 = vadd.f32 0.0, %v947
      %v949 = vpop.f32.mrf.mxu0
      %950 = vmatprep.mubr.f32.mxu0 0.0
      %951 = vmatmul.mubr.f32.gmra.mxu0 %v766
      %v952 = vpop.f32.mrf.mxu0
      %v953 = vadd.f32 0.0, %v952
      %v954 = vpop.f32.mrf.mxu0
      %955 = vmatprep.mubr.f32.mxu0 0.0
      %956 = vmatmul.mubr.f32.gmra.mxu0 %v768
      %v957 = vpop.f32.mrf.mxu0
      %v958 = vadd.f32 0.0, %v957
      %v959 = vpop.f32.mrf.mxu0
      %960 = vmatprep.mubr.f32.mxu0 0.0
      %961 = vmatmul.mubr.f32.gmra.mxu0 %v770
      %v962 = vpop.f32.mrf.mxu0
      %v963 = vadd.f32 0.0, %v962
      %v964 = vpop.f32.mrf.mxu0
      %965 = vmatprep.mubr.f32.mxu0 0.0
      %966 = vmatmul.mubr.f32.gmra.mxu0 %v772
      %v967 = vpop.f32.mrf.mxu0
      %v968 = vadd.f32 0.0, %v967
      %v969 = vpop.f32.mrf.mxu0
      %970 = vmatprep.mubr.f32.mxu0 0.0
      %971 = vmatmul.mubr.f32.gmra.mxu0 %v774
      %v972 = vpop.f32.mrf.mxu0
      %v973 = vadd.f32 0.0, %v972
      %v974 = vpop.f32.mrf.mxu0
      %975 = vmatprep.mubr.f32.mxu0 0.0
      %976 = vmatmul.mubr.f32.gmra.mxu0 %v776
      %v977 = vpop.f32.mrf.mxu0
      %v978 = vadd.f32 0.0, %v977
      %v979 = vpop.f32.mrf.mxu0
      %980 = vmatprep.mubr.f32.mxu0 0.0
      %981 = vmatmul.mubr.f32.gmra.mxu0 %v778
      %v982 = vpop.f32.mrf.mxu0
      %v983 = vadd.f32 0.0, %v982
      %v984 = vpop.f32.mrf.mxu0
      %985 = vmatprep.mubr.f32.mxu0 0.0
      %986 = vmatmul.mubr.f32.gmra.mxu0 %v780
      %v987 = vpop.f32.mrf.mxu0
      %v988 = vadd.f32 0.0, %v987
      %v989 = vpop.f32.mrf.mxu0
      %990 = vmatprep.mubr.f32.mxu0 0.0
      %991 = vmatmul.mubr.f32.gmra.mxu0 %v782
      %v992 = vpop.f32.mrf.mxu0
      %v993 = vadd.f32 0.0, %v992
      %v994 = vpop.f32.mrf.mxu0
      %995 = vmatprep.mubr.f32.mxu0 0.0
      %996 = vmatmul.mubr.f32.gmra.mxu0 %v784
      %v997 = vpop.f32.mrf.mxu0
      %v998 = vadd.f32 0.0, %v997
      %v999 = vpop.f32.mrf.mxu0
      %1000 = vmatprep.mubr.f32.mxu0 0.0
      %1001 = vmatmul.mubr.f32.gmra.mxu0 %v786
      %v1002 = vpop.f32.mrf.mxu0
      %v1003 = vadd.f32 0.0, %v1002
      %v1004 = vpop.f32.mrf.mxu0
      %1005 = vdwg.mxu0
      %v1006 = vadd.f32 %v605, %v858
      %v1007 = vadd.f32 %v606, %v863
      %v1008 = vadd.f32 %v607, %v868
      %v1009 = vadd.f32 %v608, %v873
      %v1010 = vadd.f32 %v609, %v878
      %v1011 = vadd.f32 %v610, %v883
      %v1012 = vadd.f32 %v611, %v888
      %v1013 = vadd.f32 %v612, %v893
      %v1014 = vadd.f32 %v613, %v898
      %v1015 = vadd.f32 %v614, %v903
      %v1016 = vadd.f32 %v615, %v908
      %v1017 = vadd.f32 %v616, %v913
      %v1018 = vadd.f32 %v617, %v918
      %v1019 = vadd.f32 %v618, %v923
      %v1020 = vadd.f32 %v619, %v928
      %v1021 = vadd.f32 %v620, %v933
      %v1022 = vadd.f32 %v621, %v938
      %v1023 = vadd.f32 %v622, %v943
      %v1024 = vadd.f32 %v623, %v948
      %v1025 = vadd.f32 %v624, %v953
      %v1026 = vadd.f32 %v625, %v958
      %v1027 = vadd.f32 %v626, %v963
      %v1028 = vadd.f32 %v627, %v968
      %v1029 = vadd.f32 %v628, %v973
      %v1030 = vadd.f32 %v629, %v978
      %v1031 = vadd.f32 %v630, %v983
      %v1032 = vadd.f32 %v631, %v988
      %v1033 = vadd.f32 %v632, %v993
      %v1034 = vadd.f32 %v633, %v998
      %v1035 = vadd.f32 %v634, %v1003
      %vm1036 = vcmask 1045504
      %v1037 = vrot.slane %v238, 2
      %v1038 = vrot.slane %v239, 2
      %v1039 = vsel %vm1036, %v1037, %v1038
      %v1040 = vrot.slane %v240, 2
      %v1041 = vsel %vm1036, %v1038, %v1040
      %v1042 = vrot.slane %v241, 2
      %v1043 = vrot.slane %v242, 2
      %v1044 = vsel %vm1036, %v1042, %v1043
      %v1045 = vrot.slane %v243, 2
      %v1046 = vsel %vm1036, %v1043, %v1045
      %v1047 = vrot.slane %v244, 2
      %v1048 = vrot.slane %v245, 2
      %v1049 = vsel %vm1036, %v1047, %v1048
      %v1050 = vrot.slane %v246, 2
      %v1051 = vsel %vm1036, %v1048, %v1050
      %v1052 = vrot.slane %v247, 2
      %v1053 = vrot.slane %v248, 2
      %v1054 = vsel %vm1036, %v1052, %v1053
      %v1055 = vrot.slane %v249, 2
      %v1056 = vsel %vm1036, %v1053, %v1055
      %v1057 = vrot.slane %v250, 2
      %v1058 = vrot.slane %v251, 2
      %v1059 = vsel %vm1036, %v1057, %v1058
      %v1060 = vrot.slane %v252, 2
      %v1061 = vsel %vm1036, %v1058, %v1060
      %v1062 = vrot.slane %v253, 2
      %v1063 = vrot.slane %v254, 2
      %v1064 = vsel %vm1036, %v1062, %v1063
      %v1065 = vrot.slane %v255, 2
      %v1066 = vsel %vm1036, %v1063, %v1065
      %v1067 = vrot.slane %v256, 2
      %v1068 = vrot.slane %v257, 2
      %v1069 = vsel %vm1036, %v1067, %v1068
      %v1070 = vrot.slane %v258, 2
      %v1071 = vsel %vm1036, %v1068, %v1070
      %v1072 = vrot.slane %v259, 2
      %v1073 = vrot.slane %v260, 2
      %v1074 = vsel %vm1036, %v1072, %v1073
      %v1075 = vrot.slane %v261, 2
      %v1076 = vsel %vm1036, %v1073, %v1075
      %v1077 = vrot.slane %v262, 2
      %v1078 = vrot.slane %v263, 2
      %v1079 = vsel %vm1036, %v1077, %v1078
      %v1080 = vrot.slane %v264, 2
      %v1081 = vsel %vm1036, %v1078, %v1080
      %v1082 = vrot.slane %v265, 2
      %v1083 = vrot.slane %v266, 2
      %v1084 = vsel %vm1036, %v1082, %v1083
      %v1085 = vrot.slane %v267, 2
      %v1086 = vsel %vm1036, %v1083, %v1085
      %v1087 = vrot.slane %v268, 2
      %v1088 = vrot.slane %v269, 2
      %v1089 = vsel %vm1036, %v1087, %v1088
      %v1090 = vrot.slane %v270, 2
      %v1091 = vsel %vm1036, %v1088, %v1090
      %v1092 = vrot.slane %v271, 2
      %v1093 = vrot.slane %v272, 2
      %v1094 = vsel %vm1036, %v1092, %v1093
      %v1095 = vrot.slane %v273, 2
      %v1096 = vsel %vm1036, %v1093, %v1095
      %v1097 = vrot.slane %v274, 2
      %v1098 = vrot.slane %v275, 2
      %v1099 = vsel %vm1036, %v1097, %v1098
      %v1100 = vrot.slane %v276, 2
      %v1101 = vsel %vm1036, %v1098, %v1100
      %v1102 = vrot.slane %v277, 2
      %v1103 = vrot.slane %v278, 2
      %v1104 = vsel %vm1036, %v1102, %v1103
      %v1105 = vrot.slane %v279, 2
      %v1106 = vsel %vm1036, %v1103, %v1105
      %v1107 = vrot.slane %v280, 2
      %v1108 = vrot.slane %v281, 2
      %v1109 = vsel %vm1036, %v1107, %v1108
      %v1110 = vrot.slane %v282, 2
      %v1111 = vsel %vm1036, %v1108, %v1110
      %s1112 = scalar_lea.vmem %s1, 8
      %v1113 = vld [vmem:[%s1112] sm:$0xf]
      %v1114 = vsel %vm295, %v1039, 0
      %v1116 = vsel %vm295, %v1041, 0
      %v1118 = vsel %vm295, %v1044, 0
      %v1120 = vsel %vm295, %v1046, 0
      %v1122 = vsel %vm295, %v1049, 0
      %v1124 = vsel %vm295, %v1051, 0
      %v1126 = vsel %vm295, %v1054, 0
      %v1128 = vsel %vm295, %v1056, 0
      %v1130 = vsel %vm295, %v1059, 0
      %v1132 = vsel %vm295, %v1061, 0
      %v1134 = vsel %vm295, %v1064, 0
      %v1136 = vsel %vm295, %v1066, 0
      %v1138 = vsel %vm295, %v1069, 0
      %v1140 = vsel %vm295, %v1071, 0
      %v1142 = vsel %vm295, %v1074, 0
      %v1144 = vsel %vm295, %v1076, 0
      %v1146 = vsel %vm295, %v1079, 0
      %v1148 = vsel %vm295, %v1081, 0
      %v1150 = vsel %vm295, %v1084, 0
      %v1152 = vsel %vm295, %v1086, 0
      %v1154 = vsel %vm295, %v1089, 0
      %v1156 = vsel %vm295, %v1091, 0
      %v1158 = vsel %vm295, %v1094, 0
      %v1160 = vsel %vm295, %v1096, 0
      %v1162 = vsel %vm295, %v1099, 0
      %v1164 = vsel %vm295, %v1101, 0
      %v1166 = vsel %vm295, %v1104, 0
      %v1168 = vsel %vm295, %v1106, 0
      %v1170 = vsel %vm295, %v1109, 0
      %v1172 = vsel %vm295, %v1111, 0
      %v1175 = vsel %vm386, %v1113, 0
      %1177 = vmatprep.subr.mxu0 0.0
      %1178 = vmatpush1.msra.mxu0 0.0
      %1179 = vmatprep.subr.mxu0 0.0
      %1180 = vmatpush1.msra.mxu0 0.0
      %1181 = vmatprep.subr.mxu0 0.0
      %1182 = vmatpush1.msra.mxu0 0.0
      %1183 = vmatprep.subr.mxu0 0.0
      %1184 = vmatpush1.msra.mxu0 0.0
      %1185 = vmatprep.subr.mxu0 0.0
      %1186 = vmatpush1.msra.mxu0 0.0
      %1187 = vmatprep.subr.mxu0 0.0
      %1188 = vmatpush1.msra.mxu0 0.0
      %1189 = vmatprep.subr.mxu0 0.0
      %1190 = vmatpush1.msra.mxu0 0.0
      %1191 = vmatprep.subr.mxu0 0.0
      %1192 = vmatpush1.msra.mxu0 0.0
      %1193 = vmatprep.subr.mxu0 0.0
      %1194 = vmatpush1.msra.mxu0 0.0
      %1195 = vmatprep.subr.mxu0 0.0
      %1196 = vmatpush1.msra.mxu0 0.0
      %1197 = vmatprep.subr.mxu0 0.0
      %1198 = vmatpush1.msra.mxu0 0.0
      %1199 = vmatprep.subr.mxu0 0.0
      %1200 = vmatpush1.msra.mxu0 0.0
      %1201 = vmatprep.subr.mxu0 0.0
      %1202 = vmatpush1.msra.mxu0 0.0
      %1203 = vmatprep.subr.mxu0 0.0
      %1204 = vmatpush1.msra.mxu0 0.0
      %1205 = vmatprep.subr.mxu0 0.0
      %1206 = vmatpush1.msra.mxu0 0.0
      %1207 = vmatprep.subr.mxu0 0.0
      %1208 = vmatpush1.msra.mxu0 %v1175
      %1209 = vmatprep.subr.mxu0 0.0
      %1210 = vmatpush2.msra.mxu0 0.0
      %1211 = vmatprep.subr.mxu0 0.0
      %1212 = vmatpush2.msra.mxu0 0.0
      %1213 = vmatprep.subr.mxu0 0.0
      %1214 = vmatpush2.msra.mxu0 0.0
      %1215 = vmatprep.subr.mxu0 0.0
      %1216 = vmatpush2.msra.mxu0 0.0
      %1217 = vmatprep.subr.mxu0 0.0
      %1218 = vmatpush2.msra.mxu0 0.0
      %1219 = vmatprep.subr.mxu0 0.0
      %1220 = vmatpush2.msra.mxu0 0.0
      %1221 = vmatprep.subr.mxu0 0.0
      %1222 = vmatpush2.msra.mxu0 0.0
      %1223 = vmatprep.subr.mxu0 0.0
      %1224 = vmatpush2.msra.mxu0 0.0
      %1225 = vmatprep.subr.mxu0 0.0
      %1226 = vmatpush2.msra.mxu0 0.0
      %1227 = vmatprep.subr.mxu0 0.0
      %1228 = vmatpush2.msra.mxu0 0.0
      %1229 = vmatprep.subr.mxu0 0.0
      %1230 = vmatpush2.msra.mxu0 0.0
      %1231 = vmatprep.subr.mxu0 0.0
      %1232 = vmatpush2.msra.mxu0 0.0
      %1233 = vmatprep.subr.mxu0 0.0
      %1234 = vmatpush2.msra.mxu0 0.0
      %1235 = vmatprep.subr.mxu0 0.0
      %1236 = vmatpush2.msra.mxu0 0.0
      %1237 = vmatprep.subr.mxu0 0.0
      %1238 = vmatpush2.msra.mxu0 0.0
      %1239 = vmatprep.subr.mxu0 0.0
      %1240 = vmatpush2.msra.mxu0 0.0
      %1241 = vmatprep.mubr.f32.mxu0 0.0
      %1242 = vmatmul.mubr.f32.gmra.mxu0 %v1114
      %v1243 = vpop.f32.mrf.mxu0
      %v1244 = vadd.f32 0.0, %v1243
      %v1245 = vpop.f32.mrf.mxu0
      %1246 = vmatprep.mubr.f32.mxu0 0.0
      %1247 = vmatmul.mubr.f32.gmra.mxu0 %v1116
      %v1248 = vpop.f32.mrf.mxu0
      %v1249 = vadd.f32 0.0, %v1248
      %v1250 = vpop.f32.mrf.mxu0
      %1251 = vmatprep.mubr.f32.mxu0 0.0
      %1252 = vmatmul.mubr.f32.gmra.mxu0 %v1118
      %v1253 = vpop.f32.mrf.mxu0
      %v1254 = vadd.f32 0.0, %v1253
      %v1255 = vpop.f32.mrf.mxu0
      %1256 = vmatprep.mubr.f32.mxu0 0.0
      %1257 = vmatmul.mubr.f32.gmra.mxu0 %v1120
      %v1258 = vpop.f32.mrf.mxu0
      %v1259 = vadd.f32 0.0, %v1258
      %v1260 = vpop.f32.mrf.mxu0
      %1261 = vmatprep.mubr.f32.mxu0 0.0
      %1262 = vmatmul.mubr.f32.gmra.mxu0 %v1122
      %v1263 = vpop.f32.mrf.mxu0
      %v1264 = vadd.f32 0.0, %v1263
      %v1265 = vpop.f32.mrf.mxu0
      %1266 = vmatprep.mubr.f32.mxu0 0.0
      %1267 = vmatmul.mubr.f32.gmra.mxu0 %v1124
      %v1268 = vpop.f32.mrf.mxu0
      %v1269 = vadd.f32 0.0, %v1268
      %v1270 = vpop.f32.mrf.mxu0
      %1271 = vmatprep.mubr.f32.mxu0 0.0
      %1272 = vmatmul.mubr.f32.gmra.mxu0 %v1126
      %v1273 = vpop.f32.mrf.mxu0
      %v1274 = vadd.f32 0.0, %v1273
      %v1275 = vpop.f32.mrf.mxu0
      %1276 = vmatprep.mubr.f32.mxu0 0.0
      %1277 = vmatmul.mubr.f32.gmra.mxu0 %v1128
      %v1278 = vpop.f32.mrf.mxu0
      %v1279 = vadd.f32 0.0, %v1278
      %v1280 = vpop.f32.mrf.mxu0
      %1281 = vmatprep.mubr.f32.mxu0 0.0
      %1282 = vmatmul.mubr.f32.gmra.mxu0 %v1130
      %v1283 = vpop.f32.mrf.mxu0
      %v1284 = vadd.f32 0.0, %v1283
      %v1285 = vpop.f32.mrf.mxu0
      %1286 = vmatprep.mubr.f32.mxu0 0.0
      %1287 = vmatmul.mubr.f32.gmra.mxu0 %v1132
      %v1288 = vpop.f32.mrf.mxu0
      %v1289 = vadd.f32 0.0, %v1288
      %v1290 = vpop.f32.mrf.mxu0
      %1291 = vmatprep.mubr.f32.mxu0 0.0
      %1292 = vmatmul.mubr.f32.gmra.mxu0 %v1134
      %v1293 = vpop.f32.mrf.mxu0
      %v1294 = vadd.f32 0.0, %v1293
      %v1295 = vpop.f32.mrf.mxu0
      %1296 = vmatprep.mubr.f32.mxu0 0.0
      %1297 = vmatmul.mubr.f32.gmra.mxu0 %v1136
      %v1298 = vpop.f32.mrf.mxu0
      %v1299 = vadd.f32 0.0, %v1298
      %v1300 = vpop.f32.mrf.mxu0
      %1301 = vmatprep.mubr.f32.mxu0 0.0
      %1302 = vmatmul.mubr.f32.gmra.mxu0 %v1138
      %v1303 = vpop.f32.mrf.mxu0
      %v1304 = vadd.f32 0.0, %v1303
      %v1305 = vpop.f32.mrf.mxu0
      %1306 = vmatprep.mubr.f32.mxu0 0.0
      %1307 = vmatmul.mubr.f32.gmra.mxu0 %v1140
      %v1308 = vpop.f32.mrf.mxu0
      %v1309 = vadd.f32 0.0, %v1308
      %v1310 = vpop.f32.mrf.mxu0
      %1311 = vmatprep.mubr.f32.mxu0 0.0
      %1312 = vmatmul.mubr.f32.gmra.mxu0 %v1142
      %v1313 = vpop.f32.mrf.mxu0
      %v1314 = vadd.f32 0.0, %v1313
      %v1315 = vpop.f32.mrf.mxu0
      %1316 = vmatprep.mubr.f32.mxu0 0.0
      %1317 = vmatmul.mubr.f32.gmra.mxu0 %v1144
      %v1318 = vpop.f32.mrf.mxu0
      %v1319 = vadd.f32 0.0, %v1318
      %v1320 = vpop.f32.mrf.mxu0
      %1321 = vmatprep.mubr.f32.mxu0 0.0
      %1322 = vmatmul.mubr.f32.gmra.mxu0 %v1146
      %v1323 = vpop.f32.mrf.mxu0
      %v1324 = vadd.f32 0.0, %v1323
      %v1325 = vpop.f32.mrf.mxu0
      %1326 = vmatprep.mubr.f32.mxu0 0.0
      %1327 = vmatmul.mubr.f32.gmra.mxu0 %v1148
      %v1328 = vpop.f32.mrf.mxu0
      %v1329 = vadd.f32 0.0, %v1328
      %v1330 = vpop.f32.mrf.mxu0
      %1331 = vmatprep.mubr.f32.mxu0 0.0
      %1332 = vmatmul.mubr.f32.gmra.mxu0 %v1150
      %v1333 = vpop.f32.mrf.mxu0
      %v1334 = vadd.f32 0.0, %v1333
      %v1335 = vpop.f32.mrf.mxu0
      %1336 = vmatprep.mubr.f32.mxu0 0.0
      %1337 = vmatmul.mubr.f32.gmra.mxu0 %v1152
      %v1338 = vpop.f32.mrf.mxu0
      %v1339 = vadd.f32 0.0, %v1338
      %v1340 = vpop.f32.mrf.mxu0
      %1341 = vmatprep.mubr.f32.mxu0 0.0
      %1342 = vmatmul.mubr.f32.gmra.mxu0 %v1154
      %v1343 = vpop.f32.mrf.mxu0
      %v1344 = vadd.f32 0.0, %v1343
      %v1345 = vpop.f32.mrf.mxu0
      %1346 = vmatprep.mubr.f32.mxu0 0.0
      %1347 = vmatmul.mubr.f32.gmra.mxu0 %v1156
      %v1348 = vpop.f32.mrf.mxu0
      %v1349 = vadd.f32 0.0, %v1348
      %v1350 = vpop.f32.mrf.mxu0
      %1351 = vmatprep.mubr.f32.mxu0 0.0
      %1352 = vmatmul.mubr.f32.gmra.mxu0 %v1158
      %v1353 = vpop.f32.mrf.mxu0
      %v1354 = vadd.f32 0.0, %v1353
      %v1355 = vpop.f32.mrf.mxu0
      %1356 = vmatprep.mubr.f32.mxu0 0.0
      %1357 = vmatmul.mubr.f32.gmra.mxu0 %v1160
      %v1358 = vpop.f32.mrf.mxu0
      %v1359 = vadd.f32 0.0, %v1358
      %v1360 = vpop.f32.mrf.mxu0
      %1361 = vmatprep.mubr.f32.mxu0 0.0
      %1362 = vmatmul.mubr.f32.gmra.mxu0 %v1162
      %v1363 = vpop.f32.mrf.mxu0
      %v1364 = vadd.f32 0.0, %v1363
      %v1365 = vpop.f32.mrf.mxu0
      %1366 = vmatprep.mubr.f32.mxu0 0.0
      %1367 = vmatmul.mubr.f32.gmra.mxu0 %v1164
      %v1368 = vpop.f32.mrf.mxu0
      %v1369 = vadd.f32 0.0, %v1368
      %v1370 = vpop.f32.mrf.mxu0
      %1371 = vmatprep.mubr.f32.mxu0 0.0
      %1372 = vmatmul.mubr.f32.gmra.mxu0 %v1166
      %v1373 = vpop.f32.mrf.mxu0
      %v1374 = vadd.f32 0.0, %v1373
      %v1375 = vpop.f32.mrf.mxu0
      %1376 = vmatprep.mubr.f32.mxu0 0.0
      %1377 = vmatmul.mubr.f32.gmra.mxu0 %v1168
      %v1378 = vpop.f32.mrf.mxu0
      %v1379 = vadd.f32 0.0, %v1378
      %v1380 = vpop.f32.mrf.mxu0
      %1381 = vmatprep.mubr.f32.mxu0 0.0
      %1382 = vmatmul.mubr.f32.gmra.mxu0 %v1170
      %v1383 = vpop.f32.mrf.mxu0
      %v1384 = vadd.f32 0.0, %v1383
      %v1385 = vpop.f32.mrf.mxu0
      %1386 = vmatprep.mubr.f32.mxu0 0.0
      %1387 = vmatmul.mubr.f32.gmra.mxu0 %v1172
      %v1388 = vpop.f32.mrf.mxu0
      %v1389 = vadd.f32 0.0, %v1388
      %v1390 = vpop.f32.mrf.mxu0
      %1391 = vdwg.mxu0
      %v1392 = vadd.f32 %v1006, %v1244
      %v1393 = vadd.f32 %v1007, %v1249
      %v1394 = vadd.f32 %v1008, %v1254
      %v1395 = vadd.f32 %v1009, %v1259
      %v1396 = vadd.f32 %v1010, %v1264
      %v1397 = vadd.f32 %v1011, %v1269
      %v1398 = vadd.f32 %v1012, %v1274
      %v1399 = vadd.f32 %v1013, %v1279
      %v1400 = vadd.f32 %v1014, %v1284
      %v1401 = vadd.f32 %v1015, %v1289
      %v1402 = vadd.f32 %v1016, %v1294
      %v1403 = vadd.f32 %v1017, %v1299
      %v1404 = vadd.f32 %v1018, %v1304
      %v1405 = vadd.f32 %v1019, %v1309
      %v1406 = vadd.f32 %v1020, %v1314
      %v1407 = vadd.f32 %v1021, %v1319
      %v1408 = vadd.f32 %v1022, %v1324
      %v1409 = vadd.f32 %v1023, %v1329
      %v1410 = vadd.f32 %v1024, %v1334
      %v1411 = vadd.f32 %v1025, %v1339
      %v1412 = vadd.f32 %v1026, %v1344
      %v1413 = vadd.f32 %v1027, %v1349
      %v1414 = vadd.f32 %v1028, %v1354
      %v1415 = vadd.f32 %v1029, %v1359
      %v1416 = vadd.f32 %v1030, %v1364
      %v1417 = vadd.f32 %v1031, %v1369
      %v1418 = vadd.f32 %v1032, %v1374
      %v1419 = vadd.f32 %v1033, %v1379
      %v1420 = vadd.f32 %v1034, %v1384
      %v1421 = vadd.f32 %v1035, %v1389
      %s1422 = scalar_lea.vmem %s1, 12
      %v1423 = vld [vmem:[%s1422] sm:$0xf]
      %v1425 = vsel %vm295, %v283, 0
      %v1428 = vsel %vm295, %v284, 0
      %v1431 = vsel %vm386, %v1423, 0
      %1433 = vmatprep.subr.mxu0 0.0
      %1434 = vmatpush1.msra.mxu0 0.0
      %1435 = vmatprep.subr.mxu0 0.0
      %1436 = vmatpush1.msra.mxu0 0.0
      %1437 = vmatprep.subr.mxu0 0.0
      %1438 = vmatpush1.msra.mxu0 0.0
      %1439 = vmatprep.subr.mxu0 0.0
      %1440 = vmatpush1.msra.mxu0 0.0
      %1441 = vmatprep.subr.mxu0 0.0
      %1442 = vmatpush1.msra.mxu0 0.0
      %1443 = vmatprep.subr.mxu0 0.0
      %1444 = vmatpush1.msra.mxu0 0.0
      %1445 = vmatprep.subr.mxu0 0.0
      %1446 = vmatpush1.msra.mxu0 0.0
      %1447 = vmatprep.subr.mxu0 0.0
      %1448 = vmatpush1.msra.mxu0 0.0
      %1449 = vmatprep.subr.mxu0 0.0
      %1450 = vmatpush1.msra.mxu0 0.0
      %1451 = vmatprep.subr.mxu0 0.0
      %1452 = vmatpush1.msra.mxu0 0.0
      %1453 = vmatprep.subr.mxu0 0.0
      %1454 = vmatpush1.msra.mxu0 0.0
      %1455 = vmatprep.subr.mxu0 0.0
      %1456 = vmatpush1.msra.mxu0 0.0
      %1457 = vmatprep.subr.mxu0 0.0
      %1458 = vmatpush1.msra.mxu0 0.0
      %1459 = vmatprep.subr.mxu0 0.0
      %1460 = vmatpush1.msra.mxu0 0.0
      %1461 = vmatprep.subr.mxu0 0.0
      %1462 = vmatpush1.msra.mxu0 0.0
      %1463 = vmatprep.subr.mxu0 0.0
      %1464 = vmatpush1.msra.mxu0 %v1431
      %1465 = vmatprep.subr.mxu0 0.0
      %1466 = vmatpush2.msra.mxu0 0.0
      %1467 = vmatprep.subr.mxu0 0.0
      %1468 = vmatpush2.msra.mxu0 0.0
      %1469 = vmatprep.subr.mxu0 0.0
      %1470 = vmatpush2.msra.mxu0 0.0
      %1471 = vmatprep.subr.mxu0 0.0
      %1472 = vmatpush2.msra.mxu0 0.0
      %1473 = vmatprep.subr.mxu0 0.0
      %1474 = vmatpush2.msra.mxu0 0.0
      %1475 = vmatprep.subr.mxu0 0.0
      %1476 = vmatpush2.msra.mxu0 0.0
      %1477 = vmatprep.subr.mxu0 0.0
      %1478 = vmatpush2.msra.mxu0 0.0
      %1479 = vmatprep.subr.mxu0 0.0
      %1480 = vmatpush2.msra.mxu0 0.0
      %1481 = vmatprep.subr.mxu0 0.0
      %1482 = vmatpush2.msra.mxu0 0.0
      %1483 = vmatprep.subr.mxu0 0.0
      %1484 = vmatpush2.msra.mxu0 0.0
      %1485 = vmatprep.subr.mxu0 0.0
      %1486 = vmatpush2.msra.mxu0 0.0
      %1487 = vmatprep.subr.mxu0 0.0
      %1488 = vmatpush2.msra.mxu0 0.0
      %1489 = vmatprep.subr.mxu0 0.0
      %1490 = vmatpush2.msra.mxu0 0.0
      %1491 = vmatprep.subr.mxu0 0.0
      %1492 = vmatpush2.msra.mxu0 0.0
      %1493 = vmatprep.subr.mxu0 0.0
      %1494 = vmatpush2.msra.mxu0 0.0
      %1495 = vmatprep.subr.mxu0 0.0
      %1496 = vmatpush2.msra.mxu0 0.0
      %1497 = vmatprep.mubr.f32.mxu0 0.0
      %1498 = vmatmul.mubr.f32.gmra.mxu0 %v303
      %v1499 = vpop.f32.mrf.mxu0
      %v1500 = vadd.f32 0.0, %v1499
      %v1501 = vpop.f32.mrf.mxu0
      %1502 = vmatprep.mubr.f32.mxu0 0.0
      %1503 = vmatmul.mubr.f32.gmra.mxu0 %v306
      %v1504 = vpop.f32.mrf.mxu0
      %v1505 = vadd.f32 0.0, %v1504
      %v1506 = vpop.f32.mrf.mxu0
      %1507 = vmatprep.mubr.f32.mxu0 0.0
      %1508 = vmatmul.mubr.f32.gmra.mxu0 %v309
      %v1509 = vpop.f32.mrf.mxu0
      %v1510 = vadd.f32 0.0, %v1509
      %v1511 = vpop.f32.mrf.mxu0
      %1512 = vmatprep.mubr.f32.mxu0 0.0
      %1513 = vmatmul.mubr.f32.gmra.mxu0 %v312
      %v1514 = vpop.f32.mrf.mxu0
      %v1515 = vadd.f32 0.0, %v1514
      %v1516 = vpop.f32.mrf.mxu0
      %1517 = vmatprep.mubr.f32.mxu0 0.0
      %1518 = vmatmul.mubr.f32.gmra.mxu0 %v315
      %v1519 = vpop.f32.mrf.mxu0
      %v1520 = vadd.f32 0.0, %v1519
      %v1521 = vpop.f32.mrf.mxu0
      %1522 = vmatprep.mubr.f32.mxu0 0.0
      %1523 = vmatmul.mubr.f32.gmra.mxu0 %v318
      %v1524 = vpop.f32.mrf.mxu0
      %v1525 = vadd.f32 0.0, %v1524
      %v1526 = vpop.f32.mrf.mxu0
      %1527 = vmatprep.mubr.f32.mxu0 0.0
      %1528 = vmatmul.mubr.f32.gmra.mxu0 %v321
      %v1529 = vpop.f32.mrf.mxu0
      %v1530 = vadd.f32 0.0, %v1529
      %v1531 = vpop.f32.mrf.mxu0
      %1532 = vmatprep.mubr.f32.mxu0 0.0
      %1533 = vmatmul.mubr.f32.gmra.mxu0 %v324
      %v1534 = vpop.f32.mrf.mxu0
      %v1535 = vadd.f32 0.0, %v1534
      %v1536 = vpop.f32.mrf.mxu0
      %1537 = vmatprep.mubr.f32.mxu0 0.0
      %1538 = vmatmul.mubr.f32.gmra.mxu0 %v327
      %v1539 = vpop.f32.mrf.mxu0
      %v1540 = vadd.f32 0.0, %v1539
      %v1541 = vpop.f32.mrf.mxu0
      %1542 = vmatprep.mubr.f32.mxu0 0.0
      %1543 = vmatmul.mubr.f32.gmra.mxu0 %v330
      %v1544 = vpop.f32.mrf.mxu0
      %v1545 = vadd.f32 0.0, %v1544
      %v1546 = vpop.f32.mrf.mxu0
      %1547 = vmatprep.mubr.f32.mxu0 0.0
      %1548 = vmatmul.mubr.f32.gmra.mxu0 %v333
      %v1549 = vpop.f32.mrf.mxu0
      %v1550 = vadd.f32 0.0, %v1549
      %v1551 = vpop.f32.mrf.mxu0
      %1552 = vmatprep.mubr.f32.mxu0 0.0
      %1553 = vmatmul.mubr.f32.gmra.mxu0 %v336
      %v1554 = vpop.f32.mrf.mxu0
      %v1555 = vadd.f32 0.0, %v1554
      %v1556 = vpop.f32.mrf.mxu0
      %1557 = vmatprep.mubr.f32.mxu0 0.0
      %1558 = vmatmul.mubr.f32.gmra.mxu0 %v339
      %v1559 = vpop.f32.mrf.mxu0
      %v1560 = vadd.f32 0.0, %v1559
      %v1561 = vpop.f32.mrf.mxu0
      %1562 = vmatprep.mubr.f32.mxu0 0.0
      %1563 = vmatmul.mubr.f32.gmra.mxu0 %v342
      %v1564 = vpop.f32.mrf.mxu0
      %v1565 = vadd.f32 0.0, %v1564
      %v1566 = vpop.f32.mrf.mxu0
      %1567 = vmatprep.mubr.f32.mxu0 0.0
      %1568 = vmatmul.mubr.f32.gmra.mxu0 %v345
      %v1569 = vpop.f32.mrf.mxu0
      %v1570 = vadd.f32 0.0, %v1569
      %v1571 = vpop.f32.mrf.mxu0
      %1572 = vmatprep.mubr.f32.mxu0 0.0
      %1573 = vmatmul.mubr.f32.gmra.mxu0 %v348
      %v1574 = vpop.f32.mrf.mxu0
      %v1575 = vadd.f32 0.0, %v1574
      %v1576 = vpop.f32.mrf.mxu0
      %1577 = vmatprep.mubr.f32.mxu0 0.0
      %1578 = vmatmul.mubr.f32.gmra.mxu0 %v351
      %v1579 = vpop.f32.mrf.mxu0
      %v1580 = vadd.f32 0.0, %v1579
      %v1581 = vpop.f32.mrf.mxu0
      %1582 = vmatprep.mubr.f32.mxu0 0.0
      %1583 = vmatmul.mubr.f32.gmra.mxu0 %v354
      %v1584 = vpop.f32.mrf.mxu0
      %v1585 = vadd.f32 0.0, %v1584
      %v1586 = vpop.f32.mrf.mxu0
      %1587 = vmatprep.mubr.f32.mxu0 0.0
      %1588 = vmatmul.mubr.f32.gmra.mxu0 %v357
      %v1589 = vpop.f32.mrf.mxu0
      %v1590 = vadd.f32 0.0, %v1589
      %v1591 = vpop.f32.mrf.mxu0
      %1592 = vmatprep.mubr.f32.mxu0 0.0
      %1593 = vmatmul.mubr.f32.gmra.mxu0 %v360
      %v1594 = vpop.f32.mrf.mxu0
      %v1595 = vadd.f32 0.0, %v1594
      %v1596 = vpop.f32.mrf.mxu0
      %1597 = vmatprep.mubr.f32.mxu0 0.0
      %1598 = vmatmul.mubr.f32.gmra.mxu0 %v363
      %v1599 = vpop.f32.mrf.mxu0
      %v1600 = vadd.f32 0.0, %v1599
      %v1601 = vpop.f32.mrf.mxu0
      %1602 = vmatprep.mubr.f32.mxu0 0.0
      %1603 = vmatmul.mubr.f32.gmra.mxu0 %v366
      %v1604 = vpop.f32.mrf.mxu0
      %v1605 = vadd.f32 0.0, %v1604
      %v1606 = vpop.f32.mrf.mxu0
      %1607 = vmatprep.mubr.f32.mxu0 0.0
      %1608 = vmatmul.mubr.f32.gmra.mxu0 %v369
      %v1609 = vpop.f32.mrf.mxu0
      %v1610 = vadd.f32 0.0, %v1609
      %v1611 = vpop.f32.mrf.mxu0
      %1612 = vmatprep.mubr.f32.mxu0 0.0
      %1613 = vmatmul.mubr.f32.gmra.mxu0 %v372
      %v1614 = vpop.f32.mrf.mxu0
      %v1615 = vadd.f32 0.0, %v1614
      %v1616 = vpop.f32.mrf.mxu0
      %1617 = vmatprep.mubr.f32.mxu0 0.0
      %1618 = vmatmul.mubr.f32.gmra.mxu0 %v375
      %v1619 = vpop.f32.mrf.mxu0
      %v1620 = vadd.f32 0.0, %v1619
      %v1621 = vpop.f32.mrf.mxu0
      %1622 = vmatprep.mubr.f32.mxu0 0.0
      %1623 = vmatmul.mubr.f32.gmra.mxu0 %v378
      %v1624 = vpop.f32.mrf.mxu0
      %v1625 = vadd.f32 0.0, %v1624
      %v1626 = vpop.f32.mrf.mxu0
      %1627 = vmatprep.mubr.f32.mxu0 0.0
      %1628 = vmatmul.mubr.f32.gmra.mxu0 %v381
      %v1629 = vpop.f32.mrf.mxu0
      %v1630 = vadd.f32 0.0, %v1629
      %v1631 = vpop.f32.mrf.mxu0
      %1632 = vmatprep.mubr.f32.mxu0 0.0
      %1633 = vmatmul.mubr.f32.gmra.mxu0 %v384
      %v1634 = vpop.f32.mrf.mxu0
      %v1635 = vadd.f32 0.0, %v1634
      %v1636 = vpop.f32.mrf.mxu0
      %1637 = vmatprep.mubr.f32.mxu0 0.0
      %1638 = vmatmul.mubr.f32.gmra.mxu0 %v1425
      %v1639 = vpop.f32.mrf.mxu0
      %v1640 = vadd.f32 0.0, %v1639
      %v1641 = vpop.f32.mrf.mxu0
      %1642 = vmatprep.mubr.f32.mxu0 0.0
      %1643 = vmatmul.mubr.f32.gmra.mxu0 %v1428
      %v1644 = vpop.f32.mrf.mxu0
      %v1645 = vadd.f32 0.0, %v1644
      %v1646 = vpop.f32.mrf.mxu0
      %1647 = vdwg.mxu0
      %v1648 = vadd.f32 %v1392, %v1500
      %v1649 = vadd.f32 %v1393, %v1505
      %v1650 = vadd.f32 %v1394, %v1510
      %v1651 = vadd.f32 %v1395, %v1515
      %v1652 = vadd.f32 %v1396, %v1520
      %v1653 = vadd.f32 %v1397, %v1525
      %v1654 = vadd.f32 %v1398, %v1530
      %v1655 = vadd.f32 %v1399, %v1535
      %v1656 = vadd.f32 %v1400, %v1540
      %v1657 = vadd.f32 %v1401, %v1545
      %v1658 = vadd.f32 %v1402, %v1550
      %v1659 = vadd.f32 %v1403, %v1555
      %v1660 = vadd.f32 %v1404, %v1560
      %v1661 = vadd.f32 %v1405, %v1565
      %v1662 = vadd.f32 %v1406, %v1570
      %v1663 = vadd.f32 %v1407, %v1575
      %v1664 = vadd.f32 %v1408, %v1580
      %v1665 = vadd.f32 %v1409, %v1585
      %v1666 = vadd.f32 %v1410, %v1590
      %v1667 = vadd.f32 %v1411, %v1595
      %v1668 = vadd.f32 %v1412, %v1600
      %v1669 = vadd.f32 %v1413, %v1605
      %v1670 = vadd.f32 %v1414, %v1610
      %v1671 = vadd.f32 %v1415, %v1615
      %v1672 = vadd.f32 %v1416, %v1620
      %v1673 = vadd.f32 %v1417, %v1625
      %v1674 = vadd.f32 %v1418, %v1630
      %v1675 = vadd.f32 %v1419, %v1635
      %v1676 = vadd.f32 %v1420, %v1640
      %v1677 = vadd.f32 %v1421, %v1645
      %v1679 = vrot.slane %v283, 1
      %v1680 = vrot.slane %v284, 1
      %v1681 = vsel %vm650, %v1679, %v1680
      %v1682 = vrot.slane %v285, 1
      %v1683 = vsel %vm650, %v1680, %v1682
      %s1684 = scalar_lea.vmem %s1, 16
      %v1685 = vld [vmem:[%s1684] sm:$0xf]
      %v1686 = vsel %vm295, %v1681, 0
      %v1688 = vsel %vm295, %v1683, 0
      %v1691 = vsel %vm386, %v1685, 0
      %1693 = vmatprep.subr.mxu0 0.0
      %1694 = vmatpush1.msra.mxu0 0.0
      %1695 = vmatprep.subr.mxu0 0.0
      %1696 = vmatpush1.msra.mxu0 0.0
      %1697 = vmatprep.subr.mxu0 0.0
      %1698 = vmatpush1.msra.mxu0 0.0
      %1699 = vmatprep.subr.mxu0 0.0
      %1700 = vmatpush1.msra.mxu0 0.0
      %1701 = vmatprep.subr.mxu0 0.0
      %1702 = vmatpush1.msra.mxu0 0.0
      %1703 = vmatprep.subr.mxu0 0.0
      %1704 = vmatpush1.msra.mxu0 0.0
      %1705 = vmatprep.subr.mxu0 0.0
      %1706 = vmatpush1.msra.mxu0 0.0
      %1707 = vmatprep.subr.mxu0 0.0
      %1708 = vmatpush1.msra.mxu0 0.0
      %1709 = vmatprep.subr.mxu0 0.0
      %1710 = vmatpush1.msra.mxu0 0.0
      %1711 = vmatprep.subr.mxu0 0.0
      %1712 = vmatpush1.msra.mxu0 0.0
      %1713 = vmatprep.subr.mxu0 0.0
      %1714 = vmatpush1.msra.mxu0 0.0
      %1715 = vmatprep.subr.mxu0 0.0
      %1716 = vmatpush1.msra.mxu0 0.0
      %1717 = vmatprep.subr.mxu0 0.0
      %1718 = vmatpush1.msra.mxu0 0.0
      %1719 = vmatprep.subr.mxu0 0.0
      %1720 = vmatpush1.msra.mxu0 0.0
      %1721 = vmatprep.subr.mxu0 0.0
      %1722 = vmatpush1.msra.mxu0 0.0
      %1723 = vmatprep.subr.mxu0 0.0
      %1724 = vmatpush1.msra.mxu0 %v1691
      %1725 = vmatprep.subr.mxu0 0.0
      %1726 = vmatpush2.msra.mxu0 0.0
      %1727 = vmatprep.subr.mxu0 0.0
      %1728 = vmatpush2.msra.mxu0 0.0
      %1729 = vmatprep.subr.mxu0 0.0
      %1730 = vmatpush2.msra.mxu0 0.0
      %1731 = vmatprep.subr.mxu0 0.0
      %1732 = vmatpush2.msra.mxu0 0.0
      %1733 = vmatprep.subr.mxu0 0.0
      %1734 = vmatpush2.msra.mxu0 0.0
      %1735 = vmatprep.subr.mxu0 0.0
      %1736 = vmatpush2.msra.mxu0 0.0
      %1737 = vmatprep.subr.mxu0 0.0
      %1738 = vmatpush2.msra.mxu0 0.0
      %1739 = vmatprep.subr.mxu0 0.0
      %1740 = vmatpush2.msra.mxu0 0.0
      %1741 = vmatprep.subr.mxu0 0.0
      %1742 = vmatpush2.msra.mxu0 0.0
      %1743 = vmatprep.subr.mxu0 0.0
      %1744 = vmatpush2.msra.mxu0 0.0
      %1745 = vmatprep.subr.mxu0 0.0
      %1746 = vmatpush2.msra.mxu0 0.0
      %1747 = vmatprep.subr.mxu0 0.0
      %1748 = vmatpush2.msra.mxu0 0.0
      %1749 = vmatprep.subr.mxu0 0.0
      %1750 = vmatpush2.msra.mxu0 0.0
      %1751 = vmatprep.subr.mxu0 0.0
      %1752 = vmatpush2.msra.mxu0 0.0
      %1753 = vmatprep.subr.mxu0 0.0
      %1754 = vmatpush2.msra.mxu0 0.0
      %1755 = vmatprep.subr.mxu0 0.0
      %1756 = vmatpush2.msra.mxu0 0.0
      %1757 = vmatprep.mubr.f32.mxu0 0.0
      %1758 = vmatmul.mubr.f32.gmra.mxu0 %v732
      %v1759 = vpop.f32.mrf.mxu0
      %v1760 = vadd.f32 0.0, %v1759
      %v1761 = vpop.f32.mrf.mxu0
      %1762 = vmatprep.mubr.f32.mxu0 0.0
      %1763 = vmatmul.mubr.f32.gmra.mxu0 %v734
      %v1764 = vpop.f32.mrf.mxu0
      %v1765 = vadd.f32 0.0, %v1764
      %v1766 = vpop.f32.mrf.mxu0
      %1767 = vmatprep.mubr.f32.mxu0 0.0
      %1768 = vmatmul.mubr.f32.gmra.mxu0 %v736
      %v1769 = vpop.f32.mrf.mxu0
      %v1770 = vadd.f32 0.0, %v1769
      %v1771 = vpop.f32.mrf.mxu0
      %1772 = vmatprep.mubr.f32.mxu0 0.0
      %1773 = vmatmul.mubr.f32.gmra.mxu0 %v738
      %v1774 = vpop.f32.mrf.mxu0
      %v1775 = vadd.f32 0.0, %v1774
      %v1776 = vpop.f32.mrf.mxu0
      %1777 = vmatprep.mubr.f32.mxu0 0.0
      %1778 = vmatmul.mubr.f32.gmra.mxu0 %v740
      %v1779 = vpop.f32.mrf.mxu0
      %v1780 = vadd.f32 0.0, %v1779
      %v1781 = vpop.f32.mrf.mxu0
      %1782 = vmatprep.mubr.f32.mxu0 0.0
      %1783 = vmatmul.mubr.f32.gmra.mxu0 %v742
      %v1784 = vpop.f32.mrf.mxu0
      %v1785 = vadd.f32 0.0, %v1784
      %v1786 = vpop.f32.mrf.mxu0
      %1787 = vmatprep.mubr.f32.mxu0 0.0
      %1788 = vmatmul.mubr.f32.gmra.mxu0 %v744
      %v1789 = vpop.f32.mrf.mxu0
      %v1790 = vadd.f32 0.0, %v1789
      %v1791 = vpop.f32.mrf.mxu0
      %1792 = vmatprep.mubr.f32.mxu0 0.0
      %1793 = vmatmul.mubr.f32.gmra.mxu0 %v746
      %v1794 = vpop.f32.mrf.mxu0
      %v1795 = vadd.f32 0.0, %v1794
      %v1796 = vpop.f32.mrf.mxu0
      %1797 = vmatprep.mubr.f32.mxu0 0.0
      %1798 = vmatmul.mubr.f32.gmra.mxu0 %v748
      %v1799 = vpop.f32.mrf.mxu0
      %v1800 = vadd.f32 0.0, %v1799
      %v1801 = vpop.f32.mrf.mxu0
      %1802 = vmatprep.mubr.f32.mxu0 0.0
      %1803 = vmatmul.mubr.f32.gmra.mxu0 %v750
      %v1804 = vpop.f32.mrf.mxu0
      %v1805 = vadd.f32 0.0, %v1804
      %v1806 = vpop.f32.mrf.mxu0
      %1807 = vmatprep.mubr.f32.mxu0 0.0
      %1808 = vmatmul.mubr.f32.gmra.mxu0 %v752
      %v1809 = vpop.f32.mrf.mxu0
      %v1810 = vadd.f32 0.0, %v1809
      %v1811 = vpop.f32.mrf.mxu0
      %1812 = vmatprep.mubr.f32.mxu0 0.0
      %1813 = vmatmul.mubr.f32.gmra.mxu0 %v754
      %v1814 = vpop.f32.mrf.mxu0
      %v1815 = vadd.f32 0.0, %v1814
      %v1816 = vpop.f32.mrf.mxu0
      %1817 = vmatprep.mubr.f32.mxu0 0.0
      %1818 = vmatmul.mubr.f32.gmra.mxu0 %v756
      %v1819 = vpop.f32.mrf.mxu0
      %v1820 = vadd.f32 0.0, %v1819
      %v1821 = vpop.f32.mrf.mxu0
      %1822 = vmatprep.mubr.f32.mxu0 0.0
      %1823 = vmatmul.mubr.f32.gmra.mxu0 %v758
      %v1824 = vpop.f32.mrf.mxu0
      %v1825 = vadd.f32 0.0, %v1824
      %v1826 = vpop.f32.mrf.mxu0
      %1827 = vmatprep.mubr.f32.mxu0 0.0
      %1828 = vmatmul.mubr.f32.gmra.mxu0 %v760
      %v1829 = vpop.f32.mrf.mxu0
      %v1830 = vadd.f32 0.0, %v1829
      %v1831 = vpop.f32.mrf.mxu0
      %1832 = vmatprep.mubr.f32.mxu0 0.0
      %1833 = vmatmul.mubr.f32.gmra.mxu0 %v762
      %v1834 = vpop.f32.mrf.mxu0
      %v1835 = vadd.f32 0.0, %v1834
      %v1836 = vpop.f32.mrf.mxu0
      %1837 = vmatprep.mubr.f32.mxu0 0.0
      %1838 = vmatmul.mubr.f32.gmra.mxu0 %v764
      %v1839 = vpop.f32.mrf.mxu0
      %v1840 = vadd.f32 0.0, %v1839
      %v1841 = vpop.f32.mrf.mxu0
      %1842 = vmatprep.mubr.f32.mxu0 0.0
      %1843 = vmatmul.mubr.f32.gmra.mxu0 %v766
      %v1844 = vpop.f32.mrf.mxu0
      %v1845 = vadd.f32 0.0, %v1844
      %v1846 = vpop.f32.mrf.mxu0
      %1847 = vmatprep.mubr.f32.mxu0 0.0
      %1848 = vmatmul.mubr.f32.gmra.mxu0 %v768
      %v1849 = vpop.f32.mrf.mxu0
      %v1850 = vadd.f32 0.0, %v1849
      %v1851 = vpop.f32.mrf.mxu0
      %1852 = vmatprep.mubr.f32.mxu0 0.0
      %1853 = vmatmul.mubr.f32.gmra.mxu0 %v770
      %v1854 = vpop.f32.mrf.mxu0
      %v1855 = vadd.f32 0.0, %v1854
      %v1856 = vpop.f32.mrf.mxu0
      %1857 = vmatprep.mubr.f32.mxu0 0.0
      %1858 = vmatmul.mubr.f32.gmra.mxu0 %v772
      %v1859 = vpop.f32.mrf.mxu0
      %v1860 = vadd.f32 0.0, %v1859
      %v1861 = vpop.f32.mrf.mxu0
      %1862 = vmatprep.mubr.f32.mxu0 0.0
      %1863 = vmatmul.mubr.f32.gmra.mxu0 %v774
      %v1864 = vpop.f32.mrf.mxu0
      %v1865 = vadd.f32 0.0, %v1864
      %v1866 = vpop.f32.mrf.mxu0
      %1867 = vmatprep.mubr.f32.mxu0 0.0
      %1868 = vmatmul.mubr.f32.gmra.mxu0 %v776
      %v1869 = vpop.f32.mrf.mxu0
      %v1870 = vadd.f32 0.0, %v1869
      %v1871 = vpop.f32.mrf.mxu0
      %1872 = vmatprep.mubr.f32.mxu0 0.0
      %1873 = vmatmul.mubr.f32.gmra.mxu0 %v778
      %v1874 = vpop.f32.mrf.mxu0
      %v1875 = vadd.f32 0.0, %v1874
      %v1876 = vpop.f32.mrf.mxu0
      %1877 = vmatprep.mubr.f32.mxu0 0.0
      %1878 = vmatmul.mubr.f32.gmra.mxu0 %v780
      %v1879 = vpop.f32.mrf.mxu0
      %v1880 = vadd.f32 0.0, %v1879
      %v1881 = vpop.f32.mrf.mxu0
      %1882 = vmatprep.mubr.f32.mxu0 0.0
      %1883 = vmatmul.mubr.f32.gmra.mxu0 %v782
      %v1884 = vpop.f32.mrf.mxu0
      %v1885 = vadd.f32 0.0, %v1884
      %v1886 = vpop.f32.mrf.mxu0
      %1887 = vmatprep.mubr.f32.mxu0 0.0
      %1888 = vmatmul.mubr.f32.gmra.mxu0 %v784
      %v1889 = vpop.f32.mrf.mxu0
      %v1890 = vadd.f32 0.0, %v1889
      %v1891 = vpop.f32.mrf.mxu0
      %1892 = vmatprep.mubr.f32.mxu0 0.0
      %1893 = vmatmul.mubr.f32.gmra.mxu0 %v786
      %v1894 = vpop.f32.mrf.mxu0
      %v1895 = vadd.f32 0.0, %v1894
      %v1896 = vpop.f32.mrf.mxu0
      %1897 = vmatprep.mubr.f32.mxu0 0.0
      %1898 = vmatmul.mubr.f32.gmra.mxu0 %v1686
      %v1899 = vpop.f32.mrf.mxu0
      %v1900 = vadd.f32 0.0, %v1899
      %v1901 = vpop.f32.mrf.mxu0
      %1902 = vmatprep.mubr.f32.mxu0 0.0
      %1903 = vmatmul.mubr.f32.gmra.mxu0 %v1688
      %v1904 = vpop.f32.mrf.mxu0
      %v1905 = vadd.f32 0.0, %v1904
      %v1906 = vpop.f32.mrf.mxu0
      %1907 = vdwg.mxu0
      %v1908 = vadd.f32 %v1648, %v1760
      %v1909 = vadd.f32 %v1649, %v1765
      %v1910 = vadd.f32 %v1650, %v1770
      %v1911 = vadd.f32 %v1651, %v1775
      %v1912 = vadd.f32 %v1652, %v1780
      %v1913 = vadd.f32 %v1653, %v1785
      %v1914 = vadd.f32 %v1654, %v1790
      %v1915 = vadd.f32 %v1655, %v1795
      %v1916 = vadd.f32 %v1656, %v1800
      %v1917 = vadd.f32 %v1657, %v1805
      %v1918 = vadd.f32 %v1658, %v1810
      %v1919 = vadd.f32 %v1659, %v1815
      %v1920 = vadd.f32 %v1660, %v1820
      %v1921 = vadd.f32 %v1661, %v1825
      %v1922 = vadd.f32 %v1662, %v1830
      %v1923 = vadd.f32 %v1663, %v1835
      %v1924 = vadd.f32 %v1664, %v1840
      %v1925 = vadd.f32 %v1665, %v1845
      %v1926 = vadd.f32 %v1666, %v1850
      %v1927 = vadd.f32 %v1667, %v1855
      %v1928 = vadd.f32 %v1668, %v1860
      %v1929 = vadd.f32 %v1669, %v1865
      %v1930 = vadd.f32 %v1670, %v1870
      %v1931 = vadd.f32 %v1671, %v1875
      %v1932 = vadd.f32 %v1672, %v1880
      %v1933 = vadd.f32 %v1673, %v1885
      %v1934 = vadd.f32 %v1674, %v1890
      %v1935 = vadd.f32 %v1675, %v1895
      %v1936 = vadd.f32 %v1676, %v1900
      %v1937 = vadd.f32 %v1677, %v1905
      %v1938 = vrot.slane %v283, 2
      %v1939 = vrot.slane %v284, 2
      %v1940 = vsel %vm1036, %v1938, %v1939
      %v1941 = vrot.slane %v285, 2
      %v1942 = vsel %vm1036, %v1939, %v1941
      %s1943 = scalar_lea.vmem %s1, 20
      %v1944 = vld [vmem:[%s1943] sm:$0xf]
      %v1945 = vsel %vm295, %v1940, 0
      %v1947 = vsel %vm295, %v1942, 0
      %v1950 = vsel %vm386, %v1944, 0
      %1952 = vmatprep.subr.mxu0 0.0
      %1953 = vmatpush1.msra.mxu0 0.0
      %1954 = vmatprep.subr.mxu0 0.0
      %1955 = vmatpush1.msra.mxu0 0.0
      %1956 = vmatprep.subr.mxu0 0.0
      %1957 = vmatpush1.msra.mxu0 0.0
      %1958 = vmatprep.subr.mxu0 0.0
      %1959 = vmatpush1.msra.mxu0 0.0
      %1960 = vmatprep.subr.mxu0 0.0
      %1961 = vmatpush1.msra.mxu0 0.0
      %1962 = vmatprep.subr.mxu0 0.0
      %1963 = vmatpush1.msra.mxu0 0.0
      %1964 = vmatprep.subr.mxu0 0.0
      %1965 = vmatpush1.msra.mxu0 0.0
      %1966 = vmatprep.subr.mxu0 0.0
      %1967 = vmatpush1.msra.mxu0 0.0
      %1968 = vmatprep.subr.mxu0 0.0
      %1969 = vmatpush1.msra.mxu0 0.0
      %1970 = vmatprep.subr.mxu0 0.0
      %1971 = vmatpush1.msra.mxu0 0.0
      %1972 = vmatprep.subr.mxu0 0.0
      %1973 = vmatpush1.msra.mxu0 0.0
      %1974 = vmatprep.subr.mxu0 0.0
      %1975 = vmatpush1.msra.mxu0 0.0
      %1976 = vmatprep.subr.mxu0 0.0
      %1977 = vmatpush1.msra.mxu0 0.0
      %1978 = vmatprep.subr.mxu0 0.0
      %1979 = vmatpush1.msra.mxu0 0.0
      %1980 = vmatprep.subr.mxu0 0.0
      %1981 = vmatpush1.msra.mxu0 0.0
      %1982 = vmatprep.subr.mxu0 0.0
      %1983 = vmatpush1.msra.mxu0 %v1950
      %1984 = vmatprep.subr.mxu0 0.0
      %1985 = vmatpush2.msra.mxu0 0.0
      %1986 = vmatprep.subr.mxu0 0.0
      %1987 = vmatpush2.msra.mxu0 0.0
      %1988 = vmatprep.subr.mxu0 0.0
      %1989 = vmatpush2.msra.mxu0 0.0
      %1990 = vmatprep.subr.mxu0 0.0
      %1991 = vmatpush2.msra.mxu0 0.0
      %1992 = vmatprep.subr.mxu0 0.0
      %1993 = vmatpush2.msra.mxu0 0.0
      %1994 = vmatprep.subr.mxu0 0.0
      %1995 = vmatpush2.msra.mxu0 0.0
      %1996 = vmatprep.subr.mxu0 0.0
      %1997 = vmatpush2.msra.mxu0 0.0
      %1998 = vmatprep.subr.mxu0 0.0
      %1999 = vmatpush2.msra.mxu0 0.0
      %2000 = vmatprep.subr.mxu0 0.0
      %2001 = vmatpush2.msra.mxu0 0.0
      %2002 = vmatprep.subr.mxu0 0.0
      %2003 = vmatpush2.msra.mxu0 0.0
      %2004 = vmatprep.subr.mxu0 0.0
      %2005 = vmatpush2.msra.mxu0 0.0
      %2006 = vmatprep.subr.mxu0 0.0
      %2007 = vmatpush2.msra.mxu0 0.0
      %2008 = vmatprep.subr.mxu0 0.0
      %2009 = vmatpush2.msra.mxu0 0.0
      %2010 = vmatprep.subr.mxu0 0.0
      %2011 = vmatpush2.msra.mxu0 0.0
      %2012 = vmatprep.subr.mxu0 0.0
      %2013 = vmatpush2.msra.mxu0 0.0
      %2014 = vmatprep.subr.mxu0 0.0
      %2015 = vmatpush2.msra.mxu0 0.0
      %2016 = vmatprep.mubr.f32.mxu0 0.0
      %2017 = vmatmul.mubr.f32.gmra.mxu0 %v1118
      %v2018 = vpop.f32.mrf.mxu0
      %v2019 = vadd.f32 0.0, %v2018
      %v2020 = vpop.f32.mrf.mxu0
      %2021 = vmatprep.mubr.f32.mxu0 0.0
      %2022 = vmatmul.mubr.f32.gmra.mxu0 %v1120
      %v2023 = vpop.f32.mrf.mxu0
      %v2024 = vadd.f32 0.0, %v2023
      %v2025 = vpop.f32.mrf.mxu0
      %2026 = vmatprep.mubr.f32.mxu0 0.0
      %2027 = vmatmul.mubr.f32.gmra.mxu0 %v1122
      %v2028 = vpop.f32.mrf.mxu0
      %v2029 = vadd.f32 0.0, %v2028
      %v2030 = vpop.f32.mrf.mxu0
      %2031 = vmatprep.mubr.f32.mxu0 0.0
      %2032 = vmatmul.mubr.f32.gmra.mxu0 %v1124
      %v2033 = vpop.f32.mrf.mxu0
      %v2034 = vadd.f32 0.0, %v2033
      %v2035 = vpop.f32.mrf.mxu0
      %2036 = vmatprep.mubr.f32.mxu0 0.0
      %2037 = vmatmul.mubr.f32.gmra.mxu0 %v1126
      %v2038 = vpop.f32.mrf.mxu0
      %v2039 = vadd.f32 0.0, %v2038
      %v2040 = vpop.f32.mrf.mxu0
      %2041 = vmatprep.mubr.f32.mxu0 0.0
      %2042 = vmatmul.mubr.f32.gmra.mxu0 %v1128
      %v2043 = vpop.f32.mrf.mxu0
      %v2044 = vadd.f32 0.0, %v2043
      %v2045 = vpop.f32.mrf.mxu0
      %2046 = vmatprep.mubr.f32.mxu0 0.0
      %2047 = vmatmul.mubr.f32.gmra.mxu0 %v1130
      %v2048 = vpop.f32.mrf.mxu0
      %v2049 = vadd.f32 0.0, %v2048
      %v2050 = vpop.f32.mrf.mxu0
      %2051 = vmatprep.mubr.f32.mxu0 0.0
      %2052 = vmatmul.mubr.f32.gmra.mxu0 %v1132
      %v2053 = vpop.f32.mrf.mxu0
      %v2054 = vadd.f32 0.0, %v2053
      %v2055 = vpop.f32.mrf.mxu0
      %2056 = vmatprep.mubr.f32.mxu0 0.0
      %2057 = vmatmul.mubr.f32.gmra.mxu0 %v1134
      %v2058 = vpop.f32.mrf.mxu0
      %v2059 = vadd.f32 0.0, %v2058
      %v2060 = vpop.f32.mrf.mxu0
      %2061 = vmatprep.mubr.f32.mxu0 0.0
      %2062 = vmatmul.mubr.f32.gmra.mxu0 %v1136
      %v2063 = vpop.f32.mrf.mxu0
      %v2064 = vadd.f32 0.0, %v2063
      %v2065 = vpop.f32.mrf.mxu0
      %2066 = vmatprep.mubr.f32.mxu0 0.0
      %2067 = vmatmul.mubr.f32.gmra.mxu0 %v1138
      %v2068 = vpop.f32.mrf.mxu0
      %v2069 = vadd.f32 0.0, %v2068
      %v2070 = vpop.f32.mrf.mxu0
      %2071 = vmatprep.mubr.f32.mxu0 0.0
      %2072 = vmatmul.mubr.f32.gmra.mxu0 %v1140
      %v2073 = vpop.f32.mrf.mxu0
      %v2074 = vadd.f32 0.0, %v2073
      %v2075 = vpop.f32.mrf.mxu0
      %2076 = vmatprep.mubr.f32.mxu0 0.0
      %2077 = vmatmul.mubr.f32.gmra.mxu0 %v1142
      %v2078 = vpop.f32.mrf.mxu0
      %v2079 = vadd.f32 0.0, %v2078
      %v2080 = vpop.f32.mrf.mxu0
      %2081 = vmatprep.mubr.f32.mxu0 0.0
      %2082 = vmatmul.mubr.f32.gmra.mxu0 %v1144
      %v2083 = vpop.f32.mrf.mxu0
      %v2084 = vadd.f32 0.0, %v2083
      %v2085 = vpop.f32.mrf.mxu0
      %2086 = vmatprep.mubr.f32.mxu0 0.0
      %2087 = vmatmul.mubr.f32.gmra.mxu0 %v1146
      %v2088 = vpop.f32.mrf.mxu0
      %v2089 = vadd.f32 0.0, %v2088
      %v2090 = vpop.f32.mrf.mxu0
      %2091 = vmatprep.mubr.f32.mxu0 0.0
      %2092 = vmatmul.mubr.f32.gmra.mxu0 %v1148
      %v2093 = vpop.f32.mrf.mxu0
      %v2094 = vadd.f32 0.0, %v2093
      %v2095 = vpop.f32.mrf.mxu0
      %2096 = vmatprep.mubr.f32.mxu0 0.0
      %2097 = vmatmul.mubr.f32.gmra.mxu0 %v1150
      %v2098 = vpop.f32.mrf.mxu0
      %v2099 = vadd.f32 0.0, %v2098
      %v2100 = vpop.f32.mrf.mxu0
      %2101 = vmatprep.mubr.f32.mxu0 0.0
      %2102 = vmatmul.mubr.f32.gmra.mxu0 %v1152
      %v2103 = vpop.f32.mrf.mxu0
      %v2104 = vadd.f32 0.0, %v2103
      %v2105 = vpop.f32.mrf.mxu0
      %2106 = vmatprep.mubr.f32.mxu0 0.0
      %2107 = vmatmul.mubr.f32.gmra.mxu0 %v1154
      %v2108 = vpop.f32.mrf.mxu0
      %v2109 = vadd.f32 0.0, %v2108
      %v2110 = vpop.f32.mrf.mxu0
      %2111 = vmatprep.mubr.f32.mxu0 0.0
      %2112 = vmatmul.mubr.f32.gmra.mxu0 %v1156
      %v2113 = vpop.f32.mrf.mxu0
      %v2114 = vadd.f32 0.0, %v2113
      %v2115 = vpop.f32.mrf.mxu0
      %2116 = vmatprep.mubr.f32.mxu0 0.0
      %2117 = vmatmul.mubr.f32.gmra.mxu0 %v1158
      %v2118 = vpop.f32.mrf.mxu0
      %v2119 = vadd.f32 0.0, %v2118
      %v2120 = vpop.f32.mrf.mxu0
      %2121 = vmatprep.mubr.f32.mxu0 0.0
      %2122 = vmatmul.mubr.f32.gmra.mxu0 %v1160
      %v2123 = vpop.f32.mrf.mxu0
      %v2124 = vadd.f32 0.0, %v2123
      %v2125 = vpop.f32.mrf.mxu0
      %2126 = vmatprep.mubr.f32.mxu0 0.0
      %2127 = vmatmul.mubr.f32.gmra.mxu0 %v1162
      %v2128 = vpop.f32.mrf.mxu0
      %v2129 = vadd.f32 0.0, %v2128
      %v2130 = vpop.f32.mrf.mxu0
      %2131 = vmatprep.mubr.f32.mxu0 0.0
      %2132 = vmatmul.mubr.f32.gmra.mxu0 %v1164
      %v2133 = vpop.f32.mrf.mxu0
      %v2134 = vadd.f32 0.0, %v2133
      %v2135 = vpop.f32.mrf.mxu0
      %2136 = vmatprep.mubr.f32.mxu0 0.0
      %2137 = vmatmul.mubr.f32.gmra.mxu0 %v1166
      %v2138 = vpop.f32.mrf.mxu0
      %v2139 = vadd.f32 0.0, %v2138
      %v2140 = vpop.f32.mrf.mxu0
      %2141 = vmatprep.mubr.f32.mxu0 0.0
      %2142 = vmatmul.mubr.f32.gmra.mxu0 %v1168
      %v2143 = vpop.f32.mrf.mxu0
      %v2144 = vadd.f32 0.0, %v2143
      %v2145 = vpop.f32.mrf.mxu0
      %2146 = vmatprep.mubr.f32.mxu0 0.0
      %2147 = vmatmul.mubr.f32.gmra.mxu0 %v1170
      %v2148 = vpop.f32.mrf.mxu0
      %v2149 = vadd.f32 0.0, %v2148
      %v2150 = vpop.f32.mrf.mxu0
      %2151 = vmatprep.mubr.f32.mxu0 0.0
      %2152 = vmatmul.mubr.f32.gmra.mxu0 %v1172
      %v2153 = vpop.f32.mrf.mxu0
      %v2154 = vadd.f32 0.0, %v2153
      %v2155 = vpop.f32.mrf.mxu0
      %2156 = vmatprep.mubr.f32.mxu0 0.0
      %2157 = vmatmul.mubr.f32.gmra.mxu0 %v1945
      %v2158 = vpop.f32.mrf.mxu0
      %v2159 = vadd.f32 0.0, %v2158
      %v2160 = vpop.f32.mrf.mxu0
      %2161 = vmatprep.mubr.f32.mxu0 0.0
      %2162 = vmatmul.mubr.f32.gmra.mxu0 %v1947
      %v2163 = vpop.f32.mrf.mxu0
      %v2164 = vadd.f32 0.0, %v2163
      %v2165 = vpop.f32.mrf.mxu0
      %2166 = vdwg.mxu0
      %v2167 = vadd.f32 %v1908, %v2019
      %v2168 = vadd.f32 %v1909, %v2024
      %v2169 = vadd.f32 %v1910, %v2029
      %v2170 = vadd.f32 %v1911, %v2034
      %v2171 = vadd.f32 %v1912, %v2039
      %v2172 = vadd.f32 %v1913, %v2044
      %v2173 = vadd.f32 %v1914, %v2049
      %v2174 = vadd.f32 %v1915, %v2054
      %v2175 = vadd.f32 %v1916, %v2059
      %v2176 = vadd.f32 %v1917, %v2064
      %v2177 = vadd.f32 %v1918, %v2069
      %v2178 = vadd.f32 %v1919, %v2074
      %v2179 = vadd.f32 %v1920, %v2079
      %v2180 = vadd.f32 %v1921, %v2084
      %v2181 = vadd.f32 %v1922, %v2089
      %v2182 = vadd.f32 %v1923, %v2094
      %v2183 = vadd.f32 %v1924, %v2099
      %v2184 = vadd.f32 %v1925, %v2104
      %v2185 = vadd.f32 %v1926, %v2109
      %v2186 = vadd.f32 %v1927, %v2114
      %v2187 = vadd.f32 %v1928, %v2119
      %v2188 = vadd.f32 %v1929, %v2124
      %v2189 = vadd.f32 %v1930, %v2129
      %v2190 = vadd.f32 %v1931, %v2134
      %v2191 = vadd.f32 %v1932, %v2139
      %v2192 = vadd.f32 %v1933, %v2144
      %v2193 = vadd.f32 %v1934, %v2149
      %v2194 = vadd.f32 %v1935, %v2154
      %v2195 = vadd.f32 %v1936, %v2159
      %v2196 = vadd.f32 %v1937, %v2164
      %s2197 = scalar_lea.vmem %s1, 24
      %v2198 = vld [vmem:[%s2197] sm:$0xf]
      %v2200 = vsel %vm295, %v286, 0
      %v2203 = vsel %vm295, %v287, 0
      %v2206 = vsel %vm386, %v2198, 0
      %2208 = vmatprep.subr.mxu0 0.0
      %2209 = vmatpush1.msra.mxu0 0.0
      %2210 = vmatprep.subr.mxu0 0.0
      %2211 = vmatpush1.msra.mxu0 0.0
      %2212 = vmatprep.subr.mxu0 0.0
      %2213 = vmatpush1.msra.mxu0 0.0
      %2214 = vmatprep.subr.mxu0 0.0
      %2215 = vmatpush1.msra.mxu0 0.0
      %2216 = vmatprep.subr.mxu0 0.0
      %2217 = vmatpush1.msra.mxu0 0.0
      %2218 = vmatprep.subr.mxu0 0.0
      %2219 = vmatpush1.msra.mxu0 0.0
      %2220 = vmatprep.subr.mxu0 0.0
      %2221 = vmatpush1.msra.mxu0 0.0
      %2222 = vmatprep.subr.mxu0 0.0
      %2223 = vmatpush1.msra.mxu0 0.0
      %2224 = vmatprep.subr.mxu0 0.0
      %2225 = vmatpush1.msra.mxu0 0.0
      %2226 = vmatprep.subr.mxu0 0.0
      %2227 = vmatpush1.msra.mxu0 0.0
      %2228 = vmatprep.subr.mxu0 0.0
      %2229 = vmatpush1.msra.mxu0 0.0
      %2230 = vmatprep.subr.mxu0 0.0
      %2231 = vmatpush1.msra.mxu0 0.0
      %2232 = vmatprep.subr.mxu0 0.0
      %2233 = vmatpush1.msra.mxu0 0.0
      %2234 = vmatprep.subr.mxu0 0.0
      %2235 = vmatpush1.msra.mxu0 0.0
      %2236 = vmatprep.subr.mxu0 0.0
      %2237 = vmatpush1.msra.mxu0 0.0
      %2238 = vmatprep.subr.mxu0 0.0
      %2239 = vmatpush1.msra.mxu0 %v2206
      %2240 = vmatprep.subr.mxu0 0.0
      %2241 = vmatpush2.msra.mxu0 0.0
      %2242 = vmatprep.subr.mxu0 0.0
      %2243 = vmatpush2.msra.mxu0 0.0
      %2244 = vmatprep.subr.mxu0 0.0
      %2245 = vmatpush2.msra.mxu0 0.0
      %2246 = vmatprep.subr.mxu0 0.0
      %2247 = vmatpush2.msra.mxu0 0.0
      %2248 = vmatprep.subr.mxu0 0.0
      %2249 = vmatpush2.msra.mxu0 0.0
      %2250 = vmatprep.subr.mxu0 0.0
      %2251 = vmatpush2.msra.mxu0 0.0
      %2252 = vmatprep.subr.mxu0 0.0
      %2253 = vmatpush2.msra.mxu0 0.0
      %2254 = vmatprep.subr.mxu0 0.0
      %2255 = vmatpush2.msra.mxu0 0.0
      %2256 = vmatprep.subr.mxu0 0.0
      %2257 = vmatpush2.msra.mxu0 0.0
      %2258 = vmatprep.subr.mxu0 0.0
      %2259 = vmatpush2.msra.mxu0 0.0
      %2260 = vmatprep.subr.mxu0 0.0
      %2261 = vmatpush2.msra.mxu0 0.0
      %2262 = vmatprep.subr.mxu0 0.0
      %2263 = vmatpush2.msra.mxu0 0.0
      %2264 = vmatprep.subr.mxu0 0.0
      %2265 = vmatpush2.msra.mxu0 0.0
      %2266 = vmatprep.subr.mxu0 0.0
      %2267 = vmatpush2.msra.mxu0 0.0
      %2268 = vmatprep.subr.mxu0 0.0
      %2269 = vmatpush2.msra.mxu0 0.0
      %2270 = vmatprep.subr.mxu0 0.0
      %2271 = vmatpush2.msra.mxu0 0.0
      %2272 = vmatprep.mubr.f32.mxu0 0.0
      %2273 = vmatmul.mubr.f32.gmra.mxu0 %v309
      %v2274 = vpop.f32.mrf.mxu0
      %v2275 = vadd.f32 0.0, %v2274
      %v2276 = vpop.f32.mrf.mxu0
      %2277 = vmatprep.mubr.f32.mxu0 0.0
      %2278 = vmatmul.mubr.f32.gmra.mxu0 %v312
      %v2279 = vpop.f32.mrf.mxu0
      %v2280 = vadd.f32 0.0, %v2279
      %v2281 = vpop.f32.mrf.mxu0
      %2282 = vmatprep.mubr.f32.mxu0 0.0
      %2283 = vmatmul.mubr.f32.gmra.mxu0 %v315
      %v2284 = vpop.f32.mrf.mxu0
      %v2285 = vadd.f32 0.0, %v2284
      %v2286 = vpop.f32.mrf.mxu0
      %2287 = vmatprep.mubr.f32.mxu0 0.0
      %2288 = vmatmul.mubr.f32.gmra.mxu0 %v318
      %v2289 = vpop.f32.mrf.mxu0
      %v2290 = vadd.f32 0.0, %v2289
      %v2291 = vpop.f32.mrf.mxu0
      %2292 = vmatprep.mubr.f32.mxu0 0.0
      %2293 = vmatmul.mubr.f32.gmra.mxu0 %v321
      %v2294 = vpop.f32.mrf.mxu0
      %v2295 = vadd.f32 0.0, %v2294
      %v2296 = vpop.f32.mrf.mxu0
      %2297 = vmatprep.mubr.f32.mxu0 0.0
      %2298 = vmatmul.mubr.f32.gmra.mxu0 %v324
      %v2299 = vpop.f32.mrf.mxu0
      %v2300 = vadd.f32 0.0, %v2299
      %v2301 = vpop.f32.mrf.mxu0
      %2302 = vmatprep.mubr.f32.mxu0 0.0
      %2303 = vmatmul.mubr.f32.gmra.mxu0 %v327
      %v2304 = vpop.f32.mrf.mxu0
      %v2305 = vadd.f32 0.0, %v2304
      %v2306 = vpop.f32.mrf.mxu0
      %2307 = vmatprep.mubr.f32.mxu0 0.0
      %2308 = vmatmul.mubr.f32.gmra.mxu0 %v330
      %v2309 = vpop.f32.mrf.mxu0
      %v2310 = vadd.f32 0.0, %v2309
      %v2311 = vpop.f32.mrf.mxu0
      %2312 = vmatprep.mubr.f32.mxu0 0.0
      %2313 = vmatmul.mubr.f32.gmra.mxu0 %v333
      %v2314 = vpop.f32.mrf.mxu0
      %v2315 = vadd.f32 0.0, %v2314
      %v2316 = vpop.f32.mrf.mxu0
      %2317 = vmatprep.mubr.f32.mxu0 0.0
      %2318 = vmatmul.mubr.f32.gmra.mxu0 %v336
      %v2319 = vpop.f32.mrf.mxu0
      %v2320 = vadd.f32 0.0, %v2319
      %v2321 = vpop.f32.mrf.mxu0
      %2322 = vmatprep.mubr.f32.mxu0 0.0
      %2323 = vmatmul.mubr.f32.gmra.mxu0 %v339
      %v2324 = vpop.f32.mrf.mxu0
      %v2325 = vadd.f32 0.0, %v2324
      %v2326 = vpop.f32.mrf.mxu0
      %2327 = vmatprep.mubr.f32.mxu0 0.0
      %2328 = vmatmul.mubr.f32.gmra.mxu0 %v342
      %v2329 = vpop.f32.mrf.mxu0
      %v2330 = vadd.f32 0.0, %v2329
      %v2331 = vpop.f32.mrf.mxu0
      %2332 = vmatprep.mubr.f32.mxu0 0.0
      %2333 = vmatmul.mubr.f32.gmra.mxu0 %v345
      %v2334 = vpop.f32.mrf.mxu0
      %v2335 = vadd.f32 0.0, %v2334
      %v2336 = vpop.f32.mrf.mxu0
      %2337 = vmatprep.mubr.f32.mxu0 0.0
      %2338 = vmatmul.mubr.f32.gmra.mxu0 %v348
      %v2339 = vpop.f32.mrf.mxu0
      %v2340 = vadd.f32 0.0, %v2339
      %v2341 = vpop.f32.mrf.mxu0
      %2342 = vmatprep.mubr.f32.mxu0 0.0
      %2343 = vmatmul.mubr.f32.gmra.mxu0 %v351
      %v2344 = vpop.f32.mrf.mxu0
      %v2345 = vadd.f32 0.0, %v2344
      %v2346 = vpop.f32.mrf.mxu0
      %2347 = vmatprep.mubr.f32.mxu0 0.0
      %2348 = vmatmul.mubr.f32.gmra.mxu0 %v354
      %v2349 = vpop.f32.mrf.mxu0
      %v2350 = vadd.f32 0.0, %v2349
      %v2351 = vpop.f32.mrf.mxu0
      %2352 = vmatprep.mubr.f32.mxu0 0.0
      %2353 = vmatmul.mubr.f32.gmra.mxu0 %v357
      %v2354 = vpop.f32.mrf.mxu0
      %v2355 = vadd.f32 0.0, %v2354
      %v2356 = vpop.f32.mrf.mxu0
      %2357 = vmatprep.mubr.f32.mxu0 0.0
      %2358 = vmatmul.mubr.f32.gmra.mxu0 %v360
      %v2359 = vpop.f32.mrf.mxu0
      %v2360 = vadd.f32 0.0, %v2359
      %v2361 = vpop.f32.mrf.mxu0
      %2362 = vmatprep.mubr.f32.mxu0 0.0
      %2363 = vmatmul.mubr.f32.gmra.mxu0 %v363
      %v2364 = vpop.f32.mrf.mxu0
      %v2365 = vadd.f32 0.0, %v2364
      %v2366 = vpop.f32.mrf.mxu0
      %2367 = vmatprep.mubr.f32.mxu0 0.0
      %2368 = vmatmul.mubr.f32.gmra.mxu0 %v366
      %v2369 = vpop.f32.mrf.mxu0
      %v2370 = vadd.f32 0.0, %v2369
      %v2371 = vpop.f32.mrf.mxu0
      %2372 = vmatprep.mubr.f32.mxu0 0.0
      %2373 = vmatmul.mubr.f32.gmra.mxu0 %v369
      %v2374 = vpop.f32.mrf.mxu0
      %v2375 = vadd.f32 0.0, %v2374
      %v2376 = vpop.f32.mrf.mxu0
      %2377 = vmatprep.mubr.f32.mxu0 0.0
      %2378 = vmatmul.mubr.f32.gmra.mxu0 %v372
      %v2379 = vpop.f32.mrf.mxu0
      %v2380 = vadd.f32 0.0, %v2379
      %v2381 = vpop.f32.mrf.mxu0
      %2382 = vmatprep.mubr.f32.mxu0 0.0
      %2383 = vmatmul.mubr.f32.gmra.mxu0 %v375
      %v2384 = vpop.f32.mrf.mxu0
      %v2385 = vadd.f32 0.0, %v2384
      %v2386 = vpop.f32.mrf.mxu0
      %2387 = vmatprep.mubr.f32.mxu0 0.0
      %2388 = vmatmul.mubr.f32.gmra.mxu0 %v378
      %v2389 = vpop.f32.mrf.mxu0
      %v2390 = vadd.f32 0.0, %v2389
      %v2391 = vpop.f32.mrf.mxu0
      %2392 = vmatprep.mubr.f32.mxu0 0.0
      %2393 = vmatmul.mubr.f32.gmra.mxu0 %v381
      %v2394 = vpop.f32.mrf.mxu0
      %v2395 = vadd.f32 0.0, %v2394
      %v2396 = vpop.f32.mrf.mxu0
      %2397 = vmatprep.mubr.f32.mxu0 0.0
      %2398 = vmatmul.mubr.f32.gmra.mxu0 %v384
      %v2399 = vpop.f32.mrf.mxu0
      %v2400 = vadd.f32 0.0, %v2399
      %v2401 = vpop.f32.mrf.mxu0
      %2402 = vmatprep.mubr.f32.mxu0 0.0
      %2403 = vmatmul.mubr.f32.gmra.mxu0 %v1425
      %v2404 = vpop.f32.mrf.mxu0
      %v2405 = vadd.f32 0.0, %v2404
      %v2406 = vpop.f32.mrf.mxu0
      %2407 = vmatprep.mubr.f32.mxu0 0.0
      %2408 = vmatmul.mubr.f32.gmra.mxu0 %v1428
      %v2409 = vpop.f32.mrf.mxu0
      %v2410 = vadd.f32 0.0, %v2409
      %v2411 = vpop.f32.mrf.mxu0
      %2412 = vmatprep.mubr.f32.mxu0 0.0
      %2413 = vmatmul.mubr.f32.gmra.mxu0 %v2200
      %v2414 = vpop.f32.mrf.mxu0
      %v2415 = vadd.f32 0.0, %v2414
      %v2416 = vpop.f32.mrf.mxu0
      %2417 = vmatprep.mubr.f32.mxu0 0.0
      %2418 = vmatmul.mubr.f32.gmra.mxu0 %v2203
      %v2419 = vpop.f32.mrf.mxu0
      %v2420 = vadd.f32 0.0, %v2419
      %v2421 = vpop.f32.mrf.mxu0
      %2422 = vdwg.mxu0
      %v2423 = vadd.f32 %v2167, %v2275
      %v2424 = vadd.f32 %v2168, %v2280
      %v2425 = vadd.f32 %v2169, %v2285
      %v2426 = vadd.f32 %v2170, %v2290
      %v2427 = vadd.f32 %v2171, %v2295
      %v2428 = vadd.f32 %v2172, %v2300
      %v2429 = vadd.f32 %v2173, %v2305
      %v2430 = vadd.f32 %v2174, %v2310
      %v2431 = vadd.f32 %v2175, %v2315
      %v2432 = vadd.f32 %v2176, %v2320
      %v2433 = vadd.f32 %v2177, %v2325
      %v2434 = vadd.f32 %v2178, %v2330
      %v2435 = vadd.f32 %v2179, %v2335
      %v2436 = vadd.f32 %v2180, %v2340
      %v2437 = vadd.f32 %v2181, %v2345
      %v2438 = vadd.f32 %v2182, %v2350
      %v2439 = vadd.f32 %v2183, %v2355
      %v2440 = vadd.f32 %v2184, %v2360
      %v2441 = vadd.f32 %v2185, %v2365
      %v2442 = vadd.f32 %v2186, %v2370
      %v2443 = vadd.f32 %v2187, %v2375
      %v2444 = vadd.f32 %v2188, %v2380
      %v2445 = vadd.f32 %v2189, %v2385
      %v2446 = vadd.f32 %v2190, %v2390
      %v2447 = vadd.f32 %v2191, %v2395
      %v2448 = vadd.f32 %v2192, %v2400
      %v2449 = vadd.f32 %v2193, %v2405
      %v2450 = vadd.f32 %v2194, %v2410
      %v2451 = vadd.f32 %v2195, %v2415
      %v2452 = vadd.f32 %v2196, %v2420
      %v2454 = vrot.slane %v286, 1
      %v2455 = vrot.slane %v287, 1
      %v2456 = vsel %vm650, %v2454, %v2455
      %v2457 = vrot.slane %v288, 1
      %v2458 = vsel %vm650, %v2455, %v2457
      %s2459 = scalar_lea.vmem %s1, 28
      %v2460 = vld [vmem:[%s2459] sm:$0xf]
      %v2461 = vsel %vm295, %v2456, 0
      %v2463 = vsel %vm295, %v2458, 0
      %v2466 = vsel %vm386, %v2460, 0
      %2468 = vmatprep.subr.mxu0 0.0
      %2469 = vmatpush1.msra.mxu0 0.0
      %2470 = vmatprep.subr.mxu0 0.0
      %2471 = vmatpush1.msra.mxu0 0.0
      %2472 = vmatprep.subr.mxu0 0.0
      %2473 = vmatpush1.msra.mxu0 0.0
      %2474 = vmatprep.subr.mxu0 0.0
      %2475 = vmatpush1.msra.mxu0 0.0
      %2476 = vmatprep.subr.mxu0 0.0
      %2477 = vmatpush1.msra.mxu0 0.0
      %2478 = vmatprep.subr.mxu0 0.0
      %2479 = vmatpush1.msra.mxu0 0.0
      %2480 = vmatprep.subr.mxu0 0.0
      %2481 = vmatpush1.msra.mxu0 0.0
      %2482 = vmatprep.subr.mxu0 0.0
      %2483 = vmatpush1.msra.mxu0 0.0
      %2484 = vmatprep.subr.mxu0 0.0
      %2485 = vmatpush1.msra.mxu0 0.0
      %2486 = vmatprep.subr.mxu0 0.0
      %2487 = vmatpush1.msra.mxu0 0.0
      %2488 = vmatprep.subr.mxu0 0.0
      %2489 = vmatpush1.msra.mxu0 0.0
      %2490 = vmatprep.subr.mxu0 0.0
      %2491 = vmatpush1.msra.mxu0 0.0
      %2492 = vmatprep.subr.mxu0 0.0
      %2493 = vmatpush1.msra.mxu0 0.0
      %2494 = vmatprep.subr.mxu0 0.0
      %2495 = vmatpush1.msra.mxu0 0.0
      %2496 = vmatprep.subr.mxu0 0.0
      %2497 = vmatpush1.msra.mxu0 0.0
      %2498 = vmatprep.subr.mxu0 0.0
      %2499 = vmatpush1.msra.mxu0 %v2466
      %2500 = vmatprep.subr.mxu0 0.0
      %2501 = vmatpush2.msra.mxu0 0.0
      %2502 = vmatprep.subr.mxu0 0.0
      %2503 = vmatpush2.msra.mxu0 0.0
      %2504 = vmatprep.subr.mxu0 0.0
      %2505 = vmatpush2.msra.mxu0 0.0
      %2506 = vmatprep.subr.mxu0 0.0
      %2507 = vmatpush2.msra.mxu0 0.0
      %2508 = vmatprep.subr.mxu0 0.0
      %2509 = vmatpush2.msra.mxu0 0.0
      %2510 = vmatprep.subr.mxu0 0.0
      %2511 = vmatpush2.msra.mxu0 0.0
      %2512 = vmatprep.subr.mxu0 0.0
      %2513 = vmatpush2.msra.mxu0 0.0
      %2514 = vmatprep.subr.mxu0 0.0
      %2515 = vmatpush2.msra.mxu0 0.0
      %2516 = vmatprep.subr.mxu0 0.0
      %2517 = vmatpush2.msra.mxu0 0.0
      %2518 = vmatprep.subr.mxu0 0.0
      %2519 = vmatpush2.msra.mxu0 0.0
      %2520 = vmatprep.subr.mxu0 0.0
      %2521 = vmatpush2.msra.mxu0 0.0
      %2522 = vmatprep.subr.mxu0 0.0
      %2523 = vmatpush2.msra.mxu0 0.0
      %2524 = vmatprep.subr.mxu0 0.0
      %2525 = vmatpush2.msra.mxu0 0.0
      %2526 = vmatprep.subr.mxu0 0.0
      %2527 = vmatpush2.msra.mxu0 0.0
      %2528 = vmatprep.subr.mxu0 0.0
      %2529 = vmatpush2.msra.mxu0 0.0
      %2530 = vmatprep.subr.mxu0 0.0
      %2531 = vmatpush2.msra.mxu0 0.0
      %2532 = vmatprep.mubr.f32.mxu0 0.0
      %2533 = vmatmul.mubr.f32.gmra.mxu0 %v736
      %v2534 = vpop.f32.mrf.mxu0
      %v2535 = vadd.f32 0.0, %v2534
      %v2536 = vpop.f32.mrf.mxu0
      %2537 = vmatprep.mubr.f32.mxu0 0.0
      %2538 = vmatmul.mubr.f32.gmra.mxu0 %v738
      %v2539 = vpop.f32.mrf.mxu0
      %v2540 = vadd.f32 0.0, %v2539
      %v2541 = vpop.f32.mrf.mxu0
      %2542 = vmatprep.mubr.f32.mxu0 0.0
      %2543 = vmatmul.mubr.f32.gmra.mxu0 %v740
      %v2544 = vpop.f32.mrf.mxu0
      %v2545 = vadd.f32 0.0, %v2544
      %v2546 = vpop.f32.mrf.mxu0
      %2547 = vmatprep.mubr.f32.mxu0 0.0
      %2548 = vmatmul.mubr.f32.gmra.mxu0 %v742
      %v2549 = vpop.f32.mrf.mxu0
      %v2550 = vadd.f32 0.0, %v2549
      %v2551 = vpop.f32.mrf.mxu0
      %2552 = vmatprep.mubr.f32.mxu0 0.0
      %2553 = vmatmul.mubr.f32.gmra.mxu0 %v744
      %v2554 = vpop.f32.mrf.mxu0
      %v2555 = vadd.f32 0.0, %v2554
      %v2556 = vpop.f32.mrf.mxu0
      %2557 = vmatprep.mubr.f32.mxu0 0.0
      %2558 = vmatmul.mubr.f32.gmra.mxu0 %v746
      %v2559 = vpop.f32.mrf.mxu0
      %v2560 = vadd.f32 0.0, %v2559
      %v2561 = vpop.f32.mrf.mxu0
      %2562 = vmatprep.mubr.f32.mxu0 0.0
      %2563 = vmatmul.mubr.f32.gmra.mxu0 %v748
      %v2564 = vpop.f32.mrf.mxu0
      %v2565 = vadd.f32 0.0, %v2564
      %v2566 = vpop.f32.mrf.mxu0
      %2567 = vmatprep.mubr.f32.mxu0 0.0
      %2568 = vmatmul.mubr.f32.gmra.mxu0 %v750
      %v2569 = vpop.f32.mrf.mxu0
      %v2570 = vadd.f32 0.0, %v2569
      %v2571 = vpop.f32.mrf.mxu0
      %2572 = vmatprep.mubr.f32.mxu0 0.0
      %2573 = vmatmul.mubr.f32.gmra.mxu0 %v752
      %v2574 = vpop.f32.mrf.mxu0
      %v2575 = vadd.f32 0.0, %v2574
      %v2576 = vpop.f32.mrf.mxu0
      %2577 = vmatprep.mubr.f32.mxu0 0.0
      %2578 = vmatmul.mubr.f32.gmra.mxu0 %v754
      %v2579 = vpop.f32.mrf.mxu0
      %v2580 = vadd.f32 0.0, %v2579
      %v2581 = vpop.f32.mrf.mxu0
      %2582 = vmatprep.mubr.f32.mxu0 0.0
      %2583 = vmatmul.mubr.f32.gmra.mxu0 %v756
      %v2584 = vpop.f32.mrf.mxu0
      %v2585 = vadd.f32 0.0, %v2584
      %v2586 = vpop.f32.mrf.mxu0
      %2587 = vmatprep.mubr.f32.mxu0 0.0
      %2588 = vmatmul.mubr.f32.gmra.mxu0 %v758
      %v2589 = vpop.f32.mrf.mxu0
      %v2590 = vadd.f32 0.0, %v2589
      %v2591 = vpop.f32.mrf.mxu0
      %2592 = vmatprep.mubr.f32.mxu0 0.0
      %2593 = vmatmul.mubr.f32.gmra.mxu0 %v760
      %v2594 = vpop.f32.mrf.mxu0
      %v2595 = vadd.f32 0.0, %v2594
      %v2596 = vpop.f32.mrf.mxu0
      %2597 = vmatprep.mubr.f32.mxu0 0.0
      %2598 = vmatmul.mubr.f32.gmra.mxu0 %v762
      %v2599 = vpop.f32.mrf.mxu0
      %v2600 = vadd.f32 0.0, %v2599
      %v2601 = vpop.f32.mrf.mxu0
      %2602 = vmatprep.mubr.f32.mxu0 0.0
      %2603 = vmatmul.mubr.f32.gmra.mxu0 %v764
      %v2604 = vpop.f32.mrf.mxu0
      %v2605 = vadd.f32 0.0, %v2604
      %v2606 = vpop.f32.mrf.mxu0
      %2607 = vmatprep.mubr.f32.mxu0 0.0
      %2608 = vmatmul.mubr.f32.gmra.mxu0 %v766
      %v2609 = vpop.f32.mrf.mxu0
      %v2610 = vadd.f32 0.0, %v2609
      %v2611 = vpop.f32.mrf.mxu0
      %2612 = vmatprep.mubr.f32.mxu0 0.0
      %2613 = vmatmul.mubr.f32.gmra.mxu0 %v768
      %v2614 = vpop.f32.mrf.mxu0
      %v2615 = vadd.f32 0.0, %v2614
      %v2616 = vpop.f32.mrf.mxu0
      %2617 = vmatprep.mubr.f32.mxu0 0.0
      %2618 = vmatmul.mubr.f32.gmra.mxu0 %v770
      %v2619 = vpop.f32.mrf.mxu0
      %v2620 = vadd.f32 0.0, %v2619
      %v2621 = vpop.f32.mrf.mxu0
      %2622 = vmatprep.mubr.f32.mxu0 0.0
      %2623 = vmatmul.mubr.f32.gmra.mxu0 %v772
      %v2624 = vpop.f32.mrf.mxu0
      %v2625 = vadd.f32 0.0, %v2624
      %v2626 = vpop.f32.mrf.mxu0
      %2627 = vmatprep.mubr.f32.mxu0 0.0
      %2628 = vmatmul.mubr.f32.gmra.mxu0 %v774
      %v2629 = vpop.f32.mrf.mxu0
      %v2630 = vadd.f32 0.0, %v2629
      %v2631 = vpop.f32.mrf.mxu0
      %2632 = vmatprep.mubr.f32.mxu0 0.0
      %2633 = vmatmul.mubr.f32.gmra.mxu0 %v776
      %v2634 = vpop.f32.mrf.mxu0
      %v2635 = vadd.f32 0.0, %v2634
      %v2636 = vpop.f32.mrf.mxu0
      %2637 = vmatprep.mubr.f32.mxu0 0.0
      %2638 = vmatmul.mubr.f32.gmra.mxu0 %v778
      %v2639 = vpop.f32.mrf.mxu0
      %v2640 = vadd.f32 0.0, %v2639
      %v2641 = vpop.f32.mrf.mxu0
      %2642 = vmatprep.mubr.f32.mxu0 0.0
      %2643 = vmatmul.mubr.f32.gmra.mxu0 %v780
      %v2644 = vpop.f32.mrf.mxu0
      %v2645 = vadd.f32 0.0, %v2644
      %v2646 = vpop.f32.mrf.mxu0
      %2647 = vmatprep.mubr.f32.mxu0 0.0
      %2648 = vmatmul.mubr.f32.gmra.mxu0 %v782
      %v2649 = vpop.f32.mrf.mxu0
      %v2650 = vadd.f32 0.0, %v2649
      %v2651 = vpop.f32.mrf.mxu0
      %2652 = vmatprep.mubr.f32.mxu0 0.0
      %2653 = vmatmul.mubr.f32.gmra.mxu0 %v784
      %v2654 = vpop.f32.mrf.mxu0
      %v2655 = vadd.f32 0.0, %v2654
      %v2656 = vpop.f32.mrf.mxu0
      %2657 = vmatprep.mubr.f32.mxu0 0.0
      %2658 = vmatmul.mubr.f32.gmra.mxu0 %v786
      %v2659 = vpop.f32.mrf.mxu0
      %v2660 = vadd.f32 0.0, %v2659
      %v2661 = vpop.f32.mrf.mxu0
      %2662 = vmatprep.mubr.f32.mxu0 0.0
      %2663 = vmatmul.mubr.f32.gmra.mxu0 %v1686
      %v2664 = vpop.f32.mrf.mxu0
      %v2665 = vadd.f32 0.0, %v2664
      %v2666 = vpop.f32.mrf.mxu0
      %2667 = vmatprep.mubr.f32.mxu0 0.0
      %2668 = vmatmul.mubr.f32.gmra.mxu0 %v1688
      %v2669 = vpop.f32.mrf.mxu0
      %v2670 = vadd.f32 0.0, %v2669
      %v2671 = vpop.f32.mrf.mxu0
      %2672 = vmatprep.mubr.f32.mxu0 0.0
      %2673 = vmatmul.mubr.f32.gmra.mxu0 %v2461
      %v2674 = vpop.f32.mrf.mxu0
      %v2675 = vadd.f32 0.0, %v2674
      %v2676 = vpop.f32.mrf.mxu0
      %2677 = vmatprep.mubr.f32.mxu0 0.0
      %2678 = vmatmul.mubr.f32.gmra.mxu0 %v2463
      %v2679 = vpop.f32.mrf.mxu0
      %v2680 = vadd.f32 0.0, %v2679
      %v2681 = vpop.f32.mrf.mxu0
      %2682 = vdwg.mxu0
      %v2683 = vadd.f32 %v2423, %v2535
      %v2684 = vadd.f32 %v2424, %v2540
      %v2685 = vadd.f32 %v2425, %v2545
      %v2686 = vadd.f32 %v2426, %v2550
      %v2687 = vadd.f32 %v2427, %v2555
      %v2688 = vadd.f32 %v2428, %v2560
      %v2689 = vadd.f32 %v2429, %v2565
      %v2690 = vadd.f32 %v2430, %v2570
      %v2691 = vadd.f32 %v2431, %v2575
      %v2692 = vadd.f32 %v2432, %v2580
      %v2693 = vadd.f32 %v2433, %v2585
      %v2694 = vadd.f32 %v2434, %v2590
      %v2695 = vadd.f32 %v2435, %v2595
      %v2696 = vadd.f32 %v2436, %v2600
      %v2697 = vadd.f32 %v2437, %v2605
      %v2698 = vadd.f32 %v2438, %v2610
      %v2699 = vadd.f32 %v2439, %v2615
      %v2700 = vadd.f32 %v2440, %v2620
      %v2701 = vadd.f32 %v2441, %v2625
      %v2702 = vadd.f32 %v2442, %v2630
      %v2703 = vadd.f32 %v2443, %v2635
      %v2704 = vadd.f32 %v2444, %v2640
      %v2705 = vadd.f32 %v2445, %v2645
      %v2706 = vadd.f32 %v2446, %v2650
      %v2707 = vadd.f32 %v2447, %v2655
      %v2708 = vadd.f32 %v2448, %v2660
      %v2709 = vadd.f32 %v2449, %v2665
      %v2710 = vadd.f32 %v2450, %v2670
      %v2711 = vadd.f32 %v2451, %v2675
      %v2712 = vadd.f32 %v2452, %v2680
      %v2713 = vrot.slane %v286, 2
      %v2714 = vrot.slane %v287, 2
      %v2715 = vsel %vm1036, %v2713, %v2714
      %v2716 = vrot.slane %v288, 2
      %v2717 = vsel %vm1036, %v2714, %v2716
      %s2718 = scalar_lea.vmem %s1, 32
      %v2719 = vld [vmem:[%s2718] sm:$0xf]
      %v2720 = vsel %vm295, %v2715, 0
      %v2722 = vsel %vm295, %v2717, 0
      %v2725 = vsel %vm386, %v2719, 0
      %2727 = vmatprep.subr.mxu0 0.0
      %2728 = vmatpush1.msra.mxu0 0.0
      %2729 = vmatprep.subr.mxu0 0.0
      %2730 = vmatpush1.msra.mxu0 0.0
      %2731 = vmatprep.subr.mxu0 0.0
      %2732 = vmatpush1.msra.mxu0 0.0
      %2733 = vmatprep.subr.mxu0 0.0
      %2734 = vmatpush1.msra.mxu0 0.0
      %2735 = vmatprep.subr.mxu0 0.0
      %2736 = vmatpush1.msra.mxu0 0.0
      %2737 = vmatprep.subr.mxu0 0.0
      %2738 = vmatpush1.msra.mxu0 0.0
      %2739 = vmatprep.subr.mxu0 0.0
      %2740 = vmatpush1.msra.mxu0 0.0
      %2741 = vmatprep.subr.mxu0 0.0
      %2742 = vmatpush1.msra.mxu0 0.0
      %2743 = vmatprep.subr.mxu0 0.0
      %2744 = vmatpush1.msra.mxu0 0.0
      %2745 = vmatprep.subr.mxu0 0.0
      %2746 = vmatpush1.msra.mxu0 0.0
      %2747 = vmatprep.subr.mxu0 0.0
      %2748 = vmatpush1.msra.mxu0 0.0
      %2749 = vmatprep.subr.mxu0 0.0
      %2750 = vmatpush1.msra.mxu0 0.0
      %2751 = vmatprep.subr.mxu0 0.0
      %2752 = vmatpush1.msra.mxu0 0.0
      %2753 = vmatprep.subr.mxu0 0.0
      %2754 = vmatpush1.msra.mxu0 0.0
      %2755 = vmatprep.subr.mxu0 0.0
      %2756 = vmatpush1.msra.mxu0 0.0
      %2757 = vmatprep.subr.mxu0 0.0
      %2758 = vmatpush1.msra.mxu0 %v2725
      %2759 = vmatprep.subr.mxu0 0.0
      %2760 = vmatpush2.msra.mxu0 0.0
      %2761 = vmatprep.subr.mxu0 0.0
      %2762 = vmatpush2.msra.mxu0 0.0
      %2763 = vmatprep.subr.mxu0 0.0
      %2764 = vmatpush2.msra.mxu0 0.0
      %2765 = vmatprep.subr.mxu0 0.0
      %2766 = vmatpush2.msra.mxu0 0.0
      %2767 = vmatprep.subr.mxu0 0.0
      %2768 = vmatpush2.msra.mxu0 0.0
      %2769 = vmatprep.subr.mxu0 0.0
      %2770 = vmatpush2.msra.mxu0 0.0
      %2771 = vmatprep.subr.mxu0 0.0
      %2772 = vmatpush2.msra.mxu0 0.0
      %2773 = vmatprep.subr.mxu0 0.0
      %2774 = vmatpush2.msra.mxu0 0.0
      %2775 = vmatprep.subr.mxu0 0.0
      %2776 = vmatpush2.msra.mxu0 0.0
      %2777 = vmatprep.subr.mxu0 0.0
      %2778 = vmatpush2.msra.mxu0 0.0
      %2779 = vmatprep.subr.mxu0 0.0
      %2780 = vmatpush2.msra.mxu0 0.0
      %2781 = vmatprep.subr.mxu0 0.0
      %2782 = vmatpush2.msra.mxu0 0.0
      %2783 = vmatprep.subr.mxu0 0.0
      %2784 = vmatpush2.msra.mxu0 0.0
      %2785 = vmatprep.subr.mxu0 0.0
      %2786 = vmatpush2.msra.mxu0 0.0
      %2787 = vmatprep.subr.mxu0 0.0
      %2788 = vmatpush2.msra.mxu0 0.0
      %2789 = vmatprep.subr.mxu0 0.0
      %2790 = vmatpush2.msra.mxu0 0.0
      %2791 = vmatprep.mubr.f32.mxu0 0.0
      %2792 = vmatmul.mubr.f32.gmra.mxu0 %v1122
      %v2793 = vpop.f32.mrf.mxu0
      %v2794 = vadd.f32 0.0, %v2793
      %v2795 = vpop.f32.mrf.mxu0
      %2796 = vmatprep.mubr.f32.mxu0 0.0
      %2797 = vmatmul.mubr.f32.gmra.mxu0 %v1124
      %v2798 = vpop.f32.mrf.mxu0
      %v2799 = vadd.f32 0.0, %v2798
      %v2800 = vpop.f32.mrf.mxu0
      %2801 = vmatprep.mubr.f32.mxu0 0.0
      %2802 = vmatmul.mubr.f32.gmra.mxu0 %v1126
      %v2803 = vpop.f32.mrf.mxu0
      %v2804 = vadd.f32 0.0, %v2803
      %v2805 = vpop.f32.mrf.mxu0
      %2806 = vmatprep.mubr.f32.mxu0 0.0
      %2807 = vmatmul.mubr.f32.gmra.mxu0 %v1128
      %v2808 = vpop.f32.mrf.mxu0
      %v2809 = vadd.f32 0.0, %v2808
      %v2810 = vpop.f32.mrf.mxu0
      %2811 = vmatprep.mubr.f32.mxu0 0.0
      %2812 = vmatmul.mubr.f32.gmra.mxu0 %v1130
      %v2813 = vpop.f32.mrf.mxu0
      %v2814 = vadd.f32 0.0, %v2813
      %v2815 = vpop.f32.mrf.mxu0
      %2816 = vmatprep.mubr.f32.mxu0 0.0
      %2817 = vmatmul.mubr.f32.gmra.mxu0 %v1132
      %v2818 = vpop.f32.mrf.mxu0
      %v2819 = vadd.f32 0.0, %v2818
      %v2820 = vpop.f32.mrf.mxu0
      %2821 = vmatprep.mubr.f32.mxu0 0.0
      %2822 = vmatmul.mubr.f32.gmra.mxu0 %v1134
      %v2823 = vpop.f32.mrf.mxu0
      %v2824 = vadd.f32 0.0, %v2823
      %v2825 = vpop.f32.mrf.mxu0
      %2826 = vmatprep.mubr.f32.mxu0 0.0
      %2827 = vmatmul.mubr.f32.gmra.mxu0 %v1136
      %v2828 = vpop.f32.mrf.mxu0
      %v2829 = vadd.f32 0.0, %v2828
      %v2830 = vpop.f32.mrf.mxu0
      %2831 = vmatprep.mubr.f32.mxu0 0.0
      %2832 = vmatmul.mubr.f32.gmra.mxu0 %v1138
      %v2833 = vpop.f32.mrf.mxu0
      %v2834 = vadd.f32 0.0, %v2833
      %v2835 = vpop.f32.mrf.mxu0
      %2836 = vmatprep.mubr.f32.mxu0 0.0
      %2837 = vmatmul.mubr.f32.gmra.mxu0 %v1140
      %v2838 = vpop.f32.mrf.mxu0
      %v2839 = vadd.f32 0.0, %v2838
      %v2840 = vpop.f32.mrf.mxu0
      %2841 = vmatprep.mubr.f32.mxu0 0.0
      %2842 = vmatmul.mubr.f32.gmra.mxu0 %v1142
      %v2843 = vpop.f32.mrf.mxu0
      %v2844 = vadd.f32 0.0, %v2843
      %v2845 = vpop.f32.mrf.mxu0
      %2846 = vmatprep.mubr.f32.mxu0 0.0
      %2847 = vmatmul.mubr.f32.gmra.mxu0 %v1144
      %v2848 = vpop.f32.mrf.mxu0
      %v2849 = vadd.f32 0.0, %v2848
      %v2850 = vpop.f32.mrf.mxu0
      %2851 = vmatprep.mubr.f32.mxu0 0.0
      %2852 = vmatmul.mubr.f32.gmra.mxu0 %v1146
      %v2853 = vpop.f32.mrf.mxu0
      %v2854 = vadd.f32 0.0, %v2853
      %v2855 = vpop.f32.mrf.mxu0
      %2856 = vmatprep.mubr.f32.mxu0 0.0
      %2857 = vmatmul.mubr.f32.gmra.mxu0 %v1148
      %v2858 = vpop.f32.mrf.mxu0
      %v2859 = vadd.f32 0.0, %v2858
      %v2860 = vpop.f32.mrf.mxu0
      %2861 = vmatprep.mubr.f32.mxu0 0.0
      %2862 = vmatmul.mubr.f32.gmra.mxu0 %v1150
      %v2863 = vpop.f32.mrf.mxu0
      %v2864 = vadd.f32 0.0, %v2863
      %v2865 = vpop.f32.mrf.mxu0
      %2866 = vmatprep.mubr.f32.mxu0 0.0
      %2867 = vmatmul.mubr.f32.gmra.mxu0 %v1152
      %v2868 = vpop.f32.mrf.mxu0
      %v2869 = vadd.f32 0.0, %v2868
      %v2870 = vpop.f32.mrf.mxu0
      %2871 = vmatprep.mubr.f32.mxu0 0.0
      %2872 = vmatmul.mubr.f32.gmra.mxu0 %v1154
      %v2873 = vpop.f32.mrf.mxu0
      %v2874 = vadd.f32 0.0, %v2873
      %v2875 = vpop.f32.mrf.mxu0
      %2876 = vmatprep.mubr.f32.mxu0 0.0
      %2877 = vmatmul.mubr.f32.gmra.mxu0 %v1156
      %v2878 = vpop.f32.mrf.mxu0
      %v2879 = vadd.f32 0.0, %v2878
      %v2880 = vpop.f32.mrf.mxu0
      %2881 = vmatprep.mubr.f32.mxu0 0.0
      %2882 = vmatmul.mubr.f32.gmra.mxu0 %v1158
      %v2883 = vpop.f32.mrf.mxu0
      %v2884 = vadd.f32 0.0, %v2883
      %v2885 = vpop.f32.mrf.mxu0
      %2886 = vmatprep.mubr.f32.mxu0 0.0
      %2887 = vmatmul.mubr.f32.gmra.mxu0 %v1160
      %v2888 = vpop.f32.mrf.mxu0
      %v2889 = vadd.f32 0.0, %v2888
      %v2890 = vpop.f32.mrf.mxu0
      %2891 = vmatprep.mubr.f32.mxu0 0.0
      %2892 = vmatmul.mubr.f32.gmra.mxu0 %v1162
      %v2893 = vpop.f32.mrf.mxu0
      %v2894 = vadd.f32 0.0, %v2893
      %v2895 = vpop.f32.mrf.mxu0
      %2896 = vmatprep.mubr.f32.mxu0 0.0
      %2897 = vmatmul.mubr.f32.gmra.mxu0 %v1164
      %v2898 = vpop.f32.mrf.mxu0
      %v2899 = vadd.f32 0.0, %v2898
      %v2900 = vpop.f32.mrf.mxu0
      %2901 = vmatprep.mubr.f32.mxu0 0.0
      %2902 = vmatmul.mubr.f32.gmra.mxu0 %v1166
      %v2903 = vpop.f32.mrf.mxu0
      %v2904 = vadd.f32 0.0, %v2903
      %v2905 = vpop.f32.mrf.mxu0
      %2906 = vmatprep.mubr.f32.mxu0 0.0
      %2907 = vmatmul.mubr.f32.gmra.mxu0 %v1168
      %v2908 = vpop.f32.mrf.mxu0
      %v2909 = vadd.f32 0.0, %v2908
      %v2910 = vpop.f32.mrf.mxu0
      %2911 = vmatprep.mubr.f32.mxu0 0.0
      %2912 = vmatmul.mubr.f32.gmra.mxu0 %v1170
      %v2913 = vpop.f32.mrf.mxu0
      %v2914 = vadd.f32 0.0, %v2913
      %v2915 = vpop.f32.mrf.mxu0
      %2916 = vmatprep.mubr.f32.mxu0 0.0
      %2917 = vmatmul.mubr.f32.gmra.mxu0 %v1172
      %v2918 = vpop.f32.mrf.mxu0
      %v2919 = vadd.f32 0.0, %v2918
      %v2920 = vpop.f32.mrf.mxu0
      %2921 = vmatprep.mubr.f32.mxu0 0.0
      %2922 = vmatmul.mubr.f32.gmra.mxu0 %v1945
      %v2923 = vpop.f32.mrf.mxu0
      %v2924 = vadd.f32 0.0, %v2923
      %v2925 = vpop.f32.mrf.mxu0
      %2926 = vmatprep.mubr.f32.mxu0 0.0
      %2927 = vmatmul.mubr.f32.gmra.mxu0 %v1947
      %v2928 = vpop.f32.mrf.mxu0
      %v2929 = vadd.f32 0.0, %v2928
      %v2930 = vpop.f32.mrf.mxu0
      %2931 = vmatprep.mubr.f32.mxu0 0.0
      %2932 = vmatmul.mubr.f32.gmra.mxu0 %v2720
      %v2933 = vpop.f32.mrf.mxu0
      %v2934 = vadd.f32 0.0, %v2933
      %v2935 = vpop.f32.mrf.mxu0
      %2936 = vmatprep.mubr.f32.mxu0 0.0
      %2937 = vmatmul.mubr.f32.gmra.mxu0 %v2722
      %v2938 = vpop.f32.mrf.mxu0
      %v2939 = vadd.f32 0.0, %v2938
      %v2940 = vpop.f32.mrf.mxu0
      %2941 = vdwg.mxu0
      %v2942 = vadd.f32 %v2683, %v2794
      %v2943 = vadd.f32 %v2684, %v2799
      %v2944 = vadd.f32 %v2685, %v2804
      %v2945 = vadd.f32 %v2686, %v2809
      %v2946 = vadd.f32 %v2687, %v2814
      %v2947 = vadd.f32 %v2688, %v2819
      %v2948 = vadd.f32 %v2689, %v2824
      %v2949 = vadd.f32 %v2690, %v2829
      %v2950 = vadd.f32 %v2691, %v2834
      %v2951 = vadd.f32 %v2692, %v2839
      %v2952 = vadd.f32 %v2693, %v2844
      %v2953 = vadd.f32 %v2694, %v2849
      %v2954 = vadd.f32 %v2695, %v2854
      %v2955 = vadd.f32 %v2696, %v2859
      %v2956 = vadd.f32 %v2697, %v2864
      %v2957 = vadd.f32 %v2698, %v2869
      %v2958 = vadd.f32 %v2699, %v2874
      %v2959 = vadd.f32 %v2700, %v2879
      %v2960 = vadd.f32 %v2701, %v2884
      %v2961 = vadd.f32 %v2702, %v2889
      %v2962 = vadd.f32 %v2703, %v2894
      %v2963 = vadd.f32 %v2704, %v2899
      %v2964 = vadd.f32 %v2705, %v2904
      %v2965 = vadd.f32 %v2706, %v2909
      %v2966 = vadd.f32 %v2707, %v2914
      %v2967 = vadd.f32 %v2708, %v2919
      %v2968 = vadd.f32 %v2709, %v2924
      %v2969 = vadd.f32 %v2710, %v2929
      %v2970 = vadd.f32 %v2711, %v2934
      %v2971 = vadd.f32 %v2712, %v2939
      %vm2972 = vcmp.gt.f32.partialorder %v2942, 0.0
      %vm2973 = vcmp.gt.f32.partialorder %v2943, 0.0
      %vm2974 = vcmp.gt.f32.partialorder %v2944, 0.0
      %vm2975 = vcmp.gt.f32.partialorder %v2945, 0.0
      %vm2976 = vcmp.gt.f32.partialorder %v2946, 0.0
      %vm2977 = vcmp.gt.f32.partialorder %v2947, 0.0
      %vm2978 = vcmp.gt.f32.partialorder %v2948, 0.0
      %vm2979 = vcmp.gt.f32.partialorder %v2949, 0.0
      %vm2980 = vcmp.gt.f32.partialorder %v2950, 0.0
      %vm2981 = vcmp.gt.f32.partialorder %v2951, 0.0
      %vm2982 = vcmp.gt.f32.partialorder %v2952, 0.0
      %vm2983 = vcmp.gt.f32.partialorder %v2953, 0.0
      %vm2984 = vcmp.gt.f32.partialorder %v2954, 0.0
      %vm2985 = vcmp.gt.f32.partialorder %v2955, 0.0
      %vm2986 = vcmp.gt.f32.partialorder %v2956, 0.0
      %vm2987 = vcmp.gt.f32.partialorder %v2957, 0.0
      %vm2988 = vcmp.gt.f32.partialorder %v2958, 0.0
      %vm2989 = vcmp.gt.f32.partialorder %v2959, 0.0
      %vm2990 = vcmp.gt.f32.partialorder %v2960, 0.0
      %vm2991 = vcmp.gt.f32.partialorder %v2961, 0.0
      %vm2992 = vcmp.gt.f32.partialorder %v2962, 0.0
      %vm2993 = vcmp.gt.f32.partialorder %v2963, 0.0
      %vm2994 = vcmp.gt.f32.partialorder %v2964, 0.0
      %vm2995 = vcmp.gt.f32.partialorder %v2965, 0.0
      %vm2996 = vcmp.gt.f32.partialorder %v2966, 0.0
      %vm2997 = vcmp.gt.f32.partialorder %v2967, 0.0
      %vm2998 = vcmp.gt.f32.partialorder %v2968, 0.0
      %vm2999 = vcmp.gt.f32.partialorder %v2969, 0.0
      %vm3000 = vcmp.gt.f32.partialorder %v2970, 0.0
      %vm3001 = vcmp.gt.f32.partialorder %v2971, 0.0
      %v3002 = vmin.f32 %v2942, 0.0
      %v3003 = vmin.f32 %v2943, 0.0
      %v3004 = vmin.f32 %v2944, 0.0
      %v3005 = vmin.f32 %v2945, 0.0
      %v3006 = vmin.f32 %v2946, 0.0
      %v3007 = vmin.f32 %v2947, 0.0
      %v3008 = vmin.f32 %v2948, 0.0
      %v3009 = vmin.f32 %v2949, 0.0
      %v3010 = vmin.f32 %v2950, 0.0
      %v3011 = vmin.f32 %v2951, 0.0
      %v3012 = vmin.f32 %v2952, 0.0
      %v3013 = vmin.f32 %v2953, 0.0
      %v3014 = vmin.f32 %v2954, 0.0
      %v3015 = vmin.f32 %v2955, 0.0
      %v3016 = vmin.f32 %v2956, 0.0
      %v3017 = vmin.f32 %v2957, 0.0
      %v3018 = vmin.f32 %v2958, 0.0
      %v3019 = vmin.f32 %v2959, 0.0
      %v3020 = vmin.f32 %v2960, 0.0
      %v3021 = vmin.f32 %v2961, 0.0
      %v3022 = vmin.f32 %v2962, 0.0
      %v3023 = vmin.f32 %v2963, 0.0
      %v3024 = vmin.f32 %v2964, 0.0
      %v3025 = vmin.f32 %v2965, 0.0
      %v3026 = vmin.f32 %v2966, 0.0
      %v3027 = vmin.f32 %v2967, 0.0
      %v3028 = vmin.f32 %v2968, 0.0
      %v3029 = vmin.f32 %v2969, 0.0
      %v3030 = vmin.f32 %v2970, 0.0
      %v3031 = vmin.f32 %v2971, 0.0
      %v3032 = vmul.f32 %v3002, 1.442695
      %v3033 = vpow.pop %v3032
      %v3034 = vmul.f32 %v3003, 1.442695
      %v3035 = vpow.pop %v3034
      %v3036 = vmul.f32 %v3004, 1.442695
      %v3037 = vpow.pop %v3036
      %v3038 = vmul.f32 %v3005, 1.442695
      %v3039 = vpow.pop %v3038
      %v3040 = vmul.f32 %v3006, 1.442695
      %v3041 = vpow.pop %v3040
      %v3042 = vmul.f32 %v3007, 1.442695
      %v3043 = vpow.pop %v3042
      %v3044 = vmul.f32 %v3008, 1.442695
      %v3045 = vpow.pop %v3044
      %v3046 = vmul.f32 %v3009, 1.442695
      %v3047 = vpow.pop %v3046
      %v3048 = vmul.f32 %v3010, 1.442695
      %v3049 = vpow.pop %v3048
      %v3050 = vmul.f32 %v3011, 1.442695
      %v3051 = vpow.pop %v3050
      %v3052 = vmul.f32 %v3012, 1.442695
      %v3053 = vpow.pop %v3052
      %v3054 = vmul.f32 %v3013, 1.442695
      %v3055 = vpow.pop %v3054
      %v3056 = vmul.f32 %v3014, 1.442695
      %v3057 = vpow.pop %v3056
      %v3058 = vmul.f32 %v3015, 1.442695
      %v3059 = vpow.pop %v3058
      %v3060 = vmul.f32 %v3016, 1.442695
      %v3061 = vpow.pop %v3060
      %v3062 = vmul.f32 %v3017, 1.442695
      %v3063 = vpow.pop %v3062
      %v3064 = vmul.f32 %v3018, 1.442695
      %v3065 = vpow.pop %v3064
      %v3066 = vmul.f32 %v3019, 1.442695
      %v3067 = vpow.pop %v3066
      %v3068 = vmul.f32 %v3020, 1.442695
      %v3069 = vpow.pop %v3068
      %v3070 = vmul.f32 %v3021, 1.442695
      %v3071 = vpow.pop %v3070
      %v3072 = vmul.f32 %v3022, 1.442695
      %v3073 = vpow.pop %v3072
      %v3074 = vmul.f32 %v3023, 1.442695
      %v3075 = vpow.pop %v3074
      %v3076 = vmul.f32 %v3024, 1.442695
      %v3077 = vpow.pop %v3076
      %v3078 = vmul.f32 %v3025, 1.442695
      %v3079 = vpow.pop %v3078
      %v3080 = vmul.f32 %v3026, 1.442695
      %v3081 = vpow.pop %v3080
      %v3082 = vmul.f32 %v3027, 1.442695
      %v3083 = vpow.pop %v3082
      %v3084 = vmul.f32 %v3028, 1.442695
      %v3085 = vpow.pop %v3084
      %v3086 = vmul.f32 %v3029, 1.442695
      %v3087 = vpow.pop %v3086
      %v3088 = vmul.f32 %v3030, 1.442695
      %v3089 = vpow.pop %v3088
      %v3090 = vmul.f32 %v3031, 1.442695
      %v3091 = vpow.pop %v3090
      %v3092 = vsub.f32 %v3033, 1.0
      %v3093 = vsub.f32 %v3035, 1.0
      %v3094 = vsub.f32 %v3037, 1.0
      %v3095 = vsub.f32 %v3039, 1.0
      %v3096 = vsub.f32 %v3041, 1.0
      %v3097 = vsub.f32 %v3043, 1.0
      %v3098 = vsub.f32 %v3045, 1.0
      %v3099 = vsub.f32 %v3047, 1.0
      %v3100 = vsub.f32 %v3049, 1.0
      %v3101 = vsub.f32 %v3051, 1.0
      %v3102 = vsub.f32 %v3053, 1.0
      %v3103 = vsub.f32 %v3055, 1.0
      %v3104 = vsub.f32 %v3057, 1.0
      %v3105 = vsub.f32 %v3059, 1.0
      %v3106 = vsub.f32 %v3061, 1.0
      %v3107 = vsub.f32 %v3063, 1.0
      %v3108 = vsub.f32 %v3065, 1.0
      %v3109 = vsub.f32 %v3067, 1.0
      %v3110 = vsub.f32 %v3069, 1.0
      %v3111 = vsub.f32 %v3071, 1.0
      %v3112 = vsub.f32 %v3073, 1.0
      %v3113 = vsub.f32 %v3075, 1.0
      %v3114 = vsub.f32 %v3077, 1.0
      %v3115 = vsub.f32 %v3079, 1.0
      %v3116 = vsub.f32 %v3081, 1.0
      %v3117 = vsub.f32 %v3083, 1.0
      %v3118 = vsub.f32 %v3085, 1.0
      %v3119 = vsub.f32 %v3087, 1.0
      %v3120 = vsub.f32 %v3089, 1.0
      %v3121 = vsub.f32 %v3091, 1.0
      %v3122 = vsel %vm2972, %v2942, %v3092
      %v3123 = vsel %vm2973, %v2943, %v3093
      %v3124 = vsel %vm2974, %v2944, %v3094
      %v3125 = vsel %vm2975, %v2945, %v3095
      %v3126 = vsel %vm2976, %v2946, %v3096
      %v3127 = vsel %vm2977, %v2947, %v3097
      %v3128 = vsel %vm2978, %v2948, %v3098
      %v3129 = vsel %vm2979, %v2949, %v3099
      %v3130 = vsel %vm2980, %v2950, %v3100
      %v3131 = vsel %vm2981, %v2951, %v3101
      %v3132 = vsel %vm2982, %v2952, %v3102
      %v3133 = vsel %vm2983, %v2953, %v3103
      %v3134 = vsel %vm2984, %v2954, %v3104
      %v3135 = vsel %vm2985, %v2955, %v3105
      %v3136 = vsel %vm2986, %v2956, %v3106
      %v3137 = vsel %vm2987, %v2957, %v3107
      %v3138 = vsel %vm2988, %v2958, %v3108
      %v3139 = vsel %vm2989, %v2959, %v3109
      %v3140 = vsel %vm2990, %v2960, %v3110
      %v3141 = vsel %vm2991, %v2961, %v3111
      %v3142 = vsel %vm2992, %v2962, %v3112
      %v3143 = vsel %vm2993, %v2963, %v3113
      %v3144 = vsel %vm2994, %v2964, %v3114
      %v3145 = vsel %vm2995, %v2965, %v3115
      %v3146 = vsel %vm2996, %v2966, %v3116
      %v3147 = vsel %vm2997, %v2967, %v3117
      %v3148 = vsel %vm2998, %v2968, %v3118
      %v3149 = vsel %vm2999, %v2969, %v3119
      %v3150 = vsel %vm3000, %v2970, %v3120
      %v3151 = vsel %vm3001, %v2971, %v3121
      %vm3152 = vcmask 64512
      %3153 = vst.msk [vmem:[#allocation2] sm:$0xff] %vm3152, 0.0
      %3154 = vst.msk [vmem:[#allocation2 + $0x8] sm:$0xff] %vm3152, 0.0
      %vm3155 = vcmask 58368
      %3156 = vst.msk [vmem:[#allocation2 + $0x10] sm:$0x3] %vm3155, 0.0
      %3157 = vst.msk [vmem:[#allocation2 + $0x18] sm:$0xff] %vm3152, 0.0
      %3158 = vst.msk [vmem:[#allocation2 + $0x20] sm:$0xff] %vm3152, 0.0
      %3159 = vst.msk [vmem:[#allocation2 + $0x28] sm:$0x3] %vm3155, 0.0
      %3160 = vst.msk [vmem:[#allocation2 + $0x30] sm:$0xff] %vm3152, 0.0
      %3161 = vst.msk [vmem:[#allocation2 + $0x38] sm:$0xff] %vm3152, 0.0
      %3162 = vst.msk [vmem:[#allocation2 + $0x40] sm:$0x3] %vm3155, 0.0
      %3163 = vst.msk [vmem:[#allocation2 + $0x48] sm:$0xff] %vm3152, 0.0
      %3164 = vst.msk [vmem:[#allocation2 + $0x50] sm:$0xff] %vm3152, 0.0
      %3165 = vst.msk [vmem:[#allocation2 + $0x58] sm:$0x3] %vm3155, 0.0
      %3166 = vst.msk [vmem:[#allocation2 + $0x60] sm:$0xff] %vm3152, 0.0
      %3167 = vst.msk [vmem:[#allocation2 + $0x68] sm:$0xff] %vm3152, 0.0
      %3168 = vst.msk [vmem:[#allocation2 + $0x70] sm:$0x3] %vm3155, 0.0
      %3169 = vst.msk [vmem:[#allocation2 + $0x78] sm:$0xff] %vm3152, 0.0
      %3170 = vst.msk [vmem:[#allocation2 + $0x80] sm:$0xff] %vm3152, 0.0
      %3171 = vst.msk [vmem:[#allocation2 + $0x88] sm:$0x3] %vm3155, 0.0
      %3172 = vst.msk [vmem:[#allocation2 + $0x90] sm:$0xff] %vm3152, 0.0
      %3173 = vst.msk [vmem:[#allocation2 + $0x98] sm:$0xff] %vm3152, 0.0
      %3174 = vst.msk [vmem:[#allocation2 + $0xa0] sm:$0x3] %vm3155, 0.0
      %3175 = vst.msk [vmem:[#allocation2 + $0xa8] sm:$0xff] %vm3152, 0.0
      %3176 = vst.msk [vmem:[#allocation2 + $0xb0] sm:$0xff] %vm3152, 0.0
      %3177 = vst.msk [vmem:[#allocation2 + $0xb8] sm:$0x3] %vm3155, 0.0
      %3178 = vst.msk [vmem:[#allocation2 + $0xc0] sm:$0xff] %vm3152, 0.0
      %3179 = vst.msk [vmem:[#allocation2 + $0xc8] sm:$0xff] %vm3152, 0.0
      %3180 = vst.msk [vmem:[#allocation2 + $0xd0] sm:$0x3] %vm3155, 0.0
      %3181 = vst.msk [vmem:[#allocation2 + $0xd8] sm:$0xff] %vm3152, 0.0
      %3182 = vst.msk [vmem:[#allocation2 + $0xe0] sm:$0xff] %vm3152, 0.0
      %3183 = vst.msk [vmem:[#allocation2 + $0xe8] sm:$0x3] %vm3155, 0.0
      %3184 = vst.msk [vmem:[#allocation2 + $0xf0] sm:$0xff] %vm3152, 0.0
      %3185 = vst.msk [vmem:[#allocation2 + $0xf8] sm:$0xff] %vm3152, 0.0
      %3186 = vst.msk [vmem:[#allocation2 + $0x100] sm:$0x3] %vm3155, 0.0
      %3187 = vst.msk [vmem:[#allocation2 + $0x108] sm:$0xff] %vm3152, 0.0
      %3188 = vst.msk [vmem:[#allocation2 + $0x110] sm:$0xff] %vm3152, 0.0
      %3189 = vst.msk [vmem:[#allocation2 + $0x118] sm:$0x3] %vm3155, 0.0
      %3190 = vst.msk [vmem:[#allocation2 + $0x120] sm:$0xff] %vm3152, 0.0
      %3191 = vst.msk [vmem:[#allocation2 + $0x128] sm:$0xff] %vm3152, 0.0
      %3192 = vst.msk [vmem:[#allocation2 + $0x130] sm:$0x3] %vm3155, 0.0
      %3193 = vst.msk [vmem:[#allocation2 + $0x138] sm:$0xff] %vm3152, 0.0
      %3194 = vst.msk [vmem:[#allocation2 + $0x140] sm:$0xff] %vm3152, 0.0
      %3195 = vst.msk [vmem:[#allocation2 + $0x148] sm:$0x3] %vm3155, 0.0
      %3196 = vst.msk [vmem:[#allocation2 + $0x150] sm:$0xff] %vm3152, 0.0
      %3197 = vst.msk [vmem:[#allocation2 + $0x158] sm:$0xff] %vm3152, 0.0
      %3198 = vst.msk [vmem:[#allocation2 + $0x160] sm:$0x3] %vm3155, 0.0
      %3199 = vst.msk [vmem:[#allocation2 + $0x168] sm:$0xff] %vm3152, 0.0
      %3200 = vst.msk [vmem:[#allocation2 + $0x170] sm:$0xff] %vm3152, 0.0
      %3201 = vst.msk [vmem:[#allocation2 + $0x178] sm:$0x3] %vm3155, 0.0
      %3202 = vst.msk [vmem:[#allocation2 + $0x180] sm:$0xff] %vm3152, 0.0
      %3203 = vst.msk [vmem:[#allocation2 + $0x188] sm:$0xff] %vm3152, 0.0
      %3204 = vst.msk [vmem:[#allocation2 + $0x190] sm:$0x3] %vm3155, 0.0
      %s3205 = scalar_lea.vmem [#allocation2], 48
      %3206 = vst.msk [vmem:[%s3205 + $0x1] sm:$0xff] %vm3152, %v3122
      %3207 = vst.msk [vmem:[%s3205 + $0x9] sm:$0xff] %vm3152, %v3123
      %3208 = vst.msk [vmem:[%s3205 + $0x19] sm:$0xff] %vm3152, %v3124
      %3209 = vst.msk [vmem:[%s3205 + $0x21] sm:$0xff] %vm3152, %v3125
      %3210 = vst.msk [vmem:[%s3205 + $0x31] sm:$0xff] %vm3152, %v3126
      %3211 = vst.msk [vmem:[%s3205 + $0x39] sm:$0xff] %vm3152, %v3127
      %3212 = vst.msk [vmem:[%s3205 + $0x49] sm:$0xff] %vm3152, %v3128
      %3213 = vst.msk [vmem:[%s3205 + $0x51] sm:$0xff] %vm3152, %v3129
      %3214 = vst.msk [vmem:[%s3205 + $0x61] sm:$0xff] %vm3152, %v3130
      %3215 = vst.msk [vmem:[%s3205 + $0x69] sm:$0xff] %vm3152, %v3131
      %3216 = vst.msk [vmem:[%s3205 + $0x79] sm:$0xff] %vm3152, %v3132
      %3217 = vst.msk [vmem:[%s3205 + $0x81] sm:$0xff] %vm3152, %v3133
      %3218 = vst.msk [vmem:[%s3205 + $0x91] sm:$0xff] %vm3152, %v3134
      %3219 = vst.msk [vmem:[%s3205 + $0x99] sm:$0xff] %vm3152, %v3135
      %3220 = vst.msk [vmem:[%s3205 + $0xa9] sm:$0xff] %vm3152, %v3136
      %3221 = vst.msk [vmem:[%s3205 + $0xb1] sm:$0xff] %vm3152, %v3137
      %3222 = vst.msk [vmem:[%s3205 + $0xc1] sm:$0xff] %vm3152, %v3138
      %3223 = vst.msk [vmem:[%s3205 + $0xc9] sm:$0xff] %vm3152, %v3139
      %3224 = vst.msk [vmem:[%s3205 + $0xd9] sm:$0xff] %vm3152, %v3140
      %3225 = vst.msk [vmem:[%s3205 + $0xe1] sm:$0xff] %vm3152, %v3141
      %3226 = vst.msk [vmem:[%s3205 + $0xf1] sm:$0xff] %vm3152, %v3142
      %3227 = vst.msk [vmem:[%s3205 + $0xf9] sm:$0xff] %vm3152, %v3143
      %3228 = vst.msk [vmem:[%s3205 + $0x109] sm:$0xff] %vm3152, %v3144
      %3229 = vst.msk [vmem:[%s3205 + $0x111] sm:$0xff] %vm3152, %v3145
      %3230 = vst.msk [vmem:[%s3205 + $0x121] sm:$0xff] %vm3152, %v3146
      %3231 = vst.msk [vmem:[%s3205 + $0x129] sm:$0xff] %vm3152, %v3147
      %3232 = vst.msk [vmem:[%s3205 + $0x139] sm:$0xff] %vm3152, %v3148
      %3233 = vst.msk [vmem:[%s3205 + $0x141] sm:$0xff] %vm3152, %v3149
      %3234 = vst.msk [vmem:[%s3205 + $0x151] sm:$0xff] %vm3152, %v3150
      %3235 = vst.msk [vmem:[%s3205 + $0x159] sm:$0xff] %vm3152, %v3151
      %v3236 = vlaneseq
      %v3237 = vshrl.u32 %v3236, 7
      %v3238 = vsub.s32 1, %v3237
      %v3239 = vrot.slane %v289, %v3238
      %s3240 = scalar_lea.vmem [#allocation2], 24
      %v3241 = vld [vmem:[%s3240 + $0x1] sm:$0xff]
      %v3242 = vld [vmem:[%s3240 + $0x9] sm:$0xff]
      %v3243 = vld [vmem:[%s3240 + $0x19] sm:$0xff]
      %v3244 = vld [vmem:[%s3240 + $0x21] sm:$0xff]
      %v3245 = vld [vmem:[%s3240 + $0x31] sm:$0xff]
      %v3246 = vld [vmem:[%s3240 + $0x39] sm:$0xff]
      %v3247 = vld [vmem:[%s3240 + $0x49] sm:$0xff]
      %v3248 = vld [vmem:[%s3240 + $0x51] sm:$0xff]
      %v3249 = vld [vmem:[%s3240 + $0x61] sm:$0xff]
      %v3250 = vld [vmem:[%s3240 + $0x69] sm:$0xff]
      %v3251 = vld [vmem:[%s3240 + $0x79] sm:$0xff]
      %v3252 = vld [vmem:[%s3240 + $0x81] sm:$0xff]
      %v3253 = vld [vmem:[%s3240 + $0x91] sm:$0xff]
      %v3254 = vld [vmem:[%s3240 + $0x99] sm:$0xff]
      %v3255 = vld [vmem:[%s3240 + $0xa9] sm:$0xff]
      %v3256 = vld [vmem:[%s3240 + $0xb1] sm:$0xff]
      %v3257 = vld [vmem:[%s3240 + $0xc1] sm:$0xff]
      %v3258 = vld [vmem:[%s3240 + $0xc9] sm:$0xff]
      %v3259 = vld [vmem:[%s3240 + $0xd9] sm:$0xff]
      %v3260 = vld [vmem:[%s3240 + $0xe1] sm:$0xff]
      %v3261 = vld [vmem:[%s3240 + $0xf1] sm:$0xff]
      %v3262 = vld [vmem:[%s3240 + $0xf9] sm:$0xff]
      %v3263 = vld [vmem:[%s3240 + $0x109] sm:$0xff]
      %v3264 = vld [vmem:[%s3240 + $0x111] sm:$0xff]
      %v3265 = vld [vmem:[%s3240 + $0x121] sm:$0xff]
      %v3266 = vld [vmem:[%s3240 + $0x129] sm:$0xff]
      %v3267 = vld [vmem:[%s3240 + $0x139] sm:$0xff]
      %v3268 = vld [vmem:[%s3240 + $0x141] sm:$0xff]
      %v3269 = vld [vmem:[%s3240 + $0x151] sm:$0xff]
      %v3270 = vld [vmem:[%s3240 + $0x159] sm:$0xff]
      %v3271 = vld [vmem:[%s3240 + $0x169] sm:$0xff]
      %v3272 = vld [vmem:[%s3240 + $0x171] sm:$0xff]
      %v3273 = vld [vmem:[%s2] sm:$0xff]
      %v3275 = vsel %vm3152, %v3241, 0
      %v3278 = vsel %vm3152, %v3242, 0
      %v3281 = vsel %vm3152, %v3243, 0
      %v3284 = vsel %vm3152, %v3244, 0
      %v3287 = vsel %vm3152, %v3245, 0
      %v3290 = vsel %vm3152, %v3246, 0
      %v3293 = vsel %vm3152, %v3247, 0
      %v3296 = vsel %vm3152, %v3248, 0
      %v3299 = vsel %vm3152, %v3249, 0
      %v3302 = vsel %vm3152, %v3250, 0
      %v3305 = vsel %vm3152, %v3251, 0
      %v3308 = vsel %vm3152, %v3252, 0
      %v3311 = vsel %vm3152, %v3253, 0
      %v3314 = vsel %vm3152, %v3254, 0
      %v3317 = vsel %vm3152, %v3255, 0
      %v3320 = vsel %vm3152, %v3256, 0
      %v3323 = vsel %vm3152, %v3257, 0
      %v3326 = vsel %vm3152, %v3258, 0
      %v3329 = vsel %vm3152, %v3259, 0
      %v3332 = vsel %vm3152, %v3260, 0
      %v3335 = vsel %vm3152, %v3261, 0
      %v3338 = vsel %vm3152, %v3262, 0
      %v3341 = vsel %vm3152, %v3263, 0
      %v3344 = vsel %vm3152, %v3264, 0
      %v3347 = vsel %vm3152, %v3265, 0
      %v3350 = vsel %vm3152, %v3266, 0
      %v3353 = vsel %vm3152, %v3267, 0
      %v3356 = vsel %vm3152, %v3268, 0
      %v3359 = vsel %vm3152, %v3269, 0
      %v3362 = vsel %vm3152, %v3270, 0
      %v3365 = vsel %vm3152, %v3271, 0
      %v3368 = vsel %vm3152, %v3272, 0
      %3370 = vmatprep.subr.mxu0 0.0
      %3371 = vmatpush1.msra.mxu0 0.0
      %3372 = vmatprep.subr.mxu0 0.0
      %3373 = vmatpush1.msra.mxu0 0.0
      %3374 = vmatprep.subr.mxu0 0.0
      %3375 = vmatpush1.msra.mxu0 0.0
      %3376 = vmatprep.subr.mxu0 0.0
      %3377 = vmatpush1.msra.mxu0 0.0
      %3378 = vmatprep.subr.mxu0 0.0
      %3379 = vmatpush1.msra.mxu0 0.0
      %3380 = vmatprep.subr.mxu0 0.0
      %3381 = vmatpush1.msra.mxu0 0.0
      %3382 = vmatprep.subr.mxu0 0.0
      %3383 = vmatpush1.msra.mxu0 0.0
      %3384 = vmatprep.subr.mxu0 0.0
      %3385 = vmatpush1.msra.mxu0 0.0
      %3386 = vmatprep.subr.mxu0 0.0
      %3387 = vmatpush1.msra.mxu0 0.0
      %3388 = vmatprep.subr.mxu0 0.0
      %3389 = vmatpush1.msra.mxu0 0.0
      %3390 = vmatprep.subr.mxu0 0.0
      %3391 = vmatpush1.msra.mxu0 0.0
      %3392 = vmatprep.subr.mxu0 0.0
      %3393 = vmatpush1.msra.mxu0 0.0
      %3394 = vmatprep.subr.mxu0 0.0
      %3395 = vmatpush1.msra.mxu0 0.0
      %3396 = vmatprep.subr.mxu0 0.0
      %3397 = vmatpush1.msra.mxu0 0.0
      %3398 = vmatprep.subr.mxu0 0.0
      %3399 = vmatpush1.msra.mxu0 0.0
      %3400 = vmatprep.subr.mxu0 0.0
      %3401 = vmatpush1.msra.mxu0 %v3273
      %3402 = vmatprep.subr.mxu0 0.0
      %3403 = vmatpush2.msra.mxu0 0.0
      %3404 = vmatprep.subr.mxu0 0.0
      %3405 = vmatpush2.msra.mxu0 0.0
      %3406 = vmatprep.subr.mxu0 0.0
      %3407 = vmatpush2.msra.mxu0 0.0
      %3408 = vmatprep.subr.mxu0 0.0
      %3409 = vmatpush2.msra.mxu0 0.0
      %3410 = vmatprep.subr.mxu0 0.0
      %3411 = vmatpush2.msra.mxu0 0.0
      %3412 = vmatprep.subr.mxu0 0.0
      %3413 = vmatpush2.msra.mxu0 0.0
      %3414 = vmatprep.subr.mxu0 0.0
      %3415 = vmatpush2.msra.mxu0 0.0
      %3416 = vmatprep.subr.mxu0 0.0
      %3417 = vmatpush2.msra.mxu0 0.0
      %3418 = vmatprep.subr.mxu0 0.0
      %3419 = vmatpush2.msra.mxu0 0.0
      %3420 = vmatprep.subr.mxu0 0.0
      %3421 = vmatpush2.msra.mxu0 0.0
      %3422 = vmatprep.subr.mxu0 0.0
      %3423 = vmatpush2.msra.mxu0 0.0
      %3424 = vmatprep.subr.mxu0 0.0
      %3425 = vmatpush2.msra.mxu0 0.0
      %3426 = vmatprep.subr.mxu0 0.0
      %3427 = vmatpush2.msra.mxu0 0.0
      %3428 = vmatprep.subr.mxu0 0.0
      %3429 = vmatpush2.msra.mxu0 0.0
      %3430 = vmatprep.subr.mxu0 0.0
      %3431 = vmatpush2.msra.mxu0 0.0
      %3432 = vmatprep.subr.mxu0 0.0
      %3433 = vmatpush2.msra.mxu0 0.0
      %3434 = vmatprep.mubr.f32.mxu0 0.0
      %3435 = vmatmul.mubr.f32.gmra.mxu0 %v3275
      %v3436 = vpop.f32.mrf.mxu0
      %v3437 = vadd.f32 0.0, %v3436
      %v3438 = vpop.f32.mrf.mxu0
      %3439 = vmatprep.mubr.f32.mxu0 0.0
      %3440 = vmatmul.mubr.f32.gmra.mxu0 %v3278
      %v3441 = vpop.f32.mrf.mxu0
      %v3442 = vadd.f32 0.0, %v3441
      %v3443 = vpop.f32.mrf.mxu0
      %3444 = vmatprep.mubr.f32.mxu0 0.0
      %3445 = vmatmul.mubr.f32.gmra.mxu0 %v3281
      %v3446 = vpop.f32.mrf.mxu0
      %v3447 = vadd.f32 0.0, %v3446
      %v3448 = vpop.f32.mrf.mxu0
      %3449 = vmatprep.mubr.f32.mxu0 0.0
      %3450 = vmatmul.mubr.f32.gmra.mxu0 %v3284
      %v3451 = vpop.f32.mrf.mxu0
      %v3452 = vadd.f32 0.0, %v3451
      %v3453 = vpop.f32.mrf.mxu0
      %3454 = vmatprep.mubr.f32.mxu0 0.0
      %3455 = vmatmul.mubr.f32.gmra.mxu0 %v3287
      %v3456 = vpop.f32.mrf.mxu0
      %v3457 = vadd.f32 0.0, %v3456
      %v3458 = vpop.f32.mrf.mxu0
      %3459 = vmatprep.mubr.f32.mxu0 0.0
      %3460 = vmatmul.mubr.f32.gmra.mxu0 %v3290
      %v3461 = vpop.f32.mrf.mxu0
      %v3462 = vadd.f32 0.0, %v3461
      %v3463 = vpop.f32.mrf.mxu0
      %3464 = vmatprep.mubr.f32.mxu0 0.0
      %3465 = vmatmul.mubr.f32.gmra.mxu0 %v3293
      %v3466 = vpop.f32.mrf.mxu0
      %v3467 = vadd.f32 0.0, %v3466
      %v3468 = vpop.f32.mrf.mxu0
      %3469 = vmatprep.mubr.f32.mxu0 0.0
      %3470 = vmatmul.mubr.f32.gmra.mxu0 %v3296
      %v3471 = vpop.f32.mrf.mxu0
      %v3472 = vadd.f32 0.0, %v3471
      %v3473 = vpop.f32.mrf.mxu0
      %3474 = vmatprep.mubr.f32.mxu0 0.0
      %3475 = vmatmul.mubr.f32.gmra.mxu0 %v3299
      %v3476 = vpop.f32.mrf.mxu0
      %v3477 = vadd.f32 0.0, %v3476
      %v3478 = vpop.f32.mrf.mxu0
      %3479 = vmatprep.mubr.f32.mxu0 0.0
      %3480 = vmatmul.mubr.f32.gmra.mxu0 %v3302
      %v3481 = vpop.f32.mrf.mxu0
      %v3482 = vadd.f32 0.0, %v3481
      %v3483 = vpop.f32.mrf.mxu0
      %3484 = vmatprep.mubr.f32.mxu0 0.0
      %3485 = vmatmul.mubr.f32.gmra.mxu0 %v3305
      %v3486 = vpop.f32.mrf.mxu0
      %v3487 = vadd.f32 0.0, %v3486
      %v3488 = vpop.f32.mrf.mxu0
      %3489 = vmatprep.mubr.f32.mxu0 0.0
      %3490 = vmatmul.mubr.f32.gmra.mxu0 %v3308
      %v3491 = vpop.f32.mrf.mxu0
      %v3492 = vadd.f32 0.0, %v3491
      %v3493 = vpop.f32.mrf.mxu0
      %3494 = vmatprep.mubr.f32.mxu0 0.0
      %3495 = vmatmul.mubr.f32.gmra.mxu0 %v3311
      %v3496 = vpop.f32.mrf.mxu0
      %v3497 = vadd.f32 0.0, %v3496
      %v3498 = vpop.f32.mrf.mxu0
      %3499 = vmatprep.mubr.f32.mxu0 0.0
      %3500 = vmatmul.mubr.f32.gmra.mxu0 %v3314
      %v3501 = vpop.f32.mrf.mxu0
      %v3502 = vadd.f32 0.0, %v3501
      %v3503 = vpop.f32.mrf.mxu0
      %3504 = vmatprep.mubr.f32.mxu0 0.0
      %3505 = vmatmul.mubr.f32.gmra.mxu0 %v3317
      %v3506 = vpop.f32.mrf.mxu0
      %v3507 = vadd.f32 0.0, %v3506
      %v3508 = vpop.f32.mrf.mxu0
      %3509 = vmatprep.mubr.f32.mxu0 0.0
      %3510 = vmatmul.mubr.f32.gmra.mxu0 %v3320
      %v3511 = vpop.f32.mrf.mxu0
      %v3512 = vadd.f32 0.0, %v3511
      %v3513 = vpop.f32.mrf.mxu0
      %3514 = vmatprep.mubr.f32.mxu0 0.0
      %3515 = vmatmul.mubr.f32.gmra.mxu0 %v3323
      %v3516 = vpop.f32.mrf.mxu0
      %v3517 = vadd.f32 0.0, %v3516
      %v3518 = vpop.f32.mrf.mxu0
      %3519 = vmatprep.mubr.f32.mxu0 0.0
      %3520 = vmatmul.mubr.f32.gmra.mxu0 %v3326
      %v3521 = vpop.f32.mrf.mxu0
      %v3522 = vadd.f32 0.0, %v3521
      %v3523 = vpop.f32.mrf.mxu0
      %3524 = vmatprep.mubr.f32.mxu0 0.0
      %3525 = vmatmul.mubr.f32.gmra.mxu0 %v3329
      %v3526 = vpop.f32.mrf.mxu0
      %v3527 = vadd.f32 0.0, %v3526
      %v3528 = vpop.f32.mrf.mxu0
      %3529 = vmatprep.mubr.f32.mxu0 0.0
      %3530 = vmatmul.mubr.f32.gmra.mxu0 %v3332
      %v3531 = vpop.f32.mrf.mxu0
      %v3532 = vadd.f32 0.0, %v3531
      %v3533 = vpop.f32.mrf.mxu0
      %3534 = vmatprep.mubr.f32.mxu0 0.0
      %3535 = vmatmul.mubr.f32.gmra.mxu0 %v3335
      %v3536 = vpop.f32.mrf.mxu0
      %v3537 = vadd.f32 0.0, %v3536
      %v3538 = vpop.f32.mrf.mxu0
      %3539 = vmatprep.mubr.f32.mxu0 0.0
      %3540 = vmatmul.mubr.f32.gmra.mxu0 %v3338
      %v3541 = vpop.f32.mrf.mxu0
      %v3542 = vadd.f32 0.0, %v3541
      %v3543 = vpop.f32.mrf.mxu0
      %3544 = vmatprep.mubr.f32.mxu0 0.0
      %3545 = vmatmul.mubr.f32.gmra.mxu0 %v3341
      %v3546 = vpop.f32.mrf.mxu0
      %v3547 = vadd.f32 0.0, %v3546
      %v3548 = vpop.f32.mrf.mxu0
      %3549 = vmatprep.mubr.f32.mxu0 0.0
      %3550 = vmatmul.mubr.f32.gmra.mxu0 %v3344
      %v3551 = vpop.f32.mrf.mxu0
      %v3552 = vadd.f32 0.0, %v3551
      %v3553 = vpop.f32.mrf.mxu0
      %3554 = vmatprep.mubr.f32.mxu0 0.0
      %3555 = vmatmul.mubr.f32.gmra.mxu0 %v3347
      %v3556 = vpop.f32.mrf.mxu0
      %v3557 = vadd.f32 0.0, %v3556
      %v3558 = vpop.f32.mrf.mxu0
      %3559 = vmatprep.mubr.f32.mxu0 0.0
      %3560 = vmatmul.mubr.f32.gmra.mxu0 %v3350
      %v3561 = vpop.f32.mrf.mxu0
      %v3562 = vadd.f32 0.0, %v3561
      %v3563 = vpop.f32.mrf.mxu0
      %3564 = vmatprep.mubr.f32.mxu0 0.0
      %3565 = vmatmul.mubr.f32.gmra.mxu0 %v3353
      %v3566 = vpop.f32.mrf.mxu0
      %v3567 = vadd.f32 0.0, %v3566
      %v3568 = vpop.f32.mrf.mxu0
      %3569 = vmatprep.mubr.f32.mxu0 0.0
      %3570 = vmatmul.mubr.f32.gmra.mxu0 %v3356
      %v3571 = vpop.f32.mrf.mxu0
      %v3572 = vadd.f32 0.0, %v3571
      %v3573 = vpop.f32.mrf.mxu0
      %3574 = vmatprep.mubr.f32.mxu0 0.0
      %3575 = vmatmul.mubr.f32.gmra.mxu0 %v3359
      %v3576 = vpop.f32.mrf.mxu0
      %v3577 = vadd.f32 0.0, %v3576
      %v3578 = vpop.f32.mrf.mxu0
      %3579 = vmatprep.mubr.f32.mxu0 0.0
      %3580 = vmatmul.mubr.f32.gmra.mxu0 %v3362
      %v3581 = vpop.f32.mrf.mxu0
      %v3582 = vadd.f32 0.0, %v3581
      %v3583 = vpop.f32.mrf.mxu0
      %3584 = vmatprep.mubr.f32.mxu0 0.0
      %3585 = vmatmul.mubr.f32.gmra.mxu0 %v3365
      %v3586 = vpop.f32.mrf.mxu0
      %v3587 = vadd.f32 0.0, %v3586
      %v3588 = vpop.f32.mrf.mxu0
      %3589 = vmatprep.mubr.f32.mxu0 0.0
      %3590 = vmatmul.mubr.f32.gmra.mxu0 %v3368
      %v3591 = vpop.f32.mrf.mxu0
      %v3592 = vadd.f32 0.0, %v3591
      %v3593 = vpop.f32.mrf.mxu0
      %3594 = vdwg.mxu0
      %v3595 = vadd.f32 %v3239, %v3437
      %v3596 = vadd.f32 %v3239, %v3442
      %v3597 = vadd.f32 %v3239, %v3447
      %v3598 = vadd.f32 %v3239, %v3452
      %v3599 = vadd.f32 %v3239, %v3457
      %v3600 = vadd.f32 %v3239, %v3462
      %v3601 = vadd.f32 %v3239, %v3467
      %v3602 = vadd.f32 %v3239, %v3472
      %v3603 = vadd.f32 %v3239, %v3477
      %v3604 = vadd.f32 %v3239, %v3482
      %v3605 = vadd.f32 %v3239, %v3487
      %v3606 = vadd.f32 %v3239, %v3492
      %v3607 = vadd.f32 %v3239, %v3497
      %v3608 = vadd.f32 %v3239, %v3502
      %v3609 = vadd.f32 %v3239, %v3507
      %v3610 = vadd.f32 %v3239, %v3512
      %v3611 = vadd.f32 %v3239, %v3517
      %v3612 = vadd.f32 %v3239, %v3522
      %v3613 = vadd.f32 %v3239, %v3527
      %v3614 = vadd.f32 %v3239, %v3532
      %v3615 = vadd.f32 %v3239, %v3537
      %v3616 = vadd.f32 %v3239, %v3542
      %v3617 = vadd.f32 %v3239, %v3547
      %v3618 = vadd.f32 %v3239, %v3552
      %v3619 = vadd.f32 %v3239, %v3557
      %v3620 = vadd.f32 %v3239, %v3562
      %v3621 = vadd.f32 %v3239, %v3567
      %v3622 = vadd.f32 %v3239, %v3572
      %v3623 = vadd.f32 %v3239, %v3577
      %v3624 = vadd.f32 %v3239, %v3582
      %v3625 = vadd.f32 %v3239, %v3587
      %v3626 = vadd.f32 %v3239, %v3592
      %v3627 = vld [vmem:[%s3240] sm:$0xff]
      %v3628 = vld [vmem:[%s3240 + $0x8] sm:$0xff]
      %v3629 = vld [vmem:[%s3240 + $0x18] sm:$0xff]
      %v3630 = vld [vmem:[%s3240 + $0x20] sm:$0xff]
      %v3631 = vld [vmem:[%s3240 + $0x30] sm:$0xff]
      %v3632 = vld [vmem:[%s3240 + $0x38] sm:$0xff]
      %v3633 = vld [vmem:[%s3240 + $0x48] sm:$0xff]
      %v3634 = vld [vmem:[%s3240 + $0x50] sm:$0xff]
      %v3635 = vld [vmem:[%s3240 + $0x60] sm:$0xff]
      %v3636 = vld [vmem:[%s3240 + $0x68] sm:$0xff]
      %v3637 = vld [vmem:[%s3240 + $0x78] sm:$0xff]
      %v3638 = vld [vmem:[%s3240 + $0x80] sm:$0xff]
      %v3639 = vld [vmem:[%s3240 + $0x90] sm:$0xff]
      %v3640 = vld [vmem:[%s3240 + $0x98] sm:$0xff]
      %v3641 = vld [vmem:[%s3240 + $0xa8] sm:$0xff]
      %v3642 = vld [vmem:[%s3240 + $0xb0] sm:$0xff]
      %v3643 = vld [vmem:[%s3240 + $0xc0] sm:$0xff]
      %v3644 = vld [vmem:[%s3240 + $0xc8] sm:$0xff]
      %v3645 = vld [vmem:[%s3240 + $0xd8] sm:$0xff]
      %v3646 = vld [vmem:[%s3240 + $0xe0] sm:$0xff]
      %v3647 = vld [vmem:[%s3240 + $0xf0] sm:$0xff]
      %v3648 = vld [vmem:[%s3240 + $0xf8] sm:$0xff]
      %v3649 = vld [vmem:[%s3240 + $0x108] sm:$0xff]
      %v3650 = vld [vmem:[%s3240 + $0x110] sm:$0xff]
      %v3651 = vld [vmem:[%s3240 + $0x120] sm:$0xff]
      %v3652 = vld [vmem:[%s3240 + $0x128] sm:$0xff]
      %v3653 = vld [vmem:[%s3240 + $0x138] sm:$0xff]
      %v3654 = vld [vmem:[%s3240 + $0x140] sm:$0xff]
      %v3655 = vld [vmem:[%s3240 + $0x150] sm:$0xff]
      %v3656 = vld [vmem:[%s3240 + $0x158] sm:$0xff]
      %v3657 = vld [vmem:[%s3240 + $0x168] sm:$0xff]
      %v3658 = vld [vmem:[%s3240 + $0x170] sm:$0xff]
      %s3659 = scalar_lea.vmem %s2, 8
      %v3660 = vld [vmem:[%s3659] sm:$0xff]
      %v3662 = vsel %vm3152, %v3627, 0
      %v3665 = vsel %vm3152, %v3628, 0
      %v3668 = vsel %vm3152, %v3629, 0
      %v3671 = vsel %vm3152, %v3630, 0
      %v3674 = vsel %vm3152, %v3631, 0
      %v3677 = vsel %vm3152, %v3632, 0
      %v3680 = vsel %vm3152, %v3633, 0
      %v3683 = vsel %vm3152, %v3634, 0
      %v3686 = vsel %vm3152, %v3635, 0
      %v3689 = vsel %vm3152, %v3636, 0
      %v3692 = vsel %vm3152, %v3637, 0
      %v3695 = vsel %vm3152, %v3638, 0
      %v3698 = vsel %vm3152, %v3639, 0
      %v3701 = vsel %vm3152, %v3640, 0
      %v3704 = vsel %vm3152, %v3641, 0
      %v3707 = vsel %vm3152, %v3642, 0
      %v3710 = vsel %vm3152, %v3643, 0
      %v3713 = vsel %vm3152, %v3644, 0
      %v3716 = vsel %vm3152, %v3645, 0
      %v3719 = vsel %vm3152, %v3646, 0
      %v3722 = vsel %vm3152, %v3647, 0
      %v3725 = vsel %vm3152, %v3648, 0
      %v3728 = vsel %vm3152, %v3649, 0
      %v3731 = vsel %vm3152, %v3650, 0
      %v3734 = vsel %vm3152, %v3651, 0
      %v3737 = vsel %vm3152, %v3652, 0
      %v3740 = vsel %vm3152, %v3653, 0
      %v3743 = vsel %vm3152, %v3654, 0
      %v3746 = vsel %vm3152, %v3655, 0
      %v3749 = vsel %vm3152, %v3656, 0
      %v3752 = vsel %vm3152, %v3657, 0
      %v3755 = vsel %vm3152, %v3658, 0
      %3757 = vmatprep.subr.mxu0 0.0
      %3758 = vmatpush1.msra.mxu0 0.0
      %3759 = vmatprep.subr.mxu0 0.0
      %3760 = vmatpush1.msra.mxu0 0.0
      %3761 = vmatprep.subr.mxu0 0.0
      %3762 = vmatpush1.msra.mxu0 0.0
      %3763 = vmatprep.subr.mxu0 0.0
      %3764 = vmatpush1.msra.mxu0 0.0
      %3765 = vmatprep.subr.mxu0 0.0
      %3766 = vmatpush1.msra.mxu0 0.0
      %3767 = vmatprep.subr.mxu0 0.0
      %3768 = vmatpush1.msra.mxu0 0.0
      %3769 = vmatprep.subr.mxu0 0.0
      %3770 = vmatpush1.msra.mxu0 0.0
      %3771 = vmatprep.subr.mxu0 0.0
      %3772 = vmatpush1.msra.mxu0 0.0
      %3773 = vmatprep.subr.mxu0 0.0
      %3774 = vmatpush1.msra.mxu0 0.0
      %3775 = vmatprep.subr.mxu0 0.0
      %3776 = vmatpush1.msra.mxu0 0.0
      %3777 = vmatprep.subr.mxu0 0.0
      %3778 = vmatpush1.msra.mxu0 0.0
      %3779 = vmatprep.subr.mxu0 0.0
      %3780 = vmatpush1.msra.mxu0 0.0
      %3781 = vmatprep.subr.mxu0 0.0
      %3782 = vmatpush1.msra.mxu0 0.0
      %3783 = vmatprep.subr.mxu0 0.0
      %3784 = vmatpush1.msra.mxu0 0.0
      %3785 = vmatprep.subr.mxu0 0.0
      %3786 = vmatpush1.msra.mxu0 0.0
      %3787 = vmatprep.subr.mxu0 0.0
      %3788 = vmatpush1.msra.mxu0 %v3660
      %3789 = vmatprep.subr.mxu0 0.0
      %3790 = vmatpush2.msra.mxu0 0.0
      %3791 = vmatprep.subr.mxu0 0.0
      %3792 = vmatpush2.msra.mxu0 0.0
      %3793 = vmatprep.subr.mxu0 0.0
      %3794 = vmatpush2.msra.mxu0 0.0
      %3795 = vmatprep.subr.mxu0 0.0
      %3796 = vmatpush2.msra.mxu0 0.0
      %3797 = vmatprep.subr.mxu0 0.0
      %3798 = vmatpush2.msra.mxu0 0.0
      %3799 = vmatprep.subr.mxu0 0.0
      %3800 = vmatpush2.msra.mxu0 0.0
      %3801 = vmatprep.subr.mxu0 0.0
      %3802 = vmatpush2.msra.mxu0 0.0
      %3803 = vmatprep.subr.mxu0 0.0
      %3804 = vmatpush2.msra.mxu0 0.0
      %3805 = vmatprep.subr.mxu0 0.0
      %3806 = vmatpush2.msra.mxu0 0.0
      %3807 = vmatprep.subr.mxu0 0.0
      %3808 = vmatpush2.msra.mxu0 0.0
      %3809 = vmatprep.subr.mxu0 0.0
      %3810 = vmatpush2.msra.mxu0 0.0
      %3811 = vmatprep.subr.mxu0 0.0
      %3812 = vmatpush2.msra.mxu0 0.0
      %3813 = vmatprep.subr.mxu0 0.0
      %3814 = vmatpush2.msra.mxu0 0.0
      %3815 = vmatprep.subr.mxu0 0.0
      %3816 = vmatpush2.msra.mxu0 0.0
      %3817 = vmatprep.subr.mxu0 0.0
      %3818 = vmatpush2.msra.mxu0 0.0
      %3819 = vmatprep.subr.mxu0 0.0
      %3820 = vmatpush2.msra.mxu0 0.0
      %3821 = vmatprep.mubr.f32.mxu0 0.0
      %3822 = vmatmul.mubr.f32.gmra.mxu0 %v3662
      %v3823 = vpop.f32.mrf.mxu0
      %v3824 = vadd.f32 0.0, %v3823
      %v3825 = vpop.f32.mrf.mxu0
      %3826 = vmatprep.mubr.f32.mxu0 0.0
      %3827 = vmatmul.mubr.f32.gmra.mxu0 %v3665
      %v3828 = vpop.f32.mrf.mxu0
      %v3829 = vadd.f32 0.0, %v3828
      %v3830 = vpop.f32.mrf.mxu0
      %3831 = vmatprep.mubr.f32.mxu0 0.0
      %3832 = vmatmul.mubr.f32.gmra.mxu0 %v3668
      %v3833 = vpop.f32.mrf.mxu0
      %v3834 = vadd.f32 0.0, %v3833
      %v3835 = vpop.f32.mrf.mxu0
      %3836 = vmatprep.mubr.f32.mxu0 0.0
      %3837 = vmatmul.mubr.f32.gmra.mxu0 %v3671
      %v3838 = vpop.f32.mrf.mxu0
      %v3839 = vadd.f32 0.0, %v3838
      %v3840 = vpop.f32.mrf.mxu0
      %3841 = vmatprep.mubr.f32.mxu0 0.0
      %3842 = vmatmul.mubr.f32.gmra.mxu0 %v3674
      %v3843 = vpop.f32.mrf.mxu0
      %v3844 = vadd.f32 0.0, %v3843
      %v3845 = vpop.f32.mrf.mxu0
      %3846 = vmatprep.mubr.f32.mxu0 0.0
      %3847 = vmatmul.mubr.f32.gmra.mxu0 %v3677
      %v3848 = vpop.f32.mrf.mxu0
      %v3849 = vadd.f32 0.0, %v3848
      %v3850 = vpop.f32.mrf.mxu0
      %3851 = vmatprep.mubr.f32.mxu0 0.0
      %3852 = vmatmul.mubr.f32.gmra.mxu0 %v3680
      %v3853 = vpop.f32.mrf.mxu0
      %v3854 = vadd.f32 0.0, %v3853
      %v3855 = vpop.f32.mrf.mxu0
      %3856 = vmatprep.mubr.f32.mxu0 0.0
      %3857 = vmatmul.mubr.f32.gmra.mxu0 %v3683
      %v3858 = vpop.f32.mrf.mxu0
      %v3859 = vadd.f32 0.0, %v3858
      %v3860 = vpop.f32.mrf.mxu0
      %3861 = vmatprep.mubr.f32.mxu0 0.0
      %3862 = vmatmul.mubr.f32.gmra.mxu0 %v3686
      %v3863 = vpop.f32.mrf.mxu0
      %v3864 = vadd.f32 0.0, %v3863
      %v3865 = vpop.f32.mrf.mxu0
      %3866 = vmatprep.mubr.f32.mxu0 0.0
      %3867 = vmatmul.mubr.f32.gmra.mxu0 %v3689
      %v3868 = vpop.f32.mrf.mxu0
      %v3869 = vadd.f32 0.0, %v3868
      %v3870 = vpop.f32.mrf.mxu0
      %3871 = vmatprep.mubr.f32.mxu0 0.0
      %3872 = vmatmul.mubr.f32.gmra.mxu0 %v3692
      %v3873 = vpop.f32.mrf.mxu0
      %v3874 = vadd.f32 0.0, %v3873
      %v3875 = vpop.f32.mrf.mxu0
      %3876 = vmatprep.mubr.f32.mxu0 0.0
      %3877 = vmatmul.mubr.f32.gmra.mxu0 %v3695
      %v3878 = vpop.f32.mrf.mxu0
      %v3879 = vadd.f32 0.0, %v3878
      %v3880 = vpop.f32.mrf.mxu0
      %3881 = vmatprep.mubr.f32.mxu0 0.0
      %3882 = vmatmul.mubr.f32.gmra.mxu0 %v3698
      %v3883 = vpop.f32.mrf.mxu0
      %v3884 = vadd.f32 0.0, %v3883
      %v3885 = vpop.f32.mrf.mxu0
      %3886 = vmatprep.mubr.f32.mxu0 0.0
      %3887 = vmatmul.mubr.f32.gmra.mxu0 %v3701
      %v3888 = vpop.f32.mrf.mxu0
      %v3889 = vadd.f32 0.0, %v3888
      %v3890 = vpop.f32.mrf.mxu0
      %3891 = vmatprep.mubr.f32.mxu0 0.0
      %3892 = vmatmul.mubr.f32.gmra.mxu0 %v3704
      %v3893 = vpop.f32.mrf.mxu0
      %v3894 = vadd.f32 0.0, %v3893
      %v3895 = vpop.f32.mrf.mxu0
      %3896 = vmatprep.mubr.f32.mxu0 0.0
      %3897 = vmatmul.mubr.f32.gmra.mxu0 %v3707
      %v3898 = vpop.f32.mrf.mxu0
      %v3899 = vadd.f32 0.0, %v3898
      %v3900 = vpop.f32.mrf.mxu0
      %3901 = vmatprep.mubr.f32.mxu0 0.0
      %3902 = vmatmul.mubr.f32.gmra.mxu0 %v3710
      %v3903 = vpop.f32.mrf.mxu0
      %v3904 = vadd.f32 0.0, %v3903
      %v3905 = vpop.f32.mrf.mxu0
      %3906 = vmatprep.mubr.f32.mxu0 0.0
      %3907 = vmatmul.mubr.f32.gmra.mxu0 %v3713
      %v3908 = vpop.f32.mrf.mxu0
      %v3909 = vadd.f32 0.0, %v3908
      %v3910 = vpop.f32.mrf.mxu0
      %3911 = vmatprep.mubr.f32.mxu0 0.0
      %3912 = vmatmul.mubr.f32.gmra.mxu0 %v3716
      %v3913 = vpop.f32.mrf.mxu0
      %v3914 = vadd.f32 0.0, %v3913
      %v3915 = vpop.f32.mrf.mxu0
      %3916 = vmatprep.mubr.f32.mxu0 0.0
      %3917 = vmatmul.mubr.f32.gmra.mxu0 %v3719
      %v3918 = vpop.f32.mrf.mxu0
      %v3919 = vadd.f32 0.0, %v3918
      %v3920 = vpop.f32.mrf.mxu0
      %3921 = vmatprep.mubr.f32.mxu0 0.0
      %3922 = vmatmul.mubr.f32.gmra.mxu0 %v3722
      %v3923 = vpop.f32.mrf.mxu0
      %v3924 = vadd.f32 0.0, %v3923
      %v3925 = vpop.f32.mrf.mxu0
      %3926 = vmatprep.mubr.f32.mxu0 0.0
      %3927 = vmatmul.mubr.f32.gmra.mxu0 %v3725
      %v3928 = vpop.f32.mrf.mxu0
      %v3929 = vadd.f32 0.0, %v3928
      %v3930 = vpop.f32.mrf.mxu0
      %3931 = vmatprep.mubr.f32.mxu0 0.0
      %3932 = vmatmul.mubr.f32.gmra.mxu0 %v3728
      %v3933 = vpop.f32.mrf.mxu0
      %v3934 = vadd.f32 0.0, %v3933
      %v3935 = vpop.f32.mrf.mxu0
      %3936 = vmatprep.mubr.f32.mxu0 0.0
      %3937 = vmatmul.mubr.f32.gmra.mxu0 %v3731
      %v3938 = vpop.f32.mrf.mxu0
      %v3939 = vadd.f32 0.0, %v3938
      %v3940 = vpop.f32.mrf.mxu0
      %3941 = vmatprep.mubr.f32.mxu0 0.0
      %3942 = vmatmul.mubr.f32.gmra.mxu0 %v3734
      %v3943 = vpop.f32.mrf.mxu0
      %v3944 = vadd.f32 0.0, %v3943
      %v3945 = vpop.f32.mrf.mxu0
      %3946 = vmatprep.mubr.f32.mxu0 0.0
      %3947 = vmatmul.mubr.f32.gmra.mxu0 %v3737
      %v3948 = vpop.f32.mrf.mxu0
      %v3949 = vadd.f32 0.0, %v3948
      %v3950 = vpop.f32.mrf.mxu0
      %3951 = vmatprep.mubr.f32.mxu0 0.0
      %3952 = vmatmul.mubr.f32.gmra.mxu0 %v3740
      %v3953 = vpop.f32.mrf.mxu0
      %v3954 = vadd.f32 0.0, %v3953
      %v3955 = vpop.f32.mrf.mxu0
      %3956 = vmatprep.mubr.f32.mxu0 0.0
      %3957 = vmatmul.mubr.f32.gmra.mxu0 %v3743
      %v3958 = vpop.f32.mrf.mxu0
      %v3959 = vadd.f32 0.0, %v3958
      %v3960 = vpop.f32.mrf.mxu0
      %3961 = vmatprep.mubr.f32.mxu0 0.0
      %3962 = vmatmul.mubr.f32.gmra.mxu0 %v3746
      %v3963 = vpop.f32.mrf.mxu0
      %v3964 = vadd.f32 0.0, %v3963
      %v3965 = vpop.f32.mrf.mxu0
      %3966 = vmatprep.mubr.f32.mxu0 0.0
      %3967 = vmatmul.mubr.f32.gmra.mxu0 %v3749
      %v3968 = vpop.f32.mrf.mxu0
      %v3969 = vadd.f32 0.0, %v3968
      %v3970 = vpop.f32.mrf.mxu0
      %3971 = vmatprep.mubr.f32.mxu0 0.0
      %3972 = vmatmul.mubr.f32.gmra.mxu0 %v3752
      %v3973 = vpop.f32.mrf.mxu0
      %v3974 = vadd.f32 0.0, %v3973
      %v3975 = vpop.f32.mrf.mxu0
      %3976 = vmatprep.mubr.f32.mxu0 0.0
      %3977 = vmatmul.mubr.f32.gmra.mxu0 %v3755
      %v3978 = vpop.f32.mrf.mxu0
      %v3979 = vadd.f32 0.0, %v3978
      %v3980 = vpop.f32.mrf.mxu0
      %3981 = vdwg.mxu0
      %v3982 = vadd.f32 %v3595, %v3824
      %v3983 = vadd.f32 %v3596, %v3829
      %v3984 = vadd.f32 %v3597, %v3834
      %v3985 = vadd.f32 %v3598, %v3839
      %v3986 = vadd.f32 %v3599, %v3844
      %v3987 = vadd.f32 %v3600, %v3849
      %v3988 = vadd.f32 %v3601, %v3854
      %v3989 = vadd.f32 %v3602, %v3859
      %v3990 = vadd.f32 %v3603, %v3864
      %v3991 = vadd.f32 %v3604, %v3869
      %v3992 = vadd.f32 %v3605, %v3874
      %v3993 = vadd.f32 %v3606, %v3879
      %v3994 = vadd.f32 %v3607, %v3884
      %v3995 = vadd.f32 %v3608, %v3889
      %v3996 = vadd.f32 %v3609, %v3894
      %v3997 = vadd.f32 %v3610, %v3899
      %v3998 = vadd.f32 %v3611, %v3904
      %v3999 = vadd.f32 %v3612, %v3909
      %v4000 = vadd.f32 %v3613, %v3914
      %v4001 = vadd.f32 %v3614, %v3919
      %v4002 = vadd.f32 %v3615, %v3924
      %v4003 = vadd.f32 %v3616, %v3929
      %v4004 = vadd.f32 %v3617, %v3934
      %v4005 = vadd.f32 %v3618, %v3939
      %v4006 = vadd.f32 %v3619, %v3944
      %v4007 = vadd.f32 %v3620, %v3949
      %v4008 = vadd.f32 %v3621, %v3954
      %v4009 = vadd.f32 %v3622, %v3959
      %v4010 = vadd.f32 %v3623, %v3964
      %v4011 = vadd.f32 %v3624, %v3969
      %v4012 = vadd.f32 %v3625, %v3974
      %v4013 = vadd.f32 %v3626, %v3979
      %v4014 = vld [vmem:[#allocation2 + $0x1] sm:$0xff]
      %v4015 = vld [vmem:[#allocation2 + $0x9] sm:$0xff]
      %v4016 = vld [vmem:[#allocation2 + $0x19] sm:$0xff]
      %v4017 = vld [vmem:[#allocation2 + $0x21] sm:$0xff]
      %v4018 = vld [vmem:[#allocation2 + $0x31] sm:$0xff]
      %v4019 = vld [vmem:[#allocation2 + $0x39] sm:$0xff]
      %v4020 = vld [vmem:[#allocation2 + $0x49] sm:$0xff]
      %v4021 = vld [vmem:[#allocation2 + $0x51] sm:$0xff]
      %v4022 = vld [vmem:[#allocation2 + $0x61] sm:$0xff]
      %v4023 = vld [vmem:[#allocation2 + $0x69] sm:$0xff]
      %v4024 = vld [vmem:[#allocation2 + $0x79] sm:$0xff]
      %v4025 = vld [vmem:[#allocation2 + $0x81] sm:$0xff]
      %v4026 = vld [vmem:[#allocation2 + $0x91] sm:$0xff]
      %v4027 = vld [vmem:[#allocation2 + $0x99] sm:$0xff]
      %v4028 = vld [vmem:[#allocation2 + $0xa9] sm:$0xff]
      %v4029 = vld [vmem:[#allocation2 + $0xb1] sm:$0xff]
      %v4030 = vld [vmem:[#allocation2 + $0xc1] sm:$0xff]
      %v4031 = vld [vmem:[#allocation2 + $0xc9] sm:$0xff]
      %v4032 = vld [vmem:[#allocation2 + $0xd9] sm:$0xff]
      %v4033 = vld [vmem:[#allocation2 + $0xe1] sm:$0xff]
      %v4034 = vld [vmem:[#allocation2 + $0xf1] sm:$0xff]
      %v4035 = vld [vmem:[#allocation2 + $0xf9] sm:$0xff]
      %v4036 = vld [vmem:[#allocation2 + $0x109] sm:$0xff]
      %v4037 = vld [vmem:[#allocation2 + $0x111] sm:$0xff]
      %v4038 = vld [vmem:[#allocation2 + $0x121] sm:$0xff]
      %v4039 = vld [vmem:[#allocation2 + $0x129] sm:$0xff]
      %v4040 = vld [vmem:[#allocation2 + $0x139] sm:$0xff]
      %v4041 = vld [vmem:[#allocation2 + $0x141] sm:$0xff]
      %v4042 = vld [vmem:[#allocation2 + $0x151] sm:$0xff]
      %v4043 = vld [vmem:[#allocation2 + $0x159] sm:$0xff]
      %v4044 = vld [vmem:[#allocation2 + $0x169] sm:$0xff]
      %v4045 = vld [vmem:[#allocation2 + $0x171] sm:$0xff]
      %s4046 = scalar_lea.vmem %s2, 16
      %v4047 = vld [vmem:[%s4046] sm:$0xff]
      %v4049 = vsel %vm3152, %v4014, 0
      %v4052 = vsel %vm3152, %v4015, 0
      %v4055 = vsel %vm3152, %v4016, 0
      %v4058 = vsel %vm3152, %v4017, 0
      %v4061 = vsel %vm3152, %v4018, 0
      %v4064 = vsel %vm3152, %v4019, 0
      %v4067 = vsel %vm3152, %v4020, 0
      %v4070 = vsel %vm3152, %v4021, 0
      %v4073 = vsel %vm3152, %v4022, 0
      %v4076 = vsel %vm3152, %v4023, 0
      %v4079 = vsel %vm3152, %v4024, 0
      %v4082 = vsel %vm3152, %v4025, 0
      %v4085 = vsel %vm3152, %v4026, 0
      %v4088 = vsel %vm3152, %v4027, 0
      %v4091 = vsel %vm3152, %v4028, 0
      %v4094 = vsel %vm3152, %v4029, 0
      %v4097 = vsel %vm3152, %v4030, 0
      %v4100 = vsel %vm3152, %v4031, 0
      %v4103 = vsel %vm3152, %v4032, 0
      %v4106 = vsel %vm3152, %v4033, 0
      %v4109 = vsel %vm3152, %v4034, 0
      %v4112 = vsel %vm3152, %v4035, 0
      %v4115 = vsel %vm3152, %v4036, 0
      %v4118 = vsel %vm3152, %v4037, 0
      %v4121 = vsel %vm3152, %v4038, 0
      %v4124 = vsel %vm3152, %v4039, 0
      %v4127 = vsel %vm3152, %v4040, 0
      %v4130 = vsel %vm3152, %v4041, 0
      %v4133 = vsel %vm3152, %v4042, 0
      %v4136 = vsel %vm3152, %v4043, 0
      %v4139 = vsel %vm3152, %v4044, 0
      %v4142 = vsel %vm3152, %v4045, 0
      %4144 = vmatprep.subr.mxu0 0.0
      %4145 = vmatpush1.msra.mxu0 0.0
      %4146 = vmatprep.subr.mxu0 0.0
      %4147 = vmatpush1.msra.mxu0 0.0
      %4148 = vmatprep.subr.mxu0 0.0
      %4149 = vmatpush1.msra.mxu0 0.0
      %4150 = vmatprep.subr.mxu0 0.0
      %4151 = vmatpush1.msra.mxu0 0.0
      %4152 = vmatprep.subr.mxu0 0.0
      %4153 = vmatpush1.msra.mxu0 0.0
      %4154 = vmatprep.subr.mxu0 0.0
      %4155 = vmatpush1.msra.mxu0 0.0
      %4156 = vmatprep.subr.mxu0 0.0
      %4157 = vmatpush1.msra.mxu0 0.0
      %4158 = vmatprep.subr.mxu0 0.0
      %4159 = vmatpush1.msra.mxu0 0.0
      %4160 = vmatprep.subr.mxu0 0.0
      %4161 = vmatpush1.msra.mxu0 0.0
      %4162 = vmatprep.subr.mxu0 0.0
      %4163 = vmatpush1.msra.mxu0 0.0
      %4164 = vmatprep.subr.mxu0 0.0
      %4165 = vmatpush1.msra.mxu0 0.0
      %4166 = vmatprep.subr.mxu0 0.0
      %4167 = vmatpush1.msra.mxu0 0.0
      %4168 = vmatprep.subr.mxu0 0.0
      %4169 = vmatpush1.msra.mxu0 0.0
      %4170 = vmatprep.subr.mxu0 0.0
      %4171 = vmatpush1.msra.mxu0 0.0
      %4172 = vmatprep.subr.mxu0 0.0
      %4173 = vmatpush1.msra.mxu0 0.0
      %4174 = vmatprep.subr.mxu0 0.0
      %4175 = vmatpush1.msra.mxu0 %v4047
      %4176 = vmatprep.subr.mxu0 0.0
      %4177 = vmatpush2.msra.mxu0 0.0
      %4178 = vmatprep.subr.mxu0 0.0
      %4179 = vmatpush2.msra.mxu0 0.0
      %4180 = vmatprep.subr.mxu0 0.0
      %4181 = vmatpush2.msra.mxu0 0.0
      %4182 = vmatprep.subr.mxu0 0.0
      %4183 = vmatpush2.msra.mxu0 0.0
      %4184 = vmatprep.subr.mxu0 0.0
      %4185 = vmatpush2.msra.mxu0 0.0
      %4186 = vmatprep.subr.mxu0 0.0
      %4187 = vmatpush2.msra.mxu0 0.0
      %4188 = vmatprep.subr.mxu0 0.0
      %4189 = vmatpush2.msra.mxu0 0.0
      %4190 = vmatprep.subr.mxu0 0.0
      %4191 = vmatpush2.msra.mxu0 0.0
      %4192 = vmatprep.subr.mxu0 0.0
      %4193 = vmatpush2.msra.mxu0 0.0
      %4194 = vmatprep.subr.mxu0 0.0
      %4195 = vmatpush2.msra.mxu0 0.0
      %4196 = vmatprep.subr.mxu0 0.0
      %4197 = vmatpush2.msra.mxu0 0.0
      %4198 = vmatprep.subr.mxu0 0.0
      %4199 = vmatpush2.msra.mxu0 0.0
      %4200 = vmatprep.subr.mxu0 0.0
      %4201 = vmatpush2.msra.mxu0 0.0
      %4202 = vmatprep.subr.mxu0 0.0
      %4203 = vmatpush2.msra.mxu0 0.0
      %4204 = vmatprep.subr.mxu0 0.0
      %4205 = vmatpush2.msra.mxu0 0.0
      %4206 = vmatprep.subr.mxu0 0.0
      %4207 = vmatpush2.msra.mxu0 0.0
      %4208 = vmatprep.mubr.f32.mxu0 0.0
      %4209 = vmatmul.mubr.f32.gmra.mxu0 %v4049
      %v4210 = vpop.f32.mrf.mxu0
      %v4211 = vadd.f32 0.0, %v4210
      %v4212 = vpop.f32.mrf.mxu0
      %4213 = vmatprep.mubr.f32.mxu0 0.0
      %4214 = vmatmul.mubr.f32.gmra.mxu0 %v4052
      %v4215 = vpop.f32.mrf.mxu0
      %v4216 = vadd.f32 0.0, %v4215
      %v4217 = vpop.f32.mrf.mxu0
      %4218 = vmatprep.mubr.f32.mxu0 0.0
      %4219 = vmatmul.mubr.f32.gmra.mxu0 %v4055
      %v4220 = vpop.f32.mrf.mxu0
      %v4221 = vadd.f32 0.0, %v4220
      %v4222 = vpop.f32.mrf.mxu0
      %4223 = vmatprep.mubr.f32.mxu0 0.0
      %4224 = vmatmul.mubr.f32.gmra.mxu0 %v4058
      %v4225 = vpop.f32.mrf.mxu0
      %v4226 = vadd.f32 0.0, %v4225
      %v4227 = vpop.f32.mrf.mxu0
      %4228 = vmatprep.mubr.f32.mxu0 0.0
      %4229 = vmatmul.mubr.f32.gmra.mxu0 %v4061
      %v4230 = vpop.f32.mrf.mxu0
      %v4231 = vadd.f32 0.0, %v4230
      %v4232 = vpop.f32.mrf.mxu0
      %4233 = vmatprep.mubr.f32.mxu0 0.0
      %4234 = vmatmul.mubr.f32.gmra.mxu0 %v4064
      %v4235 = vpop.f32.mrf.mxu0
      %v4236 = vadd.f32 0.0, %v4235
      %v4237 = vpop.f32.mrf.mxu0
      %4238 = vmatprep.mubr.f32.mxu0 0.0
      %4239 = vmatmul.mubr.f32.gmra.mxu0 %v4067
      %v4240 = vpop.f32.mrf.mxu0
      %v4241 = vadd.f32 0.0, %v4240
      %v4242 = vpop.f32.mrf.mxu0
      %4243 = vmatprep.mubr.f32.mxu0 0.0
      %4244 = vmatmul.mubr.f32.gmra.mxu0 %v4070
      %v4245 = vpop.f32.mrf.mxu0
      %v4246 = vadd.f32 0.0, %v4245
      %v4247 = vpop.f32.mrf.mxu0
      %4248 = vmatprep.mubr.f32.mxu0 0.0
      %4249 = vmatmul.mubr.f32.gmra.mxu0 %v4073
      %v4250 = vpop.f32.mrf.mxu0
      %v4251 = vadd.f32 0.0, %v4250
      %v4252 = vpop.f32.mrf.mxu0
      %4253 = vmatprep.mubr.f32.mxu0 0.0
      %4254 = vmatmul.mubr.f32.gmra.mxu0 %v4076
      %v4255 = vpop.f32.mrf.mxu0
      %v4256 = vadd.f32 0.0, %v4255
      %v4257 = vpop.f32.mrf.mxu0
      %4258 = vmatprep.mubr.f32.mxu0 0.0
      %4259 = vmatmul.mubr.f32.gmra.mxu0 %v4079
      %v4260 = vpop.f32.mrf.mxu0
      %v4261 = vadd.f32 0.0, %v4260
      %v4262 = vpop.f32.mrf.mxu0
      %4263 = vmatprep.mubr.f32.mxu0 0.0
      %4264 = vmatmul.mubr.f32.gmra.mxu0 %v4082
      %v4265 = vpop.f32.mrf.mxu0
      %v4266 = vadd.f32 0.0, %v4265
      %v4267 = vpop.f32.mrf.mxu0
      %4268 = vmatprep.mubr.f32.mxu0 0.0
      %4269 = vmatmul.mubr.f32.gmra.mxu0 %v4085
      %v4270 = vpop.f32.mrf.mxu0
      %v4271 = vadd.f32 0.0, %v4270
      %v4272 = vpop.f32.mrf.mxu0
      %4273 = vmatprep.mubr.f32.mxu0 0.0
      %4274 = vmatmul.mubr.f32.gmra.mxu0 %v4088
      %v4275 = vpop.f32.mrf.mxu0
      %v4276 = vadd.f32 0.0, %v4275
      %v4277 = vpop.f32.mrf.mxu0
      %4278 = vmatprep.mubr.f32.mxu0 0.0
      %4279 = vmatmul.mubr.f32.gmra.mxu0 %v4091
      %v4280 = vpop.f32.mrf.mxu0
      %v4281 = vadd.f32 0.0, %v4280
      %v4282 = vpop.f32.mrf.mxu0
      %4283 = vmatprep.mubr.f32.mxu0 0.0
      %4284 = vmatmul.mubr.f32.gmra.mxu0 %v4094
      %v4285 = vpop.f32.mrf.mxu0
      %v4286 = vadd.f32 0.0, %v4285
      %v4287 = vpop.f32.mrf.mxu0
      %4288 = vmatprep.mubr.f32.mxu0 0.0
      %4289 = vmatmul.mubr.f32.gmra.mxu0 %v4097
      %v4290 = vpop.f32.mrf.mxu0
      %v4291 = vadd.f32 0.0, %v4290
      %v4292 = vpop.f32.mrf.mxu0
      %4293 = vmatprep.mubr.f32.mxu0 0.0
      %4294 = vmatmul.mubr.f32.gmra.mxu0 %v4100
      %v4295 = vpop.f32.mrf.mxu0
      %v4296 = vadd.f32 0.0, %v4295
      %v4297 = vpop.f32.mrf.mxu0
      %4298 = vmatprep.mubr.f32.mxu0 0.0
      %4299 = vmatmul.mubr.f32.gmra.mxu0 %v4103
      %v4300 = vpop.f32.mrf.mxu0
      %v4301 = vadd.f32 0.0, %v4300
      %v4302 = vpop.f32.mrf.mxu0
      %4303 = vmatprep.mubr.f32.mxu0 0.0
      %4304 = vmatmul.mubr.f32.gmra.mxu0 %v4106
      %v4305 = vpop.f32.mrf.mxu0
      %v4306 = vadd.f32 0.0, %v4305
      %v4307 = vpop.f32.mrf.mxu0
      %4308 = vmatprep.mubr.f32.mxu0 0.0
      %4309 = vmatmul.mubr.f32.gmra.mxu0 %v4109
      %v4310 = vpop.f32.mrf.mxu0
      %v4311 = vadd.f32 0.0, %v4310
      %v4312 = vpop.f32.mrf.mxu0
      %4313 = vmatprep.mubr.f32.mxu0 0.0
      %4314 = vmatmul.mubr.f32.gmra.mxu0 %v4112
      %v4315 = vpop.f32.mrf.mxu0
      %v4316 = vadd.f32 0.0, %v4315
      %v4317 = vpop.f32.mrf.mxu0
      %4318 = vmatprep.mubr.f32.mxu0 0.0
      %4319 = vmatmul.mubr.f32.gmra.mxu0 %v4115
      %v4320 = vpop.f32.mrf.mxu0
      %v4321 = vadd.f32 0.0, %v4320
      %v4322 = vpop.f32.mrf.mxu0
      %4323 = vmatprep.mubr.f32.mxu0 0.0
      %4324 = vmatmul.mubr.f32.gmra.mxu0 %v4118
      %v4325 = vpop.f32.mrf.mxu0
      %v4326 = vadd.f32 0.0, %v4325
      %v4327 = vpop.f32.mrf.mxu0
      %4328 = vmatprep.mubr.f32.mxu0 0.0
      %4329 = vmatmul.mubr.f32.gmra.mxu0 %v4121
      %v4330 = vpop.f32.mrf.mxu0
      %v4331 = vadd.f32 0.0, %v4330
      %v4332 = vpop.f32.mrf.mxu0
      %4333 = vmatprep.mubr.f32.mxu0 0.0
      %4334 = vmatmul.mubr.f32.gmra.mxu0 %v4124
      %v4335 = vpop.f32.mrf.mxu0
      %v4336 = vadd.f32 0.0, %v4335
      %v4337 = vpop.f32.mrf.mxu0
      %4338 = vmatprep.mubr.f32.mxu0 0.0
      %4339 = vmatmul.mubr.f32.gmra.mxu0 %v4127
      %v4340 = vpop.f32.mrf.mxu0
      %v4341 = vadd.f32 0.0, %v4340
      %v4342 = vpop.f32.mrf.mxu0
      %4343 = vmatprep.mubr.f32.mxu0 0.0
      %4344 = vmatmul.mubr.f32.gmra.mxu0 %v4130
      %v4345 = vpop.f32.mrf.mxu0
      %v4346 = vadd.f32 0.0, %v4345
      %v4347 = vpop.f32.mrf.mxu0
      %4348 = vmatprep.mubr.f32.mxu0 0.0
      %4349 = vmatmul.mubr.f32.gmra.mxu0 %v4133
      %v4350 = vpop.f32.mrf.mxu0
      %v4351 = vadd.f32 0.0, %v4350
      %v4352 = vpop.f32.mrf.mxu0
      %4353 = vmatprep.mubr.f32.mxu0 0.0
      %4354 = vmatmul.mubr.f32.gmra.mxu0 %v4136
      %v4355 = vpop.f32.mrf.mxu0
      %v4356 = vadd.f32 0.0, %v4355
      %v4357 = vpop.f32.mrf.mxu0
      %4358 = vmatprep.mubr.f32.mxu0 0.0
      %4359 = vmatmul.mubr.f32.gmra.mxu0 %v4139
      %v4360 = vpop.f32.mrf.mxu0
      %v4361 = vadd.f32 0.0, %v4360
      %v4362 = vpop.f32.mrf.mxu0
      %4363 = vmatprep.mubr.f32.mxu0 0.0
      %4364 = vmatmul.mubr.f32.gmra.mxu0 %v4142
      %v4365 = vpop.f32.mrf.mxu0
      %v4366 = vadd.f32 0.0, %v4365
      %v4367 = vpop.f32.mrf.mxu0
      %4368 = vdwg.mxu0
      %v4369 = vadd.f32 %v3982, %v4211
      %v4370 = vadd.f32 %v3983, %v4216
      %v4371 = vadd.f32 %v3984, %v4221
      %v4372 = vadd.f32 %v3985, %v4226
      %v4373 = vadd.f32 %v3986, %v4231
      %v4374 = vadd.f32 %v3987, %v4236
      %v4375 = vadd.f32 %v3988, %v4241
      %v4376 = vadd.f32 %v3989, %v4246
      %v4377 = vadd.f32 %v3990, %v4251
      %v4378 = vadd.f32 %v3991, %v4256
      %v4379 = vadd.f32 %v3992, %v4261
      %v4380 = vadd.f32 %v3993, %v4266
      %v4381 = vadd.f32 %v3994, %v4271
      %v4382 = vadd.f32 %v3995, %v4276
      %v4383 = vadd.f32 %v3996, %v4281
      %v4384 = vadd.f32 %v3997, %v4286
      %v4385 = vadd.f32 %v3998, %v4291
      %v4386 = vadd.f32 %v3999, %v4296
      %v4387 = vadd.f32 %v4000, %v4301
      %v4388 = vadd.f32 %v4001, %v4306
      %v4389 = vadd.f32 %v4002, %v4311
      %v4390 = vadd.f32 %v4003, %v4316
      %v4391 = vadd.f32 %v4004, %v4321
      %v4392 = vadd.f32 %v4005, %v4326
      %v4393 = vadd.f32 %v4006, %v4331
      %v4394 = vadd.f32 %v4007, %v4336
      %v4395 = vadd.f32 %v4008, %v4341
      %v4396 = vadd.f32 %v4009, %v4346
      %v4397 = vadd.f32 %v4010, %v4351
      %v4398 = vadd.f32 %v4011, %v4356
      %v4399 = vadd.f32 %v4012, %v4361
      %v4400 = vadd.f32 %v4013, %v4366
      %v4401 = vld [vmem:[#allocation2] sm:$0xff]
      %v4402 = vld [vmem:[#allocation2 + $0x8] sm:$0xff]
      %v4403 = vld [vmem:[#allocation2 + $0x18] sm:$0xff]
      %v4404 = vld [vmem:[#allocation2 + $0x20] sm:$0xff]
      %v4405 = vld [vmem:[#allocation2 + $0x30] sm:$0xff]
      %v4406 = vld [vmem:[#allocation2 + $0x38] sm:$0xff]
      %v4407 = vld [vmem:[#allocation2 + $0x48] sm:$0xff]
      %v4408 = vld [vmem:[#allocation2 + $0x50] sm:$0xff]
      %v4409 = vld [vmem:[#allocation2 + $0x60] sm:$0xff]
      %v4410 = vld [vmem:[#allocation2 + $0x68] sm:$0xff]
      %v4411 = vld [vmem:[#allocation2 + $0x78] sm:$0xff]
      %v4412 = vld [vmem:[#allocation2 + $0x80] sm:$0xff]
      %v4413 = vld [vmem:[#allocation2 + $0x90] sm:$0xff]
      %v4414 = vld [vmem:[#allocation2 + $0x98] sm:$0xff]
      %v4415 = vld [vmem:[#allocation2 + $0xa8] sm:$0xff]
      %v4416 = vld [vmem:[#allocation2 + $0xb0] sm:$0xff]
      %v4417 = vld [vmem:[#allocation2 + $0xc0] sm:$0xff]
      %v4418 = vld [vmem:[#allocation2 + $0xc8] sm:$0xff]
      %v4419 = vld [vmem:[#allocation2 + $0xd8] sm:$0xff]
      %v4420 = vld [vmem:[#allocation2 + $0xe0] sm:$0xff]
      %v4421 = vld [vmem:[#allocation2 + $0xf0] sm:$0xff]
      %v4422 = vld [vmem:[#allocation2 + $0xf8] sm:$0xff]
      %v4423 = vld [vmem:[#allocation2 + $0x108] sm:$0xff]
      %v4424 = vld [vmem:[#allocation2 + $0x110] sm:$0xff]
      %v4425 = vld [vmem:[#allocation2 + $0x120] sm:$0xff]
      %v4426 = vld [vmem:[#allocation2 + $0x128] sm:$0xff]
      %v4427 = vld [vmem:[#allocation2 + $0x138] sm:$0xff]
      %v4428 = vld [vmem:[#allocation2 + $0x140] sm:$0xff]
      %v4429 = vld [vmem:[#allocation2 + $0x150] sm:$0xff]
      %v4430 = vld [vmem:[#allocation2 + $0x158] sm:$0xff]
      %v4431 = vld [vmem:[#allocation2 + $0x168] sm:$0xff]
      %v4432 = vld [vmem:[#allocation2 + $0x170] sm:$0xff]
      %s4433 = scalar_lea.vmem %s2, 24
      %v4434 = vld [vmem:[%s4433] sm:$0xff]
      %v4436 = vsel %vm3152, %v4401, 0
      %v4439 = vsel %vm3152, %v4402, 0
      %v4442 = vsel %vm3152, %v4403, 0
      %v4445 = vsel %vm3152, %v4404, 0
      %v4448 = vsel %vm3152, %v4405, 0
      %v4451 = vsel %vm3152, %v4406, 0
      %v4454 = vsel %vm3152, %v4407, 0
      %v4457 = vsel %vm3152, %v4408, 0
      %v4460 = vsel %vm3152, %v4409, 0
      %v4463 = vsel %vm3152, %v4410, 0
      %v4466 = vsel %vm3152, %v4411, 0
      %v4469 = vsel %vm3152, %v4412, 0
      %v4472 = vsel %vm3152, %v4413, 0
      %v4475 = vsel %vm3152, %v4414, 0
      %v4478 = vsel %vm3152, %v4415, 0
      %v4481 = vsel %vm3152, %v4416, 0
      %v4484 = vsel %vm3152, %v4417, 0
      %v4487 = vsel %vm3152, %v4418, 0
      %v4490 = vsel %vm3152, %v4419, 0
      %v4493 = vsel %vm3152, %v4420, 0
      %v4496 = vsel %vm3152, %v4421, 0
      %v4499 = vsel %vm3152, %v4422, 0
      %v4502 = vsel %vm3152, %v4423, 0
      %v4505 = vsel %vm3152, %v4424, 0
      %v4508 = vsel %vm3152, %v4425, 0
      %v4511 = vsel %vm3152, %v4426, 0
      %v4514 = vsel %vm3152, %v4427, 0
      %v4517 = vsel %vm3152, %v4428, 0
      %v4520 = vsel %vm3152, %v4429, 0
      %v4523 = vsel %vm3152, %v4430, 0
      %v4526 = vsel %vm3152, %v4431, 0
      %v4529 = vsel %vm3152, %v4432, 0
      %4531 = vmatprep.subr.mxu0 0.0
      %4532 = vmatpush1.msra.mxu0 0.0
      %4533 = vmatprep.subr.mxu0 0.0
      %4534 = vmatpush1.msra.mxu0 0.0
      %4535 = vmatprep.subr.mxu0 0.0
      %4536 = vmatpush1.msra.mxu0 0.0
      %4537 = vmatprep.subr.mxu0 0.0
      %4538 = vmatpush1.msra.mxu0 0.0
      %4539 = vmatprep.subr.mxu0 0.0
      %4540 = vmatpush1.msra.mxu0 0.0
      %4541 = vmatprep.subr.mxu0 0.0
      %4542 = vmatpush1.msra.mxu0 0.0
      %4543 = vmatprep.subr.mxu0 0.0
      %4544 = vmatpush1.msra.mxu0 0.0
      %4545 = vmatprep.subr.mxu0 0.0
      %4546 = vmatpush1.msra.mxu0 0.0
      %4547 = vmatprep.subr.mxu0 0.0
      %4548 = vmatpush1.msra.mxu0 0.0
      %4549 = vmatprep.subr.mxu0 0.0
      %4550 = vmatpush1.msra.mxu0 0.0
      %4551 = vmatprep.subr.mxu0 0.0
      %4552 = vmatpush1.msra.mxu0 0.0
      %4553 = vmatprep.subr.mxu0 0.0
      %4554 = vmatpush1.msra.mxu0 0.0
      %4555 = vmatprep.subr.mxu0 0.0
      %4556 = vmatpush1.msra.mxu0 0.0
      %4557 = vmatprep.subr.mxu0 0.0
      %4558 = vmatpush1.msra.mxu0 0.0
      %4559 = vmatprep.subr.mxu0 0.0
      %4560 = vmatpush1.msra.mxu0 0.0
      %4561 = vmatprep.subr.mxu0 0.0
      %4562 = vmatpush1.msra.mxu0 %v4434
      %4563 = vmatprep.subr.mxu0 0.0
      %4564 = vmatpush2.msra.mxu0 0.0
      %4565 = vmatprep.subr.mxu0 0.0
      %4566 = vmatpush2.msra.mxu0 0.0
      %4567 = vmatprep.subr.mxu0 0.0
      %4568 = vmatpush2.msra.mxu0 0.0
      %4569 = vmatprep.subr.mxu0 0.0
      %4570 = vmatpush2.msra.mxu0 0.0
      %4571 = vmatprep.subr.mxu0 0.0
      %4572 = vmatpush2.msra.mxu0 0.0
      %4573 = vmatprep.subr.mxu0 0.0
      %4574 = vmatpush2.msra.mxu0 0.0
      %4575 = vmatprep.subr.mxu0 0.0
      %4576 = vmatpush2.msra.mxu0 0.0
      %4577 = vmatprep.subr.mxu0 0.0
      %4578 = vmatpush2.msra.mxu0 0.0
      %4579 = vmatprep.subr.mxu0 0.0
      %4580 = vmatpush2.msra.mxu0 0.0
      %4581 = vmatprep.subr.mxu0 0.0
      %4582 = vmatpush2.msra.mxu0 0.0
      %4583 = vmatprep.subr.mxu0 0.0
      %4584 = vmatpush2.msra.mxu0 0.0
      %4585 = vmatprep.subr.mxu0 0.0
      %4586 = vmatpush2.msra.mxu0 0.0
      %4587 = vmatprep.subr.mxu0 0.0
      %4588 = vmatpush2.msra.mxu0 0.0
      %4589 = vmatprep.subr.mxu0 0.0
      %4590 = vmatpush2.msra.mxu0 0.0
      %4591 = vmatprep.subr.mxu0 0.0
      %4592 = vmatpush2.msra.mxu0 0.0
      %4593 = vmatprep.subr.mxu0 0.0
      %4594 = vmatpush2.msra.mxu0 0.0
      %4595 = vmatprep.mubr.f32.mxu0 0.0
      %4596 = vmatmul.mubr.f32.gmra.mxu0 %v4436
      %v4597 = vpop.f32.mrf.mxu0
      %v4598 = vadd.f32 0.0, %v4597
      %v4599 = vpop.f32.mrf.mxu0
      %4600 = vmatprep.mubr.f32.mxu0 0.0
      %4601 = vmatmul.mubr.f32.gmra.mxu0 %v4439
      %v4602 = vpop.f32.mrf.mxu0
      %v4603 = vadd.f32 0.0, %v4602
      %v4604 = vpop.f32.mrf.mxu0
      %4605 = vmatprep.mubr.f32.mxu0 0.0
      %4606 = vmatmul.mubr.f32.gmra.mxu0 %v4442
      %v4607 = vpop.f32.mrf.mxu0
      %v4608 = vadd.f32 0.0, %v4607
      %v4609 = vpop.f32.mrf.mxu0
      %4610 = vmatprep.mubr.f32.mxu0 0.0
      %4611 = vmatmul.mubr.f32.gmra.mxu0 %v4445
      %v4612 = vpop.f32.mrf.mxu0
      %v4613 = vadd.f32 0.0, %v4612
      %v4614 = vpop.f32.mrf.mxu0
      %4615 = vmatprep.mubr.f32.mxu0 0.0
      %4616 = vmatmul.mubr.f32.gmra.mxu0 %v4448
      %v4617 = vpop.f32.mrf.mxu0
      %v4618 = vadd.f32 0.0, %v4617
      %v4619 = vpop.f32.mrf.mxu0
      %4620 = vmatprep.mubr.f32.mxu0 0.0
      %4621 = vmatmul.mubr.f32.gmra.mxu0 %v4451
      %v4622 = vpop.f32.mrf.mxu0
      %v4623 = vadd.f32 0.0, %v4622
      %v4624 = vpop.f32.mrf.mxu0
      %4625 = vmatprep.mubr.f32.mxu0 0.0
      %4626 = vmatmul.mubr.f32.gmra.mxu0 %v4454
      %v4627 = vpop.f32.mrf.mxu0
      %v4628 = vadd.f32 0.0, %v4627
      %v4629 = vpop.f32.mrf.mxu0
      %4630 = vmatprep.mubr.f32.mxu0 0.0
      %4631 = vmatmul.mubr.f32.gmra.mxu0 %v4457
      %v4632 = vpop.f32.mrf.mxu0
      %v4633 = vadd.f32 0.0, %v4632
      %v4634 = vpop.f32.mrf.mxu0
      %4635 = vmatprep.mubr.f32.mxu0 0.0
      %4636 = vmatmul.mubr.f32.gmra.mxu0 %v4460
      %v4637 = vpop.f32.mrf.mxu0
      %v4638 = vadd.f32 0.0, %v4637
      %v4639 = vpop.f32.mrf.mxu0
      %4640 = vmatprep.mubr.f32.mxu0 0.0
      %4641 = vmatmul.mubr.f32.gmra.mxu0 %v4463
      %v4642 = vpop.f32.mrf.mxu0
      %v4643 = vadd.f32 0.0, %v4642
      %v4644 = vpop.f32.mrf.mxu0
      %4645 = vmatprep.mubr.f32.mxu0 0.0
      %4646 = vmatmul.mubr.f32.gmra.mxu0 %v4466
      %v4647 = vpop.f32.mrf.mxu0
      %v4648 = vadd.f32 0.0, %v4647
      %v4649 = vpop.f32.mrf.mxu0
      %4650 = vmatprep.mubr.f32.mxu0 0.0
      %4651 = vmatmul.mubr.f32.gmra.mxu0 %v4469
      %v4652 = vpop.f32.mrf.mxu0
      %v4653 = vadd.f32 0.0, %v4652
      %v4654 = vpop.f32.mrf.mxu0
      %4655 = vmatprep.mubr.f32.mxu0 0.0
      %4656 = vmatmul.mubr.f32.gmra.mxu0 %v4472
      %v4657 = vpop.f32.mrf.mxu0
      %v4658 = vadd.f32 0.0, %v4657
      %v4659 = vpop.f32.mrf.mxu0
      %4660 = vmatprep.mubr.f32.mxu0 0.0
      %4661 = vmatmul.mubr.f32.gmra.mxu0 %v4475
      %v4662 = vpop.f32.mrf.mxu0
      %v4663 = vadd.f32 0.0, %v4662
      %v4664 = vpop.f32.mrf.mxu0
      %4665 = vmatprep.mubr.f32.mxu0 0.0
      %4666 = vmatmul.mubr.f32.gmra.mxu0 %v4478
      %v4667 = vpop.f32.mrf.mxu0
      %v4668 = vadd.f32 0.0, %v4667
      %v4669 = vpop.f32.mrf.mxu0
      %4670 = vmatprep.mubr.f32.mxu0 0.0
      %4671 = vmatmul.mubr.f32.gmra.mxu0 %v4481
      %v4672 = vpop.f32.mrf.mxu0
      %v4673 = vadd.f32 0.0, %v4672
      %v4674 = vpop.f32.mrf.mxu0
      %4675 = vmatprep.mubr.f32.mxu0 0.0
      %4676 = vmatmul.mubr.f32.gmra.mxu0 %v4484
      %v4677 = vpop.f32.mrf.mxu0
      %v4678 = vadd.f32 0.0, %v4677
      %v4679 = vpop.f32.mrf.mxu0
      %4680 = vmatprep.mubr.f32.mxu0 0.0
      %4681 = vmatmul.mubr.f32.gmra.mxu0 %v4487
      %v4682 = vpop.f32.mrf.mxu0
      %v4683 = vadd.f32 0.0, %v4682
      %v4684 = vpop.f32.mrf.mxu0
      %4685 = vmatprep.mubr.f32.mxu0 0.0
      %4686 = vmatmul.mubr.f32.gmra.mxu0 %v4490
      %v4687 = vpop.f32.mrf.mxu0
      %v4688 = vadd.f32 0.0, %v4687
      %v4689 = vpop.f32.mrf.mxu0
      %4690 = vmatprep.mubr.f32.mxu0 0.0
      %4691 = vmatmul.mubr.f32.gmra.mxu0 %v4493
      %v4692 = vpop.f32.mrf.mxu0
      %v4693 = vadd.f32 0.0, %v4692
      %v4694 = vpop.f32.mrf.mxu0
      %4695 = vmatprep.mubr.f32.mxu0 0.0
      %4696 = vmatmul.mubr.f32.gmra.mxu0 %v4496
      %v4697 = vpop.f32.mrf.mxu0
      %v4698 = vadd.f32 0.0, %v4697
      %v4699 = vpop.f32.mrf.mxu0
      %4700 = vmatprep.mubr.f32.mxu0 0.0
      %4701 = vmatmul.mubr.f32.gmra.mxu0 %v4499
      %v4702 = vpop.f32.mrf.mxu0
      %v4703 = vadd.f32 0.0, %v4702
      %v4704 = vpop.f32.mrf.mxu0
      %4705 = vmatprep.mubr.f32.mxu0 0.0
      %4706 = vmatmul.mubr.f32.gmra.mxu0 %v4502
      %v4707 = vpop.f32.mrf.mxu0
      %v4708 = vadd.f32 0.0, %v4707
      %v4709 = vpop.f32.mrf.mxu0
      %4710 = vmatprep.mubr.f32.mxu0 0.0
      %4711 = vmatmul.mubr.f32.gmra.mxu0 %v4505
      %v4712 = vpop.f32.mrf.mxu0
      %v4713 = vadd.f32 0.0, %v4712
      %v4714 = vpop.f32.mrf.mxu0
      %4715 = vmatprep.mubr.f32.mxu0 0.0
      %4716 = vmatmul.mubr.f32.gmra.mxu0 %v4508
      %v4717 = vpop.f32.mrf.mxu0
      %v4718 = vadd.f32 0.0, %v4717
      %v4719 = vpop.f32.mrf.mxu0
      %4720 = vmatprep.mubr.f32.mxu0 0.0
      %4721 = vmatmul.mubr.f32.gmra.mxu0 %v4511
      %v4722 = vpop.f32.mrf.mxu0
      %v4723 = vadd.f32 0.0, %v4722
      %v4724 = vpop.f32.mrf.mxu0
      %4725 = vmatprep.mubr.f32.mxu0 0.0
      %4726 = vmatmul.mubr.f32.gmra.mxu0 %v4514
      %v4727 = vpop.f32.mrf.mxu0
      %v4728 = vadd.f32 0.0, %v4727
      %v4729 = vpop.f32.mrf.mxu0
      %4730 = vmatprep.mubr.f32.mxu0 0.0
      %4731 = vmatmul.mubr.f32.gmra.mxu0 %v4517
      %v4732 = vpop.f32.mrf.mxu0
      %v4733 = vadd.f32 0.0, %v4732
      %v4734 = vpop.f32.mrf.mxu0
      %4735 = vmatprep.mubr.f32.mxu0 0.0
      %4736 = vmatmul.mubr.f32.gmra.mxu0 %v4520
      %v4737 = vpop.f32.mrf.mxu0
      %v4738 = vadd.f32 0.0, %v4737
      %v4739 = vpop.f32.mrf.mxu0
      %4740 = vmatprep.mubr.f32.mxu0 0.0
      %4741 = vmatmul.mubr.f32.gmra.mxu0 %v4523
      %v4742 = vpop.f32.mrf.mxu0
      %v4743 = vadd.f32 0.0, %v4742
      %v4744 = vpop.f32.mrf.mxu0
      %4745 = vmatprep.mubr.f32.mxu0 0.0
      %4746 = vmatmul.mubr.f32.gmra.mxu0 %v4526
      %v4747 = vpop.f32.mrf.mxu0
      %v4748 = vadd.f32 0.0, %v4747
      %v4749 = vpop.f32.mrf.mxu0
      %4750 = vmatprep.mubr.f32.mxu0 0.0
      %4751 = vmatmul.mubr.f32.gmra.mxu0 %v4529
      %v4752 = vpop.f32.mrf.mxu0
      %v4753 = vadd.f32 0.0, %v4752
      %v4754 = vpop.f32.mrf.mxu0
      %4755 = vdwg.mxu0
      %v4756 = vadd.f32 %v4369, %v4598
      %v4757 = vadd.f32 %v4370, %v4603
      %v4758 = vadd.f32 %v4371, %v4608
      %v4759 = vadd.f32 %v4372, %v4613
      %v4760 = vadd.f32 %v4373, %v4618
      %v4761 = vadd.f32 %v4374, %v4623
      %v4762 = vadd.f32 %v4375, %v4628
      %v4763 = vadd.f32 %v4376, %v4633
      %v4764 = vadd.f32 %v4377, %v4638
      %v4765 = vadd.f32 %v4378, %v4643
      %v4766 = vadd.f32 %v4379, %v4648
      %v4767 = vadd.f32 %v4380, %v4653
      %v4768 = vadd.f32 %v4381, %v4658
      %v4769 = vadd.f32 %v4382, %v4663
      %v4770 = vadd.f32 %v4383, %v4668
      %v4771 = vadd.f32 %v4384, %v4673
      %v4772 = vadd.f32 %v4385, %v4678
      %v4773 = vadd.f32 %v4386, %v4683
      %v4774 = vadd.f32 %v4387, %v4688
      %v4775 = vadd.f32 %v4388, %v4693
      %v4776 = vadd.f32 %v4389, %v4698
      %v4777 = vadd.f32 %v4390, %v4703
      %v4778 = vadd.f32 %v4391, %v4708
      %v4779 = vadd.f32 %v4392, %v4713
      %v4780 = vadd.f32 %v4393, %v4718
      %v4781 = vadd.f32 %v4394, %v4723
      %v4782 = vadd.f32 %v4395, %v4728
      %v4783 = vadd.f32 %v4396, %v4733
      %v4784 = vadd.f32 %v4397, %v4738
      %v4785 = vadd.f32 %v4398, %v4743
      %v4786 = vadd.f32 %v4399, %v4748
      %v4787 = vadd.f32 %v4400, %v4753
      %vm4788 = vcmp.gt.f32.partialorder %v4756, 0.0
      %vm4789 = vcmp.gt.f32.partialorder %v4757, 0.0
      %vm4790 = vcmp.gt.f32.partialorder %v4758, 0.0
      %vm4791 = vcmp.gt.f32.partialorder %v4759, 0.0
      %vm4792 = vcmp.gt.f32.partialorder %v4760, 0.0
      %vm4793 = vcmp.gt.f32.partialorder %v4761, 0.0
      %vm4794 = vcmp.gt.f32.partialorder %v4762, 0.0
      %vm4795 = vcmp.gt.f32.partialorder %v4763, 0.0
      %vm4796 = vcmp.gt.f32.partialorder %v4764, 0.0
      %vm4797 = vcmp.gt.f32.partialorder %v4765, 0.0
      %vm4798 = vcmp.gt.f32.partialorder %v4766, 0.0
      %vm4799 = vcmp.gt.f32.partialorder %v4767, 0.0
      %vm4800 = vcmp.gt.f32.partialorder %v4768, 0.0
      %vm4801 = vcmp.gt.f32.partialorder %v4769, 0.0
      %vm4802 = vcmp.gt.f32.partialorder %v4770, 0.0
      %vm4803 = vcmp.gt.f32.partialorder %v4771, 0.0
      %vm4804 = vcmp.gt.f32.partialorder %v4772, 0.0
      %vm4805 = vcmp.gt.f32.partialorder %v4773, 0.0
      %vm4806 = vcmp.gt.f32.partialorder %v4774, 0.0
      %vm4807 = vcmp.gt.f32.partialorder %v4775, 0.0
      %vm4808 = vcmp.gt.f32.partialorder %v4776, 0.0
      %vm4809 = vcmp.gt.f32.partialorder %v4777, 0.0
      %vm4810 = vcmp.gt.f32.partialorder %v4778, 0.0
      %vm4811 = vcmp.gt.f32.partialorder %v4779, 0.0
      %vm4812 = vcmp.gt.f32.partialorder %v4780, 0.0
      %vm4813 = vcmp.gt.f32.partialorder %v4781, 0.0
      %vm4814 = vcmp.gt.f32.partialorder %v4782, 0.0
      %vm4815 = vcmp.gt.f32.partialorder %v4783, 0.0
      %vm4816 = vcmp.gt.f32.partialorder %v4784, 0.0
      %vm4817 = vcmp.gt.f32.partialorder %v4785, 0.0
      %vm4818 = vcmp.gt.f32.partialorder %v4786, 0.0
      %vm4819 = vcmp.gt.f32.partialorder %v4787, 0.0
      %v4820 = vmin.f32 %v4756, 0.0
      %v4821 = vmin.f32 %v4757, 0.0
      %v4822 = vmin.f32 %v4758, 0.0
      %v4823 = vmin.f32 %v4759, 0.0
      %v4824 = vmin.f32 %v4760, 0.0
      %v4825 = vmin.f32 %v4761, 0.0
      %v4826 = vmin.f32 %v4762, 0.0
      %v4827 = vmin.f32 %v4763, 0.0
      %v4828 = vmin.f32 %v4764, 0.0
      %v4829 = vmin.f32 %v4765, 0.0
      %v4830 = vmin.f32 %v4766, 0.0
      %v4831 = vmin.f32 %v4767, 0.0
      %v4832 = vmin.f32 %v4768, 0.0
      %v4833 = vmin.f32 %v4769, 0.0
      %v4834 = vmin.f32 %v4770, 0.0
      %v4835 = vmin.f32 %v4771, 0.0
      %v4836 = vmin.f32 %v4772, 0.0
      %v4837 = vmin.f32 %v4773, 0.0
      %v4838 = vmin.f32 %v4774, 0.0
      %v4839 = vmin.f32 %v4775, 0.0
      %v4840 = vmin.f32 %v4776, 0.0
      %v4841 = vmin.f32 %v4777, 0.0
      %v4842 = vmin.f32 %v4778, 0.0
      %v4843 = vmin.f32 %v4779, 0.0
      %v4844 = vmin.f32 %v4780, 0.0
      %v4845 = vmin.f32 %v4781, 0.0
      %v4846 = vmin.f32 %v4782, 0.0
      %v4847 = vmin.f32 %v4783, 0.0
      %v4848 = vmin.f32 %v4784, 0.0
      %v4849 = vmin.f32 %v4785, 0.0
      %v4850 = vmin.f32 %v4786, 0.0
      %v4851 = vmin.f32 %v4787, 0.0
      %v4852 = vmul.f32 %v4820, 1.442695
      %v4853 = vpow.pop %v4852
      %v4854 = vmul.f32 %v4821, 1.442695
      %v4855 = vpow.pop %v4854
      %v4856 = vmul.f32 %v4822, 1.442695
      %v4857 = vpow.pop %v4856
      %v4858 = vmul.f32 %v4823, 1.442695
      %v4859 = vpow.pop %v4858
      %v4860 = vmul.f32 %v4824, 1.442695
      %v4861 = vpow.pop %v4860
      %v4862 = vmul.f32 %v4825, 1.442695
      %v4863 = vpow.pop %v4862
      %v4864 = vmul.f32 %v4826, 1.442695
      %v4865 = vpow.pop %v4864
      %v4866 = vmul.f32 %v4827, 1.442695
      %v4867 = vpow.pop %v4866
      %v4868 = vmul.f32 %v4828, 1.442695
      %v4869 = vpow.pop %v4868
      %v4870 = vmul.f32 %v4829, 1.442695
      %v4871 = vpow.pop %v4870
      %v4872 = vmul.f32 %v4830, 1.442695
      %v4873 = vpow.pop %v4872
      %v4874 = vmul.f32 %v4831, 1.442695
      %v4875 = vpow.pop %v4874
      %v4876 = vmul.f32 %v4832, 1.442695
      %v4877 = vpow.pop %v4876
      %v4878 = vmul.f32 %v4833, 1.442695
      %v4879 = vpow.pop %v4878
      %v4880 = vmul.f32 %v4834, 1.442695
      %v4881 = vpow.pop %v4880
      %v4882 = vmul.f32 %v4835, 1.442695
      %v4883 = vpow.pop %v4882
      %v4884 = vmul.f32 %v4836, 1.442695
      %v4885 = vpow.pop %v4884
      %v4886 = vmul.f32 %v4837, 1.442695
      %v4887 = vpow.pop %v4886
      %v4888 = vmul.f32 %v4838, 1.442695
      %v4889 = vpow.pop %v4888
      %v4890 = vmul.f32 %v4839, 1.442695
      %v4891 = vpow.pop %v4890
      %v4892 = vmul.f32 %v4840, 1.442695
      %v4893 = vpow.pop %v4892
      %v4894 = vmul.f32 %v4841, 1.442695
      %v4895 = vpow.pop %v4894
      %v4896 = vmul.f32 %v4842, 1.442695
      %v4897 = vpow.pop %v4896
      %v4898 = vmul.f32 %v4843, 1.442695
      %v4899 = vpow.pop %v4898
      %v4900 = vmul.f32 %v4844, 1.442695
      %v4901 = vpow.pop %v4900
      %v4902 = vmul.f32 %v4845, 1.442695
      %v4903 = vpow.pop %v4902
      %v4904 = vmul.f32 %v4846, 1.442695
      %v4905 = vpow.pop %v4904
      %v4906 = vmul.f32 %v4847, 1.442695
      %v4907 = vpow.pop %v4906
      %v4908 = vmul.f32 %v4848, 1.442695
      %v4909 = vpow.pop %v4908
      %v4910 = vmul.f32 %v4849, 1.442695
      %v4911 = vpow.pop %v4910
      %v4912 = vmul.f32 %v4850, 1.442695
      %v4913 = vpow.pop %v4912
      %v4914 = vmul.f32 %v4851, 1.442695
      %v4915 = vpow.pop %v4914
      %v4916 = vsub.f32 %v4853, 1.0
      %v4917 = vsub.f32 %v4855, 1.0
      %v4918 = vsub.f32 %v4857, 1.0
      %v4919 = vsub.f32 %v4859, 1.0
      %v4920 = vsub.f32 %v4861, 1.0
      %v4921 = vsub.f32 %v4863, 1.0
      %v4922 = vsub.f32 %v4865, 1.0
      %v4923 = vsub.f32 %v4867, 1.0
      %v4924 = vsub.f32 %v4869, 1.0
      %v4925 = vsub.f32 %v4871, 1.0
      %v4926 = vsub.f32 %v4873, 1.0
      %v4927 = vsub.f32 %v4875, 1.0
      %v4928 = vsub.f32 %v4877, 1.0
      %v4929 = vsub.f32 %v4879, 1.0
      %v4930 = vsub.f32 %v4881, 1.0
      %v4931 = vsub.f32 %v4883, 1.0
      %v4932 = vsub.f32 %v4885, 1.0
      %v4933 = vsub.f32 %v4887, 1.0
      %v4934 = vsub.f32 %v4889, 1.0
      %v4935 = vsub.f32 %v4891, 1.0
      %v4936 = vsub.f32 %v4893, 1.0
      %v4937 = vsub.f32 %v4895, 1.0
      %v4938 = vsub.f32 %v4897, 1.0
      %v4939 = vsub.f32 %v4899, 1.0
      %v4940 = vsub.f32 %v4901, 1.0
      %v4941 = vsub.f32 %v4903, 1.0
      %v4942 = vsub.f32 %v4905, 1.0
      %v4943 = vsub.f32 %v4907, 1.0
      %v4944 = vsub.f32 %v4909, 1.0
      %v4945 = vsub.f32 %v4911, 1.0
      %v4946 = vsub.f32 %v4913, 1.0
      %v4947 = vsub.f32 %v4915, 1.0
      %v4948 = vsel %vm4788, %v4756, %v4916
      %v4949 = vsel %vm4789, %v4757, %v4917
      %v4950 = vsel %vm4790, %v4758, %v4918
      %v4951 = vsel %vm4791, %v4759, %v4919
      %v4952 = vsel %vm4792, %v4760, %v4920
      %v4953 = vsel %vm4793, %v4761, %v4921
      %v4954 = vsel %vm4794, %v4762, %v4922
      %v4955 = vsel %vm4795, %v4763, %v4923
      %v4956 = vsel %vm4796, %v4764, %v4924
      %v4957 = vsel %vm4797, %v4765, %v4925
      %v4958 = vsel %vm4798, %v4766, %v4926
      %v4959 = vsel %vm4799, %v4767, %v4927
      %v4960 = vsel %vm4800, %v4768, %v4928
      %v4961 = vsel %vm4801, %v4769, %v4929
      %v4962 = vsel %vm4802, %v4770, %v4930
      %v4963 = vsel %vm4803, %v4771, %v4931
      %v4964 = vsel %vm4804, %v4772, %v4932
      %v4965 = vsel %vm4805, %v4773, %v4933
      %v4966 = vsel %vm4806, %v4774, %v4934
      %v4967 = vsel %vm4807, %v4775, %v4935
      %v4968 = vsel %vm4808, %v4776, %v4936
      %v4969 = vsel %vm4809, %v4777, %v4937
      %v4970 = vsel %vm4810, %v4778, %v4938
      %v4971 = vsel %vm4811, %v4779, %v4939
      %v4972 = vsel %vm4812, %v4780, %v4940
      %v4973 = vsel %vm4813, %v4781, %v4941
      %v4974 = vsel %vm4814, %v4782, %v4942
      %v4975 = vsel %vm4815, %v4783, %v4943
      %v4976 = vsel %vm4816, %v4784, %v4944
      %v4977 = vsel %vm4817, %v4785, %v4945
      %v4978 = vsel %vm4818, %v4786, %v4946
      %v4979 = vsel %vm4819, %v4787, %v4947
      %v4980 = vld [vmem:[%s3240 + $0x2] sm:$0xff]
      %v4981 = vld [vmem:[%s3240 + $0xa] sm:$0xff]
      %v4982 = vld [vmem:[%s3240 + $0x1a] sm:$0xff]
      %v4983 = vld [vmem:[%s3240 + $0x22] sm:$0xff]
      %v4984 = vld [vmem:[%s3240 + $0x32] sm:$0xff]
      %v4985 = vld [vmem:[%s3240 + $0x3a] sm:$0xff]
      %v4986 = vld [vmem:[%s3240 + $0x4a] sm:$0xff]
      %v4987 = vld [vmem:[%s3240 + $0x52] sm:$0xff]
      %v4988 = vld [vmem:[%s3240 + $0x62] sm:$0xff]
      %v4989 = vld [vmem:[%s3240 + $0x6a] sm:$0xff]
      %v4990 = vld [vmem:[%s3240 + $0x7a] sm:$0xff]
      %v4991 = vld [vmem:[%s3240 + $0x82] sm:$0xff]
      %v4992 = vld [vmem:[%s3240 + $0x92] sm:$0xff]
      %v4993 = vld [vmem:[%s3240 + $0x9a] sm:$0xff]
      %v4994 = vld [vmem:[%s3240 + $0xaa] sm:$0xff]
      %v4995 = vld [vmem:[%s3240 + $0xb2] sm:$0xff]
      %v4996 = vld [vmem:[%s3240 + $0xc2] sm:$0xff]
      %v4997 = vld [vmem:[%s3240 + $0xca] sm:$0xff]
      %v4998 = vld [vmem:[%s3240 + $0xda] sm:$0xff]
      %v4999 = vld [vmem:[%s3240 + $0xe2] sm:$0xff]
      %v5000 = vld [vmem:[%s3240 + $0xf2] sm:$0xff]
      %v5001 = vld [vmem:[%s3240 + $0xfa] sm:$0xff]
      %v5002 = vld [vmem:[%s3240 + $0x10a] sm:$0xff]
      %v5003 = vld [vmem:[%s3240 + $0x112] sm:$0xff]
      %v5004 = vld [vmem:[%s3240 + $0x122] sm:$0xff]
      %v5005 = vld [vmem:[%s3240 + $0x12a] sm:$0xff]
      %v5006 = vld [vmem:[%s3240 + $0x13a] sm:$0xff]
      %v5007 = vld [vmem:[%s3240 + $0x142] sm:$0xff]
      %v5008 = vld [vmem:[%s3240 + $0x152] sm:$0xff]
      %v5009 = vld [vmem:[%s3240 + $0x15a] sm:$0xff]
      %v5010 = vld [vmem:[%s3240 + $0x16a] sm:$0xff]
      %v5011 = vld [vmem:[%s3240 + $0x172] sm:$0xff]
      %s5012 = scalar_lea.vmem %s2, 32
      %v5013 = vld [vmem:[%s5012] sm:$0xff]
      %v5015 = vsel %vm3152, %v4980, 0
      %v5018 = vsel %vm3152, %v4981, 0
      %v5021 = vsel %vm3152, %v4982, 0
      %v5024 = vsel %vm3152, %v4983, 0
      %v5027 = vsel %vm3152, %v4984, 0
      %v5030 = vsel %vm3152, %v4985, 0
      %v5033 = vsel %vm3152, %v4986, 0
      %v5036 = vsel %vm3152, %v4987, 0
      %v5039 = vsel %vm3152, %v4988, 0
      %v5042 = vsel %vm3152, %v4989, 0
      %v5045 = vsel %vm3152, %v4990, 0
      %v5048 = vsel %vm3152, %v4991, 0
      %v5051 = vsel %vm3152, %v4992, 0
      %v5054 = vsel %vm3152, %v4993, 0
      %v5057 = vsel %vm3152, %v4994, 0
      %v5060 = vsel %vm3152, %v4995, 0
      %v5063 = vsel %vm3152, %v4996, 0
      %v5066 = vsel %vm3152, %v4997, 0
      %v5069 = vsel %vm3152, %v4998, 0
      %v5072 = vsel %vm3152, %v4999, 0
      %v5075 = vsel %vm3152, %v5000, 0
      %v5078 = vsel %vm3152, %v5001, 0
      %v5081 = vsel %vm3152, %v5002, 0
      %v5084 = vsel %vm3152, %v5003, 0
      %v5087 = vsel %vm3152, %v5004, 0
      %v5090 = vsel %vm3152, %v5005, 0
      %v5093 = vsel %vm3152, %v5006, 0
      %v5096 = vsel %vm3152, %v5007, 0
      %v5099 = vsel %vm3152, %v5008, 0
      %v5102 = vsel %vm3152, %v5009, 0
      %v5105 = vsel %vm3152, %v5010, 0
      %v5108 = vsel %vm3152, %v5011, 0
      %5110 = vmatprep.subr.mxu0 0.0
      %5111 = vmatpush1.msra.mxu0 0.0
      %5112 = vmatprep.subr.mxu0 0.0
      %5113 = vmatpush1.msra.mxu0 0.0
      %5114 = vmatprep.subr.mxu0 0.0
      %5115 = vmatpush1.msra.mxu0 0.0
      %5116 = vmatprep.subr.mxu0 0.0
      %5117 = vmatpush1.msra.mxu0 0.0
      %5118 = vmatprep.subr.mxu0 0.0
      %5119 = vmatpush1.msra.mxu0 0.0
      %5120 = vmatprep.subr.mxu0 0.0
      %5121 = vmatpush1.msra.mxu0 0.0
      %5122 = vmatprep.subr.mxu0 0.0
      %5123 = vmatpush1.msra.mxu0 0.0
      %5124 = vmatprep.subr.mxu0 0.0
      %5125 = vmatpush1.msra.mxu0 0.0
      %5126 = vmatprep.subr.mxu0 0.0
      %5127 = vmatpush1.msra.mxu0 0.0
      %5128 = vmatprep.subr.mxu0 0.0
      %5129 = vmatpush1.msra.mxu0 0.0
      %5130 = vmatprep.subr.mxu0 0.0
      %5131 = vmatpush1.msra.mxu0 0.0
      %5132 = vmatprep.subr.mxu0 0.0
      %5133 = vmatpush1.msra.mxu0 0.0
      %5134 = vmatprep.subr.mxu0 0.0
      %5135 = vmatpush1.msra.mxu0 0.0
      %5136 = vmatprep.subr.mxu0 0.0
      %5137 = vmatpush1.msra.mxu0 0.0
      %5138 = vmatprep.subr.mxu0 0.0
      %5139 = vmatpush1.msra.mxu0 0.0
      %5140 = vmatprep.subr.mxu0 0.0
      %5141 = vmatpush1.msra.mxu0 %v5013
      %5142 = vmatprep.subr.mxu0 0.0
      %5143 = vmatpush2.msra.mxu0 0.0
      %5144 = vmatprep.subr.mxu0 0.0
      %5145 = vmatpush2.msra.mxu0 0.0
      %5146 = vmatprep.subr.mxu0 0.0
      %5147 = vmatpush2.msra.mxu0 0.0
      %5148 = vmatprep.subr.mxu0 0.0
      %5149 = vmatpush2.msra.mxu0 0.0
      %5150 = vmatprep.subr.mxu0 0.0
      %5151 = vmatpush2.msra.mxu0 0.0
      %5152 = vmatprep.subr.mxu0 0.0
      %5153 = vmatpush2.msra.mxu0 0.0
      %5154 = vmatprep.subr.mxu0 0.0
      %5155 = vmatpush2.msra.mxu0 0.0
      %5156 = vmatprep.subr.mxu0 0.0
      %5157 = vmatpush2.msra.mxu0 0.0
      %5158 = vmatprep.subr.mxu0 0.0
      %5159 = vmatpush2.msra.mxu0 0.0
      %5160 = vmatprep.subr.mxu0 0.0
      %5161 = vmatpush2.msra.mxu0 0.0
      %5162 = vmatprep.subr.mxu0 0.0
      %5163 = vmatpush2.msra.mxu0 0.0
      %5164 = vmatprep.subr.mxu0 0.0
      %5165 = vmatpush2.msra.mxu0 0.0
      %5166 = vmatprep.subr.mxu0 0.0
      %5167 = vmatpush2.msra.mxu0 0.0
      %5168 = vmatprep.subr.mxu0 0.0
      %5169 = vmatpush2.msra.mxu0 0.0
      %5170 = vmatprep.subr.mxu0 0.0
      %5171 = vmatpush2.msra.mxu0 0.0
      %5172 = vmatprep.subr.mxu0 0.0
      %5173 = vmatpush2.msra.mxu0 0.0
      %5174 = vmatprep.mubr.f32.mxu0 0.0
      %5175 = vmatmul.mubr.f32.gmra.mxu0 %v5015
      %v5176 = vpop.f32.mrf.mxu0
      %v5177 = vadd.f32 0.0, %v5176
      %v5178 = vpop.f32.mrf.mxu0
      %5179 = vmatprep.mubr.f32.mxu0 0.0
      %5180 = vmatmul.mubr.f32.gmra.mxu0 %v5018
      %v5181 = vpop.f32.mrf.mxu0
      %v5182 = vadd.f32 0.0, %v5181
      %v5183 = vpop.f32.mrf.mxu0
      %5184 = vmatprep.mubr.f32.mxu0 0.0
      %5185 = vmatmul.mubr.f32.gmra.mxu0 %v5021
      %v5186 = vpop.f32.mrf.mxu0
      %v5187 = vadd.f32 0.0, %v5186
      %v5188 = vpop.f32.mrf.mxu0
      %5189 = vmatprep.mubr.f32.mxu0 0.0
      %5190 = vmatmul.mubr.f32.gmra.mxu0 %v5024
      %v5191 = vpop.f32.mrf.mxu0
      %v5192 = vadd.f32 0.0, %v5191
      %v5193 = vpop.f32.mrf.mxu0
      %5194 = vmatprep.mubr.f32.mxu0 0.0
      %5195 = vmatmul.mubr.f32.gmra.mxu0 %v5027
      %v5196 = vpop.f32.mrf.mxu0
      %v5197 = vadd.f32 0.0, %v5196
      %v5198 = vpop.f32.mrf.mxu0
      %5199 = vmatprep.mubr.f32.mxu0 0.0
      %5200 = vmatmul.mubr.f32.gmra.mxu0 %v5030
      %v5201 = vpop.f32.mrf.mxu0
      %v5202 = vadd.f32 0.0, %v5201
      %v5203 = vpop.f32.mrf.mxu0
      %5204 = vmatprep.mubr.f32.mxu0 0.0
      %5205 = vmatmul.mubr.f32.gmra.mxu0 %v5033
      %v5206 = vpop.f32.mrf.mxu0
      %v5207 = vadd.f32 0.0, %v5206
      %v5208 = vpop.f32.mrf.mxu0
      %5209 = vmatprep.mubr.f32.mxu0 0.0
      %5210 = vmatmul.mubr.f32.gmra.mxu0 %v5036
      %v5211 = vpop.f32.mrf.mxu0
      %v5212 = vadd.f32 0.0, %v5211
      %v5213 = vpop.f32.mrf.mxu0
      %5214 = vmatprep.mubr.f32.mxu0 0.0
      %5215 = vmatmul.mubr.f32.gmra.mxu0 %v5039
      %v5216 = vpop.f32.mrf.mxu0
      %v5217 = vadd.f32 0.0, %v5216
      %v5218 = vpop.f32.mrf.mxu0
      %5219 = vmatprep.mubr.f32.mxu0 0.0
      %5220 = vmatmul.mubr.f32.gmra.mxu0 %v5042
      %v5221 = vpop.f32.mrf.mxu0
      %v5222 = vadd.f32 0.0, %v5221
      %v5223 = vpop.f32.mrf.mxu0
      %5224 = vmatprep.mubr.f32.mxu0 0.0
      %5225 = vmatmul.mubr.f32.gmra.mxu0 %v5045
      %v5226 = vpop.f32.mrf.mxu0
      %v5227 = vadd.f32 0.0, %v5226
      %v5228 = vpop.f32.mrf.mxu0
      %5229 = vmatprep.mubr.f32.mxu0 0.0
      %5230 = vmatmul.mubr.f32.gmra.mxu0 %v5048
      %v5231 = vpop.f32.mrf.mxu0
      %v5232 = vadd.f32 0.0, %v5231
      %v5233 = vpop.f32.mrf.mxu0
      %5234 = vmatprep.mubr.f32.mxu0 0.0
      %5235 = vmatmul.mubr.f32.gmra.mxu0 %v5051
      %v5236 = vpop.f32.mrf.mxu0
      %v5237 = vadd.f32 0.0, %v5236
      %v5238 = vpop.f32.mrf.mxu0
      %5239 = vmatprep.mubr.f32.mxu0 0.0
      %5240 = vmatmul.mubr.f32.gmra.mxu0 %v5054
      %v5241 = vpop.f32.mrf.mxu0
      %v5242 = vadd.f32 0.0, %v5241
      %v5243 = vpop.f32.mrf.mxu0
      %5244 = vmatprep.mubr.f32.mxu0 0.0
      %5245 = vmatmul.mubr.f32.gmra.mxu0 %v5057
      %v5246 = vpop.f32.mrf.mxu0
      %v5247 = vadd.f32 0.0, %v5246
      %v5248 = vpop.f32.mrf.mxu0
      %5249 = vmatprep.mubr.f32.mxu0 0.0
      %5250 = vmatmul.mubr.f32.gmra.mxu0 %v5060
      %v5251 = vpop.f32.mrf.mxu0
      %v5252 = vadd.f32 0.0, %v5251
      %v5253 = vpop.f32.mrf.mxu0
      %5254 = vmatprep.mubr.f32.mxu0 0.0
      %5255 = vmatmul.mubr.f32.gmra.mxu0 %v5063
      %v5256 = vpop.f32.mrf.mxu0
      %v5257 = vadd.f32 0.0, %v5256
      %v5258 = vpop.f32.mrf.mxu0
      %5259 = vmatprep.mubr.f32.mxu0 0.0
      %5260 = vmatmul.mubr.f32.gmra.mxu0 %v5066
      %v5261 = vpop.f32.mrf.mxu0
      %v5262 = vadd.f32 0.0, %v5261
      %v5263 = vpop.f32.mrf.mxu0
      %5264 = vmatprep.mubr.f32.mxu0 0.0
      %5265 = vmatmul.mubr.f32.gmra.mxu0 %v5069
      %v5266 = vpop.f32.mrf.mxu0
      %v5267 = vadd.f32 0.0, %v5266
      %v5268 = vpop.f32.mrf.mxu0
      %5269 = vmatprep.mubr.f32.mxu0 0.0
      %5270 = vmatmul.mubr.f32.gmra.mxu0 %v5072
      %v5271 = vpop.f32.mrf.mxu0
      %v5272 = vadd.f32 0.0, %v5271
      %v5273 = vpop.f32.mrf.mxu0
      %5274 = vmatprep.mubr.f32.mxu0 0.0
      %5275 = vmatmul.mubr.f32.gmra.mxu0 %v5075
      %v5276 = vpop.f32.mrf.mxu0
      %v5277 = vadd.f32 0.0, %v5276
      %v5278 = vpop.f32.mrf.mxu0
      %5279 = vmatprep.mubr.f32.mxu0 0.0
      %5280 = vmatmul.mubr.f32.gmra.mxu0 %v5078
      %v5281 = vpop.f32.mrf.mxu0
      %v5282 = vadd.f32 0.0, %v5281
      %v5283 = vpop.f32.mrf.mxu0
      %5284 = vmatprep.mubr.f32.mxu0 0.0
      %5285 = vmatmul.mubr.f32.gmra.mxu0 %v5081
      %v5286 = vpop.f32.mrf.mxu0
      %v5287 = vadd.f32 0.0, %v5286
      %v5288 = vpop.f32.mrf.mxu0
      %5289 = vmatprep.mubr.f32.mxu0 0.0
      %5290 = vmatmul.mubr.f32.gmra.mxu0 %v5084
      %v5291 = vpop.f32.mrf.mxu0
      %v5292 = vadd.f32 0.0, %v5291
      %v5293 = vpop.f32.mrf.mxu0
      %5294 = vmatprep.mubr.f32.mxu0 0.0
      %5295 = vmatmul.mubr.f32.gmra.mxu0 %v5087
      %v5296 = vpop.f32.mrf.mxu0
      %v5297 = vadd.f32 0.0, %v5296
      %v5298 = vpop.f32.mrf.mxu0
      %5299 = vmatprep.mubr.f32.mxu0 0.0
      %5300 = vmatmul.mubr.f32.gmra.mxu0 %v5090
      %v5301 = vpop.f32.mrf.mxu0
      %v5302 = vadd.f32 0.0, %v5301
      %v5303 = vpop.f32.mrf.mxu0
      %5304 = vmatprep.mubr.f32.mxu0 0.0
      %5305 = vmatmul.mubr.f32.gmra.mxu0 %v5093
      %v5306 = vpop.f32.mrf.mxu0
      %v5307 = vadd.f32 0.0, %v5306
      %v5308 = vpop.f32.mrf.mxu0
      %5309 = vmatprep.mubr.f32.mxu0 0.0
      %5310 = vmatmul.mubr.f32.gmra.mxu0 %v5096
      %v5311 = vpop.f32.mrf.mxu0
      %v5312 = vadd.f32 0.0, %v5311
      %v5313 = vpop.f32.mrf.mxu0
      %5314 = vmatprep.mubr.f32.mxu0 0.0
      %5315 = vmatmul.mubr.f32.gmra.mxu0 %v5099
      %v5316 = vpop.f32.mrf.mxu0
      %v5317 = vadd.f32 0.0, %v5316
      %v5318 = vpop.f32.mrf.mxu0
      %5319 = vmatprep.mubr.f32.mxu0 0.0
      %5320 = vmatmul.mubr.f32.gmra.mxu0 %v5102
      %v5321 = vpop.f32.mrf.mxu0
      %v5322 = vadd.f32 0.0, %v5321
      %v5323 = vpop.f32.mrf.mxu0
      %5324 = vmatprep.mubr.f32.mxu0 0.0
      %5325 = vmatmul.mubr.f32.gmra.mxu0 %v5105
      %v5326 = vpop.f32.mrf.mxu0
      %v5327 = vadd.f32 0.0, %v5326
      %v5328 = vpop.f32.mrf.mxu0
      %5329 = vmatprep.mubr.f32.mxu0 0.0
      %5330 = vmatmul.mubr.f32.gmra.mxu0 %v5108
      %v5331 = vpop.f32.mrf.mxu0
      %v5332 = vadd.f32 0.0, %v5331
      %v5333 = vpop.f32.mrf.mxu0
      %5334 = vdwg.mxu0
      %v5335 = vadd.f32 %v3239, %v5177
      %v5336 = vadd.f32 %v3239, %v5182
      %v5337 = vadd.f32 %v3239, %v5187
      %v5338 = vadd.f32 %v3239, %v5192
      %v5339 = vadd.f32 %v3239, %v5197
      %v5340 = vadd.f32 %v3239, %v5202
      %v5341 = vadd.f32 %v3239, %v5207
      %v5342 = vadd.f32 %v3239, %v5212
      %v5343 = vadd.f32 %v3239, %v5217
      %v5344 = vadd.f32 %v3239, %v5222
      %v5345 = vadd.f32 %v3239, %v5227
      %v5346 = vadd.f32 %v3239, %v5232
      %v5347 = vadd.f32 %v3239, %v5237
      %v5348 = vadd.f32 %v3239, %v5242
      %v5349 = vadd.f32 %v3239, %v5247
      %v5350 = vadd.f32 %v3239, %v5252
      %v5351 = vadd.f32 %v3239, %v5257
      %v5352 = vadd.f32 %v3239, %v5262
      %v5353 = vadd.f32 %v3239, %v5267
      %v5354 = vadd.f32 %v3239, %v5272
      %v5355 = vadd.f32 %v3239, %v5277
      %v5356 = vadd.f32 %v3239, %v5282
      %v5357 = vadd.f32 %v3239, %v5287
      %v5358 = vadd.f32 %v3239, %v5292
      %v5359 = vadd.f32 %v3239, %v5297
      %v5360 = vadd.f32 %v3239, %v5302
      %v5361 = vadd.f32 %v3239, %v5307
      %v5362 = vadd.f32 %v3239, %v5312
      %v5363 = vadd.f32 %v3239, %v5317
      %v5364 = vadd.f32 %v3239, %v5322
      %v5365 = vadd.f32 %v3239, %v5327
      %v5366 = vadd.f32 %v3239, %v5332
      %s5367 = scalar_lea.vmem %s2, 40
      %v5368 = vld [vmem:[%s5367] sm:$0xff]
      %5369 = vmatprep.subr.mxu0 0.0
      %5370 = vmatpush1.msra.mxu0 0.0
      %5371 = vmatprep.subr.mxu0 0.0
      %5372 = vmatpush1.msra.mxu0 0.0
      %5373 = vmatprep.subr.mxu0 0.0
      %5374 = vmatpush1.msra.mxu0 0.0
      %5375 = vmatprep.subr.mxu0 0.0
      %5376 = vmatpush1.msra.mxu0 0.0
      %5377 = vmatprep.subr.mxu0 0.0
      %5378 = vmatpush1.msra.mxu0 0.0
      %5379 = vmatprep.subr.mxu0 0.0
      %5380 = vmatpush1.msra.mxu0 0.0
      %5381 = vmatprep.subr.mxu0 0.0
      %5382 = vmatpush1.msra.mxu0 0.0
      %5383 = vmatprep.subr.mxu0 0.0
      %5384 = vmatpush1.msra.mxu0 0.0
      %5385 = vmatprep.subr.mxu0 0.0
      %5386 = vmatpush1.msra.mxu0 0.0
      %5387 = vmatprep.subr.mxu0 0.0
      %5388 = vmatpush1.msra.mxu0 0.0
      %5389 = vmatprep.subr.mxu0 0.0
      %5390 = vmatpush1.msra.mxu0 0.0
      %5391 = vmatprep.subr.mxu0 0.0
      %5392 = vmatpush1.msra.mxu0 0.0
      %5393 = vmatprep.subr.mxu0 0.0
      %5394 = vmatpush1.msra.mxu0 0.0
      %5395 = vmatprep.subr.mxu0 0.0
      %5396 = vmatpush1.msra.mxu0 0.0
      %5397 = vmatprep.subr.mxu0 0.0
      %5398 = vmatpush1.msra.mxu0 0.0
      %5399 = vmatprep.subr.mxu0 0.0
      %5400 = vmatpush1.msra.mxu0 %v5368
      %5401 = vmatprep.subr.mxu0 0.0
      %5402 = vmatpush2.msra.mxu0 0.0
      %5403 = vmatprep.subr.mxu0 0.0
      %5404 = vmatpush2.msra.mxu0 0.0
      %5405 = vmatprep.subr.mxu0 0.0
      %5406 = vmatpush2.msra.mxu0 0.0
      %5407 = vmatprep.subr.mxu0 0.0
      %5408 = vmatpush2.msra.mxu0 0.0
      %5409 = vmatprep.subr.mxu0 0.0
      %5410 = vmatpush2.msra.mxu0 0.0
      %5411 = vmatprep.subr.mxu0 0.0
      %5412 = vmatpush2.msra.mxu0 0.0
      %5413 = vmatprep.subr.mxu0 0.0
      %5414 = vmatpush2.msra.mxu0 0.0
      %5415 = vmatprep.subr.mxu0 0.0
      %5416 = vmatpush2.msra.mxu0 0.0
      %5417 = vmatprep.subr.mxu0 0.0
      %5418 = vmatpush2.msra.mxu0 0.0
      %5419 = vmatprep.subr.mxu0 0.0
      %5420 = vmatpush2.msra.mxu0 0.0
      %5421 = vmatprep.subr.mxu0 0.0
      %5422 = vmatpush2.msra.mxu0 0.0
      %5423 = vmatprep.subr.mxu0 0.0
      %5424 = vmatpush2.msra.mxu0 0.0
      %5425 = vmatprep.subr.mxu0 0.0
      %5426 = vmatpush2.msra.mxu0 0.0
      %5427 = vmatprep.subr.mxu0 0.0
      %5428 = vmatpush2.msra.mxu0 0.0
      %5429 = vmatprep.subr.mxu0 0.0
      %5430 = vmatpush2.msra.mxu0 0.0
      %5431 = vmatprep.subr.mxu0 0.0
      %5432 = vmatpush2.msra.mxu0 0.0
      %5433 = vmatprep.mubr.f32.mxu0 0.0
      %5434 = vmatmul.mubr.f32.gmra.mxu0 %v3275
      %v5435 = vpop.f32.mrf.mxu0
      %v5436 = vadd.f32 0.0, %v5435
      %v5437 = vpop.f32.mrf.mxu0
      %5438 = vmatprep.mubr.f32.mxu0 0.0
      %5439 = vmatmul.mubr.f32.gmra.mxu0 %v3278
      %v5440 = vpop.f32.mrf.mxu0
      %v5441 = vadd.f32 0.0, %v5440
      %v5442 = vpop.f32.mrf.mxu0
      %5443 = vmatprep.mubr.f32.mxu0 0.0
      %5444 = vmatmul.mubr.f32.gmra.mxu0 %v3281
      %v5445 = vpop.f32.mrf.mxu0
      %v5446 = vadd.f32 0.0, %v5445
      %v5447 = vpop.f32.mrf.mxu0
      %5448 = vmatprep.mubr.f32.mxu0 0.0
      %5449 = vmatmul.mubr.f32.gmra.mxu0 %v3284
      %v5450 = vpop.f32.mrf.mxu0
      %v5451 = vadd.f32 0.0, %v5450
      %v5452 = vpop.f32.mrf.mxu0
      %5453 = vmatprep.mubr.f32.mxu0 0.0
      %5454 = vmatmul.mubr.f32.gmra.mxu0 %v3287
      %v5455 = vpop.f32.mrf.mxu0
      %v5456 = vadd.f32 0.0, %v5455
      %v5457 = vpop.f32.mrf.mxu0
      %5458 = vmatprep.mubr.f32.mxu0 0.0
      %5459 = vmatmul.mubr.f32.gmra.mxu0 %v3290
      %v5460 = vpop.f32.mrf.mxu0
      %v5461 = vadd.f32 0.0, %v5460
      %v5462 = vpop.f32.mrf.mxu0
      %5463 = vmatprep.mubr.f32.mxu0 0.0
      %5464 = vmatmul.mubr.f32.gmra.mxu0 %v3293
      %v5465 = vpop.f32.mrf.mxu0
      %v5466 = vadd.f32 0.0, %v5465
      %v5467 = vpop.f32.mrf.mxu0
      %5468 = vmatprep.mubr.f32.mxu0 0.0
      %5469 = vmatmul.mubr.f32.gmra.mxu0 %v3296
      %v5470 = vpop.f32.mrf.mxu0
      %v5471 = vadd.f32 0.0, %v5470
      %v5472 = vpop.f32.mrf.mxu0
      %5473 = vmatprep.mubr.f32.mxu0 0.0
      %5474 = vmatmul.mubr.f32.gmra.mxu0 %v3299
      %v5475 = vpop.f32.mrf.mxu0
      %v5476 = vadd.f32 0.0, %v5475
      %v5477 = vpop.f32.mrf.mxu0
      %5478 = vmatprep.mubr.f32.mxu0 0.0
      %5479 = vmatmul.mubr.f32.gmra.mxu0 %v3302
      %v5480 = vpop.f32.mrf.mxu0
      %v5481 = vadd.f32 0.0, %v5480
      %v5482 = vpop.f32.mrf.mxu0
      %5483 = vmatprep.mubr.f32.mxu0 0.0
      %5484 = vmatmul.mubr.f32.gmra.mxu0 %v3305
      %v5485 = vpop.f32.mrf.mxu0
      %v5486 = vadd.f32 0.0, %v5485
      %v5487 = vpop.f32.mrf.mxu0
      %5488 = vmatprep.mubr.f32.mxu0 0.0
      %5489 = vmatmul.mubr.f32.gmra.mxu0 %v3308
      %v5490 = vpop.f32.mrf.mxu0
      %v5491 = vadd.f32 0.0, %v5490
      %v5492 = vpop.f32.mrf.mxu0
      %5493 = vmatprep.mubr.f32.mxu0 0.0
      %5494 = vmatmul.mubr.f32.gmra.mxu0 %v3311
      %v5495 = vpop.f32.mrf.mxu0
      %v5496 = vadd.f32 0.0, %v5495
      %v5497 = vpop.f32.mrf.mxu0
      %5498 = vmatprep.mubr.f32.mxu0 0.0
      %5499 = vmatmul.mubr.f32.gmra.mxu0 %v3314
      %v5500 = vpop.f32.mrf.mxu0
      %v5501 = vadd.f32 0.0, %v5500
      %v5502 = vpop.f32.mrf.mxu0
      %5503 = vmatprep.mubr.f32.mxu0 0.0
      %5504 = vmatmul.mubr.f32.gmra.mxu0 %v3317
      %v5505 = vpop.f32.mrf.mxu0
      %v5506 = vadd.f32 0.0, %v5505
      %v5507 = vpop.f32.mrf.mxu0
      %5508 = vmatprep.mubr.f32.mxu0 0.0
      %5509 = vmatmul.mubr.f32.gmra.mxu0 %v3320
      %v5510 = vpop.f32.mrf.mxu0
      %v5511 = vadd.f32 0.0, %v5510
      %v5512 = vpop.f32.mrf.mxu0
      %5513 = vmatprep.mubr.f32.mxu0 0.0
      %5514 = vmatmul.mubr.f32.gmra.mxu0 %v3323
      %v5515 = vpop.f32.mrf.mxu0
      %v5516 = vadd.f32 0.0, %v5515
      %v5517 = vpop.f32.mrf.mxu0
      %5518 = vmatprep.mubr.f32.mxu0 0.0
      %5519 = vmatmul.mubr.f32.gmra.mxu0 %v3326
      %v5520 = vpop.f32.mrf.mxu0
      %v5521 = vadd.f32 0.0, %v5520
      %v5522 = vpop.f32.mrf.mxu0
      %5523 = vmatprep.mubr.f32.mxu0 0.0
      %5524 = vmatmul.mubr.f32.gmra.mxu0 %v3329
      %v5525 = vpop.f32.mrf.mxu0
      %v5526 = vadd.f32 0.0, %v5525
      %v5527 = vpop.f32.mrf.mxu0
      %5528 = vmatprep.mubr.f32.mxu0 0.0
      %5529 = vmatmul.mubr.f32.gmra.mxu0 %v3332
      %v5530 = vpop.f32.mrf.mxu0
      %v5531 = vadd.f32 0.0, %v5530
      %v5532 = vpop.f32.mrf.mxu0
      %5533 = vmatprep.mubr.f32.mxu0 0.0
      %5534 = vmatmul.mubr.f32.gmra.mxu0 %v3335
      %v5535 = vpop.f32.mrf.mxu0
      %v5536 = vadd.f32 0.0, %v5535
      %v5537 = vpop.f32.mrf.mxu0
      %5538 = vmatprep.mubr.f32.mxu0 0.0
      %5539 = vmatmul.mubr.f32.gmra.mxu0 %v3338
      %v5540 = vpop.f32.mrf.mxu0
      %v5541 = vadd.f32 0.0, %v5540
      %v5542 = vpop.f32.mrf.mxu0
      %5543 = vmatprep.mubr.f32.mxu0 0.0
      %5544 = vmatmul.mubr.f32.gmra.mxu0 %v3341
      %v5545 = vpop.f32.mrf.mxu0
      %v5546 = vadd.f32 0.0, %v5545
      %v5547 = vpop.f32.mrf.mxu0
      %5548 = vmatprep.mubr.f32.mxu0 0.0
      %5549 = vmatmul.mubr.f32.gmra.mxu0 %v3344
      %v5550 = vpop.f32.mrf.mxu0
      %v5551 = vadd.f32 0.0, %v5550
      %v5552 = vpop.f32.mrf.mxu0
      %5553 = vmatprep.mubr.f32.mxu0 0.0
      %5554 = vmatmul.mubr.f32.gmra.mxu0 %v3347
      %v5555 = vpop.f32.mrf.mxu0
      %v5556 = vadd.f32 0.0, %v5555
      %v5557 = vpop.f32.mrf.mxu0
      %5558 = vmatprep.mubr.f32.mxu0 0.0
      %5559 = vmatmul.mubr.f32.gmra.mxu0 %v3350
      %v5560 = vpop.f32.mrf.mxu0
      %v5561 = vadd.f32 0.0, %v5560
      %v5562 = vpop.f32.mrf.mxu0
      %5563 = vmatprep.mubr.f32.mxu0 0.0
      %5564 = vmatmul.mubr.f32.gmra.mxu0 %v3353
      %v5565 = vpop.f32.mrf.mxu0
      %v5566 = vadd.f32 0.0, %v5565
      %v5567 = vpop.f32.mrf.mxu0
      %5568 = vmatprep.mubr.f32.mxu0 0.0
      %5569 = vmatmul.mubr.f32.gmra.mxu0 %v3356
      %v5570 = vpop.f32.mrf.mxu0
      %v5571 = vadd.f32 0.0, %v5570
      %v5572 = vpop.f32.mrf.mxu0
      %5573 = vmatprep.mubr.f32.mxu0 0.0
      %5574 = vmatmul.mubr.f32.gmra.mxu0 %v3359
      %v5575 = vpop.f32.mrf.mxu0
      %v5576 = vadd.f32 0.0, %v5575
      %v5577 = vpop.f32.mrf.mxu0
      %5578 = vmatprep.mubr.f32.mxu0 0.0
      %5579 = vmatmul.mubr.f32.gmra.mxu0 %v3362
      %v5580 = vpop.f32.mrf.mxu0
      %v5581 = vadd.f32 0.0, %v5580
      %v5582 = vpop.f32.mrf.mxu0
      %5583 = vmatprep.mubr.f32.mxu0 0.0
      %5584 = vmatmul.mubr.f32.gmra.mxu0 %v3365
      %v5585 = vpop.f32.mrf.mxu0
      %v5586 = vadd.f32 0.0, %v5585
      %v5587 = vpop.f32.mrf.mxu0
      %5588 = vmatprep.mubr.f32.mxu0 0.0
      %5589 = vmatmul.mubr.f32.gmra.mxu0 %v3368
      %v5590 = vpop.f32.mrf.mxu0
      %v5591 = vadd.f32 0.0, %v5590
      %v5592 = vpop.f32.mrf.mxu0
      %5593 = vdwg.mxu0
      %v5594 = vadd.f32 %v5335, %v5436
      %v5595 = vadd.f32 %v5336, %v5441
      %v5596 = vadd.f32 %v5337, %v5446
      %v5597 = vadd.f32 %v5338, %v5451
      %v5598 = vadd.f32 %v5339, %v5456
      %v5599 = vadd.f32 %v5340, %v5461
      %v5600 = vadd.f32 %v5341, %v5466
      %v5601 = vadd.f32 %v5342, %v5471
      %v5602 = vadd.f32 %v5343, %v5476
      %v5603 = vadd.f32 %v5344, %v5481
      %v5604 = vadd.f32 %v5345, %v5486
      %v5605 = vadd.f32 %v5346, %v5491
      %v5606 = vadd.f32 %v5347, %v5496
      %v5607 = vadd.f32 %v5348, %v5501
      %v5608 = vadd.f32 %v5349, %v5506
      %v5609 = vadd.f32 %v5350, %v5511
      %v5610 = vadd.f32 %v5351, %v5516
      %v5611 = vadd.f32 %v5352, %v5521
      %v5612 = vadd.f32 %v5353, %v5526
      %v5613 = vadd.f32 %v5354, %v5531
      %v5614 = vadd.f32 %v5355, %v5536
      %v5615 = vadd.f32 %v5356, %v5541
      %v5616 = vadd.f32 %v5357, %v5546
      %v5617 = vadd.f32 %v5358, %v5551
      %v5618 = vadd.f32 %v5359, %v5556
      %v5619 = vadd.f32 %v5360, %v5561
      %v5620 = vadd.f32 %v5361, %v5566
      %v5621 = vadd.f32 %v5362, %v5571
      %v5622 = vadd.f32 %v5363, %v5576
      %v5623 = vadd.f32 %v5364, %v5581
      %v5624 = vadd.f32 %v5365, %v5586
      %v5625 = vadd.f32 %v5366, %v5591
      %s5626 = scalar_lea.vmem %s2, 48
      %v5627 = vld [vmem:[%s5626] sm:$0xff]
      %5628 = vmatprep.subr.mxu0 0.0
      %5629 = vmatpush1.msra.mxu0 0.0
      %5630 = vmatprep.subr.mxu0 0.0
      %5631 = vmatpush1.msra.mxu0 0.0
      %5632 = vmatprep.subr.mxu0 0.0
      %5633 = vmatpush1.msra.mxu0 0.0
      %5634 = vmatprep.subr.mxu0 0.0
      %5635 = vmatpush1.msra.mxu0 0.0
      %5636 = vmatprep.subr.mxu0 0.0
      %5637 = vmatpush1.msra.mxu0 0.0
      %5638 = vmatprep.subr.mxu0 0.0
      %5639 = vmatpush1.msra.mxu0 0.0
      %5640 = vmatprep.subr.mxu0 0.0
      %5641 = vmatpush1.msra.mxu0 0.0
      %5642 = vmatprep.subr.mxu0 0.0
      %5643 = vmatpush1.msra.mxu0 0.0
      %5644 = vmatprep.subr.mxu0 0.0
      %5645 = vmatpush1.msra.mxu0 0.0
      %5646 = vmatprep.subr.mxu0 0.0
      %5647 = vmatpush1.msra.mxu0 0.0
      %5648 = vmatprep.subr.mxu0 0.0
      %5649 = vmatpush1.msra.mxu0 0.0
      %5650 = vmatprep.subr.mxu0 0.0
      %5651 = vmatpush1.msra.mxu0 0.0
      %5652 = vmatprep.subr.mxu0 0.0
      %5653 = vmatpush1.msra.mxu0 0.0
      %5654 = vmatprep.subr.mxu0 0.0
      %5655 = vmatpush1.msra.mxu0 0.0
      %5656 = vmatprep.subr.mxu0 0.0
      %5657 = vmatpush1.msra.mxu0 0.0
      %5658 = vmatprep.subr.mxu0 0.0
      %5659 = vmatpush1.msra.mxu0 %v5627
      %5660 = vmatprep.subr.mxu0 0.0
      %5661 = vmatpush2.msra.mxu0 0.0
      %5662 = vmatprep.subr.mxu0 0.0
      %5663 = vmatpush2.msra.mxu0 0.0
      %5664 = vmatprep.subr.mxu0 0.0
      %5665 = vmatpush2.msra.mxu0 0.0
      %5666 = vmatprep.subr.mxu0 0.0
      %5667 = vmatpush2.msra.mxu0 0.0
      %5668 = vmatprep.subr.mxu0 0.0
      %5669 = vmatpush2.msra.mxu0 0.0
      %5670 = vmatprep.subr.mxu0 0.0
      %5671 = vmatpush2.msra.mxu0 0.0
      %5672 = vmatprep.subr.mxu0 0.0
      %5673 = vmatpush2.msra.mxu0 0.0
      %5674 = vmatprep.subr.mxu0 0.0
      %5675 = vmatpush2.msra.mxu0 0.0
      %5676 = vmatprep.subr.mxu0 0.0
      %5677 = vmatpush2.msra.mxu0 0.0
      %5678 = vmatprep.subr.mxu0 0.0
      %5679 = vmatpush2.msra.mxu0 0.0
      %5680 = vmatprep.subr.mxu0 0.0
      %5681 = vmatpush2.msra.mxu0 0.0
      %5682 = vmatprep.subr.mxu0 0.0
      %5683 = vmatpush2.msra.mxu0 0.0
      %5684 = vmatprep.subr.mxu0 0.0
      %5685 = vmatpush2.msra.mxu0 0.0
      %5686 = vmatprep.subr.mxu0 0.0
      %5687 = vmatpush2.msra.mxu0 0.0
      %5688 = vmatprep.subr.mxu0 0.0
      %5689 = vmatpush2.msra.mxu0 0.0
      %5690 = vmatprep.subr.mxu0 0.0
      %5691 = vmatpush2.msra.mxu0 0.0
      %5692 = vmatprep.mubr.f32.mxu0 0.0
      %5693 = vmatmul.mubr.f32.gmra.mxu0 %v3662
      %v5694 = vpop.f32.mrf.mxu0
      %v5695 = vadd.f32 0.0, %v5694
      %v5696 = vpop.f32.mrf.mxu0
      %5697 = vmatprep.mubr.f32.mxu0 0.0
      %5698 = vmatmul.mubr.f32.gmra.mxu0 %v3665
      %v5699 = vpop.f32.mrf.mxu0
      %v5700 = vadd.f32 0.0, %v5699
      %v5701 = vpop.f32.mrf.mxu0
      %5702 = vmatprep.mubr.f32.mxu0 0.0
      %5703 = vmatmul.mubr.f32.gmra.mxu0 %v3668
      %v5704 = vpop.f32.mrf.mxu0
      %v5705 = vadd.f32 0.0, %v5704
      %v5706 = vpop.f32.mrf.mxu0
      %5707 = vmatprep.mubr.f32.mxu0 0.0
      %5708 = vmatmul.mubr.f32.gmra.mxu0 %v3671
      %v5709 = vpop.f32.mrf.mxu0
      %v5710 = vadd.f32 0.0, %v5709
      %v5711 = vpop.f32.mrf.mxu0
      %5712 = vmatprep.mubr.f32.mxu0 0.0
      %5713 = vmatmul.mubr.f32.gmra.mxu0 %v3674
      %v5714 = vpop.f32.mrf.mxu0
      %v5715 = vadd.f32 0.0, %v5714
      %v5716 = vpop.f32.mrf.mxu0
      %5717 = vmatprep.mubr.f32.mxu0 0.0
      %5718 = vmatmul.mubr.f32.gmra.mxu0 %v3677
      %v5719 = vpop.f32.mrf.mxu0
      %v5720 = vadd.f32 0.0, %v5719
      %v5721 = vpop.f32.mrf.mxu0
      %5722 = vmatprep.mubr.f32.mxu0 0.0
      %5723 = vmatmul.mubr.f32.gmra.mxu0 %v3680
      %v5724 = vpop.f32.mrf.mxu0
      %v5725 = vadd.f32 0.0, %v5724
      %v5726 = vpop.f32.mrf.mxu0
      %5727 = vmatprep.mubr.f32.mxu0 0.0
      %5728 = vmatmul.mubr.f32.gmra.mxu0 %v3683
      %v5729 = vpop.f32.mrf.mxu0
      %v5730 = vadd.f32 0.0, %v5729
      %v5731 = vpop.f32.mrf.mxu0
      %5732 = vmatprep.mubr.f32.mxu0 0.0
      %5733 = vmatmul.mubr.f32.gmra.mxu0 %v3686
      %v5734 = vpop.f32.mrf.mxu0
      %v5735 = vadd.f32 0.0, %v5734
      %v5736 = vpop.f32.mrf.mxu0
      %5737 = vmatprep.mubr.f32.mxu0 0.0
      %5738 = vmatmul.mubr.f32.gmra.mxu0 %v3689
      %v5739 = vpop.f32.mrf.mxu0
      %v5740 = vadd.f32 0.0, %v5739
      %v5741 = vpop.f32.mrf.mxu0
      %5742 = vmatprep.mubr.f32.mxu0 0.0
      %5743 = vmatmul.mubr.f32.gmra.mxu0 %v3692
      %v5744 = vpop.f32.mrf.mxu0
      %v5745 = vadd.f32 0.0, %v5744
      %v5746 = vpop.f32.mrf.mxu0
      %5747 = vmatprep.mubr.f32.mxu0 0.0
      %5748 = vmatmul.mubr.f32.gmra.mxu0 %v3695
      %v5749 = vpop.f32.mrf.mxu0
      %v5750 = vadd.f32 0.0, %v5749
      %v5751 = vpop.f32.mrf.mxu0
      %5752 = vmatprep.mubr.f32.mxu0 0.0
      %5753 = vmatmul.mubr.f32.gmra.mxu0 %v3698
      %v5754 = vpop.f32.mrf.mxu0
      %v5755 = vadd.f32 0.0, %v5754
      %v5756 = vpop.f32.mrf.mxu0
      %5757 = vmatprep.mubr.f32.mxu0 0.0
      %5758 = vmatmul.mubr.f32.gmra.mxu0 %v3701
      %v5759 = vpop.f32.mrf.mxu0
      %v5760 = vadd.f32 0.0, %v5759
      %v5761 = vpop.f32.mrf.mxu0
      %5762 = vmatprep.mubr.f32.mxu0 0.0
      %5763 = vmatmul.mubr.f32.gmra.mxu0 %v3704
      %v5764 = vpop.f32.mrf.mxu0
      %v5765 = vadd.f32 0.0, %v5764
      %v5766 = vpop.f32.mrf.mxu0
      %5767 = vmatprep.mubr.f32.mxu0 0.0
      %5768 = vmatmul.mubr.f32.gmra.mxu0 %v3707
      %v5769 = vpop.f32.mrf.mxu0
      %v5770 = vadd.f32 0.0, %v5769
      %v5771 = vpop.f32.mrf.mxu0
      %5772 = vmatprep.mubr.f32.mxu0 0.0
      %5773 = vmatmul.mubr.f32.gmra.mxu0 %v3710
      %v5774 = vpop.f32.mrf.mxu0
      %v5775 = vadd.f32 0.0, %v5774
      %v5776 = vpop.f32.mrf.mxu0
      %5777 = vmatprep.mubr.f32.mxu0 0.0
      %5778 = vmatmul.mubr.f32.gmra.mxu0 %v3713
      %v5779 = vpop.f32.mrf.mxu0
      %v5780 = vadd.f32 0.0, %v5779
      %v5781 = vpop.f32.mrf.mxu0
      %5782 = vmatprep.mubr.f32.mxu0 0.0
      %5783 = vmatmul.mubr.f32.gmra.mxu0 %v3716
      %v5784 = vpop.f32.mrf.mxu0
      %v5785 = vadd.f32 0.0, %v5784
      %v5786 = vpop.f32.mrf.mxu0
      %5787 = vmatprep.mubr.f32.mxu0 0.0
      %5788 = vmatmul.mubr.f32.gmra.mxu0 %v3719
      %v5789 = vpop.f32.mrf.mxu0
      %v5790 = vadd.f32 0.0, %v5789
      %v5791 = vpop.f32.mrf.mxu0
      %5792 = vmatprep.mubr.f32.mxu0 0.0
      %5793 = vmatmul.mubr.f32.gmra.mxu0 %v3722
      %v5794 = vpop.f32.mrf.mxu0
      %v5795 = vadd.f32 0.0, %v5794
      %v5796 = vpop.f32.mrf.mxu0
      %5797 = vmatprep.mubr.f32.mxu0 0.0
      %5798 = vmatmul.mubr.f32.gmra.mxu0 %v3725
      %v5799 = vpop.f32.mrf.mxu0
      %v5800 = vadd.f32 0.0, %v5799
      %v5801 = vpop.f32.mrf.mxu0
      %5802 = vmatprep.mubr.f32.mxu0 0.0
      %5803 = vmatmul.mubr.f32.gmra.mxu0 %v3728
      %v5804 = vpop.f32.mrf.mxu0
      %v5805 = vadd.f32 0.0, %v5804
      %v5806 = vpop.f32.mrf.mxu0
      %5807 = vmatprep.mubr.f32.mxu0 0.0
      %5808 = vmatmul.mubr.f32.gmra.mxu0 %v3731
      %v5809 = vpop.f32.mrf.mxu0
      %v5810 = vadd.f32 0.0, %v5809
      %v5811 = vpop.f32.mrf.mxu0
      %5812 = vmatprep.mubr.f32.mxu0 0.0
      %5813 = vmatmul.mubr.f32.gmra.mxu0 %v3734
      %v5814 = vpop.f32.mrf.mxu0
      %v5815 = vadd.f32 0.0, %v5814
      %v5816 = vpop.f32.mrf.mxu0
      %5817 = vmatprep.mubr.f32.mxu0 0.0
      %5818 = vmatmul.mubr.f32.gmra.mxu0 %v3737
      %v5819 = vpop.f32.mrf.mxu0
      %v5820 = vadd.f32 0.0, %v5819
      %v5821 = vpop.f32.mrf.mxu0
      %5822 = vmatprep.mubr.f32.mxu0 0.0
      %5823 = vmatmul.mubr.f32.gmra.mxu0 %v3740
      %v5824 = vpop.f32.mrf.mxu0
      %v5825 = vadd.f32 0.0, %v5824
      %v5826 = vpop.f32.mrf.mxu0
      %5827 = vmatprep.mubr.f32.mxu0 0.0
      %5828 = vmatmul.mubr.f32.gmra.mxu0 %v3743
      %v5829 = vpop.f32.mrf.mxu0
      %v5830 = vadd.f32 0.0, %v5829
      %v5831 = vpop.f32.mrf.mxu0
      %5832 = vmatprep.mubr.f32.mxu0 0.0
      %5833 = vmatmul.mubr.f32.gmra.mxu0 %v3746
      %v5834 = vpop.f32.mrf.mxu0
      %v5835 = vadd.f32 0.0, %v5834
      %v5836 = vpop.f32.mrf.mxu0
      %5837 = vmatprep.mubr.f32.mxu0 0.0
      %5838 = vmatmul.mubr.f32.gmra.mxu0 %v3749
      %v5839 = vpop.f32.mrf.mxu0
      %v5840 = vadd.f32 0.0, %v5839
      %v5841 = vpop.f32.mrf.mxu0
      %5842 = vmatprep.mubr.f32.mxu0 0.0
      %5843 = vmatmul.mubr.f32.gmra.mxu0 %v3752
      %v5844 = vpop.f32.mrf.mxu0
      %v5845 = vadd.f32 0.0, %v5844
      %v5846 = vpop.f32.mrf.mxu0
      %5847 = vmatprep.mubr.f32.mxu0 0.0
      %5848 = vmatmul.mubr.f32.gmra.mxu0 %v3755
      %v5849 = vpop.f32.mrf.mxu0
      %v5850 = vadd.f32 0.0, %v5849
      %v5851 = vpop.f32.mrf.mxu0
      %5852 = vdwg.mxu0
      %v5853 = vadd.f32 %v5594, %v5695
      %v5854 = vadd.f32 %v5595, %v5700
      %v5855 = vadd.f32 %v5596, %v5705
      %v5856 = vadd.f32 %v5597, %v5710
      %v5857 = vadd.f32 %v5598, %v5715
      %v5858 = vadd.f32 %v5599, %v5720
      %v5859 = vadd.f32 %v5600, %v5725
      %v5860 = vadd.f32 %v5601, %v5730
      %v5861 = vadd.f32 %v5602, %v5735
      %v5862 = vadd.f32 %v5603, %v5740
      %v5863 = vadd.f32 %v5604, %v5745
      %v5864 = vadd.f32 %v5605, %v5750
      %v5865 = vadd.f32 %v5606, %v5755
      %v5866 = vadd.f32 %v5607, %v5760
      %v5867 = vadd.f32 %v5608, %v5765
      %v5868 = vadd.f32 %v5609, %v5770
      %v5869 = vadd.f32 %v5610, %v5775
      %v5870 = vadd.f32 %v5611, %v5780
      %v5871 = vadd.f32 %v5612, %v5785
      %v5872 = vadd.f32 %v5613, %v5790
      %v5873 = vadd.f32 %v5614, %v5795
      %v5874 = vadd.f32 %v5615, %v5800
      %v5875 = vadd.f32 %v5616, %v5805
      %v5876 = vadd.f32 %v5617, %v5810
      %v5877 = vadd.f32 %v5618, %v5815
      %v5878 = vadd.f32 %v5619, %v5820
      %v5879 = vadd.f32 %v5620, %v5825
      %v5880 = vadd.f32 %v5621, %v5830
      %v5881 = vadd.f32 %v5622, %v5835
      %v5882 = vadd.f32 %v5623, %v5840
      %v5883 = vadd.f32 %v5624, %v5845
      %v5884 = vadd.f32 %v5625, %v5850
      %v5885 = vld [vmem:[#allocation2 + $0x2] sm:$0xff]
      %v5886 = vld [vmem:[#allocation2 + $0xa] sm:$0xff]
      %v5887 = vld [vmem:[#allocation2 + $0x1a] sm:$0xff]
      %v5888 = vld [vmem:[#allocation2 + $0x22] sm:$0xff]
      %v5889 = vld [vmem:[#allocation2 + $0x32] sm:$0xff]
      %v5890 = vld [vmem:[#allocation2 + $0x3a] sm:$0xff]
      %v5891 = vld [vmem:[#allocation2 + $0x4a] sm:$0xff]
      %v5892 = vld [vmem:[#allocation2 + $0x52] sm:$0xff]
      %v5893 = vld [vmem:[#allocation2 + $0x62] sm:$0xff]
      %v5894 = vld [vmem:[#allocation2 + $0x6a] sm:$0xff]
      %v5895 = vld [vmem:[#allocation2 + $0x7a] sm:$0xff]
      %v5896 = vld [vmem:[#allocation2 + $0x82] sm:$0xff]
      %v5897 = vld [vmem:[#allocation2 + $0x92] sm:$0xff]
      %v5898 = vld [vmem:[#allocation2 + $0x9a] sm:$0xff]
      %v5899 = vld [vmem:[#allocation2 + $0xaa] sm:$0xff]
      %v5900 = vld [vmem:[#allocation2 + $0xb2] sm:$0xff]
      %v5901 = vld [vmem:[#allocation2 + $0xc2] sm:$0xff]
      %v5902 = vld [vmem:[#allocation2 + $0xca] sm:$0xff]
      %v5903 = vld [vmem:[#allocation2 + $0xda] sm:$0xff]
      %v5904 = vld [vmem:[#allocation2 + $0xe2] sm:$0xff]
      %v5905 = vld [vmem:[#allocation2 + $0xf2] sm:$0xff]
      %v5906 = vld [vmem:[#allocation2 + $0xfa] sm:$0xff]
      %v5907 = vld [vmem:[#allocation2 + $0x10a] sm:$0xff]
      %v5908 = vld [vmem:[#allocation2 + $0x112] sm:$0xff]
      %v5909 = vld [vmem:[#allocation2 + $0x122] sm:$0xff]
      %v5910 = vld [vmem:[#allocation2 + $0x12a] sm:$0xff]
      %v5911 = vld [vmem:[#allocation2 + $0x13a] sm:$0xff]
      %v5912 = vld [vmem:[#allocation2 + $0x142] sm:$0xff]
      %v5913 = vld [vmem:[#allocation2 + $0x152] sm:$0xff]
      %v5914 = vld [vmem:[#allocation2 + $0x15a] sm:$0xff]
      %v5915 = vld [vmem:[#allocation2 + $0x16a] sm:$0xff]
      %v5916 = vld [vmem:[#allocation2 + $0x172] sm:$0xff]
      %s5917 = scalar_lea.vmem %s2, 56
      %v5918 = vld [vmem:[%s5917] sm:$0xff]
      %v5920 = vsel %vm3152, %v5885, 0
      %v5923 = vsel %vm3152, %v5886, 0
      %v5926 = vsel %vm3152, %v5887, 0
      %v5929 = vsel %vm3152, %v5888, 0
      %v5932 = vsel %vm3152, %v5889, 0
      %v5935 = vsel %vm3152, %v5890, 0
      %v5938 = vsel %vm3152, %v5891, 0
      %v5941 = vsel %vm3152, %v5892, 0
      %v5944 = vsel %vm3152, %v5893, 0
      %v5947 = vsel %vm3152, %v5894, 0
      %v5950 = vsel %vm3152, %v5895, 0
      %v5953 = vsel %vm3152, %v5896, 0
      %v5956 = vsel %vm3152, %v5897, 0
      %v5959 = vsel %vm3152, %v5898, 0
      %v5962 = vsel %vm3152, %v5899, 0
      %v5965 = vsel %vm3152, %v5900, 0
      %v5968 = vsel %vm3152, %v5901, 0
      %v5971 = vsel %vm3152, %v5902, 0
      %v5974 = vsel %vm3152, %v5903, 0
      %v5977 = vsel %vm3152, %v5904, 0
      %v5980 = vsel %vm3152, %v5905, 0
      %v5983 = vsel %vm3152, %v5906, 0
      %v5986 = vsel %vm3152, %v5907, 0
      %v5989 = vsel %vm3152, %v5908, 0
      %v5992 = vsel %vm3152, %v5909, 0
      %v5995 = vsel %vm3152, %v5910, 0
      %v5998 = vsel %vm3152, %v5911, 0
      %v6001 = vsel %vm3152, %v5912, 0
      %v6004 = vsel %vm3152, %v5913, 0
      %v6007 = vsel %vm3152, %v5914, 0
      %v6010 = vsel %vm3152, %v5915, 0
      %v6013 = vsel %vm3152, %v5916, 0
      %6015 = vmatprep.subr.mxu0 0.0
      %6016 = vmatpush1.msra.mxu0 0.0
      %6017 = vmatprep.subr.mxu0 0.0
      %6018 = vmatpush1.msra.mxu0 0.0
      %6019 = vmatprep.subr.mxu0 0.0
      %6020 = vmatpush1.msra.mxu0 0.0
      %6021 = vmatprep.subr.mxu0 0.0
      %6022 = vmatpush1.msra.mxu0 0.0
      %6023 = vmatprep.subr.mxu0 0.0
      %6024 = vmatpush1.msra.mxu0 0.0
      %6025 = vmatprep.subr.mxu0 0.0
      %6026 = vmatpush1.msra.mxu0 0.0
      %6027 = vmatprep.subr.mxu0 0.0
      %6028 = vmatpush1.msra.mxu0 0.0
      %6029 = vmatprep.subr.mxu0 0.0
      %6030 = vmatpush1.msra.mxu0 0.0
      %6031 = vmatprep.subr.mxu0 0.0
      %6032 = vmatpush1.msra.mxu0 0.0
      %6033 = vmatprep.subr.mxu0 0.0
      %6034 = vmatpush1.msra.mxu0 0.0
      %6035 = vmatprep.subr.mxu0 0.0
      %6036 = vmatpush1.msra.mxu0 0.0
      %6037 = vmatprep.subr.mxu0 0.0
      %6038 = vmatpush1.msra.mxu0 0.0
      %6039 = vmatprep.subr.mxu0 0.0
      %6040 = vmatpush1.msra.mxu0 0.0
      %6041 = vmatprep.subr.mxu0 0.0
      %6042 = vmatpush1.msra.mxu0 0.0
      %6043 = vmatprep.subr.mxu0 0.0
      %6044 = vmatpush1.msra.mxu0 0.0
      %6045 = vmatprep.subr.mxu0 0.0
      %6046 = vmatpush1.msra.mxu0 %v5918
      %6047 = vmatprep.subr.mxu0 0.0
      %6048 = vmatpush2.msra.mxu0 0.0
      %6049 = vmatprep.subr.mxu0 0.0
      %6050 = vmatpush2.msra.mxu0 0.0
      %6051 = vmatprep.subr.mxu0 0.0
      %6052 = vmatpush2.msra.mxu0 0.0
      %6053 = vmatprep.subr.mxu0 0.0
      %6054 = vmatpush2.msra.mxu0 0.0
      %6055 = vmatprep.subr.mxu0 0.0
      %6056 = vmatpush2.msra.mxu0 0.0
      %6057 = vmatprep.subr.mxu0 0.0
      %6058 = vmatpush2.msra.mxu0 0.0
      %6059 = vmatprep.subr.mxu0 0.0
      %6060 = vmatpush2.msra.mxu0 0.0
      %6061 = vmatprep.subr.mxu0 0.0
      %6062 = vmatpush2.msra.mxu0 0.0
      %6063 = vmatprep.subr.mxu0 0.0
      %6064 = vmatpush2.msra.mxu0 0.0
      %6065 = vmatprep.subr.mxu0 0.0
      %6066 = vmatpush2.msra.mxu0 0.0
      %6067 = vmatprep.subr.mxu0 0.0
      %6068 = vmatpush2.msra.mxu0 0.0
      %6069 = vmatprep.subr.mxu0 0.0
      %6070 = vmatpush2.msra.mxu0 0.0
      %6071 = vmatprep.subr.mxu0 0.0
      %6072 = vmatpush2.msra.mxu0 0.0
      %6073 = vmatprep.subr.mxu0 0.0
      %6074 = vmatpush2.msra.mxu0 0.0
      %6075 = vmatprep.subr.mxu0 0.0
      %6076 = vmatpush2.msra.mxu0 0.0
      %6077 = vmatprep.subr.mxu0 0.0
      %6078 = vmatpush2.msra.mxu0 0.0
      %6079 = vmatprep.mubr.f32.mxu0 0.0
      %6080 = vmatmul.mubr.f32.gmra.mxu0 %v5920
      %v6081 = vpop.f32.mrf.mxu0
      %v6082 = vadd.f32 0.0, %v6081
      %v6083 = vpop.f32.mrf.mxu0
      %6084 = vmatprep.mubr.f32.mxu0 0.0
      %6085 = vmatmul.mubr.f32.gmra.mxu0 %v5923
      %v6086 = vpop.f32.mrf.mxu0
      %v6087 = vadd.f32 0.0, %v6086
      %v6088 = vpop.f32.mrf.mxu0
      %6089 = vmatprep.mubr.f32.mxu0 0.0
      %6090 = vmatmul.mubr.f32.gmra.mxu0 %v5926
      %v6091 = vpop.f32.mrf.mxu0
      %v6092 = vadd.f32 0.0, %v6091
      %v6093 = vpop.f32.mrf.mxu0
      %6094 = vmatprep.mubr.f32.mxu0 0.0
      %6095 = vmatmul.mubr.f32.gmra.mxu0 %v5929
      %v6096 = vpop.f32.mrf.mxu0
      %v6097 = vadd.f32 0.0, %v6096
      %v6098 = vpop.f32.mrf.mxu0
      %6099 = vmatprep.mubr.f32.mxu0 0.0
      %6100 = vmatmul.mubr.f32.gmra.mxu0 %v5932
      %v6101 = vpop.f32.mrf.mxu0
      %v6102 = vadd.f32 0.0, %v6101
      %v6103 = vpop.f32.mrf.mxu0
      %6104 = vmatprep.mubr.f32.mxu0 0.0
      %6105 = vmatmul.mubr.f32.gmra.mxu0 %v5935
      %v6106 = vpop.f32.mrf.mxu0
      %v6107 = vadd.f32 0.0, %v6106
      %v6108 = vpop.f32.mrf.mxu0
      %6109 = vmatprep.mubr.f32.mxu0 0.0
      %6110 = vmatmul.mubr.f32.gmra.mxu0 %v5938
      %v6111 = vpop.f32.mrf.mxu0
      %v6112 = vadd.f32 0.0, %v6111
      %v6113 = vpop.f32.mrf.mxu0
      %6114 = vmatprep.mubr.f32.mxu0 0.0
      %6115 = vmatmul.mubr.f32.gmra.mxu0 %v5941
      %v6116 = vpop.f32.mrf.mxu0
      %v6117 = vadd.f32 0.0, %v6116
      %v6118 = vpop.f32.mrf.mxu0
      %6119 = vmatprep.mubr.f32.mxu0 0.0
      %6120 = vmatmul.mubr.f32.gmra.mxu0 %v5944
      %v6121 = vpop.f32.mrf.mxu0
      %v6122 = vadd.f32 0.0, %v6121
      %v6123 = vpop.f32.mrf.mxu0
      %6124 = vmatprep.mubr.f32.mxu0 0.0
      %6125 = vmatmul.mubr.f32.gmra.mxu0 %v5947
      %v6126 = vpop.f32.mrf.mxu0
      %v6127 = vadd.f32 0.0, %v6126
      %v6128 = vpop.f32.mrf.mxu0
      %6129 = vmatprep.mubr.f32.mxu0 0.0
      %6130 = vmatmul.mubr.f32.gmra.mxu0 %v5950
      %v6131 = vpop.f32.mrf.mxu0
      %v6132 = vadd.f32 0.0, %v6131
      %v6133 = vpop.f32.mrf.mxu0
      %6134 = vmatprep.mubr.f32.mxu0 0.0
      %6135 = vmatmul.mubr.f32.gmra.mxu0 %v5953
      %v6136 = vpop.f32.mrf.mxu0
      %v6137 = vadd.f32 0.0, %v6136
      %v6138 = vpop.f32.mrf.mxu0
      %6139 = vmatprep.mubr.f32.mxu0 0.0
      %6140 = vmatmul.mubr.f32.gmra.mxu0 %v5956
      %v6141 = vpop.f32.mrf.mxu0
      %v6142 = vadd.f32 0.0, %v6141
      %v6143 = vpop.f32.mrf.mxu0
      %6144 = vmatprep.mubr.f32.mxu0 0.0
      %6145 = vmatmul.mubr.f32.gmra.mxu0 %v5959
      %v6146 = vpop.f32.mrf.mxu0
      %v6147 = vadd.f32 0.0, %v6146
      %v6148 = vpop.f32.mrf.mxu0
      %6149 = vmatprep.mubr.f32.mxu0 0.0
      %6150 = vmatmul.mubr.f32.gmra.mxu0 %v5962
      %v6151 = vpop.f32.mrf.mxu0
      %v6152 = vadd.f32 0.0, %v6151
      %v6153 = vpop.f32.mrf.mxu0
      %6154 = vmatprep.mubr.f32.mxu0 0.0
      %6155 = vmatmul.mubr.f32.gmra.mxu0 %v5965
      %v6156 = vpop.f32.mrf.mxu0
      %v6157 = vadd.f32 0.0, %v6156
      %v6158 = vpop.f32.mrf.mxu0
      %6159 = vmatprep.mubr.f32.mxu0 0.0
      %6160 = vmatmul.mubr.f32.gmra.mxu0 %v5968
      %v6161 = vpop.f32.mrf.mxu0
      %v6162 = vadd.f32 0.0, %v6161
      %v6163 = vpop.f32.mrf.mxu0
      %6164 = vmatprep.mubr.f32.mxu0 0.0
      %6165 = vmatmul.mubr.f32.gmra.mxu0 %v5971
      %v6166 = vpop.f32.mrf.mxu0
      %v6167 = vadd.f32 0.0, %v6166
      %v6168 = vpop.f32.mrf.mxu0
      %6169 = vmatprep.mubr.f32.mxu0 0.0
      %6170 = vmatmul.mubr.f32.gmra.mxu0 %v5974
      %v6171 = vpop.f32.mrf.mxu0
      %v6172 = vadd.f32 0.0, %v6171
      %v6173 = vpop.f32.mrf.mxu0
      %6174 = vmatprep.mubr.f32.mxu0 0.0
      %6175 = vmatmul.mubr.f32.gmra.mxu0 %v5977
      %v6176 = vpop.f32.mrf.mxu0
      %v6177 = vadd.f32 0.0, %v6176
      %v6178 = vpop.f32.mrf.mxu0
      %6179 = vmatprep.mubr.f32.mxu0 0.0
      %6180 = vmatmul.mubr.f32.gmra.mxu0 %v5980
      %v6181 = vpop.f32.mrf.mxu0
      %v6182 = vadd.f32 0.0, %v6181
      %v6183 = vpop.f32.mrf.mxu0
      %6184 = vmatprep.mubr.f32.mxu0 0.0
      %6185 = vmatmul.mubr.f32.gmra.mxu0 %v5983
      %v6186 = vpop.f32.mrf.mxu0
      %v6187 = vadd.f32 0.0, %v6186
      %v6188 = vpop.f32.mrf.mxu0
      %6189 = vmatprep.mubr.f32.mxu0 0.0
      %6190 = vmatmul.mubr.f32.gmra.mxu0 %v5986
      %v6191 = vpop.f32.mrf.mxu0
      %v6192 = vadd.f32 0.0, %v6191
      %v6193 = vpop.f32.mrf.mxu0
      %6194 = vmatprep.mubr.f32.mxu0 0.0
      %6195 = vmatmul.mubr.f32.gmra.mxu0 %v5989
      %v6196 = vpop.f32.mrf.mxu0
      %v6197 = vadd.f32 0.0, %v6196
      %v6198 = vpop.f32.mrf.mxu0
      %6199 = vmatprep.mubr.f32.mxu0 0.0
      %6200 = vmatmul.mubr.f32.gmra.mxu0 %v5992
      %v6201 = vpop.f32.mrf.mxu0
      %v6202 = vadd.f32 0.0, %v6201
      %v6203 = vpop.f32.mrf.mxu0
      %6204 = vmatprep.mubr.f32.mxu0 0.0
      %6205 = vmatmul.mubr.f32.gmra.mxu0 %v5995
      %v6206 = vpop.f32.mrf.mxu0
      %v6207 = vadd.f32 0.0, %v6206
      %v6208 = vpop.f32.mrf.mxu0
      %6209 = vmatprep.mubr.f32.mxu0 0.0
      %6210 = vmatmul.mubr.f32.gmra.mxu0 %v5998
      %v6211 = vpop.f32.mrf.mxu0
      %v6212 = vadd.f32 0.0, %v6211
      %v6213 = vpop.f32.mrf.mxu0
      %6214 = vmatprep.mubr.f32.mxu0 0.0
      %6215 = vmatmul.mubr.f32.gmra.mxu0 %v6001
      %v6216 = vpop.f32.mrf.mxu0
      %v6217 = vadd.f32 0.0, %v6216
      %v6218 = vpop.f32.mrf.mxu0
      %6219 = vmatprep.mubr.f32.mxu0 0.0
      %6220 = vmatmul.mubr.f32.gmra.mxu0 %v6004
      %v6221 = vpop.f32.mrf.mxu0
      %v6222 = vadd.f32 0.0, %v6221
      %v6223 = vpop.f32.mrf.mxu0
      %6224 = vmatprep.mubr.f32.mxu0 0.0
      %6225 = vmatmul.mubr.f32.gmra.mxu0 %v6007
      %v6226 = vpop.f32.mrf.mxu0
      %v6227 = vadd.f32 0.0, %v6226
      %v6228 = vpop.f32.mrf.mxu0
      %6229 = vmatprep.mubr.f32.mxu0 0.0
      %6230 = vmatmul.mubr.f32.gmra.mxu0 %v6010
      %v6231 = vpop.f32.mrf.mxu0
      %v6232 = vadd.f32 0.0, %v6231
      %v6233 = vpop.f32.mrf.mxu0
      %6234 = vmatprep.mubr.f32.mxu0 0.0
      %6235 = vmatmul.mubr.f32.gmra.mxu0 %v6013
      %v6236 = vpop.f32.mrf.mxu0
      %v6237 = vadd.f32 0.0, %v6236
      %v6238 = vpop.f32.mrf.mxu0
      %6239 = vdwg.mxu0
      %v6240 = vadd.f32 %v5853, %v6082
      %v6241 = vadd.f32 %v5854, %v6087
      %v6242 = vadd.f32 %v5855, %v6092
      %v6243 = vadd.f32 %v5856, %v6097
      %v6244 = vadd.f32 %v5857, %v6102
      %v6245 = vadd.f32 %v5858, %v6107
      %v6246 = vadd.f32 %v5859, %v6112
      %v6247 = vadd.f32 %v5860, %v6117
      %v6248 = vadd.f32 %v5861, %v6122
      %v6249 = vadd.f32 %v5862, %v6127
      %v6250 = vadd.f32 %v5863, %v6132
      %v6251 = vadd.f32 %v5864, %v6137
      %v6252 = vadd.f32 %v5865, %v6142
      %v6253 = vadd.f32 %v5866, %v6147
      %v6254 = vadd.f32 %v5867, %v6152
      %v6255 = vadd.f32 %v5868, %v6157
      %v6256 = vadd.f32 %v5869, %v6162
      %v6257 = vadd.f32 %v5870, %v6167
      %v6258 = vadd.f32 %v5871, %v6172
      %v6259 = vadd.f32 %v5872, %v6177
      %v6260 = vadd.f32 %v5873, %v6182
      %v6261 = vadd.f32 %v5874, %v6187
      %v6262 = vadd.f32 %v5875, %v6192
      %v6263 = vadd.f32 %v5876, %v6197
      %v6264 = vadd.f32 %v5877, %v6202
      %v6265 = vadd.f32 %v5878, %v6207
      %v6266 = vadd.f32 %v5879, %v6212
      %v6267 = vadd.f32 %v5880, %v6217
      %v6268 = vadd.f32 %v5881, %v6222
      %v6269 = vadd.f32 %v5882, %v6227
      %v6270 = vadd.f32 %v5883, %v6232
      %v6271 = vadd.f32 %v5884, %v6237
      %s6272 = scalar_lea.vmem %s2, 64
      %v6273 = vld [vmem:[%s6272] sm:$0xff]
      %6274 = vmatprep.subr.mxu0 0.0
      %6275 = vmatpush1.msra.mxu0 0.0
      %6276 = vmatprep.subr.mxu0 0.0
      %6277 = vmatpush1.msra.mxu0 0.0
      %6278 = vmatprep.subr.mxu0 0.0
      %6279 = vmatpush1.msra.mxu0 0.0
      %6280 = vmatprep.subr.mxu0 0.0
      %6281 = vmatpush1.msra.mxu0 0.0
      %6282 = vmatprep.subr.mxu0 0.0
      %6283 = vmatpush1.msra.mxu0 0.0
      %6284 = vmatprep.subr.mxu0 0.0
      %6285 = vmatpush1.msra.mxu0 0.0
      %6286 = vmatprep.subr.mxu0 0.0
      %6287 = vmatpush1.msra.mxu0 0.0
      %6288 = vmatprep.subr.mxu0 0.0
      %6289 = vmatpush1.msra.mxu0 0.0
      %6290 = vmatprep.subr.mxu0 0.0
      %6291 = vmatpush1.msra.mxu0 0.0
      %6292 = vmatprep.subr.mxu0 0.0
      %6293 = vmatpush1.msra.mxu0 0.0
      %6294 = vmatprep.subr.mxu0 0.0
      %6295 = vmatpush1.msra.mxu0 0.0
      %6296 = vmatprep.subr.mxu0 0.0
      %6297 = vmatpush1.msra.mxu0 0.0
      %6298 = vmatprep.subr.mxu0 0.0
      %6299 = vmatpush1.msra.mxu0 0.0
      %6300 = vmatprep.subr.mxu0 0.0
      %6301 = vmatpush1.msra.mxu0 0.0
      %6302 = vmatprep.subr.mxu0 0.0
      %6303 = vmatpush1.msra.mxu0 0.0
      %6304 = vmatprep.subr.mxu0 0.0
      %6305 = vmatpush1.msra.mxu0 %v6273
      %6306 = vmatprep.subr.mxu0 0.0
      %6307 = vmatpush2.msra.mxu0 0.0
      %6308 = vmatprep.subr.mxu0 0.0
      %6309 = vmatpush2.msra.mxu0 0.0
      %6310 = vmatprep.subr.mxu0 0.0
      %6311 = vmatpush2.msra.mxu0 0.0
      %6312 = vmatprep.subr.mxu0 0.0
      %6313 = vmatpush2.msra.mxu0 0.0
      %6314 = vmatprep.subr.mxu0 0.0
      %6315 = vmatpush2.msra.mxu0 0.0
      %6316 = vmatprep.subr.mxu0 0.0
      %6317 = vmatpush2.msra.mxu0 0.0
      %6318 = vmatprep.subr.mxu0 0.0
      %6319 = vmatpush2.msra.mxu0 0.0
      %6320 = vmatprep.subr.mxu0 0.0
      %6321 = vmatpush2.msra.mxu0 0.0
      %6322 = vmatprep.subr.mxu0 0.0
      %6323 = vmatpush2.msra.mxu0 0.0
      %6324 = vmatprep.subr.mxu0 0.0
      %6325 = vmatpush2.msra.mxu0 0.0
      %6326 = vmatprep.subr.mxu0 0.0
      %6327 = vmatpush2.msra.mxu0 0.0
      %6328 = vmatprep.subr.mxu0 0.0
      %6329 = vmatpush2.msra.mxu0 0.0
      %6330 = vmatprep.subr.mxu0 0.0
      %6331 = vmatpush2.msra.mxu0 0.0
      %6332 = vmatprep.subr.mxu0 0.0
      %6333 = vmatpush2.msra.mxu0 0.0
      %6334 = vmatprep.subr.mxu0 0.0
      %6335 = vmatpush2.msra.mxu0 0.0
      %6336 = vmatprep.subr.mxu0 0.0
      %6337 = vmatpush2.msra.mxu0 0.0
      %6338 = vmatprep.mubr.f32.mxu0 0.0
      %6339 = vmatmul.mubr.f32.gmra.mxu0 %v4049
      %v6340 = vpop.f32.mrf.mxu0
      %v6341 = vadd.f32 0.0, %v6340
      %v6342 = vpop.f32.mrf.mxu0
      %6343 = vmatprep.mubr.f32.mxu0 0.0
      %6344 = vmatmul.mubr.f32.gmra.mxu0 %v4052
      %v6345 = vpop.f32.mrf.mxu0
      %v6346 = vadd.f32 0.0, %v6345
      %v6347 = vpop.f32.mrf.mxu0
      %6348 = vmatprep.mubr.f32.mxu0 0.0
      %6349 = vmatmul.mubr.f32.gmra.mxu0 %v4055
      %v6350 = vpop.f32.mrf.mxu0
      %v6351 = vadd.f32 0.0, %v6350
      %v6352 = vpop.f32.mrf.mxu0
      %6353 = vmatprep.mubr.f32.mxu0 0.0
      %6354 = vmatmul.mubr.f32.gmra.mxu0 %v4058
      %v6355 = vpop.f32.mrf.mxu0
      %v6356 = vadd.f32 0.0, %v6355
      %v6357 = vpop.f32.mrf.mxu0
      %6358 = vmatprep.mubr.f32.mxu0 0.0
      %6359 = vmatmul.mubr.f32.gmra.mxu0 %v4061
      %v6360 = vpop.f32.mrf.mxu0
      %v6361 = vadd.f32 0.0, %v6360
      %v6362 = vpop.f32.mrf.mxu0
      %6363 = vmatprep.mubr.f32.mxu0 0.0
      %6364 = vmatmul.mubr.f32.gmra.mxu0 %v4064
      %v6365 = vpop.f32.mrf.mxu0
      %v6366 = vadd.f32 0.0, %v6365
      %v6367 = vpop.f32.mrf.mxu0
      %6368 = vmatprep.mubr.f32.mxu0 0.0
      %6369 = vmatmul.mubr.f32.gmra.mxu0 %v4067
      %v6370 = vpop.f32.mrf.mxu0
      %v6371 = vadd.f32 0.0, %v6370
      %v6372 = vpop.f32.mrf.mxu0
      %6373 = vmatprep.mubr.f32.mxu0 0.0
      %6374 = vmatmul.mubr.f32.gmra.mxu0 %v4070
      %v6375 = vpop.f32.mrf.mxu0
      %v6376 = vadd.f32 0.0, %v6375
      %v6377 = vpop.f32.mrf.mxu0
      %6378 = vmatprep.mubr.f32.mxu0 0.0
      %6379 = vmatmul.mubr.f32.gmra.mxu0 %v4073
      %v6380 = vpop.f32.mrf.mxu0
      %v6381 = vadd.f32 0.0, %v6380
      %v6382 = vpop.f32.mrf.mxu0
      %6383 = vmatprep.mubr.f32.mxu0 0.0
      %6384 = vmatmul.mubr.f32.gmra.mxu0 %v4076
      %v6385 = vpop.f32.mrf.mxu0
      %v6386 = vadd.f32 0.0, %v6385
      %v6387 = vpop.f32.mrf.mxu0
      %6388 = vmatprep.mubr.f32.mxu0 0.0
      %6389 = vmatmul.mubr.f32.gmra.mxu0 %v4079
      %v6390 = vpop.f32.mrf.mxu0
      %v6391 = vadd.f32 0.0, %v6390
      %v6392 = vpop.f32.mrf.mxu0
      %6393 = vmatprep.mubr.f32.mxu0 0.0
      %6394 = vmatmul.mubr.f32.gmra.mxu0 %v4082
      %v6395 = vpop.f32.mrf.mxu0
      %v6396 = vadd.f32 0.0, %v6395
      %v6397 = vpop.f32.mrf.mxu0
      %6398 = vmatprep.mubr.f32.mxu0 0.0
      %6399 = vmatmul.mubr.f32.gmra.mxu0 %v4085
      %v6400 = vpop.f32.mrf.mxu0
      %v6401 = vadd.f32 0.0, %v6400
      %v6402 = vpop.f32.mrf.mxu0
      %6403 = vmatprep.mubr.f32.mxu0 0.0
      %6404 = vmatmul.mubr.f32.gmra.mxu0 %v4088
      %v6405 = vpop.f32.mrf.mxu0
      %v6406 = vadd.f32 0.0, %v6405
      %v6407 = vpop.f32.mrf.mxu0
      %6408 = vmatprep.mubr.f32.mxu0 0.0
      %6409 = vmatmul.mubr.f32.gmra.mxu0 %v4091
      %v6410 = vpop.f32.mrf.mxu0
      %v6411 = vadd.f32 0.0, %v6410
      %v6412 = vpop.f32.mrf.mxu0
      %6413 = vmatprep.mubr.f32.mxu0 0.0
      %6414 = vmatmul.mubr.f32.gmra.mxu0 %v4094
      %v6415 = vpop.f32.mrf.mxu0
      %v6416 = vadd.f32 0.0, %v6415
      %v6417 = vpop.f32.mrf.mxu0
      %6418 = vmatprep.mubr.f32.mxu0 0.0
      %6419 = vmatmul.mubr.f32.gmra.mxu0 %v4097
      %v6420 = vpop.f32.mrf.mxu0
      %v6421 = vadd.f32 0.0, %v6420
      %v6422 = vpop.f32.mrf.mxu0
      %6423 = vmatprep.mubr.f32.mxu0 0.0
      %6424 = vmatmul.mubr.f32.gmra.mxu0 %v4100
      %v6425 = vpop.f32.mrf.mxu0
      %v6426 = vadd.f32 0.0, %v6425
      %v6427 = vpop.f32.mrf.mxu0
      %6428 = vmatprep.mubr.f32.mxu0 0.0
      %6429 = vmatmul.mubr.f32.gmra.mxu0 %v4103
      %v6430 = vpop.f32.mrf.mxu0
      %v6431 = vadd.f32 0.0, %v6430
      %v6432 = vpop.f32.mrf.mxu0
      %6433 = vmatprep.mubr.f32.mxu0 0.0
      %6434 = vmatmul.mubr.f32.gmra.mxu0 %v4106
      %v6435 = vpop.f32.mrf.mxu0
      %v6436 = vadd.f32 0.0, %v6435
      %v6437 = vpop.f32.mrf.mxu0
      %6438 = vmatprep.mubr.f32.mxu0 0.0
      %6439 = vmatmul.mubr.f32.gmra.mxu0 %v4109
      %v6440 = vpop.f32.mrf.mxu0
      %v6441 = vadd.f32 0.0, %v6440
      %v6442 = vpop.f32.mrf.mxu0
      %6443 = vmatprep.mubr.f32.mxu0 0.0
      %6444 = vmatmul.mubr.f32.gmra.mxu0 %v4112
      %v6445 = vpop.f32.mrf.mxu0
      %v6446 = vadd.f32 0.0, %v6445
      %v6447 = vpop.f32.mrf.mxu0
      %6448 = vmatprep.mubr.f32.mxu0 0.0
      %6449 = vmatmul.mubr.f32.gmra.mxu0 %v4115
      %v6450 = vpop.f32.mrf.mxu0
      %v6451 = vadd.f32 0.0, %v6450
      %v6452 = vpop.f32.mrf.mxu0
      %6453 = vmatprep.mubr.f32.mxu0 0.0
      %6454 = vmatmul.mubr.f32.gmra.mxu0 %v4118
      %v6455 = vpop.f32.mrf.mxu0
      %v6456 = vadd.f32 0.0, %v6455
      %v6457 = vpop.f32.mrf.mxu0
      %6458 = vmatprep.mubr.f32.mxu0 0.0
      %6459 = vmatmul.mubr.f32.gmra.mxu0 %v4121
      %v6460 = vpop.f32.mrf.mxu0
      %v6461 = vadd.f32 0.0, %v6460
      %v6462 = vpop.f32.mrf.mxu0
      %6463 = vmatprep.mubr.f32.mxu0 0.0
      %6464 = vmatmul.mubr.f32.gmra.mxu0 %v4124
      %v6465 = vpop.f32.mrf.mxu0
      %v6466 = vadd.f32 0.0, %v6465
      %v6467 = vpop.f32.mrf.mxu0
      %6468 = vmatprep.mubr.f32.mxu0 0.0
      %6469 = vmatmul.mubr.f32.gmra.mxu0 %v4127
      %v6470 = vpop.f32.mrf.mxu0
      %v6471 = vadd.f32 0.0, %v6470
      %v6472 = vpop.f32.mrf.mxu0
      %6473 = vmatprep.mubr.f32.mxu0 0.0
      %6474 = vmatmul.mubr.f32.gmra.mxu0 %v4130
      %v6475 = vpop.f32.mrf.mxu0
      %v6476 = vadd.f32 0.0, %v6475
      %v6477 = vpop.f32.mrf.mxu0
      %6478 = vmatprep.mubr.f32.mxu0 0.0
      %6479 = vmatmul.mubr.f32.gmra.mxu0 %v4133
      %v6480 = vpop.f32.mrf.mxu0
      %v6481 = vadd.f32 0.0, %v6480
      %v6482 = vpop.f32.mrf.mxu0
      %6483 = vmatprep.mubr.f32.mxu0 0.0
      %6484 = vmatmul.mubr.f32.gmra.mxu0 %v4136
      %v6485 = vpop.f32.mrf.mxu0
      %v6486 = vadd.f32 0.0, %v6485
      %v6487 = vpop.f32.mrf.mxu0
      %6488 = vmatprep.mubr.f32.mxu0 0.0
      %6489 = vmatmul.mubr.f32.gmra.mxu0 %v4139
      %v6490 = vpop.f32.mrf.mxu0
      %v6491 = vadd.f32 0.0, %v6490
      %v6492 = vpop.f32.mrf.mxu0
      %6493 = vmatprep.mubr.f32.mxu0 0.0
      %6494 = vmatmul.mubr.f32.gmra.mxu0 %v4142
      %v6495 = vpop.f32.mrf.mxu0
      %v6496 = vadd.f32 0.0, %v6495
      %v6497 = vpop.f32.mrf.mxu0
      %6498 = vdwg.mxu0
      %v6499 = vadd.f32 %v6240, %v6341
      %v6500 = vadd.f32 %v6241, %v6346
      %v6501 = vadd.f32 %v6242, %v6351
      %v6502 = vadd.f32 %v6243, %v6356
      %v6503 = vadd.f32 %v6244, %v6361
      %v6504 = vadd.f32 %v6245, %v6366
      %v6505 = vadd.f32 %v6246, %v6371
      %v6506 = vadd.f32 %v6247, %v6376
      %v6507 = vadd.f32 %v6248, %v6381
      %v6508 = vadd.f32 %v6249, %v6386
      %v6509 = vadd.f32 %v6250, %v6391
      %v6510 = vadd.f32 %v6251, %v6396
      %v6511 = vadd.f32 %v6252, %v6401
      %v6512 = vadd.f32 %v6253, %v6406
      %v6513 = vadd.f32 %v6254, %v6411
      %v6514 = vadd.f32 %v6255, %v6416
      %v6515 = vadd.f32 %v6256, %v6421
      %v6516 = vadd.f32 %v6257, %v6426
      %v6517 = vadd.f32 %v6258, %v6431
      %v6518 = vadd.f32 %v6259, %v6436
      %v6519 = vadd.f32 %v6260, %v6441
      %v6520 = vadd.f32 %v6261, %v6446
      %v6521 = vadd.f32 %v6262, %v6451
      %v6522 = vadd.f32 %v6263, %v6456
      %v6523 = vadd.f32 %v6264, %v6461
      %v6524 = vadd.f32 %v6265, %v6466
      %v6525 = vadd.f32 %v6266, %v6471
      %v6526 = vadd.f32 %v6267, %v6476
      %v6527 = vadd.f32 %v6268, %v6481
      %v6528 = vadd.f32 %v6269, %v6486
      %v6529 = vadd.f32 %v6270, %v6491
      %v6530 = vadd.f32 %v6271, %v6496
      %s6531 = scalar_lea.vmem %s2, 72
      %v6532 = vld [vmem:[%s6531] sm:$0xff]
      %6533 = vmatprep.subr.mxu0 0.0
      %6534 = vmatpush1.msra.mxu0 0.0
      %6535 = vmatprep.subr.mxu0 0.0
      %6536 = vmatpush1.msra.mxu0 0.0
      %6537 = vmatprep.subr.mxu0 0.0
      %6538 = vmatpush1.msra.mxu0 0.0
      %6539 = vmatprep.subr.mxu0 0.0
      %6540 = vmatpush1.msra.mxu0 0.0
      %6541 = vmatprep.subr.mxu0 0.0
      %6542 = vmatpush1.msra.mxu0 0.0
      %6543 = vmatprep.subr.mxu0 0.0
      %6544 = vmatpush1.msra.mxu0 0.0
      %6545 = vmatprep.subr.mxu0 0.0
      %6546 = vmatpush1.msra.mxu0 0.0
      %6547 = vmatprep.subr.mxu0 0.0
      %6548 = vmatpush1.msra.mxu0 0.0
      %6549 = vmatprep.subr.mxu0 0.0
      %6550 = vmatpush1.msra.mxu0 0.0
      %6551 = vmatprep.subr.mxu0 0.0
      %6552 = vmatpush1.msra.mxu0 0.0
      %6553 = vmatprep.subr.mxu0 0.0
      %6554 = vmatpush1.msra.mxu0 0.0
      %6555 = vmatprep.subr.mxu0 0.0
      %6556 = vmatpush1.msra.mxu0 0.0
      %6557 = vmatprep.subr.mxu0 0.0
      %6558 = vmatpush1.msra.mxu0 0.0
      %6559 = vmatprep.subr.mxu0 0.0
      %6560 = vmatpush1.msra.mxu0 0.0
      %6561 = vmatprep.subr.mxu0 0.0
      %6562 = vmatpush1.msra.mxu0 0.0
      %6563 = vmatprep.subr.mxu0 0.0
      %6564 = vmatpush1.msra.mxu0 %v6532
      %6565 = vmatprep.subr.mxu0 0.0
      %6566 = vmatpush2.msra.mxu0 0.0
      %6567 = vmatprep.subr.mxu0 0.0
      %6568 = vmatpush2.msra.mxu0 0.0
      %6569 = vmatprep.subr.mxu0 0.0
      %6570 = vmatpush2.msra.mxu0 0.0
      %6571 = vmatprep.subr.mxu0 0.0
      %6572 = vmatpush2.msra.mxu0 0.0
      %6573 = vmatprep.subr.mxu0 0.0
      %6574 = vmatpush2.msra.mxu0 0.0
      %6575 = vmatprep.subr.mxu0 0.0
      %6576 = vmatpush2.msra.mxu0 0.0
      %6577 = vmatprep.subr.mxu0 0.0
      %6578 = vmatpush2.msra.mxu0 0.0
      %6579 = vmatprep.subr.mxu0 0.0
      %6580 = vmatpush2.msra.mxu0 0.0
      %6581 = vmatprep.subr.mxu0 0.0
      %6582 = vmatpush2.msra.mxu0 0.0
      %6583 = vmatprep.subr.mxu0 0.0
      %6584 = vmatpush2.msra.mxu0 0.0
      %6585 = vmatprep.subr.mxu0 0.0
      %6586 = vmatpush2.msra.mxu0 0.0
      %6587 = vmatprep.subr.mxu0 0.0
      %6588 = vmatpush2.msra.mxu0 0.0
      %6589 = vmatprep.subr.mxu0 0.0
      %6590 = vmatpush2.msra.mxu0 0.0
      %6591 = vmatprep.subr.mxu0 0.0
      %6592 = vmatpush2.msra.mxu0 0.0
      %6593 = vmatprep.subr.mxu0 0.0
      %6594 = vmatpush2.msra.mxu0 0.0
      %6595 = vmatprep.subr.mxu0 0.0
      %6596 = vmatpush2.msra.mxu0 0.0
      %6597 = vmatprep.mubr.f32.mxu0 0.0
      %6598 = vmatmul.mubr.f32.gmra.mxu0 %v4436
      %v6599 = vpop.f32.mrf.mxu0
      %v6600 = vadd.f32 0.0, %v6599
      %v6601 = vpop.f32.mrf.mxu0
      %6602 = vmatprep.mubr.f32.mxu0 0.0
      %6603 = vmatmul.mubr.f32.gmra.mxu0 %v4439
      %v6604 = vpop.f32.mrf.mxu0
      %v6605 = vadd.f32 0.0, %v6604
      %v6606 = vpop.f32.mrf.mxu0
      %6607 = vmatprep.mubr.f32.mxu0 0.0
      %6608 = vmatmul.mubr.f32.gmra.mxu0 %v4442
      %v6609 = vpop.f32.mrf.mxu0
      %v6610 = vadd.f32 0.0, %v6609
      %v6611 = vpop.f32.mrf.mxu0
      %6612 = vmatprep.mubr.f32.mxu0 0.0
      %6613 = vmatmul.mubr.f32.gmra.mxu0 %v4445
      %v6614 = vpop.f32.mrf.mxu0
      %v6615 = vadd.f32 0.0, %v6614
      %v6616 = vpop.f32.mrf.mxu0
      %6617 = vmatprep.mubr.f32.mxu0 0.0
      %6618 = vmatmul.mubr.f32.gmra.mxu0 %v4448
      %v6619 = vpop.f32.mrf.mxu0
      %v6620 = vadd.f32 0.0, %v6619
      %v6621 = vpop.f32.mrf.mxu0
      %6622 = vmatprep.mubr.f32.mxu0 0.0
      %6623 = vmatmul.mubr.f32.gmra.mxu0 %v4451
      %v6624 = vpop.f32.mrf.mxu0
      %v6625 = vadd.f32 0.0, %v6624
      %v6626 = vpop.f32.mrf.mxu0
      %6627 = vmatprep.mubr.f32.mxu0 0.0
      %6628 = vmatmul.mubr.f32.gmra.mxu0 %v4454
      %v6629 = vpop.f32.mrf.mxu0
      %v6630 = vadd.f32 0.0, %v6629
      %v6631 = vpop.f32.mrf.mxu0
      %6632 = vmatprep.mubr.f32.mxu0 0.0
      %6633 = vmatmul.mubr.f32.gmra.mxu0 %v4457
      %v6634 = vpop.f32.mrf.mxu0
      %v6635 = vadd.f32 0.0, %v6634
      %v6636 = vpop.f32.mrf.mxu0
      %6637 = vmatprep.mubr.f32.mxu0 0.0
      %6638 = vmatmul.mubr.f32.gmra.mxu0 %v4460
      %v6639 = vpop.f32.mrf.mxu0
      %v6640 = vadd.f32 0.0, %v6639
      %v6641 = vpop.f32.mrf.mxu0
      %6642 = vmatprep.mubr.f32.mxu0 0.0
      %6643 = vmatmul.mubr.f32.gmra.mxu0 %v4463
      %v6644 = vpop.f32.mrf.mxu0
      %v6645 = vadd.f32 0.0, %v6644
      %v6646 = vpop.f32.mrf.mxu0
      %6647 = vmatprep.mubr.f32.mxu0 0.0
      %6648 = vmatmul.mubr.f32.gmra.mxu0 %v4466
      %v6649 = vpop.f32.mrf.mxu0
      %v6650 = vadd.f32 0.0, %v6649
      %v6651 = vpop.f32.mrf.mxu0
      %6652 = vmatprep.mubr.f32.mxu0 0.0
      %6653 = vmatmul.mubr.f32.gmra.mxu0 %v4469
      %v6654 = vpop.f32.mrf.mxu0
      %v6655 = vadd.f32 0.0, %v6654
      %v6656 = vpop.f32.mrf.mxu0
      %6657 = vmatprep.mubr.f32.mxu0 0.0
      %6658 = vmatmul.mubr.f32.gmra.mxu0 %v4472
      %v6659 = vpop.f32.mrf.mxu0
      %v6660 = vadd.f32 0.0, %v6659
      %v6661 = vpop.f32.mrf.mxu0
      %6662 = vmatprep.mubr.f32.mxu0 0.0
      %6663 = vmatmul.mubr.f32.gmra.mxu0 %v4475
      %v6664 = vpop.f32.mrf.mxu0
      %v6665 = vadd.f32 0.0, %v6664
      %v6666 = vpop.f32.mrf.mxu0
      %6667 = vmatprep.mubr.f32.mxu0 0.0
      %6668 = vmatmul.mubr.f32.gmra.mxu0 %v4478
      %v6669 = vpop.f32.mrf.mxu0
      %v6670 = vadd.f32 0.0, %v6669
      %v6671 = vpop.f32.mrf.mxu0
      %6672 = vmatprep.mubr.f32.mxu0 0.0
      %6673 = vmatmul.mubr.f32.gmra.mxu0 %v4481
      %v6674 = vpop.f32.mrf.mxu0
      %v6675 = vadd.f32 0.0, %v6674
      %v6676 = vpop.f32.mrf.mxu0
      %6677 = vmatprep.mubr.f32.mxu0 0.0
      %6678 = vmatmul.mubr.f32.gmra.mxu0 %v4484
      %v6679 = vpop.f32.mrf.mxu0
      %v6680 = vadd.f32 0.0, %v6679
      %v6681 = vpop.f32.mrf.mxu0
      %6682 = vmatprep.mubr.f32.mxu0 0.0
      %6683 = vmatmul.mubr.f32.gmra.mxu0 %v4487
      %v6684 = vpop.f32.mrf.mxu0
      %v6685 = vadd.f32 0.0, %v6684
      %v6686 = vpop.f32.mrf.mxu0
      %6687 = vmatprep.mubr.f32.mxu0 0.0
      %6688 = vmatmul.mubr.f32.gmra.mxu0 %v4490
      %v6689 = vpop.f32.mrf.mxu0
      %v6690 = vadd.f32 0.0, %v6689
      %v6691 = vpop.f32.mrf.mxu0
      %6692 = vmatprep.mubr.f32.mxu0 0.0
      %6693 = vmatmul.mubr.f32.gmra.mxu0 %v4493
      %v6694 = vpop.f32.mrf.mxu0
      %v6695 = vadd.f32 0.0, %v6694
      %v6696 = vpop.f32.mrf.mxu0
      %6697 = vmatprep.mubr.f32.mxu0 0.0
      %6698 = vmatmul.mubr.f32.gmra.mxu0 %v4496
      %v6699 = vpop.f32.mrf.mxu0
      %v6700 = vadd.f32 0.0, %v6699
      %v6701 = vpop.f32.mrf.mxu0
      %6702 = vmatprep.mubr.f32.mxu0 0.0
      %6703 = vmatmul.mubr.f32.gmra.mxu0 %v4499
      %v6704 = vpop.f32.mrf.mxu0
      %v6705 = vadd.f32 0.0, %v6704
      %v6706 = vpop.f32.mrf.mxu0
      %6707 = vmatprep.mubr.f32.mxu0 0.0
      %6708 = vmatmul.mubr.f32.gmra.mxu0 %v4502
      %v6709 = vpop.f32.mrf.mxu0
      %v6710 = vadd.f32 0.0, %v6709
      %v6711 = vpop.f32.mrf.mxu0
      %6712 = vmatprep.mubr.f32.mxu0 0.0
      %6713 = vmatmul.mubr.f32.gmra.mxu0 %v4505
      %v6714 = vpop.f32.mrf.mxu0
      %v6715 = vadd.f32 0.0, %v6714
      %v6716 = vpop.f32.mrf.mxu0
      %6717 = vmatprep.mubr.f32.mxu0 0.0
      %6718 = vmatmul.mubr.f32.gmra.mxu0 %v4508
      %v6719 = vpop.f32.mrf.mxu0
      %v6720 = vadd.f32 0.0, %v6719
      %v6721 = vpop.f32.mrf.mxu0
      %6722 = vmatprep.mubr.f32.mxu0 0.0
      %6723 = vmatmul.mubr.f32.gmra.mxu0 %v4511
      %v6724 = vpop.f32.mrf.mxu0
      %v6725 = vadd.f32 0.0, %v6724
      %v6726 = vpop.f32.mrf.mxu0
      %6727 = vmatprep.mubr.f32.mxu0 0.0
      %6728 = vmatmul.mubr.f32.gmra.mxu0 %v4514
      %v6729 = vpop.f32.mrf.mxu0
      %v6730 = vadd.f32 0.0, %v6729
      %v6731 = vpop.f32.mrf.mxu0
      %6732 = vmatprep.mubr.f32.mxu0 0.0
      %6733 = vmatmul.mubr.f32.gmra.mxu0 %v4517
      %v6734 = vpop.f32.mrf.mxu0
      %v6735 = vadd.f32 0.0, %v6734
      %v6736 = vpop.f32.mrf.mxu0
      %6737 = vmatprep.mubr.f32.mxu0 0.0
      %6738 = vmatmul.mubr.f32.gmra.mxu0 %v4520
      %v6739 = vpop.f32.mrf.mxu0
      %v6740 = vadd.f32 0.0, %v6739
      %v6741 = vpop.f32.mrf.mxu0
      %6742 = vmatprep.mubr.f32.mxu0 0.0
      %6743 = vmatmul.mubr.f32.gmra.mxu0 %v4523
      %v6744 = vpop.f32.mrf.mxu0
      %v6745 = vadd.f32 0.0, %v6744
      %v6746 = vpop.f32.mrf.mxu0
      %6747 = vmatprep.mubr.f32.mxu0 0.0
      %6748 = vmatmul.mubr.f32.gmra.mxu0 %v4526
      %v6749 = vpop.f32.mrf.mxu0
      %v6750 = vadd.f32 0.0, %v6749
      %v6751 = vpop.f32.mrf.mxu0
      %6752 = vmatprep.mubr.f32.mxu0 0.0
      %6753 = vmatmul.mubr.f32.gmra.mxu0 %v4529
      %v6754 = vpop.f32.mrf.mxu0
      %v6755 = vadd.f32 0.0, %v6754
      %v6756 = vpop.f32.mrf.mxu0
      %6757 = vdwg.mxu0
      %v6758 = vadd.f32 %v6499, %v6600
      %v6759 = vadd.f32 %v6500, %v6605
      %v6760 = vadd.f32 %v6501, %v6610
      %v6761 = vadd.f32 %v6502, %v6615
      %v6762 = vadd.f32 %v6503, %v6620
      %v6763 = vadd.f32 %v6504, %v6625
      %v6764 = vadd.f32 %v6505, %v6630
      %v6765 = vadd.f32 %v6506, %v6635
      %v6766 = vadd.f32 %v6507, %v6640
      %v6767 = vadd.f32 %v6508, %v6645
      %v6768 = vadd.f32 %v6509, %v6650
      %v6769 = vadd.f32 %v6510, %v6655
      %v6770 = vadd.f32 %v6511, %v6660
      %v6771 = vadd.f32 %v6512, %v6665
      %v6772 = vadd.f32 %v6513, %v6670
      %v6773 = vadd.f32 %v6514, %v6675
      %v6774 = vadd.f32 %v6515, %v6680
      %v6775 = vadd.f32 %v6516, %v6685
      %v6776 = vadd.f32 %v6517, %v6690
      %v6777 = vadd.f32 %v6518, %v6695
      %v6778 = vadd.f32 %v6519, %v6700
      %v6779 = vadd.f32 %v6520, %v6705
      %v6780 = vadd.f32 %v6521, %v6710
      %v6781 = vadd.f32 %v6522, %v6715
      %v6782 = vadd.f32 %v6523, %v6720
      %v6783 = vadd.f32 %v6524, %v6725
      %v6784 = vadd.f32 %v6525, %v6730
      %v6785 = vadd.f32 %v6526, %v6735
      %v6786 = vadd.f32 %v6527, %v6740
      %v6787 = vadd.f32 %v6528, %v6745
      %v6788 = vadd.f32 %v6529, %v6750
      %v6789 = vadd.f32 %v6530, %v6755
      %vm6790 = vcmp.gt.f32.partialorder %v6758, 0.0
      %vm6791 = vcmp.gt.f32.partialorder %v6759, 0.0
      %vm6792 = vcmp.gt.f32.partialorder %v6760, 0.0
      %vm6793 = vcmp.gt.f32.partialorder %v6761, 0.0
      %vm6794 = vcmp.gt.f32.partialorder %v6762, 0.0
      %vm6795 = vcmp.gt.f32.partialorder %v6763, 0.0
      %vm6796 = vcmp.gt.f32.partialorder %v6764, 0.0
      %vm6797 = vcmp.gt.f32.partialorder %v6765, 0.0
      %vm6798 = vcmp.gt.f32.partialorder %v6766, 0.0
      %vm6799 = vcmp.gt.f32.partialorder %v6767, 0.0
      %vm6800 = vcmp.gt.f32.partialorder %v6768, 0.0
      %vm6801 = vcmp.gt.f32.partialorder %v6769, 0.0
      %vm6802 = vcmp.gt.f32.partialorder %v6770, 0.0
      %vm6803 = vcmp.gt.f32.partialorder %v6771, 0.0
      %vm6804 = vcmp.gt.f32.partialorder %v6772, 0.0
      %vm6805 = vcmp.gt.f32.partialorder %v6773, 0.0
      %vm6806 = vcmp.gt.f32.partialorder %v6774, 0.0
      %vm6807 = vcmp.gt.f32.partialorder %v6775, 0.0
      %vm6808 = vcmp.gt.f32.partialorder %v6776, 0.0
      %vm6809 = vcmp.gt.f32.partialorder %v6777, 0.0
      %vm6810 = vcmp.gt.f32.partialorder %v6778, 0.0
      %vm6811 = vcmp.gt.f32.partialorder %v6779, 0.0
      %vm6812 = vcmp.gt.f32.partialorder %v6780, 0.0
      %vm6813 = vcmp.gt.f32.partialorder %v6781, 0.0
      %vm6814 = vcmp.gt.f32.partialorder %v6782, 0.0
      %vm6815 = vcmp.gt.f32.partialorder %v6783, 0.0
      %vm6816 = vcmp.gt.f32.partialorder %v6784, 0.0
      %vm6817 = vcmp.gt.f32.partialorder %v6785, 0.0
      %vm6818 = vcmp.gt.f32.partialorder %v6786, 0.0
      %vm6819 = vcmp.gt.f32.partialorder %v6787, 0.0
      %vm6820 = vcmp.gt.f32.partialorder %v6788, 0.0
      %vm6821 = vcmp.gt.f32.partialorder %v6789, 0.0
      %v6822 = vmin.f32 %v6758, 0.0
      %v6823 = vmin.f32 %v6759, 0.0
      %v6824 = vmin.f32 %v6760, 0.0
      %v6825 = vmin.f32 %v6761, 0.0
      %v6826 = vmin.f32 %v6762, 0.0
      %v6827 = vmin.f32 %v6763, 0.0
      %v6828 = vmin.f32 %v6764, 0.0
      %v6829 = vmin.f32 %v6765, 0.0
      %v6830 = vmin.f32 %v6766, 0.0
      %v6831 = vmin.f32 %v6767, 0.0
      %v6832 = vmin.f32 %v6768, 0.0
      %v6833 = vmin.f32 %v6769, 0.0
      %v6834 = vmin.f32 %v6770, 0.0
      %v6835 = vmin.f32 %v6771, 0.0
      %v6836 = vmin.f32 %v6772, 0.0
      %v6837 = vmin.f32 %v6773, 0.0
      %v6838 = vmin.f32 %v6774, 0.0
      %v6839 = vmin.f32 %v6775, 0.0
      %v6840 = vmin.f32 %v6776, 0.0
      %v6841 = vmin.f32 %v6777, 0.0
      %v6842 = vmin.f32 %v6778, 0.0
      %v6843 = vmin.f32 %v6779, 0.0
      %v6844 = vmin.f32 %v6780, 0.0
      %v6845 = vmin.f32 %v6781, 0.0
      %v6846 = vmin.f32 %v6782, 0.0
      %v6847 = vmin.f32 %v6783, 0.0
      %v6848 = vmin.f32 %v6784, 0.0
      %v6849 = vmin.f32 %v6785, 0.0
      %v6850 = vmin.f32 %v6786, 0.0
      %v6851 = vmin.f32 %v6787, 0.0
      %v6852 = vmin.f32 %v6788, 0.0
      %v6853 = vmin.f32 %v6789, 0.0
      %v6854 = vmul.f32 %v6822, 1.442695
      %v6855 = vpow.pop %v6854
      %v6856 = vmul.f32 %v6823, 1.442695
      %v6857 = vpow.pop %v6856
      %v6858 = vmul.f32 %v6824, 1.442695
      %v6859 = vpow.pop %v6858
      %v6860 = vmul.f32 %v6825, 1.442695
      %v6861 = vpow.pop %v6860
      %v6862 = vmul.f32 %v6826, 1.442695
      %v6863 = vpow.pop %v6862
      %v6864 = vmul.f32 %v6827, 1.442695
      %v6865 = vpow.pop %v6864
      %v6866 = vmul.f32 %v6828, 1.442695
      %v6867 = vpow.pop %v6866
      %v6868 = vmul.f32 %v6829, 1.442695
      %v6869 = vpow.pop %v6868
      %v6870 = vmul.f32 %v6830, 1.442695
      %v6871 = vpow.pop %v6870
      %v6872 = vmul.f32 %v6831, 1.442695
      %v6873 = vpow.pop %v6872
      %v6874 = vmul.f32 %v6832, 1.442695
      %v6875 = vpow.pop %v6874
      %v6876 = vmul.f32 %v6833, 1.442695
      %v6877 = vpow.pop %v6876
      %v6878 = vmul.f32 %v6834, 1.442695
      %v6879 = vpow.pop %v6878
      %v6880 = vmul.f32 %v6835, 1.442695
      %v6881 = vpow.pop %v6880
      %v6882 = vmul.f32 %v6836, 1.442695
      %v6883 = vpow.pop %v6882
      %v6884 = vmul.f32 %v6837, 1.442695
      %v6885 = vpow.pop %v6884
      %v6886 = vmul.f32 %v6838, 1.442695
      %v6887 = vpow.pop %v6886
      %v6888 = vmul.f32 %v6839, 1.442695
      %v6889 = vpow.pop %v6888
      %v6890 = vmul.f32 %v6840, 1.442695
      %v6891 = vpow.pop %v6890
      %v6892 = vmul.f32 %v6841, 1.442695
      %v6893 = vpow.pop %v6892
      %v6894 = vmul.f32 %v6842, 1.442695
      %v6895 = vpow.pop %v6894
      %v6896 = vmul.f32 %v6843, 1.442695
      %v6897 = vpow.pop %v6896
      %v6898 = vmul.f32 %v6844, 1.442695
      %v6899 = vpow.pop %v6898
      %v6900 = vmul.f32 %v6845, 1.442695
      %v6901 = vpow.pop %v6900
      %v6902 = vmul.f32 %v6846, 1.442695
      %v6903 = vpow.pop %v6902
      %v6904 = vmul.f32 %v6847, 1.442695
      %v6905 = vpow.pop %v6904
      %v6906 = vmul.f32 %v6848, 1.442695
      %v6907 = vpow.pop %v6906
      %v6908 = vmul.f32 %v6849, 1.442695
      %v6909 = vpow.pop %v6908
      %v6910 = vmul.f32 %v6850, 1.442695
      %v6911 = vpow.pop %v6910
      %v6912 = vmul.f32 %v6851, 1.442695
      %v6913 = vpow.pop %v6912
      %v6914 = vmul.f32 %v6852, 1.442695
      %v6915 = vpow.pop %v6914
      %v6916 = vmul.f32 %v6853, 1.442695
      %v6917 = vpow.pop %v6916
      %v6918 = vsub.f32 %v6855, 1.0
      %v6919 = vsub.f32 %v6857, 1.0
      %v6920 = vsub.f32 %v6859, 1.0
      %v6921 = vsub.f32 %v6861, 1.0
      %v6922 = vsub.f32 %v6863, 1.0
      %v6923 = vsub.f32 %v6865, 1.0
      %v6924 = vsub.f32 %v6867, 1.0
      %v6925 = vsub.f32 %v6869, 1.0
      %v6926 = vsub.f32 %v6871, 1.0
      %v6927 = vsub.f32 %v6873, 1.0
      %v6928 = vsub.f32 %v6875, 1.0
      %v6929 = vsub.f32 %v6877, 1.0
      %v6930 = vsub.f32 %v6879, 1.0
      %v6931 = vsub.f32 %v6881, 1.0
      %v6932 = vsub.f32 %v6883, 1.0
      %v6933 = vsub.f32 %v6885, 1.0
      %v6934 = vsub.f32 %v6887, 1.0
      %v6935 = vsub.f32 %v6889, 1.0
      %v6936 = vsub.f32 %v6891, 1.0
      %v6937 = vsub.f32 %v6893, 1.0
      %v6938 = vsub.f32 %v6895, 1.0
      %v6939 = vsub.f32 %v6897, 1.0
      %v6940 = vsub.f32 %v6899, 1.0
      %v6941 = vsub.f32 %v6901, 1.0
      %v6942 = vsub.f32 %v6903, 1.0
      %v6943 = vsub.f32 %v6905, 1.0
      %v6944 = vsub.f32 %v6907, 1.0
      %v6945 = vsub.f32 %v6909, 1.0
      %v6946 = vsub.f32 %v6911, 1.0
      %v6947 = vsub.f32 %v6913, 1.0
      %v6948 = vsub.f32 %v6915, 1.0
      %v6949 = vsub.f32 %v6917, 1.0
      %v6950 = vsel %vm6790, %v6758, %v6918
      %v6951 = vsel %vm6791, %v6759, %v6919
      %v6952 = vsel %vm6792, %v6760, %v6920
      %v6953 = vsel %vm6793, %v6761, %v6921
      %v6954 = vsel %vm6794, %v6762, %v6922
      %v6955 = vsel %vm6795, %v6763, %v6923
      %v6956 = vsel %vm6796, %v6764, %v6924
      %v6957 = vsel %vm6797, %v6765, %v6925
      %v6958 = vsel %vm6798, %v6766, %v6926
      %v6959 = vsel %vm6799, %v6767, %v6927
      %v6960 = vsel %vm6800, %v6768, %v6928
      %v6961 = vsel %vm6801, %v6769, %v6929
      %v6962 = vsel %vm6802, %v6770, %v6930
      %v6963 = vsel %vm6803, %v6771, %v6931
      %v6964 = vsel %vm6804, %v6772, %v6932
      %v6965 = vsel %vm6805, %v6773, %v6933
      %v6966 = vsel %vm6806, %v6774, %v6934
      %v6967 = vsel %vm6807, %v6775, %v6935
      %v6968 = vsel %vm6808, %v6776, %v6936
      %v6969 = vsel %vm6809, %v6777, %v6937
      %v6970 = vsel %vm6810, %v6778, %v6938
      %v6971 = vsel %vm6811, %v6779, %v6939
      %v6972 = vsel %vm6812, %v6780, %v6940
      %v6973 = vsel %vm6813, %v6781, %v6941
      %v6974 = vsel %vm6814, %v6782, %v6942
      %v6975 = vsel %vm6815, %v6783, %v6943
      %v6976 = vsel %vm6816, %v6784, %v6944
      %v6977 = vsel %vm6817, %v6785, %v6945
      %v6978 = vsel %vm6818, %v6786, %v6946
      %v6979 = vsel %vm6819, %v6787, %v6947
      %v6980 = vsel %vm6820, %v6788, %v6948
      %v6981 = vsel %vm6821, %v6789, %v6949
      %6982 = vst.msk [vmem:[%s232] sm:$0xff] %vm3152, %v4948
      %6983 = vst.msk [vmem:[%s232 + $0x8] sm:$0xff] %vm3152, %v4949
      %6984 = vst.msk [vmem:[%s232 + $0x10] sm:$0xff] %vm3152, %v4950
      %6985 = vst.msk [vmem:[%s232 + $0x18] sm:$0xff] %vm3152, %v4951
      %6986 = vst.msk [vmem:[%s232 + $0x20] sm:$0xff] %vm3152, %v4952
      %6987 = vst.msk [vmem:[%s232 + $0x28] sm:$0xff] %vm3152, %v4953
      %6988 = vst.msk [vmem:[%s232 + $0x30] sm:$0xff] %vm3152, %v4954
      %6989 = vst.msk [vmem:[%s232 + $0x38] sm:$0xff] %vm3152, %v4955
      %6990 = vst.msk [vmem:[%s232 + $0x40] sm:$0xff] %vm3152, %v4956
      %6991 = vst.msk [vmem:[%s232 + $0x48] sm:$0xff] %vm3152, %v4957
      %6992 = vst.msk [vmem:[%s232 + $0x50] sm:$0xff] %vm3152, %v4958
      %6993 = vst.msk [vmem:[%s232 + $0x58] sm:$0xff] %vm3152, %v4959
      %6994 = vst.msk [vmem:[%s232 + $0x60] sm:$0xff] %vm3152, %v4960
      %6995 = vst.msk [vmem:[%s232 + $0x68] sm:$0xff] %vm3152, %v4961
      %6996 = vst.msk [vmem:[%s232 + $0x70] sm:$0xff] %vm3152, %v4962
      %6997 = vst.msk [vmem:[%s232 + $0x78] sm:$0xff] %vm3152, %v4963
      %6998 = vst.msk [vmem:[%s232 + $0x80] sm:$0xff] %vm3152, %v4964
      %6999 = vst.msk [vmem:[%s232 + $0x88] sm:$0xff] %vm3152, %v4965
      %7000 = vst.msk [vmem:[%s232 + $0x90] sm:$0xff] %vm3152, %v4966
      %7001 = vst.msk [vmem:[%s232 + $0x98] sm:$0xff] %vm3152, %v4967
      %7002 = vst.msk [vmem:[%s232 + $0xa0] sm:$0xff] %vm3152, %v4968
      %7003 = vst.msk [vmem:[%s232 + $0xa8] sm:$0xff] %vm3152, %v4969
      %7004 = vst.msk [vmem:[%s232 + $0xb0] sm:$0xff] %vm3152, %v4970
      %7005 = vst.msk [vmem:[%s232 + $0xb8] sm:$0xff] %vm3152, %v4971
      %7006 = vst.msk [vmem:[%s232 + $0xc0] sm:$0xff] %vm3152, %v4972
      %7007 = vst.msk [vmem:[%s232 + $0xc8] sm:$0xff] %vm3152, %v4973
      %7008 = vst.msk [vmem:[%s232 + $0xd0] sm:$0xff] %vm3152, %v4974
      %7009 = vst.msk [vmem:[%s232 + $0xd8] sm:$0xff] %vm3152, %v4975
      %7010 = vst.msk [vmem:[%s232 + $0xe0] sm:$0xff] %vm3152, %v4976
      %7011 = vst.msk [vmem:[%s232 + $0xe8] sm:$0xff] %vm3152, %v4977
      %7012 = vst.msk [vmem:[%s232 + $0xf0] sm:$0xff] %vm3152, %v4978
      %7013 = vst.msk [vmem:[%s232 + $0xf8] sm:$0xff] %vm3152, %v4979
      %7014 = vst.msk [vmem:[%s237] sm:$0xff] %vm3152, %v6950
      %7015 = vst.msk [vmem:[%s237 + $0x8] sm:$0xff] %vm3152, %v6951
      %7016 = vst.msk [vmem:[%s237 + $0x10] sm:$0xff] %vm3152, %v6952
      %7017 = vst.msk [vmem:[%s237 + $0x18] sm:$0xff] %vm3152, %v6953
      %7018 = vst.msk [vmem:[%s237 + $0x20] sm:$0xff] %vm3152, %v6954
      %7019 = vst.msk [vmem:[%s237 + $0x28] sm:$0xff] %vm3152, %v6955
      %7020 = vst.msk [vmem:[%s237 + $0x30] sm:$0xff] %vm3152, %v6956
      %7021 = vst.msk [vmem:[%s237 + $0x38] sm:$0xff] %vm3152, %v6957
      %7022 = vst.msk [vmem:[%s237 + $0x40] sm:$0xff] %vm3152, %v6958
      %7023 = vst.msk [vmem:[%s237 + $0x48] sm:$0xff] %vm3152, %v6959
      %7024 = vst.msk [vmem:[%s237 + $0x50] sm:$0xff] %vm3152, %v6960
      %7025 = vst.msk [vmem:[%s237 + $0x58] sm:$0xff] %vm3152, %v6961
      %7026 = vst.msk [vmem:[%s237 + $0x60] sm:$0xff] %vm3152, %v6962
      %7027 = vst.msk [vmem:[%s237 + $0x68] sm:$0xff] %vm3152, %v6963
      %7028 = vst.msk [vmem:[%s237 + $0x70] sm:$0xff] %vm3152, %v6964
      %7029 = vst.msk [vmem:[%s237 + $0x78] sm:$0xff] %vm3152, %v6965
      %7030 = vst.msk [vmem:[%s237 + $0x80] sm:$0xff] %vm3152, %v6966
      %7031 = vst.msk [vmem:[%s237 + $0x88] sm:$0xff] %vm3152, %v6967
      %7032 = vst.msk [vmem:[%s237 + $0x90] sm:$0xff] %vm3152, %v6968
      %7033 = vst.msk [vmem:[%s237 + $0x98] sm:$0xff] %vm3152, %v6969
      %7034 = vst.msk [vmem:[%s237 + $0xa0] sm:$0xff] %vm3152, %v6970
      %7035 = vst.msk [vmem:[%s237 + $0xa8] sm:$0xff] %vm3152, %v6971
      %7036 = vst.msk [vmem:[%s237 + $0xb0] sm:$0xff] %vm3152, %v6972
      %7037 = vst.msk [vmem:[%s237 + $0xb8] sm:$0xff] %vm3152, %v6973
      %7038 = vst.msk [vmem:[%s237 + $0xc0] sm:$0xff] %vm3152, %v6974
      %7039 = vst.msk [vmem:[%s237 + $0xc8] sm:$0xff] %vm3152, %v6975
      %7040 = vst.msk [vmem:[%s237 + $0xd0] sm:$0xff] %vm3152, %v6976
      %7041 = vst.msk [vmem:[%s237 + $0xd8] sm:$0xff] %vm3152, %v6977
      %7042 = vst.msk [vmem:[%s237 + $0xe0] sm:$0xff] %vm3152, %v6978
      %7043 = vst.msk [vmem:[%s237 + $0xe8] sm:$0xff] %vm3152, %v6979
      %7044 = vst.msk [vmem:[%s237 + $0xf0] sm:$0xff] %vm3152, %v6980
      %7045 = vst.msk [vmem:[%s237 + $0xf8] sm:$0xff] %vm3152, %v6981
      %p7046 = scmp.lt.s32.totalorder %s17, 1
      %s7047 = scalar_select %p7046, %s17, 1
      %s7048 = smul.addr %s7047, 32
      %s7049 = smul.addr %s7048, 8
      %s7050 = scalar_lea.vmem %s4, %s7049
      %p7051 = scmp.lt.s32.totalorder %s17, 1
      %s7052 = scalar_select %p7051, %s17, 1
      %s7053 = smul.addr %s7052, 32
      %s7054 = smul.addr %s7053, 8
      %s7055 = scalar_lea.vmem %s5, %s7054
      // Predicated region
      $region37: #{up_block_elu_forward.1} parent=35 // pred_check
        %p7056 = pneg %p124
      $region38: #{up_block_elu_forward.1} parent=35 // pred_check_branch
        %7058 = sbr.rel (%p7056) target = $region40
      $region39: #{up_block_elu_forward.1} parent=35 // pred_region
        _
      $region40: #{up_block_elu_forward.1} parent=35 // pred_fallthru
        _
      // Predicated region
      $region41: #{up_block_elu_forward.1} parent=35 // pred_check
        %p7059 = pneg %p150
      $region42: #{up_block_elu_forward.1} parent=35 // pred_check_branch
        %7061 = sbr.rel (%p7059) target = $region44
      $region43: #{up_block_elu_forward.1} parent=35 // pred_region
        _
      $region44: #{up_block_elu_forward.1} parent=35 // pred_fallthru
        _
    $region36: #{up_block_elu_forward.1} parent=5 // pred_fallthru
      _
    %p7062 = scmp.le.s32.totalorder 2, %s12
    // Predicated region
    $region45: #{up_block_elu_forward.1} parent=5 // pred_check
      %p7063 = pneg %p7062
    $region46: #{up_block_elu_forward.1} parent=5 // pred_check_branch
      %7065 = sbr.rel (%p7063) target = $region48
    $region47: #{up_block_elu_forward.1} parent=5 // pred_region
      %s7066 = ssub.s32 %s12, 2
      // Predicated region
      $region49: #{up_block_elu_forward.1} parent=47 // pred_check
        %p7067 = pneg %p130
      $region50: #{up_block_elu_forward.1} parent=47 // pred_check_branch
        %7069 = sbr.rel (%p7067) target = $region52
      $region51: #{up_block_elu_forward.1} parent=47 // pred_region
        %p7070 = scmp.lt.s32.totalorder %s18, 1
        %s7071 = scalar_select %p7070, %s18, 1
        %s7072 = smul.addr %s7071, 32
        %s7073 = smul.addr %s7072, 8
        %s7074 = scalar_lea.vmem %s4, %s7073
      $region52: #{up_block_elu_forward.1} parent=47 // pred_fallthru
        _
      // Predicated region
      $region53: #{up_block_elu_forward.1} parent=47 // pred_check
        %p7075 = pneg %p156
      $region54: #{up_block_elu_forward.1} parent=47 // pred_check_branch
        %7077 = sbr.rel (%p7075) target = $region56
      $region55: #{up_block_elu_forward.1} parent=47 // pred_region
        %p7078 = scmp.lt.s32.totalorder %s18, 1
        %s7079 = scalar_select %p7078, %s18, 1
        %s7080 = smul.addr %s7079, 32
        %s7081 = smul.addr %s7080, 8
        %s7082 = scalar_lea.vmem %s5, %s7081
      $region56: #{up_block_elu_forward.1} parent=47 // pred_fallthru
        _
    $region48: #{up_block_elu_forward.1} parent=5 // pred_fallthru
      _
  $region6: #{up_block_elu_forward.1} parent=0 // loop_footer
    %s16 = sadd.s32 1, %s12
  $region7: #{up_block_elu_forward.1} parent=0 // loop_footer_branch
    %11 = sbr.rel target = $region3
  $region8: #{up_block_elu_forward.1} parent=0 // loop_exit
    _

</llo_original>
